<compile_context>
chip_gen: v6e
topology: v6e:2x2x1
jax: 0.10.0
libtpu: 0.0.40
codegen_flags: <defaults>
</compile_context>

<pallas_src>
import functools
import math

import jax
import jax.numpy as jnp
from jax import lax
from jax.experimental import pallas as pl
from jax.experimental.pallas import tpu as pltpu


# ----------------------------------------------------------------------------
# Kernel 1: fully fused conv stack
#   Conv1d(1->c1,k3,p1)+ReLU+MaxPool2  ->  Conv1d(c1->c2,k3,p1)+ReLU+MaxPool2
#
# Row m of the block corresponds to (batch b, pooled cell p) at the final L/4
# resolution.  xcol row m holds the 6 raw samples x[4p-1 .. 4p+4] (zero padded),
# which is everything both conv windows of both pool phases of both stages need.
#   stage 1: one (M,6)x(6,4*c1) matmul -> 4 conv phases; pairwise lane-max gives the
#            two stage-1 pooled values of cell p; +bias, ReLU.
#   stage 2: neighbour taps h1[2p-1] / h1[2p+2] come from a row shift of h1 with a
#            zero mask at sequence boundaries; one (M,4*c1)x(4*c1,2*c2) matmul gives
#            both stage-2 conv phases; lane-max + bias + ReLU is the pooled output.
# ----------------------------------------------------------------------------
def _conv_stack_kernel(xcol_ref, w1p_ref, b1p_ref, w2p_ref, b2_ref, o_ref, *, l4):
    c1 = w1p_ref.shape[1] // 4                      # 32
    c2 = b2_ref.shape[1]                            # 64
    m = xcol_ref.shape[0]                           # rows in this block (whole batches)

    # ---- stage 1: all 4 conv phases in one MXU matmul ---------------------------
    y1 = jnp.dot(xcol_ref[...], w1p_ref[...], preferred_element_type=jnp.float32)   # (m, 4*c1)
    ha = jnp.maximum(y1[:, :c1], y1[:, c1:2 * c1])          # pooled conv @ L2-position 2p
    hb = jnp.maximum(y1[:, 2 * c1:3 * c1], y1[:, 3 * c1:])  # pooled conv @ L2-position 2p+1
    h1 = jnp.maximum(jnp.concatenate([ha, hb], axis=-1) + b1p_ref[...], 0.0)        # (m, 2*c1)

    # ---- stage-2 im2col in-register: taps {2p-1, 2p, 2p+1, 2p+2} ----------------
    row = lax.broadcasted_iota(jnp.int32, (m, 1), 0)
    zrow = jnp.zeros((1, c1), jnp.float32)
    prev_odd = jnp.concatenate([zrow, h1[:-1, c1:]], axis=0)          # h1[2p-1]
    prev_odd = jnp.where(row % l4 == 0, 0.0, prev_odd)                # conv zero-pad at p=0
    next_even = jnp.concatenate([h1[1:, :c1], zrow], axis=0)          # h1[2p+2]
    next_even = jnp.where(row % l4 == l4 - 1, 0.0, next_even)         # conv zero-pad at p=l4-1
    g = jnp.concatenate([prev_odd, h1, next_even], axis=-1)           # (m, 4*c1) = (m, 128)

    # ---- stage 2: both pooled conv phases in one MXU matmul ---------------------
    y2 = jnp.dot(g, w2p_ref[...], preferred_element_type=jnp.float32)               # (m, 2*c2)
    h2 = jnp.maximum(jnp.maximum(y2[:, :c2], y2[:, c2:]) + b2_ref[...], 0.0)
    o_ref[...] = h2.astype(o_ref.dtype)


def conv_stack(xcol, w1p, b1p, w2p, b2, *, batch, l4):
    M, taps = xcol.shape
    c2 = b2.shape[1]
    # Split the batch into two independent "parallel" blocks so v7x's second
    # TensorCore gets work; single-core chips just run two cheap steps.
    nsplit = 2 if (batch % 2 == 0 and batch >= 2) else 1
    mb = (batch // nsplit) * l4
    assert mb % 8 == 0
    kernel = functools.partial(_conv_stack_kernel, l4=l4)
    return pl.pallas_call(
        kernel,
        out_shape=jax.ShapeDtypeStruct((M, c2), jnp.float32),
        grid=(nsplit,),
        in_specs=[
            pl.BlockSpec((mb, taps), lambda i: (i, 0)),
            pl.BlockSpec(w1p.shape, lambda i: (0, 0)),
            pl.BlockSpec(b1p.shape, lambda i: (0, 0)),
            pl.BlockSpec(w2p.shape, lambda i: (0, 0)),
            pl.BlockSpec(b2.shape, lambda i: (0, 0)),
        ],
        out_specs=pl.BlockSpec((mb, c2), lambda i: (i, 0)),
        compiler_params=pltpu.CompilerParams(dimension_semantics=("parallel",)),
    )(xcol, w1p, b1p, w2p, b2)


# ----------------------------------------------------------------------------
# Kernel 2: fused QKV projection + self-attention (softmax over batch) + final Linear
# grid = (F // tk,): the pre-packed bf16 (F, 3*dim) weight is streamed in K-tiles
# through the double-buffered BlockSpec pipeline and accumulated into an f32 VMEM
# scratch (init/finalize gated with pl.when).  Activations stay f32; the weight tile
# is upcast in-kernel (hidden under the weight DMA).  The softmax / context / final
# (dim, W) linear run once at the last grid step, so Q/K/V and the attention matrix
# never touch HBM and the output is stored exactly once.
# ----------------------------------------------------------------------------
def _attn_head_kernel(x_ref, wqkv_ref, bqkv_ref, wfc_ref, bfc_ref, o_ref, acc_ref, *, dim):
    @pl.when(pl.program_id(0) == 0)
    def _():
        acc_ref[...] = jnp.zeros_like(acc_ref)

    # NOTE: correctness of this accumulator relies on the single grid axis being a
    # reduction ("arbitrary") with a constant output block index -- do not re-mark it.
    acc_ref[...] += jnp.dot(x_ref[...], wqkv_ref[...].astype(jnp.float32),
                            preferred_element_type=jnp.float32)

    @pl.when(pl.program_id(0) == pl.num_programs(0) - 1)
    def _():
        qkv = acc_ref[...] + bqkv_ref[...]                    # (B, 3*dim) f32
        q = qkv[:, :dim]
        k = qkv[:, dim:2 * dim]
        v = qkv[:, 2 * dim:]
        # scores = (Q @ K^T) / sqrt(dim); softmax over the batch axis (dim=-1).
        s = lax.dot_general(q, k, (((1,), (1,)), ((), ())),
                            preferred_element_type=jnp.float32) * (1.0 / math.sqrt(dim))
        s = s - jnp.max(s, axis=-1, keepdims=True)
        e = jnp.exp(s)
        p = e * pl.reciprocal(jnp.sum(e, axis=-1, keepdims=True), approx=True)
        ctx = jnp.dot(p, v, preferred_element_type=jnp.float32)              # (B, dim)
        y = jnp.dot(ctx, wfc_ref[...], preferred_element_type=jnp.float32) + bfc_ref[...]
        o_ref[...] = y.astype(o_ref.dtype)


def _pick_tk(F, tk_max):
    """Largest lane-aligned (multiple of 128) divisor of F that is <= tk_max."""
    if F <= tk_max:
        return F
    for cand in range(tk_max, 0, -128):
        if cand % 128 == 0 and F % cand == 0:
            return cand
    return F   # no aligned divisor: fall back to a single full-width step


def attention_head(x_flat, wqkv, bqkv, wfc, bfc, *, dim, tk_max=4096):
    Bn, F = x_flat.shape
    Wout = wfc.shape[1]
    tk = _pick_tk(F, tk_max)
    nsteps = F // tk
    kernel = functools.partial(_attn_head_kernel, dim=dim)
    return pl.pallas_call(
        kernel,
        out_shape=jax.ShapeDtypeStruct((Bn, Wout), jnp.float32),
        grid=(nsteps,),
        in_specs=[
            pl.BlockSpec((Bn, tk), lambda i: (0, i)),          # activations (f32, tiny)
            pl.BlockSpec((tk, 3 * dim), lambda i: (i, 0)),     # streamed QKV weight (bf16)
            pl.BlockSpec((1, 3 * dim), lambda i: (0, 0)),      # QKV bias (f32)
            pl.BlockSpec((dim, Wout), lambda i: (0, 0)),       # fc weight (f32, tiny)
            pl.BlockSpec((1, Wout), lambda i: (0, 0)),         # fc bias
        ],
        out_specs=pl.BlockSpec((Bn, Wout), lambda i: (0, 0)),
        scratch_shapes=[pltpu.VMEM((Bn, 3 * dim), jnp.float32)],
        compiler_params=pltpu.CompilerParams(
            dimension_semantics=("arbitrary",),
            vmem_limit_bytes=28 * 1024 * 1024),
    )(x_flat, wqkv, bqkv, wfc, bfc)


# ----------------------------------------------------------------------------
# One-time parameter preparation (all packing / permutation / casting hoisted here)
# ----------------------------------------------------------------------------
def prep_params(params, seq_len):
    l4 = seq_len // 4
    c1 = params['conv1_w'].shape[0]                 # 32
    c2 = params['conv2_w'].shape[0]                 # 64
    dim = params['q_w'].shape[0]                    # 128
    feat = params['q_w'].shape[1]                   # c2 * l4

    # stage-1 packed weight: column block `phase` holds conv taps for raw output
    # position 4p+phase, fed by xcol columns j = phase..phase+2 (xcol[j] = x[4p-1+j]).
    w1 = params['conv1_w'][:, 0, :]                 # (c1, 3)
    w1p = jnp.zeros((6, 4 * c1), jnp.float32)
    for phase in range(4):
        for k in range(3):
            w1p = w1p.at[phase + k, phase * c1:(phase + 1) * c1].set(w1[:, k])
    b1p = jnp.tile(params['conv1_b'], 2).reshape(1, 2 * c1)

    # stage-2 packed weight: even pool phase (cols 0..c2) uses taps h1[2p-1..2p+1]
    # (im2col blocks 0..2); odd phase (cols c2..2*c2) uses h1[2p..2p+2] (blocks 1..3).
    w2 = params['conv2_w']                          # (c2, c1, 3)
    w2p = jnp.zeros((4 * c1, 2 * c2), jnp.float32)
    for k in range(3):
        blk = jnp.transpose(w2[:, :, k])            # (c1, c2)
        w2p = w2p.at[k * c1:(k + 1) * c1, 0:c2].set(blk)
        w2p = w2p.at[(k + 1) * c1:(k + 2) * c1, c2:2 * c2].set(blk)
    b2 = params['conv2_b'].reshape(1, c2)

    # QKV weight: concat, then permute rows from torch NCL-flat order (c*l4 + p) to the
    # kernel's NLC order (p*c2 + c) so the per-call flatten transpose disappears; bf16.
    wqkv = jnp.concatenate([params['q_w'].T, params['k_w'].T, params['v_w'].T], axis=1)
    wqkv = wqkv.reshape(c2, l4, 3 * dim).transpose(1, 0, 2).reshape(feat, 3 * dim)
    wqkv = wqkv.astype(jnp.bfloat16)
    bqkv = jnp.concatenate([params['q_b'], params['k_b'], params['v_b']]).reshape(1, 3 * dim)

    wfc = jnp.transpose(params['fc_w']).astype(jnp.float32)            # (dim, W)
    bfc = params['fc_b'].reshape(1, -1).astype(jnp.float32)

    return dict(w1p=w1p, b1p=b1p, w2p=w2p, b2=b2,
                wqkv=wqkv, bqkv=bqkv, wfc=wfc, bfc=bfc)


# ----------------------------------------------------------------------------
# Forward pass (thin XLA glue around the two fused kernels)
# ----------------------------------------------------------------------------
def _forward(prepped, x):
    B, L = x.shape
    assert L % 4 == 0
    L4 = L // 4
    c2 = prepped['b2'].shape[1]
    dim = prepped['wfc'].shape[0]

    # Tiny XLA layout prep (<= 24 KiB): per final pooled cell p, the 6 raw samples
    # x[4p-1 .. 4p+4] that the fused conv kernel needs (zero padded at the ends).
    xq = x.reshape(B, L4, 4)
    left = jnp.pad(xq[:, :-1, 3:], ((0, 0), (1, 0), (0, 0)))
    right = jnp.pad(xq[:, 1:, :1], ((0, 0), (0, 1), (0, 0)))
    xcol = jnp.concatenate([left, xq, right], axis=-1).reshape(B * L4, 6)

    h2 = conv_stack(xcol, prepped['w1p'], prepped['b1p'],
                    prepped['w2p'], prepped['b2'], batch=B, l4=L4)     # (B*L4, c2)
    x_flat = h2.reshape(B, L4 * c2)        # same memory layout -> free reshape (NLC order)

    return attention_head(x_flat, prepped['wqkv'], prepped['bqkv'],
                          prepped['wfc'], prepped['bfc'], dim=dim)


forward = jax.jit(_forward)


# ----------------------------------------------------------------------------
# Parameter init (PyTorch weight layouts) and a pure-JAX reference
# ----------------------------------------------------------------------------
def init_params(key, watermark_size=32, seq_len=1024):
    assert seq_len % 4 == 0
    feat = 64 * (seq_len // 4)     # == 64*256 == SelfAttention input_dim when seq_len=1024
    ks = iter(jax.random.split(key, 16))

    def nrm(shape, scale):
        return scale * jax.random.normal(next(ks), shape, jnp.float32)

    return dict(
        conv1_w=nrm((32, 1, 3), 1.0 / math.sqrt(3.0)),
        conv1_b=nrm((32,), 0.1),
        conv2_w=nrm((64, 32, 3), 1.0 / math.sqrt(96.0)),
        conv2_b=nrm((64,), 0.1),
        q_w=nrm((128, feat), 1.0 / math.sqrt(feat)),
        q_b=nrm((128,), 0.1),
        k_w=nrm((128, feat), 1.0 / math.sqrt(feat)),
        k_b=nrm((128,), 0.1),
        v_w=nrm((128, feat), 1.0 / math.sqrt(feat)),
        v_b=nrm((128,), 0.1),
        fc_w=nrm((watermark_size, 128), 1.0 / math.sqrt(128.0)),
        fc_b=nrm((watermark_size,), 0.1),
    )


def reference_forward(params, x):
    """Pure-JAX (f32) re-implementation of the PyTorch module, for validation."""
    B, L = x.shape
    L2 = L // 2
    c1 = params['conv1_w'].shape[0]
    c2 = params['conv2_w'].shape[0]
    # conv1 + relu + pool (NCL)
    xp = jnp.pad(x, ((0, 0), (1, 1)))
    w1 = params['conv1_w'][:, 0, :]                                        # (c1, 3)
    y1 = sum(w1[None, :, k, None] * xp[:, None, k:k + L] for k in range(3))
    y1 = jnp.maximum(y1 + params['conv1_b'][None, :, None], 0.0)
    h1 = jnp.max(y1.reshape(B, c1, L2, 2), axis=-1)                        # (B, c1, L2)
    # conv2 + relu + pool
    h1p = jnp.pad(h1, ((0, 0), (0, 0), (1, 1)))
    w2 = params['conv2_w']                                                 # (c2, c1, 3)
    y2 = sum(jnp.einsum('bcl,oc->bol', h1p[:, :, k:k + L2], w2[:, :, k]) for k in range(3))
    y2 = jnp.maximum(y2 + params['conv2_b'][None, :, None], 0.0)
    h2 = jnp.max(y2.reshape(B, c2, L2 // 2, 2), axis=-1)                   # (B, c2, L4)
    xf = h2.reshape(B, -1)
    # self-attention + fc
    q = xf @ params['q_w'].T + params['q_b']
    k = xf @ params['k_w'].T + params['k_b']
    v = xf @ params['v_w'].T + params['v_b']
    s = (q @ k.T) / math.sqrt(q.shape[-1])
    p = jax.nn.softmax(s, axis=-1)
    return (p @ v) @ params['fc_w'].T + params['fc_b']


if __name__ == "__main__":
    BATCH, SEQ_LEN, WATERMARK = 4, 1024, 32     # SEQ_LEN=1024 <=> SelfAttention(64*256, 128)
    key = jax.random.PRNGKey(0)
    pkey, xkey = jax.random.split(key)
    params = init_params(pkey, watermark_size=WATERMARK, seq_len=SEQ_LEN)
    prepped = prep_params(params, seq_len=SEQ_LEN)      # one-time weight packing / bf16 cast
    x = jax.random.normal(xkey, (BATCH, SEQ_LEN), jnp.float32)

    out = jax.block_until_ready(forward(prepped, x))
    assert out.shape == (BATCH, WATERMARK), out.shape
    assert bool(jnp.all(jnp.isfinite(out)))

    ref = reference_forward(params, x)
    err = float(jnp.max(jnp.abs(out - ref)))
    assert err < 5e-2, f"mismatch vs pure-JAX reference: max|diff| = {err}"
    print("KERNEL_OK")
</pallas_src>

<mosaic_0001>
module attributes {stable_mosaic.version = 11 : i64} {
  func.func @_conv_stack_kernel(%arg0: i32, %arg1: memref<512x6xf32, #tpu.memory_space<vmem>>, %arg2: memref<6x128xf32, #tpu.memory_space<vmem>>, %arg3: memref<1x64xf32, #tpu.memory_space<vmem>>, %arg4: memref<128x128xf32, #tpu.memory_space<vmem>>, %arg5: memref<1x64xf32, #tpu.memory_space<vmem>>, %arg6: memref<512x64xf32, #tpu.memory_space<vmem>>) attributes {dimension_semantics = [#tpu.dimension_semantics<parallel>], iteration_bounds = array<i64: 2>, scalar_prefetch = 0 : i64, scratch_operands = 0 : i64, tpu.core_type = #tpu.core_type<tc>, window_params = [{transform_indices = @transform_0, window_bounds = array<i64: 512, 6>}, {pipeline_mode = #tpu.pipeline_mode<synchronous>, transform_indices = @transform_1, window_bounds = array<i64: 6, 128>}, {pipeline_mode = #tpu.pipeline_mode<synchronous>, transform_indices = @transform_2, window_bounds = array<i64: 1, 64>}, {pipeline_mode = #tpu.pipeline_mode<synchronous>, transform_indices = @transform_3, window_bounds = array<i64: 128, 128>}, {pipeline_mode = #tpu.pipeline_mode<synchronous>, transform_indices = @transform_4, window_bounds = array<i64: 1, 64>}, {transform_indices = @transform_5, window_bounds = array<i64: 512, 64>}]} {
    %c0 = arith.constant 0 : index
    %c0_0 = arith.constant 0 : index
    %0 = vector.load %arg1[%c0, %c0_0] : memref<512x6xf32, #tpu.memory_space<vmem>>, vector<512x6xf32>
    %c0_1 = arith.constant 0 : index
    %c0_2 = arith.constant 0 : index
    %1 = vector.load %arg2[%c0_1, %c0_2] : memref<6x128xf32, #tpu.memory_space<vmem>>, vector<6x128xf32>
    %cst = arith.constant dense<0.000000e+00> : vector<512x128xf32>
    %2 = tpu.matmul %0, %1, %cst {dimension_numbers = #tpu.dot_dimension_numbers<[1], [0], [0], [1], [0, 0, 1, 1], [], []>} : vector<512x6xf32>, vector<6x128xf32>, vector<512x128xf32> -> vector<512x128xf32>
    %3 = vector.extract_strided_slice %2 {offsets = [0, 0], sizes = [512, 32], strides = [1, 1]} : vector<512x128xf32> to vector<512x32xf32>
    %4 = vector.extract_strided_slice %2 {offsets = [0, 32], sizes = [512, 32], strides = [1, 1]} : vector<512x128xf32> to vector<512x32xf32>
    %5 = arith.maximumf %3, %4 : vector<512x32xf32>
    %6 = vector.extract_strided_slice %2 {offsets = [0, 64], sizes = [512, 32], strides = [1, 1]} : vector<512x128xf32> to vector<512x32xf32>
    %7 = vector.extract_strided_slice %2 {offsets = [0, 96], sizes = [512, 32], strides = [1, 1]} : vector<512x128xf32> to vector<512x32xf32>
    %8 = arith.maximumf %6, %7 : vector<512x32xf32>
    %9 = tpu.concatenate %5, %8 in 1 : vector<512x32xf32>, vector<512x32xf32> -> vector<512x64xf32>
    %c0_3 = arith.constant 0 : index
    %c0_4 = arith.constant 0 : index
    %10 = vector.load %arg3[%c0_3, %c0_4] : memref<1x64xf32, #tpu.memory_space<vmem>>, vector<1x64xf32>
    %11 = vector.broadcast %10 : vector<1x64xf32> to vector<512x64xf32>
    %12 = arith.addf %9, %11 : vector<512x64xf32>
    %cst_5 = arith.constant 0.000000e+00 : f32
    %13 = vector.broadcast %cst_5 : f32 to vector<512x64xf32>
    %14 = arith.maximumf %12, %13 : vector<512x64xf32>
    %15 = tpu.iota {dimensions = array<i32: 0>} : vector<512x1xi32>
    %cst_6 = arith.constant 0.000000e+00 : f32
    %16 = vector.broadcast %cst_6 : f32 to vector<1x32xf32>
    %17 = vector.extract_strided_slice %14 {offsets = [0, 32], sizes = [511, 32], strides = [1, 1]} : vector<512x64xf32> to vector<511x32xf32>
    %18 = tpu.concatenate %16, %17 in 0 : vector<1x32xf32>, vector<511x32xf32> -> vector<512x32xf32>
    %c256_i32 = arith.constant 256 : i32
    %c0_i32 = arith.constant 0 : i32
    %19 = arith.cmpi eq, %c256_i32, %c0_i32 : i32
    %c1_i32 = arith.constant 1 : i32
    %20 = arith.select %19, %c1_i32, %c256_i32 : i32
    %21 = vector.broadcast %20 : i32 to vector<512x1xi32>
    %22 = arith.remsi %15, %21 : vector<512x1xi32>
    %c0_i32_7 = arith.constant 0 : i32
    %23 = vector.broadcast %c0_i32_7 : i32 to vector<512x1xi32>
    %24 = arith.cmpi ne, %22, %23 : vector<512x1xi32>
    %c0_i32_8 = arith.constant 0 : i32
    %25 = vector.broadcast %c0_i32_8 : i32 to vector<512x1xi32>
    %26 = arith.cmpi slt, %22, %25 : vector<512x1xi32>
    %c0_i32_9 = arith.constant 0 : i32
    %27 = arith.cmpi slt, %20, %c0_i32_9 : i32
    %28 = vector.broadcast %27 : i1 to vector<512x1xi1>
    %29 = vector.broadcast %28 : vector<512x1xi1> to vector<512x1xi1>
    %30 = arith.xori %26, %29 : vector<512x1xi1>
    %31 = arith.andi %30, %24 : vector<512x1xi1>
    %32 = vector.broadcast %20 : i32 to vector<512x1xi32>
    %33 = arith.addi %22, %32 : vector<512x1xi32>
    %34 = arith.select %31, %33, %22 : vector<512x1xi1>, vector<512x1xi32>
    %c0_i32_10 = arith.constant 0 : i32
    %35 = vector.broadcast %c0_i32_10 : i32 to vector<512x1xi32>
    %36 = arith.cmpi eq, %34, %35 : vector<512x1xi32>
    %cst_11 = arith.constant 0.000000e+00 : f32
    %37 = vector.shape_cast %36 : vector<512x1xi1> to vector<512x1xi1>
    %38 = vector.broadcast %37 : vector<512x1xi1> to vector<512x32xi1>
    %39 = vector.broadcast %cst_11 : f32 to vector<512x32xf32>
    %40 = arith.select %38, %39, %18 : vector<512x32xi1>, vector<512x32xf32>
    %41 = vector.extract_strided_slice %14 {offsets = [1, 0], sizes = [511, 32], strides = [1, 1]} : vector<512x64xf32> to vector<511x32xf32>
    %42 = tpu.concatenate %41, %16 in 0 : vector<511x32xf32>, vector<1x32xf32> -> vector<512x32xf32>
    %c256_i32_12 = arith.constant 256 : i32
    %c0_i32_13 = arith.constant 0 : i32
    %43 = arith.cmpi eq, %c256_i32_12, %c0_i32_13 : i32
    %c1_i32_14 = arith.constant 1 : i32
    %44 = arith.select %43, %c1_i32_14, %c256_i32_12 : i32
    %45 = vector.broadcast %44 : i32 to vector<512x1xi32>
    %46 = arith.remsi %15, %45 : vector<512x1xi32>
    %c0_i32_15 = arith.constant 0 : i32
    %47 = vector.broadcast %c0_i32_15 : i32 to vector<512x1xi32>
    %48 = arith.cmpi ne, %46, %47 : vector<512x1xi32>
    %c0_i32_16 = arith.constant 0 : i32
    %49 = vector.broadcast %c0_i32_16 : i32 to vector<512x1xi32>
    %50 = arith.cmpi slt, %46, %49 : vector<512x1xi32>
    %c0_i32_17 = arith.constant 0 : i32
    %51 = arith.cmpi slt, %44, %c0_i32_17 : i32
    %52 = vector.broadcast %51 : i1 to vector<512x1xi1>
    %53 = vector.broadcast %52 : vector<512x1xi1> to vector<512x1xi1>
    %54 = arith.xori %50, %53 : vector<512x1xi1>
    %55 = arith.andi %54, %48 : vector<512x1xi1>
    %56 = vector.broadcast %44 : i32 to vector<512x1xi32>
    %57 = arith.addi %46, %56 : vector<512x1xi32>
    %58 = arith.select %55, %57, %46 : vector<512x1xi1>, vector<512x1xi32>
    %c255_i32 = arith.constant 255 : i32
    %59 = vector.broadcast %c255_i32 : i32 to vector<512x1xi32>
    %60 = arith.cmpi eq, %58, %59 : vector<512x1xi32>
    %cst_18 = arith.constant 0.000000e+00 : f32
    %61 = vector.shape_cast %60 : vector<512x1xi1> to vector<512x1xi1>
    %62 = vector.broadcast %61 : vector<512x1xi1> to vector<512x32xi1>
    %63 = vector.broadcast %cst_18 : f32 to vector<512x32xf32>
    %64 = arith.select %62, %63, %42 : vector<512x32xi1>, vector<512x32xf32>
    %65 = tpu.concatenate %40, %14, %64 in 1 : vector<512x32xf32>, vector<512x64xf32>, vector<512x32xf32> -> vector<512x128xf32>
    %c0_19 = arith.constant 0 : index
    %c0_20 = arith.constant 0 : index
    %66 = vector.load %arg4[%c0_19, %c0_20] : memref<128x128xf32, #tpu.memory_space<vmem>>, vector<128x128xf32>
    %cst_21 = arith.constant dense<0.000000e+00> : vector<512x128xf32>
    %67 = tpu.matmul %65, %66, %cst_21 {dimension_numbers = #tpu.dot_dimension_numbers<[1], [0], [0], [1], [0, 0, 1, 1], [], []>} : vector<512x128xf32>, vector<128x128xf32>, vector<512x128xf32> -> vector<512x128xf32>
    %68 = vector.extract_strided_slice %67 {offsets = [0, 0], sizes = [512, 64], strides = [1, 1]} : vector<512x128xf32> to vector<512x64xf32>
    %69 = vector.extract_strided_slice %67 {offsets = [0, 64], sizes = [512, 64], strides = [1, 1]} : vector<512x128xf32> to vector<512x64xf32>
    %70 = arith.maximumf %68, %69 : vector<512x64xf32>
    %c0_22 = arith.constant 0 : index
    %c0_23 = arith.constant 0 : index
    %71 = vector.load %arg5[%c0_22, %c0_23] : memref<1x64xf32, #tpu.memory_space<vmem>>, vector<1x64xf32>
    %72 = vector.broadcast %71 : vector<1x64xf32> to vector<512x64xf32>
    %73 = arith.addf %70, %72 : vector<512x64xf32>
    %cst_24 = arith.constant 0.000000e+00 : f32
    %74 = vector.broadcast %cst_24 : f32 to vector<512x64xf32>
    %75 = arith.maximumf %73, %74 : vector<512x64xf32>
    %c0_25 = arith.constant 0 : index
    %c0_26 = arith.constant 0 : index
    %76 = vector.load %arg6[%c0_25, %c0_26] : memref<512x64xf32, #tpu.memory_space<vmem>>, vector<512x64xf32>
    tpu.vector_store %arg6[%c0_25, %c0_26], %75 {strides = array<i32>} : memref<512x64xf32, #tpu.memory_space<vmem>>, vector<512x64xf32>,
    return
  }
  func.func @transform_0(%arg0: i32) -> (i32, i32) {
    %c0_i32 = arith.constant 0 : i32
    %c0_i32_0 = arith.constant 0 : i32
    return %arg0, %c0_i32 : i32, i32
  }
  func.func @transform_1(%arg0: i32) -> (i32, i32) {
    %c0_i32 = arith.constant 0 : i32
    %c0_i32_0 = arith.constant 0 : i32
    %c0_i32_1 = arith.constant 0 : i32
    return %c0_i32, %c0_i32_0 : i32, i32
  }
  func.func @transform_2(%arg0: i32) -> (i32, i32) {
    %c0_i32 = arith.constant 0 : i32
    %c0_i32_0 = arith.constant 0 : i32
    %c0_i32_1 = arith.constant 0 : i32
    return %c0_i32, %c0_i32_0 : i32, i32
  }
  func.func @transform_3(%arg0: i32) -> (i32, i32) {
    %c0_i32 = arith.constant 0 : i32
    %c0_i32_0 = arith.constant 0 : i32
    %c0_i32_1 = arith.constant 0 : i32
    return %c0_i32, %c0_i32_0 : i32, i32
  }
  func.func @transform_4(%arg0: i32) -> (i32, i32) {
    %c0_i32 = arith.constant 0 : i32
    %c0_i32_0 = arith.constant 0 : i32
    %c0_i32_1 = arith.constant 0 : i32
    return %c0_i32, %c0_i32_0 : i32, i32
  }
  func.func @transform_5(%arg0: i32) -> (i32, i32) {
    %c0_i32 = arith.constant 0 : i32
    %c0_i32_0 = arith.constant 0 : i32
    return %arg0, %c0_i32 : i32, i32
  }
}

module attributes {stable_mosaic.version = 11 : i64} {
  func.func @_attn_head_kernel(%arg0: i32, %arg1: memref<4x4096xf32, #tpu.memory_space<vmem>>, %arg2: memref<4096x384xbf16, #tpu.memory_space<vmem>>, %arg3: memref<1x384xf32, #tpu.memory_space<vmem>>, %arg4: memref<128x32xf32, #tpu.memory_space<vmem>>, %arg5: memref<1x32xf32, #tpu.memory_space<vmem>>, %arg6: memref<4x32xf32, #tpu.memory_space<vmem>>, %arg7: memref<4x384xf32, #tpu.memory_space<vmem>>) attributes {dimension_semantics = [#tpu.dimension_semantics<arbitrary>], iteration_bounds = array<i64: 4>, scalar_prefetch = 0 : i64, scratch_operands = 1 : i64, tpu.core_type = #tpu.core_type<tc>, window_params = [{transform_indices = @transform_0, window_bounds = array<i64: 4, 4096>}, {transform_indices = @transform_1, window_bounds = array<i64: 4096, 384>}, {pipeline_mode = #tpu.pipeline_mode<synchronous>, transform_indices = @transform_2, window_bounds = array<i64: 1, 384>}, {pipeline_mode = #tpu.pipeline_mode<synchronous>, transform_indices = @transform_3, window_bounds = array<i64: 128, 32>}, {pipeline_mode = #tpu.pipeline_mode<synchronous>, transform_indices = @transform_4, window_bounds = array<i64: 1, 32>}, {pipeline_mode = #tpu.pipeline_mode<synchronous>, transform_indices = @transform_5, window_bounds = array<i64: 4, 32>}]} {
    %c0_i32 = arith.constant 0 : i32
    %0 = arith.cmpi eq, %arg0, %c0_i32 : i32
    %1 = arith.extui %0 : i1 to i32
    %c0_i32_0 = arith.constant 0 : i32
    %2 = arith.cmpi ne, %1, %c0_i32_0 : i32
    scf.if %2 {
      %cst_9 = arith.constant 0.000000e+00 : f32
      %13 = vector.broadcast %cst_9 : f32 to vector<4x384xf32>
      %c0_10 = arith.constant 0 : index
      %c0_11 = arith.constant 0 : index
      %14 = vector.load %arg7[%c0_10, %c0_11] : memref<4x384xf32, #tpu.memory_space<vmem>>, vector<4x384xf32>
      tpu.vector_store %arg7[%c0_10, %c0_11], %13 {strides = array<i32>} : memref<4x384xf32, #tpu.memory_space<vmem>>, vector<4x384xf32>,
    } else {
    }
    %c0 = arith.constant 0 : index
    %c0_1 = arith.constant 0 : index
    %3 = vector.load %arg7[%c0, %c0_1] : memref<4x384xf32, #tpu.memory_space<vmem>>, vector<4x384xf32>
    %c0_2 = arith.constant 0 : index
    %c0_3 = arith.constant 0 : index
    %4 = vector.load %arg1[%c0_2, %c0_3] : memref<4x4096xf32, #tpu.memory_space<vmem>>, vector<4x4096xf32>
    %c0_4 = arith.constant 0 : index
    %c0_5 = arith.constant 0 : index
    %5 = vector.load %arg2[%c0_4, %c0_5] : memref<4096x384xbf16, #tpu.memory_space<vmem>>, vector<4096x384xbf16>
    %6 = arith.extf %5 : vector<4096x384xbf16> to vector<4096x384xf32>
    %cst = arith.constant dense<0.000000e+00> : vector<4x384xf32>
    %7 = tpu.matmul %4, %6, %cst {dimension_numbers = #tpu.dot_dimension_numbers<[1], [0], [0], [1], [0, 0, 1, 1], [], []>} : vector<4x4096xf32>, vector<4096x384xf32>, vector<4x384xf32> -> vector<4x384xf32>
    %8 = arith.addf %3, %7 : vector<4x384xf32>
    %c0_6 = arith.constant 0 : index
    %c0_7 = arith.constant 0 : index
    %9 = vector.load %arg7[%c0_6, %c0_7] : memref<4x384xf32, #tpu.memory_space<vmem>>, vector<4x384xf32>
    tpu.vector_store %arg7[%c0_6, %c0_7], %8 {strides = array<i32>} : memref<4x384xf32, #tpu.memory_space<vmem>>, vector<4x384xf32>,
    %c3_i32 = arith.constant 3 : i32
    %10 = arith.cmpi eq, %arg0, %c3_i32 : i32
    %11 = arith.extui %10 : i1 to i32
    %c0_i32_8 = arith.constant 0 : i32
    %12 = arith.cmpi ne, %11, %c0_i32_8 : i32
    scf.if %12 {
      %c0_9 = arith.constant 0 : index
      %c0_10 = arith.constant 0 : index
      %13 = vector.load %arg7[%c0_9, %c0_10] : memref<4x384xf32, #tpu.memory_space<vmem>>, vector<4x384xf32>
      %c0_11 = arith.constant 0 : index
      %c0_12 = arith.constant 0 : index
      %14 = vector.load %arg3[%c0_11, %c0_12] : memref<1x384xf32, #tpu.memory_space<vmem>>, vector<1x384xf32>
      %15 = vector.broadcast %14 : vector<1x384xf32> to vector<4x384xf32>
      %16 = arith.addf %13, %15 : vector<4x384xf32>
      %17 = vector.extract_strided_slice %16 {offsets = [0, 0], sizes = [4, 128], strides = [1, 1]} : vector<4x384xf32> to vector<4x128xf32>
      %18 = vector.extract_strided_slice %16 {offsets = [0, 128], sizes = [4, 128], strides = [1, 1]} : vector<4x384xf32> to vector<4x128xf32>
      %19 = vector.extract_strided_slice %16 {offsets = [0, 256], sizes = [4, 128], strides = [1, 1]} : vector<4x384xf32> to vector<4x128xf32>
      %cst_13 = arith.constant dense<0.000000e+00> : vector<4x4xf32>
      %20 = tpu.matmul %17, %18, %cst_13 {dimension_numbers = #tpu.dot_dimension_numbers<[1], [1], [0], [0], [0, 0, 1, 0], [], []>} : vector<4x128xf32>, vector<4x128xf32>, vector<4x4xf32> -> vector<4x4xf32>
      %cst_14 = arith.constant 0.0883883461 : f32
      %21 = vector.broadcast %cst_14 : f32 to vector<4x4xf32>
      %22 = arith.mulf %20, %21 : vector<4x4xf32>
      %cst_15 = arith.constant dense<0xFF800000> : vector<4xf32>
      %23 = vector.multi_reduction <maximumf>, %22, %cst_15 [1] : vector<4x4xf32> to vector<4xf32>
      %24 = vector.shape_cast %23 : vector<4xf32> to vector<4x1xf32>
      %25 = vector.broadcast %24 : vector<4x1xf32> to vector<4x4xf32>
      %26 = arith.subf %22, %25 : vector<4x4xf32>
      %27 = math.exp %26 : vector<4x4xf32>
      %cst_16 = arith.constant dense<0.000000e+00> : vector<4xf32>
      %28 = vector.multi_reduction <add>, %27, %cst_16 [1] : vector<4x4xf32> to vector<4xf32>
      %29 = vector.shape_cast %28 : vector<4xf32> to vector<4x1xf32>
      %30 = tpu.reciprocal %29 {approx = true} : vector<4x1xf32> -> vector<4x1xf32>
      %31 = vector.broadcast %30 : vector<4x1xf32> to vector<4x4xf32>
      %32 = arith.mulf %27, %31 : vector<4x4xf32>
      %cst_17 = arith.constant dense<0.000000e+00> : vector<4x128xf32>
      %33 = tpu.matmul %32, %19, %cst_17 {dimension_numbers = #tpu.dot_dimension_numbers<[1], [0], [0], [1], [0, 0, 1, 1], [], []>} : vector<4x4xf32>, vector<4x128xf32>, vector<4x128xf32> -> vector<4x128xf32>
      %c0_18 = arith.constant 0 : index
      %c0_19 = arith.constant 0 : index
      %34 = vector.load %arg4[%c0_18, %c0_19] : memref<128x32xf32, #tpu.memory_space<vmem>>, vector<128x32xf32>
      %cst_20 = arith.constant dense<0.000000e+00> : vector<4x32xf32>
      %35 = tpu.matmul %33, %34, %cst_20 {dimension_numbers = #tpu.dot_dimension_numbers<[1], [0], [0], [1], [0, 0, 1, 1], [], []>} : vector<4x128xf32>, vector<128x32xf32>, vector<4x32xf32> -> vector<4x32xf32>
      %c0_21 = arith.constant 0 : index
      %c0_22 = arith.constant 0 : index
      %36 = vector.load %arg5[%c0_21, %c0_22] : memref<1x32xf32, #tpu.memory_space<vmem>>, vector<1x32xf32>
      %37 = vector.broadcast %36 : vector<1x32xf32> to vector<4x32xf32>
      %38 = arith.addf %35, %37 : vector<4x32xf32>
      %c0_23 = arith.constant 0 : index
      %c0_24 = arith.constant 0 : index
      %39 = vector.load %arg6[%c0_23, %c0_24] : memref<4x32xf32, #tpu.memory_space<vmem>>, vector<4x32xf32>
      tpu.vector_store %arg6[%c0_23, %c0_24], %38 {strides = array<i32>} : memref<4x32xf32, #tpu.memory_space<vmem>>, vector<4x32xf32>,
    } else {
    }
    return
  }
  func.func @transform_0(%arg0: i32) -> (i32, i32) {
    %c0_i32 = arith.constant 0 : i32
    %c0_i32_0 = arith.constant 0 : i32
    return %c0_i32, %arg0 : i32, i32
  }
  func.func @transform_1(%arg0: i32) -> (i32, i32) {
    %c0_i32 = arith.constant 0 : i32
    %c0_i32_0 = arith.constant 0 : i32
    return %arg0, %c0_i32 : i32, i32
  }
  func.func @transform_2(%arg0: i32) -> (i32, i32) {
    %c0_i32 = arith.constant 0 : i32
    %c0_i32_0 = arith.constant 0 : i32
    %c0_i32_1 = arith.constant 0 : i32
    return %c0_i32, %c0_i32_0 : i32, i32
  }
  func.func @transform_3(%arg0: i32) -> (i32, i32) {
    %c0_i32 = arith.constant 0 : i32
    %c0_i32_0 = arith.constant 0 : i32
    %c0_i32_1 = arith.constant 0 : i32
    return %c0_i32, %c0_i32_0 : i32, i32
  }
  func.func @transform_4(%arg0: i32) -> (i32, i32) {
    %c0_i32 = arith.constant 0 : i32
    %c0_i32_0 = arith.constant 0 : i32
    %c0_i32_1 = arith.constant 0 : i32
    return %c0_i32, %c0_i32_0 : i32, i32
  }
  func.func @transform_5(%arg0: i32) -> (i32, i32) {
    %c0_i32 = arith.constant 0 : i32
    %c0_i32_0 = arith.constant 0 : i32
    %c0_i32_1 = arith.constant 0 : i32
    return %c0_i32, %c0_i32_0 : i32, i32
  }
}

</mosaic_0001>

<llo_original>
// kernel: _forward.2
$region0: #{_forward.2}
  #allocation0 [shape = 'u32[]', space=smem, size = 0x4, offset = 0x4, fixed_abs, tag = 'smem constant byte address 0x4 - core index']
  #allocation1 [shape = 'u32[144,128]{1,0:T(1,128)}', space=vmem, size = 0x12000, scoped, tag = 'internal scratch']
  %s0 = inlined_call_operand.vmem [shape: f32[1024,6], index: 0, kind: input, shape index: {}]
  %s1 = inlined_call_operand.hbm [shape: f32[6,128], index: 1, kind: input, shape index: {}]
  %s2 = inlined_call_operand.hbm [shape: f32[1,64], index: 2, kind: input, shape index: {}]
  %s3 = inlined_call_operand.hbm [shape: f32[128,128], index: 3, kind: input, shape index: {}]
  %s4 = inlined_call_operand.hbm [shape: f32[1,64], index: 4, kind: input, shape index: {}]
  %s5 = inlined_call_operand.vmem [shape: f32[1024,64], index: 5, kind: output, shape index: {}]
  %s6 = sld [smem:[#allocation0]]
  $region69: #{_forward.2} parent=0
    _
  %s8 = ssub.s32 1, %s6
  %s9 = scalar_select 0, %s8, %s6
  $region1: #{_forward.2} parent=0
    #allocation2 [shape = 'u8[4096]{0}', space=vmem, size = 0x1000, scoped, tag = 'input window, operand 1, single buffered']
    #allocation3 [shape = 's32[2]{0}', space=sflag, size = 0x8, scoped, tag = 'scoped memory for _forward.2']
    #allocation4 [shape = 'u8[512]{0}', space=vmem, size = 0x400, scoped, tag = 'input window, operand 2, single buffered']
    #allocation5 [shape = 's32[1]{0}', space=sflag, size = 0x4, scoped, tag = 'scoped memory for _forward.2']
    #allocation6 [shape = 'u8[65536]{0}', space=vmem, size = 0x10000, scoped, tag = 'input window, operand 3, single buffered']
    #allocation7 [shape = 'u8[512]{0}', space=vmem, size = 0x400, scoped, tag = 'input window, operand 4, single buffered']
    #allocation8 [shape = 's32[1]{0}', space=sflag, size = 0x4, scoped, tag = 'scoped memory for _forward.2']
    %10 = vsyncpa [#allocation3], 0
    %11 = vsyncpa [#allocation5], 0
    %12 = vsyncpa [#allocation8], 0
    loop: start=0, step=1, limit=4
    $region2: #{_forward.2} parent=1 // loop_pre_header
      _
    $region3: #{_forward.2} parent=1 // loop_header
      %s14 = sphi 0, %s18
      %p15 = scmp.ge.s32.totalorder %s14, 4
      %s24 = sphi 0, %s26
      %s27 = sphi 0, %s24
      %s28 = sphi 0, %s27
      %s44 = sphi 0, %s28
      %s48 = sphi 0, %s48
      %s50 = sphi 0, %s48
      %s51 = sphi 0, %s50
      %s65 = sphi 0, %s51
      %s69 = sphi 0, %s69
      %s71 = sphi 0, %s69
      %s72 = sphi 0, %s71
      %s86 = sphi 0, %s72
      %s90 = sphi 0, %s90
      %s92 = sphi 0, %s90
      %s93 = sphi 0, %s92
      %s107 = sphi 0, %s93
      %s111 = sphi 0, %s111
      %s113 = sphi 0, %s111
      %s114 = sphi 0, %s113
      %s128 = sphi 0, %s114
      %s134 = sphi 0, %s136
      %s137 = sphi 0, %s134
      %s138 = sphi 0, %s137
      %s154 = sphi 0, %s138
    $region4: #{_forward.2} parent=1 // loop_header_branch
      %17 = sbr.rel (%p15) target = $region8
    $region5: #{_forward.2} parent=1 // loop_body
      %s19 = ssub.s32 %s14, 1
      %s20 = ssub.s32 %s14, 2
      %s21 = sadd.s32 %s14, 1
      %s22 = ssub.s32 %s14, %s21
      %p23 = scmp.eq.s32.totalorder %s22, 0
      %s25 = sadd.s32 %s24, 1
      %s26 = scalar_select %p23, %s24, %s25
      %p29 = pneg %p23
      %p30 = scmp.eq.s32.totalorder %s14, 1
      %p31 = por %p29, %p30
      %p32 = scmp.ne.s32.totalorder %s24, %s27
      %p33 = scmp.eq.s32.totalorder %s14, 0
      %p34 = por %p32, %p33
      %p35 = scmp.ne.s32.totalorder %s24, %s27
      %p36 = scmp.eq.s32.totalorder %s19, 1
      %p37 = por %p35, %p36
      %p38 = scmp.ne.s32.totalorder %s27, %s28
      %p39 = scmp.eq.s32.totalorder %s19, 0
      %p40 = por %p38, %p39
      %p41 = scmp.ne.s32.totalorder %s27, %s28
      %p42 = scmp.eq.s32.totalorder %s20, 1
      %p43 = por %p41, %p42
      %p45 = scmp.ne.s32.totalorder %s28, %s44
      %p46 = scmp.eq.s32.totalorder %s20, 0
      %p47 = por %p45, %p46
      %s49 = sadd.s32 %s48, 1
      %p52 = scmp.eq.s32.totalorder %s14, 1
      %p53 = scmp.ne.s32.totalorder %s48, %s50
      %p54 = scmp.eq.s32.totalorder %s14, 0
      %p55 = por %p53, %p54
      %p56 = scmp.ne.s32.totalorder %s48, %s50
      %p57 = scmp.eq.s32.totalorder %s19, 1
      %p58 = por %p56, %p57
      %p59 = scmp.ne.s32.totalorder %s50, %s51
      %p60 = scmp.eq.s32.totalorder %s19, 0
      %p61 = por %p59, %p60
      %p62 = scmp.ne.s32.totalorder %s50, %s51
      %p63 = scmp.eq.s32.totalorder %s20, 1
      %p64 = por %p62, %p63
      %p66 = scmp.ne.s32.totalorder %s51, %s65
      %p67 = scmp.eq.s32.totalorder %s20, 0
      %p68 = por %p66, %p67
      %s70 = sadd.s32 %s69, 1
      %p73 = scmp.eq.s32.totalorder %s14, 1
      %p74 = scmp.ne.s32.totalorder %s69, %s71
      %p75 = scmp.eq.s32.totalorder %s14, 0
      %p76 = por %p74, %p75
      %p77 = scmp.ne.s32.totalorder %s69, %s71
      %p78 = scmp.eq.s32.totalorder %s19, 1
      %p79 = por %p77, %p78
      %p80 = scmp.ne.s32.totalorder %s71, %s72
      %p81 = scmp.eq.s32.totalorder %s19, 0
      %p82 = por %p80, %p81
      %p83 = scmp.ne.s32.totalorder %s71, %s72
      %p84 = scmp.eq.s32.totalorder %s20, 1
      %p85 = por %p83, %p84
      %p87 = scmp.ne.s32.totalorder %s72, %s86
      %p88 = scmp.eq.s32.totalorder %s20, 0
      %p89 = por %p87, %p88
      %s91 = sadd.s32 %s90, 1
      %p94 = scmp.eq.s32.totalorder %s14, 1
      %p95 = scmp.ne.s32.totalorder %s90, %s92
      %p96 = scmp.eq.s32.totalorder %s14, 0
      %p97 = por %p95, %p96
      %p98 = scmp.ne.s32.totalorder %s90, %s92
      %p99 = scmp.eq.s32.totalorder %s19, 1
      %p100 = por %p98, %p99
      %p101 = scmp.ne.s32.totalorder %s92, %s93
      %p102 = scmp.eq.s32.totalorder %s19, 0
      %p103 = por %p101, %p102
      %p104 = scmp.ne.s32.totalorder %s92, %s93
      %p105 = scmp.eq.s32.totalorder %s20, 1
      %p106 = por %p104, %p105
      %p108 = scmp.ne.s32.totalorder %s93, %s107
      %p109 = scmp.eq.s32.totalorder %s20, 0
      %p110 = por %p108, %p109
      %s112 = sadd.s32 %s111, 1
      %p115 = scmp.eq.s32.totalorder %s14, 1
      %p116 = scmp.ne.s32.totalorder %s111, %s113
      %p117 = scmp.eq.s32.totalorder %s14, 0
      %p118 = por %p116, %p117
      %p119 = scmp.ne.s32.totalorder %s111, %s113
      %p120 = scmp.eq.s32.totalorder %s19, 1
      %p121 = por %p119, %p120
      %p122 = scmp.ne.s32.totalorder %s113, %s114
      %p123 = scmp.eq.s32.totalorder %s19, 0
      %p124 = por %p122, %p123
      %p125 = scmp.ne.s32.totalorder %s113, %s114
      %p126 = scmp.eq.s32.totalorder %s20, 1
      %p127 = por %p125, %p126
      %p129 = scmp.ne.s32.totalorder %s114, %s128
      %p130 = scmp.eq.s32.totalorder %s20, 0
      %p131 = por %p129, %p130
      %s132 = ssub.s32 %s14, %s21
      %p133 = scmp.eq.s32.totalorder %s132, 0
      %s135 = sadd.s32 %s134, 1
      %s136 = scalar_select %p133, %s134, %s135
      %p139 = pneg %p133
      %p140 = scmp.eq.s32.totalorder %s14, 1
      %p141 = por %p139, %p140
      %p142 = scmp.ne.s32.totalorder %s134, %s137
      %p143 = scmp.eq.s32.totalorder %s14, 0
      %p144 = por %p142, %p143
      %p145 = scmp.ne.s32.totalorder %s134, %s137
      %p146 = scmp.eq.s32.totalorder %s19, 1
      %p147 = por %p145, %p146
      %p148 = scmp.ne.s32.totalorder %s137, %s138
      %p149 = scmp.eq.s32.totalorder %s19, 0
      %p150 = por %p148, %p149
      %p151 = scmp.ne.s32.totalorder %s137, %s138
      %p152 = scmp.eq.s32.totalorder %s20, 1
      %p153 = por %p151, %p152
      %p155 = scmp.ne.s32.totalorder %s138, %s154
      %p156 = scmp.eq.s32.totalorder %s20, 0
      %p157 = por %p155, %p156
      %p158 = scmp.le.s32.totalorder 1, %s14
      %p159 = scmp.lt.s32.totalorder %s14, 3
      %p160 = pnand %p158, %p159
      %p161 = pneg %p160
      // Predicated region
      $region9: #{_forward.2} parent=5 // pred_check
        _
      $region10: #{_forward.2} parent=5 // pred_check_branch
        %163 = sbr.rel (%p160) target = $region12
      $region11: #{_forward.2} parent=5 // pred_region
        %s164 = ssub.s32 %s14, 1
        // Predicated region
        $region13: #{_forward.2} parent=11 // pred_check
          %p165 = pneg %p61
        $region14: #{_forward.2} parent=11 // pred_check_branch
          %167 = sbr.rel (%p165) target = $region16
        $region15: #{_forward.2} parent=11 // pred_region
          %s169 = ssub.s32 128, 128
          %170 = vsyncadd [#allocation3], %s169
          %s172 = sshll.u32 [#allocation2], 4
          %s173 = int_to_ptr.vmem [resolvable:$true] %s172
          %175 = dma.hbm_to_vmem [thread:$0]  %s1, 128, %s173, [#allocation3]
        $region16: #{_forward.2} parent=11 // pred_fallthru
          _
        // Predicated region
        $region17: #{_forward.2} parent=11 // pred_check
          %p176 = pneg %p82
        $region18: #{_forward.2} parent=11 // pred_check_branch
          %178 = sbr.rel (%p176) target = $region20
        $region19: #{_forward.2} parent=11 // pred_region
          %s180 = ssub.s32 16, 16
          %181 = vsyncadd [#allocation5], %s180
          %s183 = sshll.u32 [#allocation4], 4
          %s184 = int_to_ptr.vmem [resolvable:$true] %s183
          %186 = dma.hbm_to_vmem [thread:$0]  %s2, 16, %s184, [#allocation5]
        $region20: #{_forward.2} parent=11 // pred_fallthru
          _
        // Predicated region
        $region21: #{_forward.2} parent=11 // pred_check
          %p187 = pneg %p103
        $region22: #{_forward.2} parent=11 // pred_check_branch
          %189 = sbr.rel (%p187) target = $region24
        $region23: #{_forward.2} parent=11 // pred_region
          %s191 = ssub.s32 2048, 2048
          %192 = vsyncadd [#allocation5], %s191
          %s193 = sshll.u32 [#allocation6], 4
          %s194 = int_to_ptr.vmem [resolvable:$true] %s193
          %199 = dma.hbm_to_vmem [thread:$0]  %s3, 2048, %s194, [#allocation5], 128, 128, 8
        $region24: #{_forward.2} parent=11 // pred_fallthru
          _
        // Predicated region
        $region25: #{_forward.2} parent=11 // pred_check
          %p200 = pneg %p124
        $region26: #{_forward.2} parent=11 // pred_check_branch
          %202 = sbr.rel (%p200) target = $region28
        $region27: #{_forward.2} parent=11 // pred_region
          %s204 = ssub.s32 16, 16
          %205 = vsyncadd [#allocation8], %s204
          %s207 = sshll.u32 [#allocation7], 4
          %s208 = int_to_ptr.vmem [resolvable:$true] %s207
          %210 = dma.hbm_to_vmem [thread:$0]  %s4, 16, %s208, [#allocation8]
        $region28: #{_forward.2} parent=11 // pred_fallthru
          _
      $region12: #{_forward.2} parent=5 // pred_fallthru
        _
      %p211 = scmp.lt.s32.totalorder %s14, 2
      // Predicated region
      $region29: #{_forward.2} parent=5 // pred_check
        %p212 = pneg %p211
      $region30: #{_forward.2} parent=5 // pred_check_branch
        %214 = sbr.rel (%p212) target = $region32
      $region31: #{_forward.2} parent=5 // pred_region
        // Predicated region
        $region33: #{_forward.2} parent=31 // pred_check
          %p215 = pneg %p34
        $region34: #{_forward.2} parent=31 // pred_check_branch
          %217 = sbr.rel (%p215) target = $region36
        $region35: #{_forward.2} parent=31 // pred_region
          %s218 = smul.u32 64, %s14
          %p219 = scmp.lt.s32.totalorder %s218, 127
          %s220 = scalar_select %p219, %s218, 127
          %s221 = smul.addr %s220, 8
          %s222 = scalar_lea.vmem %s0, %s221
          %s223 = smul.u32 64, %s14
        $region36: #{_forward.2} parent=31 // pred_fallthru
          _
      $region32: #{_forward.2} parent=5 // pred_fallthru
        _
      %p224 = scmp.le.s32.totalorder 1, %s14
      %p225 = scmp.lt.s32.totalorder %s14, 3
      %p226 = pnand %p224, %p225
      %p227 = pneg %p226
      // Predicated region
      $region37: #{_forward.2} parent=5 // pred_check
        _
      $region38: #{_forward.2} parent=5 // pred_check_branch
        %229 = sbr.rel (%p226) target = $region40
      $region39: #{_forward.2} parent=5 // pred_region
        %s230 = ssub.s32 %s14, 1
        // Predicated region
        $region41: #{_forward.2} parent=39 // pred_check
          %p231 = pneg %p61
        $region42: #{_forward.2} parent=39 // pred_check_branch
          %233 = sbr.rel (%p231) target = $region44
        $region43: #{_forward.2} parent=39 // pred_region
          %234 = dma.done [#allocation3], 128
        $region44: #{_forward.2} parent=39 // pred_fallthru
          _
        // Predicated region
        $region45: #{_forward.2} parent=39 // pred_check
          %p235 = pneg %p82
        $region46: #{_forward.2} parent=39 // pred_check_branch
          %237 = sbr.rel (%p235) target = $region48
        $region47: #{_forward.2} parent=39 // pred_region
          %238 = dma.done [#allocation5], 16
        $region48: #{_forward.2} parent=39 // pred_fallthru
          _
        // Predicated region
        $region49: #{_forward.2} parent=39 // pred_check
          %p239 = pneg %p103
        $region50: #{_forward.2} parent=39 // pred_check_branch
          %241 = sbr.rel (%p239) target = $region52
        $region51: #{_forward.2} parent=39 // pred_region
          %242 = dma.done [#allocation5], 2048
        $region52: #{_forward.2} parent=39 // pred_fallthru
          _
        // Predicated region
        $region53: #{_forward.2} parent=39 // pred_check
          %p243 = pneg %p124
        $region54: #{_forward.2} parent=39 // pred_check_branch
          %245 = sbr.rel (%p243) target = $region56
        $region55: #{_forward.2} parent=39 // pred_region
          %246 = dma.done [#allocation8], 16
        $region56: #{_forward.2} parent=39 // pred_fallthru
          _
        %s247 = smul.u32 64, %s19
        %p248 = scmp.lt.s32.totalorder %s247, 127
        %s249 = scalar_select %p248, %s247, 127
        %s250 = smul.addr %s249, 8
        %s251 = scalar_lea.vmem %s0, %s250
        %p252 = pneg %p40
        %p253 = pneg %p37
        %p254 = pneg %p61
        %p255 = pneg %p58
        %p256 = pneg %p82
        %p257 = pneg %p79
        %p258 = pneg %p103
        %p259 = pneg %p100
        %p260 = pneg %p124
        %p261 = pneg %p121
        %p262 = pneg %p150
        %p263 = pneg %p147
        %s264 = smul.u32 64, %s19
        %p265 = scmp.lt.s32.totalorder %s264, 127
        %s266 = scalar_select %p265, %s264, 127
        %s267 = smul.addr %s266, 8
        %s268 = scalar_lea.vmem %s5, %s267
        %s269 = smul.u32 64, %s19
        %p270 = scmp.lt.s32.totalorder %s269, 127
        %s271 = scalar_select %p270, %s269, 127
        %s272 = smul.addr %s271, 8
        %s273 = scalar_lea.vmem %s0, %s272
        %s274 = smul.u32 64, %s19
        %s275 = smul.u32 64, %s19
        %p276 = scmp.lt.s32.totalorder %s275, 127
        %s277 = scalar_select %p276, %s275, 127
        %s278 = smul.addr %s277, 8
        %s279 = scalar_lea.vmem %s5, %s278
        %s280 = smul.u32 64, %s19
        %v281 = vld [vmem:[%s273] sm:$0xff]
        %v282 = vld [vmem:[%s273 + $0x8] sm:$0xff]
        %v283 = vld [vmem:[%s273 + $0x10] sm:$0xff]
        %v284 = vld [vmem:[%s273 + $0x18] sm:$0xff]
        %v285 = vld [vmem:[%s273 + $0x20] sm:$0xff]
        %v286 = vld [vmem:[%s273 + $0x28] sm:$0xff]
        %v287 = vld [vmem:[%s273 + $0x30] sm:$0xff]
        %v288 = vld [vmem:[%s273 + $0x38] sm:$0xff]
        %v289 = vld [vmem:[%s273 + $0x40] sm:$0xff]
        %v290 = vld [vmem:[%s273 + $0x48] sm:$0xff]
        %v291 = vld [vmem:[%s273 + $0x50] sm:$0xff]
        %v292 = vld [vmem:[%s273 + $0x58] sm:$0xff]
        %v293 = vld [vmem:[%s273 + $0x60] sm:$0xff]
        %v294 = vld [vmem:[%s273 + $0x68] sm:$0xff]
        %v295 = vld [vmem:[%s273 + $0x70] sm:$0xff]
        %v296 = vld [vmem:[%s273 + $0x78] sm:$0xff]
        %v297 = vld [vmem:[%s273 + $0x80] sm:$0xff]
        %v298 = vld [vmem:[%s273 + $0x88] sm:$0xff]
        %v299 = vld [vmem:[%s273 + $0x90] sm:$0xff]
        %v300 = vld [vmem:[%s273 + $0x98] sm:$0xff]
        %v301 = vld [vmem:[%s273 + $0xa0] sm:$0xff]
        %v302 = vld [vmem:[%s273 + $0xa8] sm:$0xff]
        %v303 = vld [vmem:[%s273 + $0xb0] sm:$0xff]
        %v304 = vld [vmem:[%s273 + $0xb8] sm:$0xff]
        %v305 = vld [vmem:[%s273 + $0xc0] sm:$0xff]
        %v306 = vld [vmem:[%s273 + $0xc8] sm:$0xff]
        %v307 = vld [vmem:[%s273 + $0xd0] sm:$0xff]
        %v308 = vld [vmem:[%s273 + $0xd8] sm:$0xff]
        %v309 = vld [vmem:[%s273 + $0xe0] sm:$0xff]
        %v310 = vld [vmem:[%s273 + $0xe8] sm:$0xff]
        %v311 = vld [vmem:[%s273 + $0xf0] sm:$0xff]
        %v312 = vld [vmem:[%s273 + $0xf8] sm:$0xff]
        %v313 = vld [vmem:[%s273 + $0x100] sm:$0xff]
        %v314 = vld [vmem:[%s273 + $0x108] sm:$0xff]
        %v315 = vld [vmem:[%s273 + $0x110] sm:$0xff]
        %v316 = vld [vmem:[%s273 + $0x118] sm:$0xff]
        %v317 = vld [vmem:[%s273 + $0x120] sm:$0xff]
        %v318 = vld [vmem:[%s273 + $0x128] sm:$0xff]
        %v319 = vld [vmem:[%s273 + $0x130] sm:$0xff]
        %v320 = vld [vmem:[%s273 + $0x138] sm:$0xff]
        %v321 = vld [vmem:[%s273 + $0x140] sm:$0xff]
        %v322 = vld [vmem:[%s273 + $0x148] sm:$0xff]
        %v323 = vld [vmem:[%s273 + $0x150] sm:$0xff]
        %v324 = vld [vmem:[%s273 + $0x158] sm:$0xff]
        %v325 = vld [vmem:[%s273 + $0x160] sm:$0xff]
        %v326 = vld [vmem:[%s273 + $0x168] sm:$0xff]
        %v327 = vld [vmem:[%s273 + $0x170] sm:$0xff]
        %v328 = vld [vmem:[%s273 + $0x178] sm:$0xff]
        %v329 = vld [vmem:[%s273 + $0x180] sm:$0xff]
        %v330 = vld [vmem:[%s273 + $0x188] sm:$0xff]
        %v331 = vld [vmem:[%s273 + $0x190] sm:$0xff]
        %v332 = vld [vmem:[%s273 + $0x198] sm:$0xff]
        %v333 = vld [vmem:[%s273 + $0x1a0] sm:$0xff]
        %v334 = vld [vmem:[%s273 + $0x1a8] sm:$0xff]
        %v335 = vld [vmem:[%s273 + $0x1b0] sm:$0xff]
        %v336 = vld [vmem:[%s273 + $0x1b8] sm:$0xff]
        %v337 = vld [vmem:[%s273 + $0x1c0] sm:$0xff]
        %v338 = vld [vmem:[%s273 + $0x1c8] sm:$0xff]
        %v339 = vld [vmem:[%s273 + $0x1d0] sm:$0xff]
        %v340 = vld [vmem:[%s273 + $0x1d8] sm:$0xff]
        %v341 = vld [vmem:[%s273 + $0x1e0] sm:$0xff]
        %v342 = vld [vmem:[%s273 + $0x1e8] sm:$0xff]
        %v343 = vld [vmem:[%s273 + $0x1f0] sm:$0xff]
        %v344 = vld [vmem:[%s273 + $0x1f8] sm:$0xff]
        %v345 = vld [vmem:[#allocation2] sm:$0x3f]
        %vm346 = vcmask 48128
        %v348 = vsel %vm346, %v281, 0
        %v351 = vsel %vm346, %v282, 0
        %v354 = vsel %vm346, %v283, 0
        %v357 = vsel %vm346, %v284, 0
        %v360 = vsel %vm346, %v285, 0
        %v363 = vsel %vm346, %v286, 0
        %v366 = vsel %vm346, %v287, 0
        %v369 = vsel %vm346, %v288, 0
        %v372 = vsel %vm346, %v289, 0
        %v375 = vsel %vm346, %v290, 0
        %v378 = vsel %vm346, %v291, 0
        %v381 = vsel %vm346, %v292, 0
        %v384 = vsel %vm346, %v293, 0
        %v387 = vsel %vm346, %v294, 0
        %v390 = vsel %vm346, %v295, 0
        %v393 = vsel %vm346, %v296, 0
        %v396 = vsel %vm346, %v297, 0
        %v399 = vsel %vm346, %v298, 0
        %v402 = vsel %vm346, %v299, 0
        %v405 = vsel %vm346, %v300, 0
        %v408 = vsel %vm346, %v301, 0
        %v411 = vsel %vm346, %v302, 0
        %v414 = vsel %vm346, %v303, 0
        %v417 = vsel %vm346, %v304, 0
        %v420 = vsel %vm346, %v305, 0
        %v423 = vsel %vm346, %v306, 0
        %v426 = vsel %vm346, %v307, 0
        %v429 = vsel %vm346, %v308, 0
        %v432 = vsel %vm346, %v309, 0
        %v435 = vsel %vm346, %v310, 0
        %v438 = vsel %vm346, %v311, 0
        %v441 = vsel %vm346, %v312, 0
        %v444 = vsel %vm346, %v313, 0
        %v447 = vsel %vm346, %v314, 0
        %v450 = vsel %vm346, %v315, 0
        %v453 = vsel %vm346, %v316, 0
        %v456 = vsel %vm346, %v317, 0
        %v459 = vsel %vm346, %v318, 0
        %v462 = vsel %vm346, %v319, 0
        %v465 = vsel %vm346, %v320, 0
        %v468 = vsel %vm346, %v321, 0
        %v471 = vsel %vm346, %v322, 0
        %v474 = vsel %vm346, %v323, 0
        %v477 = vsel %vm346, %v324, 0
        %v480 = vsel %vm346, %v325, 0
        %v483 = vsel %vm346, %v326, 0
        %v486 = vsel %vm346, %v327, 0
        %v489 = vsel %vm346, %v328, 0
        %v492 = vsel %vm346, %v329, 0
        %v495 = vsel %vm346, %v330, 0
        %v498 = vsel %vm346, %v331, 0
        %v501 = vsel %vm346, %v332, 0
        %v504 = vsel %vm346, %v333, 0
        %v507 = vsel %vm346, %v334, 0
        %v510 = vsel %vm346, %v335, 0
        %v513 = vsel %vm346, %v336, 0
        %v516 = vsel %vm346, %v337, 0
        %v519 = vsel %vm346, %v338, 0
        %v522 = vsel %vm346, %v339, 0
        %v525 = vsel %vm346, %v340, 0
        %v528 = vsel %vm346, %v341, 0
        %v531 = vsel %vm346, %v342, 0
        %v534 = vsel %vm346, %v343, 0
        %v537 = vsel %vm346, %v344, 0
        %vm539 = vcmask 1045504
        %v541 = vsel %vm539, %v345, 0
        %543 = vmatprep.subr.mxu0 0.0
        %544 = vmatpush1.msra.mxu0 0.0
        %545 = vmatprep.subr.mxu0 0.0
        %546 = vmatpush1.msra.mxu0 0.0
        %547 = vmatprep.subr.mxu0 0.0
        %548 = vmatpush1.msra.mxu0 0.0
        %549 = vmatprep.subr.mxu0 0.0
        %550 = vmatpush1.msra.mxu0 0.0
        %551 = vmatprep.subr.mxu0 0.0
        %552 = vmatpush1.msra.mxu0 0.0
        %553 = vmatprep.subr.mxu0 0.0
        %554 = vmatpush1.msra.mxu0 0.0
        %555 = vmatprep.subr.mxu0 0.0
        %556 = vmatpush1.msra.mxu0 0.0
        %557 = vmatprep.subr.mxu0 0.0
        %558 = vmatpush1.msra.mxu0 0.0
        %559 = vmatprep.subr.mxu0 0.0
        %560 = vmatpush1.msra.mxu0 0.0
        %561 = vmatprep.subr.mxu0 0.0
        %562 = vmatpush1.msra.mxu0 0.0
        %563 = vmatprep.subr.mxu0 0.0
        %564 = vmatpush1.msra.mxu0 0.0
        %565 = vmatprep.subr.mxu0 0.0
        %566 = vmatpush1.msra.mxu0 0.0
        %567 = vmatprep.subr.mxu0 0.0
        %568 = vmatpush1.msra.mxu0 0.0
        %569 = vmatprep.subr.mxu0 0.0
        %570 = vmatpush1.msra.mxu0 0.0
        %571 = vmatprep.subr.mxu0 0.0
        %572 = vmatpush1.msra.mxu0 0.0
        %573 = vmatprep.subr.mxu0 0.0
        %574 = vmatpush1.msra.mxu0 %v541
        %575 = vmatprep.subr.mxu0 0.0
        %576 = vmatpush2.msra.mxu0 0.0
        %577 = vmatprep.subr.mxu0 0.0
        %578 = vmatpush2.msra.mxu0 0.0
        %579 = vmatprep.subr.mxu0 0.0
        %580 = vmatpush2.msra.mxu0 0.0
        %581 = vmatprep.subr.mxu0 0.0
        %582 = vmatpush2.msra.mxu0 0.0
        %583 = vmatprep.subr.mxu0 0.0
        %584 = vmatpush2.msra.mxu0 0.0
        %585 = vmatprep.subr.mxu0 0.0
        %586 = vmatpush2.msra.mxu0 0.0
        %587 = vmatprep.subr.mxu0 0.0
        %588 = vmatpush2.msra.mxu0 0.0
        %589 = vmatprep.subr.mxu0 0.0
        %590 = vmatpush2.msra.mxu0 0.0
        %591 = vmatprep.subr.mxu0 0.0
        %592 = vmatpush2.msra.mxu0 0.0
        %593 = vmatprep.subr.mxu0 0.0
        %594 = vmatpush2.msra.mxu0 0.0
        %595 = vmatprep.subr.mxu0 0.0
        %596 = vmatpush2.msra.mxu0 0.0
        %597 = vmatprep.subr.mxu0 0.0
        %598 = vmatpush2.msra.mxu0 0.0
        %599 = vmatprep.subr.mxu0 0.0
        %600 = vmatpush2.msra.mxu0 0.0
        %601 = vmatprep.subr.mxu0 0.0
        %602 = vmatpush2.msra.mxu0 0.0
        %603 = vmatprep.subr.mxu0 0.0
        %604 = vmatpush2.msra.mxu0 0.0
        %605 = vmatprep.subr.mxu0 0.0
        %606 = vmatpush2.msra.mxu0 0.0
        %607 = vmatprep.mubr.f32.mxu0 0.0
        %608 = vmatmul.mubr.f32.gmra.mxu0 %v348
        %v609 = vpop.f32.mrf.mxu0
        %v610 = vadd.f32 0.0, %v609
        %v611 = vpop.f32.mrf.mxu0
        %612 = vmatprep.mubr.f32.mxu0 0.0
        %613 = vmatmul.mubr.f32.gmra.mxu0 %v351
        %v614 = vpop.f32.mrf.mxu0
        %v615 = vadd.f32 0.0, %v614
        %v616 = vpop.f32.mrf.mxu0
        %617 = vmatprep.mubr.f32.mxu0 0.0
        %618 = vmatmul.mubr.f32.gmra.mxu0 %v354
        %v619 = vpop.f32.mrf.mxu0
        %v620 = vadd.f32 0.0, %v619
        %v621 = vpop.f32.mrf.mxu0
        %622 = vmatprep.mubr.f32.mxu0 0.0
        %623 = vmatmul.mubr.f32.gmra.mxu0 %v357
        %v624 = vpop.f32.mrf.mxu0
        %v625 = vadd.f32 0.0, %v624
        %v626 = vpop.f32.mrf.mxu0
        %627 = vmatprep.mubr.f32.mxu0 0.0
        %628 = vmatmul.mubr.f32.gmra.mxu0 %v360
        %v629 = vpop.f32.mrf.mxu0
        %v630 = vadd.f32 0.0, %v629
        %v631 = vpop.f32.mrf.mxu0
        %632 = vmatprep.mubr.f32.mxu0 0.0
        %633 = vmatmul.mubr.f32.gmra.mxu0 %v363
        %v634 = vpop.f32.mrf.mxu0
        %v635 = vadd.f32 0.0, %v634
        %v636 = vpop.f32.mrf.mxu0
        %637 = vmatprep.mubr.f32.mxu0 0.0
        %638 = vmatmul.mubr.f32.gmra.mxu0 %v366
        %v639 = vpop.f32.mrf.mxu0
        %v640 = vadd.f32 0.0, %v639
        %v641 = vpop.f32.mrf.mxu0
        %642 = vmatprep.mubr.f32.mxu0 0.0
        %643 = vmatmul.mubr.f32.gmra.mxu0 %v369
        %v644 = vpop.f32.mrf.mxu0
        %v645 = vadd.f32 0.0, %v644
        %v646 = vpop.f32.mrf.mxu0
        %647 = vmatprep.mubr.f32.mxu0 0.0
        %648 = vmatmul.mubr.f32.gmra.mxu0 %v372
        %v649 = vpop.f32.mrf.mxu0
        %v650 = vadd.f32 0.0, %v649
        %v651 = vpop.f32.mrf.mxu0
        %652 = vmatprep.mubr.f32.mxu0 0.0
        %653 = vmatmul.mubr.f32.gmra.mxu0 %v375
        %v654 = vpop.f32.mrf.mxu0
        %v655 = vadd.f32 0.0, %v654
        %v656 = vpop.f32.mrf.mxu0
        %657 = vmatprep.mubr.f32.mxu0 0.0
        %658 = vmatmul.mubr.f32.gmra.mxu0 %v378
        %v659 = vpop.f32.mrf.mxu0
        %v660 = vadd.f32 0.0, %v659
        %v661 = vpop.f32.mrf.mxu0
        %662 = vmatprep.mubr.f32.mxu0 0.0
        %663 = vmatmul.mubr.f32.gmra.mxu0 %v381
        %v664 = vpop.f32.mrf.mxu0
        %v665 = vadd.f32 0.0, %v664
        %v666 = vpop.f32.mrf.mxu0
        %667 = vmatprep.mubr.f32.mxu0 0.0
        %668 = vmatmul.mubr.f32.gmra.mxu0 %v384
        %v669 = vpop.f32.mrf.mxu0
        %v670 = vadd.f32 0.0, %v669
        %v671 = vpop.f32.mrf.mxu0
        %672 = vmatprep.mubr.f32.mxu0 0.0
        %673 = vmatmul.mubr.f32.gmra.mxu0 %v387
        %v674 = vpop.f32.mrf.mxu0
        %v675 = vadd.f32 0.0, %v674
        %v676 = vpop.f32.mrf.mxu0
        %677 = vmatprep.mubr.f32.mxu0 0.0
        %678 = vmatmul.mubr.f32.gmra.mxu0 %v390
        %v679 = vpop.f32.mrf.mxu0
        %v680 = vadd.f32 0.0, %v679
        %v681 = vpop.f32.mrf.mxu0
        %682 = vmatprep.mubr.f32.mxu0 0.0
        %683 = vmatmul.mubr.f32.gmra.mxu0 %v393
        %v684 = vpop.f32.mrf.mxu0
        %v685 = vadd.f32 0.0, %v684
        %v686 = vpop.f32.mrf.mxu0
        %687 = vmatprep.mubr.f32.mxu0 0.0
        %688 = vmatmul.mubr.f32.gmra.mxu0 %v396
        %v689 = vpop.f32.mrf.mxu0
        %v690 = vadd.f32 0.0, %v689
        %v691 = vpop.f32.mrf.mxu0
        %692 = vmatprep.mubr.f32.mxu0 0.0
        %693 = vmatmul.mubr.f32.gmra.mxu0 %v399
        %v694 = vpop.f32.mrf.mxu0
        %v695 = vadd.f32 0.0, %v694
        %v696 = vpop.f32.mrf.mxu0
        %697 = vmatprep.mubr.f32.mxu0 0.0
        %698 = vmatmul.mubr.f32.gmra.mxu0 %v402
        %v699 = vpop.f32.mrf.mxu0
        %v700 = vadd.f32 0.0, %v699
        %v701 = vpop.f32.mrf.mxu0
        %702 = vmatprep.mubr.f32.mxu0 0.0
        %703 = vmatmul.mubr.f32.gmra.mxu0 %v405
        %v704 = vpop.f32.mrf.mxu0
        %v705 = vadd.f32 0.0, %v704
        %v706 = vpop.f32.mrf.mxu0
        %707 = vmatprep.mubr.f32.mxu0 0.0
        %708 = vmatmul.mubr.f32.gmra.mxu0 %v408
        %v709 = vpop.f32.mrf.mxu0
        %v710 = vadd.f32 0.0, %v709
        %v711 = vpop.f32.mrf.mxu0
        %712 = vmatprep.mubr.f32.mxu0 0.0
        %713 = vmatmul.mubr.f32.gmra.mxu0 %v411
        %v714 = vpop.f32.mrf.mxu0
        %v715 = vadd.f32 0.0, %v714
        %v716 = vpop.f32.mrf.mxu0
        %717 = vmatprep.mubr.f32.mxu0 0.0
        %718 = vmatmul.mubr.f32.gmra.mxu0 %v414
        %v719 = vpop.f32.mrf.mxu0
        %v720 = vadd.f32 0.0, %v719
        %v721 = vpop.f32.mrf.mxu0
        %722 = vmatprep.mubr.f32.mxu0 0.0
        %723 = vmatmul.mubr.f32.gmra.mxu0 %v417
        %v724 = vpop.f32.mrf.mxu0
        %v725 = vadd.f32 0.0, %v724
        %v726 = vpop.f32.mrf.mxu0
        %727 = vmatprep.mubr.f32.mxu0 0.0
        %728 = vmatmul.mubr.f32.gmra.mxu0 %v420
        %v729 = vpop.f32.mrf.mxu0
        %v730 = vadd.f32 0.0, %v729
        %v731 = vpop.f32.mrf.mxu0
        %732 = vmatprep.mubr.f32.mxu0 0.0
        %733 = vmatmul.mubr.f32.gmra.mxu0 %v423
        %v734 = vpop.f32.mrf.mxu0
        %v735 = vadd.f32 0.0, %v734
        %v736 = vpop.f32.mrf.mxu0
        %737 = vmatprep.mubr.f32.mxu0 0.0
        %738 = vmatmul.mubr.f32.gmra.mxu0 %v426
        %v739 = vpop.f32.mrf.mxu0
        %v740 = vadd.f32 0.0, %v739
        %v741 = vpop.f32.mrf.mxu0
        %742 = vmatprep.mubr.f32.mxu0 0.0
        %743 = vmatmul.mubr.f32.gmra.mxu0 %v429
        %v744 = vpop.f32.mrf.mxu0
        %v745 = vadd.f32 0.0, %v744
        %v746 = vpop.f32.mrf.mxu0
        %747 = vmatprep.mubr.f32.mxu0 0.0
        %748 = vmatmul.mubr.f32.gmra.mxu0 %v432
        %v749 = vpop.f32.mrf.mxu0
        %v750 = vadd.f32 0.0, %v749
        %v751 = vpop.f32.mrf.mxu0
        %752 = vmatprep.mubr.f32.mxu0 0.0
        %753 = vmatmul.mubr.f32.gmra.mxu0 %v435
        %v754 = vpop.f32.mrf.mxu0
        %v755 = vadd.f32 0.0, %v754
        %v756 = vpop.f32.mrf.mxu0
        %757 = vmatprep.mubr.f32.mxu0 0.0
        %758 = vmatmul.mubr.f32.gmra.mxu0 %v438
        %v759 = vpop.f32.mrf.mxu0
        %v760 = vadd.f32 0.0, %v759
        %v761 = vpop.f32.mrf.mxu0
        %762 = vmatprep.mubr.f32.mxu0 0.0
        %763 = vmatmul.mubr.f32.gmra.mxu0 %v441
        %v764 = vpop.f32.mrf.mxu0
        %v765 = vadd.f32 0.0, %v764
        %v766 = vpop.f32.mrf.mxu0
        %767 = vmatprep.mubr.f32.mxu0 0.0
        %768 = vmatmul.mubr.f32.gmra.mxu0 %v444
        %v769 = vpop.f32.mrf.mxu0
        %v770 = vadd.f32 0.0, %v769
        %v771 = vpop.f32.mrf.mxu0
        %772 = vmatprep.mubr.f32.mxu0 0.0
        %773 = vmatmul.mubr.f32.gmra.mxu0 %v447
        %v774 = vpop.f32.mrf.mxu0
        %v775 = vadd.f32 0.0, %v774
        %v776 = vpop.f32.mrf.mxu0
        %777 = vmatprep.mubr.f32.mxu0 0.0
        %778 = vmatmul.mubr.f32.gmra.mxu0 %v450
        %v779 = vpop.f32.mrf.mxu0
        %v780 = vadd.f32 0.0, %v779
        %v781 = vpop.f32.mrf.mxu0
        %782 = vmatprep.mubr.f32.mxu0 0.0
        %783 = vmatmul.mubr.f32.gmra.mxu0 %v453
        %v784 = vpop.f32.mrf.mxu0
        %v785 = vadd.f32 0.0, %v784
        %v786 = vpop.f32.mrf.mxu0
        %787 = vmatprep.mubr.f32.mxu0 0.0
        %788 = vmatmul.mubr.f32.gmra.mxu0 %v456
        %v789 = vpop.f32.mrf.mxu0
        %v790 = vadd.f32 0.0, %v789
        %v791 = vpop.f32.mrf.mxu0
        %792 = vmatprep.mubr.f32.mxu0 0.0
        %793 = vmatmul.mubr.f32.gmra.mxu0 %v459
        %v794 = vpop.f32.mrf.mxu0
        %v795 = vadd.f32 0.0, %v794
        %v796 = vpop.f32.mrf.mxu0
        %797 = vmatprep.mubr.f32.mxu0 0.0
        %798 = vmatmul.mubr.f32.gmra.mxu0 %v462
        %v799 = vpop.f32.mrf.mxu0
        %v800 = vadd.f32 0.0, %v799
        %v801 = vpop.f32.mrf.mxu0
        %802 = vmatprep.mubr.f32.mxu0 0.0
        %803 = vmatmul.mubr.f32.gmra.mxu0 %v465
        %v804 = vpop.f32.mrf.mxu0
        %v805 = vadd.f32 0.0, %v804
        %v806 = vpop.f32.mrf.mxu0
        %807 = vmatprep.mubr.f32.mxu0 0.0
        %808 = vmatmul.mubr.f32.gmra.mxu0 %v468
        %v809 = vpop.f32.mrf.mxu0
        %v810 = vadd.f32 0.0, %v809
        %v811 = vpop.f32.mrf.mxu0
        %812 = vmatprep.mubr.f32.mxu0 0.0
        %813 = vmatmul.mubr.f32.gmra.mxu0 %v471
        %v814 = vpop.f32.mrf.mxu0
        %v815 = vadd.f32 0.0, %v814
        %v816 = vpop.f32.mrf.mxu0
        %817 = vmatprep.mubr.f32.mxu0 0.0
        %818 = vmatmul.mubr.f32.gmra.mxu0 %v474
        %v819 = vpop.f32.mrf.mxu0
        %v820 = vadd.f32 0.0, %v819
        %v821 = vpop.f32.mrf.mxu0
        %822 = vmatprep.mubr.f32.mxu0 0.0
        %823 = vmatmul.mubr.f32.gmra.mxu0 %v477
        %v824 = vpop.f32.mrf.mxu0
        %v825 = vadd.f32 0.0, %v824
        %v826 = vpop.f32.mrf.mxu0
        %827 = vmatprep.mubr.f32.mxu0 0.0
        %828 = vmatmul.mubr.f32.gmra.mxu0 %v480
        %v829 = vpop.f32.mrf.mxu0
        %v830 = vadd.f32 0.0, %v829
        %v831 = vpop.f32.mrf.mxu0
        %832 = vmatprep.mubr.f32.mxu0 0.0
        %833 = vmatmul.mubr.f32.gmra.mxu0 %v483
        %v834 = vpop.f32.mrf.mxu0
        %v835 = vadd.f32 0.0, %v834
        %v836 = vpop.f32.mrf.mxu0
        %837 = vmatprep.mubr.f32.mxu0 0.0
        %838 = vmatmul.mubr.f32.gmra.mxu0 %v486
        %v839 = vpop.f32.mrf.mxu0
        %v840 = vadd.f32 0.0, %v839
        %v841 = vpop.f32.mrf.mxu0
        %842 = vmatprep.mubr.f32.mxu0 0.0
        %843 = vmatmul.mubr.f32.gmra.mxu0 %v489
        %v844 = vpop.f32.mrf.mxu0
        %v845 = vadd.f32 0.0, %v844
        %v846 = vpop.f32.mrf.mxu0
        %847 = vmatprep.mubr.f32.mxu0 0.0
        %848 = vmatmul.mubr.f32.gmra.mxu0 %v492
        %v849 = vpop.f32.mrf.mxu0
        %v850 = vadd.f32 0.0, %v849
        %v851 = vpop.f32.mrf.mxu0
        %852 = vmatprep.mubr.f32.mxu0 0.0
        %853 = vmatmul.mubr.f32.gmra.mxu0 %v495
        %v854 = vpop.f32.mrf.mxu0
        %v855 = vadd.f32 0.0, %v854
        %v856 = vpop.f32.mrf.mxu0
        %857 = vmatprep.mubr.f32.mxu0 0.0
        %858 = vmatmul.mubr.f32.gmra.mxu0 %v498
        %v859 = vpop.f32.mrf.mxu0
        %v860 = vadd.f32 0.0, %v859
        %v861 = vpop.f32.mrf.mxu0
        %862 = vmatprep.mubr.f32.mxu0 0.0
        %863 = vmatmul.mubr.f32.gmra.mxu0 %v501
        %v864 = vpop.f32.mrf.mxu0
        %v865 = vadd.f32 0.0, %v864
        %v866 = vpop.f32.mrf.mxu0
        %867 = vmatprep.mubr.f32.mxu0 0.0
        %868 = vmatmul.mubr.f32.gmra.mxu0 %v504
        %v869 = vpop.f32.mrf.mxu0
        %v870 = vadd.f32 0.0, %v869
        %v871 = vpop.f32.mrf.mxu0
        %872 = vmatprep.mubr.f32.mxu0 0.0
        %873 = vmatmul.mubr.f32.gmra.mxu0 %v507
        %v874 = vpop.f32.mrf.mxu0
        %v875 = vadd.f32 0.0, %v874
        %v876 = vpop.f32.mrf.mxu0
        %877 = vmatprep.mubr.f32.mxu0 0.0
        %878 = vmatmul.mubr.f32.gmra.mxu0 %v510
        %v879 = vpop.f32.mrf.mxu0
        %v880 = vadd.f32 0.0, %v879
        %v881 = vpop.f32.mrf.mxu0
        %882 = vmatprep.mubr.f32.mxu0 0.0
        %883 = vmatmul.mubr.f32.gmra.mxu0 %v513
        %v884 = vpop.f32.mrf.mxu0
        %v885 = vadd.f32 0.0, %v884
        %v886 = vpop.f32.mrf.mxu0
        %887 = vmatprep.mubr.f32.mxu0 0.0
        %888 = vmatmul.mubr.f32.gmra.mxu0 %v516
        %v889 = vpop.f32.mrf.mxu0
        %v890 = vadd.f32 0.0, %v889
        %v891 = vpop.f32.mrf.mxu0
        %892 = vmatprep.mubr.f32.mxu0 0.0
        %893 = vmatmul.mubr.f32.gmra.mxu0 %v519
        %v894 = vpop.f32.mrf.mxu0
        %v895 = vadd.f32 0.0, %v894
        %v896 = vpop.f32.mrf.mxu0
        %897 = vmatprep.mubr.f32.mxu0 0.0
        %898 = vmatmul.mubr.f32.gmra.mxu0 %v522
        %v899 = vpop.f32.mrf.mxu0
        %v900 = vadd.f32 0.0, %v899
        %v901 = vpop.f32.mrf.mxu0
        %902 = vmatprep.mubr.f32.mxu0 0.0
        %903 = vmatmul.mubr.f32.gmra.mxu0 %v525
        %v904 = vpop.f32.mrf.mxu0
        %v905 = vadd.f32 0.0, %v904
        %v906 = vpop.f32.mrf.mxu0
        %907 = vmatprep.mubr.f32.mxu0 0.0
        %908 = vmatmul.mubr.f32.gmra.mxu0 %v528
        %v909 = vpop.f32.mrf.mxu0
        %v910 = vadd.f32 0.0, %v909
        %v911 = vpop.f32.mrf.mxu0
        %912 = vmatprep.mubr.f32.mxu0 0.0
        %913 = vmatmul.mubr.f32.gmra.mxu0 %v531
        %v914 = vpop.f32.mrf.mxu0
        %v915 = vadd.f32 0.0, %v914
        %v916 = vpop.f32.mrf.mxu0
        %917 = vmatprep.mubr.f32.mxu0 0.0
        %918 = vmatmul.mubr.f32.gmra.mxu0 %v534
        %v919 = vpop.f32.mrf.mxu0
        %v920 = vadd.f32 0.0, %v919
        %v921 = vpop.f32.mrf.mxu0
        %922 = vmatprep.mubr.f32.mxu0 0.0
        %923 = vmatmul.mubr.f32.gmra.mxu0 %v537
        %v924 = vpop.f32.mrf.mxu0
        %v925 = vadd.f32 0.0, %v924
        %v926 = vpop.f32.mrf.mxu0
        %927 = vdwg.mxu0
        %992 = vrot.lane.b32.xlu0 %v610, 96
        %v993 = vpop.permute.xlu0 %992
        %994 = vrot.lane.b32.xlu0 %v615, 96
        %v995 = vpop.permute.xlu0 %994
        %996 = vrot.lane.b32.xlu0 %v620, 96
        %v997 = vpop.permute.xlu0 %996
        %998 = vrot.lane.b32.xlu0 %v625, 96
        %v999 = vpop.permute.xlu0 %998
        %1000 = vrot.lane.b32.xlu0 %v630, 96
        %v1001 = vpop.permute.xlu0 %1000
        %1002 = vrot.lane.b32.xlu0 %v635, 96
        %v1003 = vpop.permute.xlu0 %1002
        %1004 = vrot.lane.b32.xlu0 %v640, 96
        %v1005 = vpop.permute.xlu0 %1004
        %1006 = vrot.lane.b32.xlu0 %v645, 96
        %v1007 = vpop.permute.xlu0 %1006
        %1008 = vrot.lane.b32.xlu0 %v650, 96
        %v1009 = vpop.permute.xlu0 %1008
        %1010 = vrot.lane.b32.xlu0 %v655, 96
        %v1011 = vpop.permute.xlu0 %1010
        %1012 = vrot.lane.b32.xlu0 %v660, 96
        %v1013 = vpop.permute.xlu0 %1012
        %1014 = vrot.lane.b32.xlu0 %v665, 96
        %v1015 = vpop.permute.xlu0 %1014
        %1016 = vrot.lane.b32.xlu0 %v670, 96
        %v1017 = vpop.permute.xlu0 %1016
        %1018 = vrot.lane.b32.xlu0 %v675, 96
        %v1019 = vpop.permute.xlu0 %1018
        %1020 = vrot.lane.b32.xlu0 %v680, 96
        %v1021 = vpop.permute.xlu0 %1020
        %1022 = vrot.lane.b32.xlu0 %v685, 96
        %v1023 = vpop.permute.xlu0 %1022
        %1024 = vrot.lane.b32.xlu0 %v690, 96
        %v1025 = vpop.permute.xlu0 %1024
        %1026 = vrot.lane.b32.xlu0 %v695, 96
        %v1027 = vpop.permute.xlu0 %1026
        %1028 = vrot.lane.b32.xlu0 %v700, 96
        %v1029 = vpop.permute.xlu0 %1028
        %1030 = vrot.lane.b32.xlu0 %v705, 96
        %v1031 = vpop.permute.xlu0 %1030
        %1032 = vrot.lane.b32.xlu0 %v710, 96
        %v1033 = vpop.permute.xlu0 %1032
        %1034 = vrot.lane.b32.xlu0 %v715, 96
        %v1035 = vpop.permute.xlu0 %1034
        %1036 = vrot.lane.b32.xlu0 %v720, 96
        %v1037 = vpop.permute.xlu0 %1036
        %1038 = vrot.lane.b32.xlu0 %v725, 96
        %v1039 = vpop.permute.xlu0 %1038
        %1040 = vrot.lane.b32.xlu0 %v730, 96
        %v1041 = vpop.permute.xlu0 %1040
        %1042 = vrot.lane.b32.xlu0 %v735, 96
        %v1043 = vpop.permute.xlu0 %1042
        %1044 = vrot.lane.b32.xlu0 %v740, 96
        %v1045 = vpop.permute.xlu0 %1044
        %1046 = vrot.lane.b32.xlu0 %v745, 96
        %v1047 = vpop.permute.xlu0 %1046
        %1048 = vrot.lane.b32.xlu0 %v750, 96
        %v1049 = vpop.permute.xlu0 %1048
        %1050 = vrot.lane.b32.xlu0 %v755, 96
        %v1051 = vpop.permute.xlu0 %1050
        %1052 = vrot.lane.b32.xlu0 %v760, 96
        %v1053 = vpop.permute.xlu0 %1052
        %1054 = vrot.lane.b32.xlu0 %v765, 96
        %v1055 = vpop.permute.xlu0 %1054
        %1056 = vrot.lane.b32.xlu0 %v770, 96
        %v1057 = vpop.permute.xlu0 %1056
        %1058 = vrot.lane.b32.xlu0 %v775, 96
        %v1059 = vpop.permute.xlu0 %1058
        %1060 = vrot.lane.b32.xlu0 %v780, 96
        %v1061 = vpop.permute.xlu0 %1060
        %1062 = vrot.lane.b32.xlu0 %v785, 96
        %v1063 = vpop.permute.xlu0 %1062
        %1064 = vrot.lane.b32.xlu0 %v790, 96
        %v1065 = vpop.permute.xlu0 %1064
        %1066 = vrot.lane.b32.xlu0 %v795, 96
        %v1067 = vpop.permute.xlu0 %1066
        %1068 = vrot.lane.b32.xlu0 %v800, 96
        %v1069 = vpop.permute.xlu0 %1068
        %1070 = vrot.lane.b32.xlu0 %v805, 96
        %v1071 = vpop.permute.xlu0 %1070
        %1072 = vrot.lane.b32.xlu0 %v810, 96
        %v1073 = vpop.permute.xlu0 %1072
        %1074 = vrot.lane.b32.xlu0 %v815, 96
        %v1075 = vpop.permute.xlu0 %1074
        %1076 = vrot.lane.b32.xlu0 %v820, 96
        %v1077 = vpop.permute.xlu0 %1076
        %1078 = vrot.lane.b32.xlu0 %v825, 96
        %v1079 = vpop.permute.xlu0 %1078
        %1080 = vrot.lane.b32.xlu0 %v830, 96
        %v1081 = vpop.permute.xlu0 %1080
        %1082 = vrot.lane.b32.xlu0 %v835, 96
        %v1083 = vpop.permute.xlu0 %1082
        %1084 = vrot.lane.b32.xlu0 %v840, 96
        %v1085 = vpop.permute.xlu0 %1084
        %1086 = vrot.lane.b32.xlu0 %v845, 96
        %v1087 = vpop.permute.xlu0 %1086
        %1088 = vrot.lane.b32.xlu0 %v850, 96
        %v1089 = vpop.permute.xlu0 %1088
        %1090 = vrot.lane.b32.xlu0 %v855, 96
        %v1091 = vpop.permute.xlu0 %1090
        %1092 = vrot.lane.b32.xlu0 %v860, 96
        %v1093 = vpop.permute.xlu0 %1092
        %1094 = vrot.lane.b32.xlu0 %v865, 96
        %v1095 = vpop.permute.xlu0 %1094
        %1096 = vrot.lane.b32.xlu0 %v870, 96
        %v1097 = vpop.permute.xlu0 %1096
        %1098 = vrot.lane.b32.xlu0 %v875, 96
        %v1099 = vpop.permute.xlu0 %1098
        %1100 = vrot.lane.b32.xlu0 %v880, 96
        %v1101 = vpop.permute.xlu0 %1100
        %1102 = vrot.lane.b32.xlu0 %v885, 96
        %v1103 = vpop.permute.xlu0 %1102
        %1104 = vrot.lane.b32.xlu0 %v890, 96
        %v1105 = vpop.permute.xlu0 %1104
        %1106 = vrot.lane.b32.xlu0 %v895, 96
        %v1107 = vpop.permute.xlu0 %1106
        %1108 = vrot.lane.b32.xlu0 %v900, 96
        %v1109 = vpop.permute.xlu0 %1108
        %1110 = vrot.lane.b32.xlu0 %v905, 96
        %v1111 = vpop.permute.xlu0 %1110
        %1112 = vrot.lane.b32.xlu0 %v910, 96
        %v1113 = vpop.permute.xlu0 %1112
        %1114 = vrot.lane.b32.xlu0 %v915, 96
        %v1115 = vpop.permute.xlu0 %1114
        %1116 = vrot.lane.b32.xlu0 %v920, 96
        %v1117 = vpop.permute.xlu0 %1116
        %1118 = vrot.lane.b32.xlu0 %v925, 96
        %v1119 = vpop.permute.xlu0 %1118
        %v1184 = vmax.f32 %v610, %v993
        %v1185 = vmax.f32 %v615, %v995
        %v1186 = vmax.f32 %v620, %v997
        %v1187 = vmax.f32 %v625, %v999
        %v1188 = vmax.f32 %v630, %v1001
        %v1189 = vmax.f32 %v635, %v1003
        %v1190 = vmax.f32 %v640, %v1005
        %v1191 = vmax.f32 %v645, %v1007
        %v1192 = vmax.f32 %v650, %v1009
        %v1193 = vmax.f32 %v655, %v1011
        %v1194 = vmax.f32 %v660, %v1013
        %v1195 = vmax.f32 %v665, %v1015
        %v1196 = vmax.f32 %v670, %v1017
        %v1197 = vmax.f32 %v675, %v1019
        %v1198 = vmax.f32 %v680, %v1021
        %v1199 = vmax.f32 %v685, %v1023
        %v1200 = vmax.f32 %v690, %v1025
        %v1201 = vmax.f32 %v695, %v1027
        %v1202 = vmax.f32 %v700, %v1029
        %v1203 = vmax.f32 %v705, %v1031
        %v1204 = vmax.f32 %v710, %v1033
        %v1205 = vmax.f32 %v715, %v1035
        %v1206 = vmax.f32 %v720, %v1037
        %v1207 = vmax.f32 %v725, %v1039
        %v1208 = vmax.f32 %v730, %v1041
        %v1209 = vmax.f32 %v735, %v1043
        %v1210 = vmax.f32 %v740, %v1045
        %v1211 = vmax.f32 %v745, %v1047
        %v1212 = vmax.f32 %v750, %v1049
        %v1213 = vmax.f32 %v755, %v1051
        %v1214 = vmax.f32 %v760, %v1053
        %v1215 = vmax.f32 %v765, %v1055
        %v1216 = vmax.f32 %v770, %v1057
        %v1217 = vmax.f32 %v775, %v1059
        %v1218 = vmax.f32 %v780, %v1061
        %v1219 = vmax.f32 %v785, %v1063
        %v1220 = vmax.f32 %v790, %v1065
        %v1221 = vmax.f32 %v795, %v1067
        %v1222 = vmax.f32 %v800, %v1069
        %v1223 = vmax.f32 %v805, %v1071
        %v1224 = vmax.f32 %v810, %v1073
        %v1225 = vmax.f32 %v815, %v1075
        %v1226 = vmax.f32 %v820, %v1077
        %v1227 = vmax.f32 %v825, %v1079
        %v1228 = vmax.f32 %v830, %v1081
        %v1229 = vmax.f32 %v835, %v1083
        %v1230 = vmax.f32 %v840, %v1085
        %v1231 = vmax.f32 %v845, %v1087
        %v1232 = vmax.f32 %v850, %v1089
        %v1233 = vmax.f32 %v855, %v1091
        %v1234 = vmax.f32 %v860, %v1093
        %v1235 = vmax.f32 %v865, %v1095
        %v1236 = vmax.f32 %v870, %v1097
        %v1237 = vmax.f32 %v875, %v1099
        %v1238 = vmax.f32 %v880, %v1101
        %v1239 = vmax.f32 %v885, %v1103
        %v1240 = vmax.f32 %v890, %v1105
        %v1241 = vmax.f32 %v895, %v1107
        %v1242 = vmax.f32 %v900, %v1109
        %v1243 = vmax.f32 %v905, %v1111
        %v1244 = vmax.f32 %v910, %v1113
        %v1245 = vmax.f32 %v915, %v1115
        %v1246 = vmax.f32 %v920, %v1117
        %v1247 = vmax.f32 %v925, %v1119
        %1312 = vrot.lane.b32.xlu0 %v1184, 96
        %v1313 = vpop.permute.xlu0 %1312
        %1314 = vrot.lane.b32.xlu0 %v1185, 96
        %v1315 = vpop.permute.xlu0 %1314
        %1316 = vrot.lane.b32.xlu0 %v1186, 96
        %v1317 = vpop.permute.xlu0 %1316
        %1318 = vrot.lane.b32.xlu0 %v1187, 96
        %v1319 = vpop.permute.xlu0 %1318
        %1320 = vrot.lane.b32.xlu0 %v1188, 96
        %v1321 = vpop.permute.xlu0 %1320
        %1322 = vrot.lane.b32.xlu0 %v1189, 96
        %v1323 = vpop.permute.xlu0 %1322
        %1324 = vrot.lane.b32.xlu0 %v1190, 96
        %v1325 = vpop.permute.xlu0 %1324
        %1326 = vrot.lane.b32.xlu0 %v1191, 96
        %v1327 = vpop.permute.xlu0 %1326
        %1328 = vrot.lane.b32.xlu0 %v1192, 96
        %v1329 = vpop.permute.xlu0 %1328
        %1330 = vrot.lane.b32.xlu0 %v1193, 96
        %v1331 = vpop.permute.xlu0 %1330
        %1332 = vrot.lane.b32.xlu0 %v1194, 96
        %v1333 = vpop.permute.xlu0 %1332
        %1334 = vrot.lane.b32.xlu0 %v1195, 96
        %v1335 = vpop.permute.xlu0 %1334
        %1336 = vrot.lane.b32.xlu0 %v1196, 96
        %v1337 = vpop.permute.xlu0 %1336
        %1338 = vrot.lane.b32.xlu0 %v1197, 96
        %v1339 = vpop.permute.xlu0 %1338
        %1340 = vrot.lane.b32.xlu0 %v1198, 96
        %v1341 = vpop.permute.xlu0 %1340
        %1342 = vrot.lane.b32.xlu0 %v1199, 96
        %v1343 = vpop.permute.xlu0 %1342
        %1344 = vrot.lane.b32.xlu0 %v1200, 96
        %v1345 = vpop.permute.xlu0 %1344
        %1346 = vrot.lane.b32.xlu0 %v1201, 96
        %v1347 = vpop.permute.xlu0 %1346
        %1348 = vrot.lane.b32.xlu0 %v1202, 96
        %v1349 = vpop.permute.xlu0 %1348
        %1350 = vrot.lane.b32.xlu0 %v1203, 96
        %v1351 = vpop.permute.xlu0 %1350
        %1352 = vrot.lane.b32.xlu0 %v1204, 96
        %v1353 = vpop.permute.xlu0 %1352
        %1354 = vrot.lane.b32.xlu0 %v1205, 96
        %v1355 = vpop.permute.xlu0 %1354
        %1356 = vrot.lane.b32.xlu0 %v1206, 96
        %v1357 = vpop.permute.xlu0 %1356
        %1358 = vrot.lane.b32.xlu0 %v1207, 96
        %v1359 = vpop.permute.xlu0 %1358
        %1360 = vrot.lane.b32.xlu0 %v1208, 96
        %v1361 = vpop.permute.xlu0 %1360
        %1362 = vrot.lane.b32.xlu0 %v1209, 96
        %v1363 = vpop.permute.xlu0 %1362
        %1364 = vrot.lane.b32.xlu0 %v1210, 96
        %v1365 = vpop.permute.xlu0 %1364
        %1366 = vrot.lane.b32.xlu0 %v1211, 96
        %v1367 = vpop.permute.xlu0 %1366
        %1368 = vrot.lane.b32.xlu0 %v1212, 96
        %v1369 = vpop.permute.xlu0 %1368
        %1370 = vrot.lane.b32.xlu0 %v1213, 96
        %v1371 = vpop.permute.xlu0 %1370
        %1372 = vrot.lane.b32.xlu0 %v1214, 96
        %v1373 = vpop.permute.xlu0 %1372
        %1374 = vrot.lane.b32.xlu0 %v1215, 96
        %v1375 = vpop.permute.xlu0 %1374
        %1376 = vrot.lane.b32.xlu0 %v1216, 96
        %v1377 = vpop.permute.xlu0 %1376
        %1378 = vrot.lane.b32.xlu0 %v1217, 96
        %v1379 = vpop.permute.xlu0 %1378
        %1380 = vrot.lane.b32.xlu0 %v1218, 96
        %v1381 = vpop.permute.xlu0 %1380
        %1382 = vrot.lane.b32.xlu0 %v1219, 96
        %v1383 = vpop.permute.xlu0 %1382
        %1384 = vrot.lane.b32.xlu0 %v1220, 96
        %v1385 = vpop.permute.xlu0 %1384
        %1386 = vrot.lane.b32.xlu0 %v1221, 96
        %v1387 = vpop.permute.xlu0 %1386
        %1388 = vrot.lane.b32.xlu0 %v1222, 96
        %v1389 = vpop.permute.xlu0 %1388
        %1390 = vrot.lane.b32.xlu0 %v1223, 96
        %v1391 = vpop.permute.xlu0 %1390
        %1392 = vrot.lane.b32.xlu0 %v1224, 96
        %v1393 = vpop.permute.xlu0 %1392
        %1394 = vrot.lane.b32.xlu0 %v1225, 96
        %v1395 = vpop.permute.xlu0 %1394
        %1396 = vrot.lane.b32.xlu0 %v1226, 96
        %v1397 = vpop.permute.xlu0 %1396
        %1398 = vrot.lane.b32.xlu0 %v1227, 96
        %v1399 = vpop.permute.xlu0 %1398
        %1400 = vrot.lane.b32.xlu0 %v1228, 96
        %v1401 = vpop.permute.xlu0 %1400
        %1402 = vrot.lane.b32.xlu0 %v1229, 96
        %v1403 = vpop.permute.xlu0 %1402
        %1404 = vrot.lane.b32.xlu0 %v1230, 96
        %v1405 = vpop.permute.xlu0 %1404
        %1406 = vrot.lane.b32.xlu0 %v1231, 96
        %v1407 = vpop.permute.xlu0 %1406
        %1408 = vrot.lane.b32.xlu0 %v1232, 96
        %v1409 = vpop.permute.xlu0 %1408
        %1410 = vrot.lane.b32.xlu0 %v1233, 96
        %v1411 = vpop.permute.xlu0 %1410
        %1412 = vrot.lane.b32.xlu0 %v1234, 96
        %v1413 = vpop.permute.xlu0 %1412
        %1414 = vrot.lane.b32.xlu0 %v1235, 96
        %v1415 = vpop.permute.xlu0 %1414
        %1416 = vrot.lane.b32.xlu0 %v1236, 96
        %v1417 = vpop.permute.xlu0 %1416
        %1418 = vrot.lane.b32.xlu0 %v1237, 96
        %v1419 = vpop.permute.xlu0 %1418
        %1420 = vrot.lane.b32.xlu0 %v1238, 96
        %v1421 = vpop.permute.xlu0 %1420
        %1422 = vrot.lane.b32.xlu0 %v1239, 96
        %v1423 = vpop.permute.xlu0 %1422
        %1424 = vrot.lane.b32.xlu0 %v1240, 96
        %v1425 = vpop.permute.xlu0 %1424
        %1426 = vrot.lane.b32.xlu0 %v1241, 96
        %v1427 = vpop.permute.xlu0 %1426
        %1428 = vrot.lane.b32.xlu0 %v1242, 96
        %v1429 = vpop.permute.xlu0 %1428
        %1430 = vrot.lane.b32.xlu0 %v1243, 96
        %v1431 = vpop.permute.xlu0 %1430
        %1432 = vrot.lane.b32.xlu0 %v1244, 96
        %v1433 = vpop.permute.xlu0 %1432
        %1434 = vrot.lane.b32.xlu0 %v1245, 96
        %v1435 = vpop.permute.xlu0 %1434
        %1436 = vrot.lane.b32.xlu0 %v1246, 96
        %v1437 = vpop.permute.xlu0 %1436
        %1438 = vrot.lane.b32.xlu0 %v1247, 96
        %v1439 = vpop.permute.xlu0 %1438
        %vm1504 = vcmask 261120
        %v1505 = vsel %vm1504, %v1184, %v1313
        %v1506 = vsel %vm1504, %v1185, %v1315
        %v1507 = vsel %vm1504, %v1186, %v1317
        %v1508 = vsel %vm1504, %v1187, %v1319
        %v1509 = vsel %vm1504, %v1188, %v1321
        %v1510 = vsel %vm1504, %v1189, %v1323
        %v1511 = vsel %vm1504, %v1190, %v1325
        %v1512 = vsel %vm1504, %v1191, %v1327
        %v1513 = vsel %vm1504, %v1192, %v1329
        %v1514 = vsel %vm1504, %v1193, %v1331
        %v1515 = vsel %vm1504, %v1194, %v1333
        %v1516 = vsel %vm1504, %v1195, %v1335
        %v1517 = vsel %vm1504, %v1196, %v1337
        %v1518 = vsel %vm1504, %v1197, %v1339
        %v1519 = vsel %vm1504, %v1198, %v1341
        %v1520 = vsel %vm1504, %v1199, %v1343
        %v1521 = vsel %vm1504, %v1200, %v1345
        %v1522 = vsel %vm1504, %v1201, %v1347
        %v1523 = vsel %vm1504, %v1202, %v1349
        %v1524 = vsel %vm1504, %v1203, %v1351
        %v1525 = vsel %vm1504, %v1204, %v1353
        %v1526 = vsel %vm1504, %v1205, %v1355
        %v1527 = vsel %vm1504, %v1206, %v1357
        %v1528 = vsel %vm1504, %v1207, %v1359
        %v1529 = vsel %vm1504, %v1208, %v1361
        %v1530 = vsel %vm1504, %v1209, %v1363
        %v1531 = vsel %vm1504, %v1210, %v1365
        %v1532 = vsel %vm1504, %v1211, %v1367
        %v1533 = vsel %vm1504, %v1212, %v1369
        %v1534 = vsel %vm1504, %v1213, %v1371
        %v1535 = vsel %vm1504, %v1214, %v1373
        %v1536 = vsel %vm1504, %v1215, %v1375
        %v1537 = vsel %vm1504, %v1216, %v1377
        %v1538 = vsel %vm1504, %v1217, %v1379
        %v1539 = vsel %vm1504, %v1218, %v1381
        %v1540 = vsel %vm1504, %v1219, %v1383
        %v1541 = vsel %vm1504, %v1220, %v1385
        %v1542 = vsel %vm1504, %v1221, %v1387
        %v1543 = vsel %vm1504, %v1222, %v1389
        %v1544 = vsel %vm1504, %v1223, %v1391
        %v1545 = vsel %vm1504, %v1224, %v1393
        %v1546 = vsel %vm1504, %v1225, %v1395
        %v1547 = vsel %vm1504, %v1226, %v1397
        %v1548 = vsel %vm1504, %v1227, %v1399
        %v1549 = vsel %vm1504, %v1228, %v1401
        %v1550 = vsel %vm1504, %v1229, %v1403
        %v1551 = vsel %vm1504, %v1230, %v1405
        %v1552 = vsel %vm1504, %v1231, %v1407
        %v1553 = vsel %vm1504, %v1232, %v1409
        %v1554 = vsel %vm1504, %v1233, %v1411
        %v1555 = vsel %vm1504, %v1234, %v1413
        %v1556 = vsel %vm1504, %v1235, %v1415
        %v1557 = vsel %vm1504, %v1236, %v1417
        %v1558 = vsel %vm1504, %v1237, %v1419
        %v1559 = vsel %vm1504, %v1238, %v1421
        %v1560 = vsel %vm1504, %v1239, %v1423
        %v1561 = vsel %vm1504, %v1240, %v1425
        %v1562 = vsel %vm1504, %v1241, %v1427
        %v1563 = vsel %vm1504, %v1242, %v1429
        %v1564 = vsel %vm1504, %v1243, %v1431
        %v1565 = vsel %vm1504, %v1244, %v1433
        %v1566 = vsel %vm1504, %v1245, %v1435
        %v1567 = vsel %vm1504, %v1246, %v1437
        %v1568 = vsel %vm1504, %v1247, %v1439
        %v1569 = vld [vmem:[#allocation4] sm:$0x1]
        %v1571 = vlaneseq
        %v1572 = vshrl.u32 %v1571, 7
        %v1573 = vsub.s32 0, %v1572
        %v1574 = vrot.slane %v1569, %v1573
        %v1576 = vadd.f32 %v1505, %v1574
        %v1577 = vadd.f32 %v1506, %v1574
        %v1578 = vadd.f32 %v1507, %v1574
        %v1579 = vadd.f32 %v1508, %v1574
        %v1580 = vadd.f32 %v1509, %v1574
        %v1581 = vadd.f32 %v1510, %v1574
        %v1582 = vadd.f32 %v1511, %v1574
        %v1583 = vadd.f32 %v1512, %v1574
        %v1584 = vadd.f32 %v1513, %v1574
        %v1585 = vadd.f32 %v1514, %v1574
        %v1586 = vadd.f32 %v1515, %v1574
        %v1587 = vadd.f32 %v1516, %v1574
        %v1588 = vadd.f32 %v1517, %v1574
        %v1589 = vadd.f32 %v1518, %v1574
        %v1590 = vadd.f32 %v1519, %v1574
        %v1591 = vadd.f32 %v1520, %v1574
        %v1592 = vadd.f32 %v1521, %v1574
        %v1593 = vadd.f32 %v1522, %v1574
        %v1594 = vadd.f32 %v1523, %v1574
        %v1595 = vadd.f32 %v1524, %v1574
        %v1596 = vadd.f32 %v1525, %v1574
        %v1597 = vadd.f32 %v1526, %v1574
        %v1598 = vadd.f32 %v1527, %v1574
        %v1599 = vadd.f32 %v1528, %v1574
        %v1600 = vadd.f32 %v1529, %v1574
        %v1601 = vadd.f32 %v1530, %v1574
        %v1602 = vadd.f32 %v1531, %v1574
        %v1603 = vadd.f32 %v1532, %v1574
        %v1604 = vadd.f32 %v1533, %v1574
        %v1605 = vadd.f32 %v1534, %v1574
        %v1606 = vadd.f32 %v1535, %v1574
        %v1607 = vadd.f32 %v1536, %v1574
        %v1608 = vadd.f32 %v1537, %v1574
        %v1609 = vadd.f32 %v1538, %v1574
        %v1610 = vadd.f32 %v1539, %v1574
        %v1611 = vadd.f32 %v1540, %v1574
        %v1612 = vadd.f32 %v1541, %v1574
        %v1613 = vadd.f32 %v1542, %v1574
        %v1614 = vadd.f32 %v1543, %v1574
        %v1615 = vadd.f32 %v1544, %v1574
        %v1616 = vadd.f32 %v1545, %v1574
        %v1617 = vadd.f32 %v1546, %v1574
        %v1618 = vadd.f32 %v1547, %v1574
        %v1619 = vadd.f32 %v1548, %v1574
        %v1620 = vadd.f32 %v1549, %v1574
        %v1621 = vadd.f32 %v1550, %v1574
        %v1622 = vadd.f32 %v1551, %v1574
        %v1623 = vadd.f32 %v1552, %v1574
        %v1624 = vadd.f32 %v1553, %v1574
        %v1625 = vadd.f32 %v1554, %v1574
        %v1626 = vadd.f32 %v1555, %v1574
        %v1627 = vadd.f32 %v1556, %v1574
        %v1628 = vadd.f32 %v1557, %v1574
        %v1629 = vadd.f32 %v1558, %v1574
        %v1630 = vadd.f32 %v1559, %v1574
        %v1631 = vadd.f32 %v1560, %v1574
        %v1632 = vadd.f32 %v1561, %v1574
        %v1633 = vadd.f32 %v1562, %v1574
        %v1634 = vadd.f32 %v1563, %v1574
        %v1635 = vadd.f32 %v1564, %v1574
        %v1636 = vadd.f32 %v1565, %v1574
        %v1637 = vadd.f32 %v1566, %v1574
        %v1638 = vadd.f32 %v1567, %v1574
        %v1639 = vadd.f32 %v1568, %v1574
        %v1640 = vmax.f32 %v1576, 0.0
        %v1641 = vmax.f32 %v1577, 0.0
        %v1642 = vmax.f32 %v1578, 0.0
        %v1643 = vmax.f32 %v1579, 0.0
        %v1644 = vmax.f32 %v1580, 0.0
        %v1645 = vmax.f32 %v1581, 0.0
        %v1646 = vmax.f32 %v1582, 0.0
        %v1647 = vmax.f32 %v1583, 0.0
        %v1648 = vmax.f32 %v1584, 0.0
        %v1649 = vmax.f32 %v1585, 0.0
        %v1650 = vmax.f32 %v1586, 0.0
        %v1651 = vmax.f32 %v1587, 0.0
        %v1652 = vmax.f32 %v1588, 0.0
        %v1653 = vmax.f32 %v1589, 0.0
        %v1654 = vmax.f32 %v1590, 0.0
        %v1655 = vmax.f32 %v1591, 0.0
        %v1656 = vmax.f32 %v1592, 0.0
        %v1657 = vmax.f32 %v1593, 0.0
        %v1658 = vmax.f32 %v1594, 0.0
        %v1659 = vmax.f32 %v1595, 0.0
        %v1660 = vmax.f32 %v1596, 0.0
        %v1661 = vmax.f32 %v1597, 0.0
        %v1662 = vmax.f32 %v1598, 0.0
        %v1663 = vmax.f32 %v1599, 0.0
        %v1664 = vmax.f32 %v1600, 0.0
        %v1665 = vmax.f32 %v1601, 0.0
        %v1666 = vmax.f32 %v1602, 0.0
        %v1667 = vmax.f32 %v1603, 0.0
        %v1668 = vmax.f32 %v1604, 0.0
        %v1669 = vmax.f32 %v1605, 0.0
        %v1670 = vmax.f32 %v1606, 0.0
        %v1671 = vmax.f32 %v1607, 0.0
        %v1672 = vmax.f32 %v1608, 0.0
        %v1673 = vmax.f32 %v1609, 0.0
        %v1674 = vmax.f32 %v1610, 0.0
        %v1675 = vmax.f32 %v1611, 0.0
        %v1676 = vmax.f32 %v1612, 0.0
        %v1677 = vmax.f32 %v1613, 0.0
        %v1678 = vmax.f32 %v1614, 0.0
        %v1679 = vmax.f32 %v1615, 0.0
        %v1680 = vmax.f32 %v1616, 0.0
        %v1681 = vmax.f32 %v1617, 0.0
        %v1682 = vmax.f32 %v1618, 0.0
        %v1683 = vmax.f32 %v1619, 0.0
        %v1684 = vmax.f32 %v1620, 0.0
        %v1685 = vmax.f32 %v1621, 0.0
        %v1686 = vmax.f32 %v1622, 0.0
        %v1687 = vmax.f32 %v1623, 0.0
        %v1688 = vmax.f32 %v1624, 0.0
        %v1689 = vmax.f32 %v1625, 0.0
        %v1690 = vmax.f32 %v1626, 0.0
        %v1691 = vmax.f32 %v1627, 0.0
        %v1692 = vmax.f32 %v1628, 0.0
        %v1693 = vmax.f32 %v1629, 0.0
        %v1694 = vmax.f32 %v1630, 0.0
        %v1695 = vmax.f32 %v1631, 0.0
        %v1696 = vmax.f32 %v1632, 0.0
        %v1697 = vmax.f32 %v1633, 0.0
        %v1698 = vmax.f32 %v1634, 0.0
        %v1699 = vmax.f32 %v1635, 0.0
        %v1700 = vmax.f32 %v1636, 0.0
        %v1701 = vmax.f32 %v1637, 0.0
        %v1702 = vmax.f32 %v1638, 0.0
        %v1703 = vmax.f32 %v1639, 0.0
        %v1704 = vlaneseq
        %v1705 = vshrl.u32 %v1704, 7
        %v1706 = vadd.s32 %v1705, 8
        %v1707 = vadd.s32 %v1705, 16
        %v1708 = vadd.s32 %v1705, 24
        %v1709 = vadd.s32 %v1705, 32
        %v1710 = vadd.s32 %v1705, 40
        %v1711 = vadd.s32 %v1705, 48
        %v1712 = vadd.s32 %v1705, 56
        %v1713 = vadd.s32 %v1705, 64
        %v1714 = vadd.s32 %v1705, 72
        %v1715 = vadd.s32 %v1705, 80
        %v1716 = vadd.s32 %v1705, 88
        %v1717 = vadd.s32 %v1705, 96
        %v1718 = vadd.s32 %v1705, 104
        %v1719 = vadd.s32 %v1705, 112
        %v1720 = vadd.s32 %v1705, 120
        %v1721 = vadd.s32 %v1705, 128
        %v1722 = vadd.s32 %v1705, 136
        %v1723 = vadd.s32 %v1705, 144
        %v1724 = vadd.s32 %v1705, 152
        %v1725 = vadd.s32 %v1705, 160
        %v1726 = vadd.s32 %v1705, 168
        %v1727 = vadd.s32 %v1705, 176
        %v1728 = vadd.s32 %v1705, 184
        %v1729 = vadd.s32 %v1705, 192
        %v1730 = vadd.s32 %v1705, 200
        %v1731 = vadd.s32 %v1705, 208
        %v1732 = vadd.s32 %v1705, 216
        %v1733 = vadd.s32 %v1705, 224
        %v1734 = vadd.s32 %v1705, 232
        %v1735 = vadd.s32 %v1705, 240
        %v1736 = vadd.s32 %v1705, 248
        %v1737 = vadd.s32 %v1705, 256
        %v1738 = vadd.s32 %v1705, 264
        %v1739 = vadd.s32 %v1705, 272
        %v1740 = vadd.s32 %v1705, 280
        %v1741 = vadd.s32 %v1705, 288
        %v1742 = vadd.s32 %v1705, 296
        %v1743 = vadd.s32 %v1705, 304
        %v1744 = vadd.s32 %v1705, 312
        %v1745 = vadd.s32 %v1705, 320
        %v1746 = vadd.s32 %v1705, 328
        %v1747 = vadd.s32 %v1705, 336
        %v1748 = vadd.s32 %v1705, 344
        %v1749 = vadd.s32 %v1705, 352
        %v1750 = vadd.s32 %v1705, 360
        %v1751 = vadd.s32 %v1705, 368
        %v1752 = vadd.s32 %v1705, 376
        %v1753 = vadd.s32 %v1705, 384
        %v1754 = vadd.s32 %v1705, 392
        %v1755 = vadd.s32 %v1705, 400
        %v1756 = vadd.s32 %v1705, 408
        %v1757 = vadd.s32 %v1705, 416
        %v1758 = vadd.s32 %v1705, 424
        %v1759 = vadd.s32 %v1705, 432
        %v1760 = vadd.s32 %v1705, 440
        %v1761 = vadd.s32 %v1705, 448
        %v1762 = vadd.s32 %v1705, 456
        %v1763 = vadd.s32 %v1705, 464
        %v1764 = vadd.s32 %v1705, 472
        %v1765 = vadd.s32 %v1705, 480
        %v1766 = vadd.s32 %v1705, 488
        %v1767 = vadd.s32 %v1705, 496
        %v1768 = vadd.s32 %v1705, 504
        %vm1833 = vcmask 1040384
        %v1834 = vrot.slane %v1640, 7
        %v1835 = vrot.slane %v1641, 7
        %v1836 = vsel %vm1833, %v1834, %v1835
        %v1837 = vrot.slane %v1642, 7
        %v1838 = vsel %vm1833, %v1835, %v1837
        %v1839 = vrot.slane %v1643, 7
        %v1840 = vsel %vm1833, %v1837, %v1839
        %v1841 = vrot.slane %v1644, 7
        %v1842 = vsel %vm1833, %v1839, %v1841
        %v1843 = vrot.slane %v1645, 7
        %v1844 = vsel %vm1833, %v1841, %v1843
        %v1845 = vrot.slane %v1646, 7
        %v1846 = vsel %vm1833, %v1843, %v1845
        %v1847 = vrot.slane %v1647, 7
        %v1848 = vsel %vm1833, %v1845, %v1847
        %v1849 = vrot.slane %v1648, 7
        %v1850 = vsel %vm1833, %v1847, %v1849
        %v1851 = vrot.slane %v1649, 7
        %v1852 = vsel %vm1833, %v1849, %v1851
        %v1853 = vrot.slane %v1650, 7
        %v1854 = vsel %vm1833, %v1851, %v1853
        %v1855 = vrot.slane %v1651, 7
        %v1856 = vsel %vm1833, %v1853, %v1855
        %v1857 = vrot.slane %v1652, 7
        %v1858 = vsel %vm1833, %v1855, %v1857
        %v1859 = vrot.slane %v1653, 7
        %v1860 = vsel %vm1833, %v1857, %v1859
        %v1861 = vrot.slane %v1654, 7
        %v1862 = vsel %vm1833, %v1859, %v1861
        %v1863 = vrot.slane %v1655, 7
        %v1864 = vsel %vm1833, %v1861, %v1863
        %v1865 = vrot.slane %v1656, 7
        %v1866 = vsel %vm1833, %v1863, %v1865
        %v1867 = vrot.slane %v1657, 7
        %v1868 = vsel %vm1833, %v1865, %v1867
        %v1869 = vrot.slane %v1658, 7
        %v1870 = vsel %vm1833, %v1867, %v1869
        %v1871 = vrot.slane %v1659, 7
        %v1872 = vsel %vm1833, %v1869, %v1871
        %v1873 = vrot.slane %v1660, 7
        %v1874 = vsel %vm1833, %v1871, %v1873
        %v1875 = vrot.slane %v1661, 7
        %v1876 = vsel %vm1833, %v1873, %v1875
        %v1877 = vrot.slane %v1662, 7
        %v1878 = vsel %vm1833, %v1875, %v1877
        %v1879 = vrot.slane %v1663, 7
        %v1880 = vsel %vm1833, %v1877, %v1879
        %v1881 = vrot.slane %v1664, 7
        %v1882 = vsel %vm1833, %v1879, %v1881
        %v1883 = vrot.slane %v1665, 7
        %v1884 = vsel %vm1833, %v1881, %v1883
        %v1885 = vrot.slane %v1666, 7
        %v1886 = vsel %vm1833, %v1883, %v1885
        %v1887 = vrot.slane %v1667, 7
        %v1888 = vsel %vm1833, %v1885, %v1887
        %v1889 = vrot.slane %v1668, 7
        %v1890 = vsel %vm1833, %v1887, %v1889
        %v1891 = vrot.slane %v1669, 7
        %v1892 = vsel %vm1833, %v1889, %v1891
        %v1893 = vrot.slane %v1670, 7
        %v1894 = vsel %vm1833, %v1891, %v1893
        %v1895 = vrot.slane %v1671, 7
        %v1896 = vsel %vm1833, %v1893, %v1895
        %v1897 = vrot.slane %v1672, 7
        %v1898 = vsel %vm1833, %v1895, %v1897
        %v1899 = vrot.slane %v1673, 7
        %v1900 = vsel %vm1833, %v1897, %v1899
        %v1901 = vrot.slane %v1674, 7
        %v1902 = vsel %vm1833, %v1899, %v1901
        %v1903 = vrot.slane %v1675, 7
        %v1904 = vsel %vm1833, %v1901, %v1903
        %v1905 = vrot.slane %v1676, 7
        %v1906 = vsel %vm1833, %v1903, %v1905
        %v1907 = vrot.slane %v1677, 7
        %v1908 = vsel %vm1833, %v1905, %v1907
        %v1909 = vrot.slane %v1678, 7
        %v1910 = vsel %vm1833, %v1907, %v1909
        %v1911 = vrot.slane %v1679, 7
        %v1912 = vsel %vm1833, %v1909, %v1911
        %v1913 = vrot.slane %v1680, 7
        %v1914 = vsel %vm1833, %v1911, %v1913
        %v1915 = vrot.slane %v1681, 7
        %v1916 = vsel %vm1833, %v1913, %v1915
        %v1917 = vrot.slane %v1682, 7
        %v1918 = vsel %vm1833, %v1915, %v1917
        %v1919 = vrot.slane %v1683, 7
        %v1920 = vsel %vm1833, %v1917, %v1919
        %v1921 = vrot.slane %v1684, 7
        %v1922 = vsel %vm1833, %v1919, %v1921
        %v1923 = vrot.slane %v1685, 7
        %v1924 = vsel %vm1833, %v1921, %v1923
        %v1925 = vrot.slane %v1686, 7
        %v1926 = vsel %vm1833, %v1923, %v1925
        %v1927 = vrot.slane %v1687, 7
        %v1928 = vsel %vm1833, %v1925, %v1927
        %v1929 = vrot.slane %v1688, 7
        %v1930 = vsel %vm1833, %v1927, %v1929
        %v1931 = vrot.slane %v1689, 7
        %v1932 = vsel %vm1833, %v1929, %v1931
        %v1933 = vrot.slane %v1690, 7
        %v1934 = vsel %vm1833, %v1931, %v1933
        %v1935 = vrot.slane %v1691, 7
        %v1936 = vsel %vm1833, %v1933, %v1935
        %v1937 = vrot.slane %v1692, 7
        %v1938 = vsel %vm1833, %v1935, %v1937
        %v1939 = vrot.slane %v1693, 7
        %v1940 = vsel %vm1833, %v1937, %v1939
        %v1941 = vrot.slane %v1694, 7
        %v1942 = vsel %vm1833, %v1939, %v1941
        %v1943 = vrot.slane %v1695, 7
        %v1944 = vsel %vm1833, %v1941, %v1943
        %v1945 = vrot.slane %v1696, 7
        %v1946 = vsel %vm1833, %v1943, %v1945
        %v1947 = vrot.slane %v1697, 7
        %v1948 = vsel %vm1833, %v1945, %v1947
        %v1949 = vrot.slane %v1698, 7
        %v1950 = vsel %vm1833, %v1947, %v1949
        %v1951 = vrot.slane %v1699, 7
        %v1952 = vsel %vm1833, %v1949, %v1951
        %v1953 = vrot.slane %v1700, 7
        %v1954 = vsel %vm1833, %v1951, %v1953
        %v1955 = vrot.slane %v1701, 7
        %v1956 = vsel %vm1833, %v1953, %v1955
        %v1957 = vrot.slane %v1702, 7
        %v1958 = vsel %vm1833, %v1955, %v1957
        %v1959 = vrot.slane %v1703, 7
        %v1960 = vsel %vm1833, %v1957, %v1959
        %1961 = vrot.lane.b32.xlu0 %v1834, 96
        %v1962 = vpop.permute.xlu0 %1961
        %1963 = vrot.lane.b32.xlu0 %v1836, 96
        %v1964 = vpop.permute.xlu0 %1963
        %1965 = vrot.lane.b32.xlu0 %v1838, 96
        %v1966 = vpop.permute.xlu0 %1965
        %1967 = vrot.lane.b32.xlu0 %v1840, 96
        %v1968 = vpop.permute.xlu0 %1967
        %1969 = vrot.lane.b32.xlu0 %v1842, 96
        %v1970 = vpop.permute.xlu0 %1969
        %1971 = vrot.lane.b32.xlu0 %v1844, 96
        %v1972 = vpop.permute.xlu0 %1971
        %1973 = vrot.lane.b32.xlu0 %v1846, 96
        %v1974 = vpop.permute.xlu0 %1973
        %1975 = vrot.lane.b32.xlu0 %v1848, 96
        %v1976 = vpop.permute.xlu0 %1975
        %1977 = vrot.lane.b32.xlu0 %v1850, 96
        %v1978 = vpop.permute.xlu0 %1977
        %1979 = vrot.lane.b32.xlu0 %v1852, 96
        %v1980 = vpop.permute.xlu0 %1979
        %1981 = vrot.lane.b32.xlu0 %v1854, 96
        %v1982 = vpop.permute.xlu0 %1981
        %1983 = vrot.lane.b32.xlu0 %v1856, 96
        %v1984 = vpop.permute.xlu0 %1983
        %1985 = vrot.lane.b32.xlu0 %v1858, 96
        %v1986 = vpop.permute.xlu0 %1985
        %1987 = vrot.lane.b32.xlu0 %v1860, 96
        %v1988 = vpop.permute.xlu0 %1987
        %1989 = vrot.lane.b32.xlu0 %v1862, 96
        %v1990 = vpop.permute.xlu0 %1989
        %1991 = vrot.lane.b32.xlu0 %v1864, 96
        %v1992 = vpop.permute.xlu0 %1991
        %1993 = vrot.lane.b32.xlu0 %v1866, 96
        %v1994 = vpop.permute.xlu0 %1993
        %1995 = vrot.lane.b32.xlu0 %v1868, 96
        %v1996 = vpop.permute.xlu0 %1995
        %1997 = vrot.lane.b32.xlu0 %v1870, 96
        %v1998 = vpop.permute.xlu0 %1997
        %1999 = vrot.lane.b32.xlu0 %v1872, 96
        %v2000 = vpop.permute.xlu0 %1999
        %2001 = vrot.lane.b32.xlu0 %v1874, 96
        %v2002 = vpop.permute.xlu0 %2001
        %2003 = vrot.lane.b32.xlu0 %v1876, 96
        %v2004 = vpop.permute.xlu0 %2003
        %2005 = vrot.lane.b32.xlu0 %v1878, 96
        %v2006 = vpop.permute.xlu0 %2005
        %2007 = vrot.lane.b32.xlu0 %v1880, 96
        %v2008 = vpop.permute.xlu0 %2007
        %2009 = vrot.lane.b32.xlu0 %v1882, 96
        %v2010 = vpop.permute.xlu0 %2009
        %2011 = vrot.lane.b32.xlu0 %v1884, 96
        %v2012 = vpop.permute.xlu0 %2011
        %2013 = vrot.lane.b32.xlu0 %v1886, 96
        %v2014 = vpop.permute.xlu0 %2013
        %2015 = vrot.lane.b32.xlu0 %v1888, 96
        %v2016 = vpop.permute.xlu0 %2015
        %2017 = vrot.lane.b32.xlu0 %v1890, 96
        %v2018 = vpop.permute.xlu0 %2017
        %2019 = vrot.lane.b32.xlu0 %v1892, 96
        %v2020 = vpop.permute.xlu0 %2019
        %2021 = vrot.lane.b32.xlu0 %v1894, 96
        %v2022 = vpop.permute.xlu0 %2021
        %2023 = vrot.lane.b32.xlu0 %v1896, 96
        %v2024 = vpop.permute.xlu0 %2023
        %2025 = vrot.lane.b32.xlu0 %v1898, 96
        %v2026 = vpop.permute.xlu0 %2025
        %2027 = vrot.lane.b32.xlu0 %v1900, 96
        %v2028 = vpop.permute.xlu0 %2027
        %2029 = vrot.lane.b32.xlu0 %v1902, 96
        %v2030 = vpop.permute.xlu0 %2029
        %2031 = vrot.lane.b32.xlu0 %v1904, 96
        %v2032 = vpop.permute.xlu0 %2031
        %2033 = vrot.lane.b32.xlu0 %v1906, 96
        %v2034 = vpop.permute.xlu0 %2033
        %2035 = vrot.lane.b32.xlu0 %v1908, 96
        %v2036 = vpop.permute.xlu0 %2035
        %2037 = vrot.lane.b32.xlu0 %v1910, 96
        %v2038 = vpop.permute.xlu0 %2037
        %2039 = vrot.lane.b32.xlu0 %v1912, 96
        %v2040 = vpop.permute.xlu0 %2039
        %2041 = vrot.lane.b32.xlu0 %v1914, 96
        %v2042 = vpop.permute.xlu0 %2041
        %2043 = vrot.lane.b32.xlu0 %v1916, 96
        %v2044 = vpop.permute.xlu0 %2043
        %2045 = vrot.lane.b32.xlu0 %v1918, 96
        %v2046 = vpop.permute.xlu0 %2045
        %2047 = vrot.lane.b32.xlu0 %v1920, 96
        %v2048 = vpop.permute.xlu0 %2047
        %2049 = vrot.lane.b32.xlu0 %v1922, 96
        %v2050 = vpop.permute.xlu0 %2049
        %2051 = vrot.lane.b32.xlu0 %v1924, 96
        %v2052 = vpop.permute.xlu0 %2051
        %2053 = vrot.lane.b32.xlu0 %v1926, 96
        %v2054 = vpop.permute.xlu0 %2053
        %2055 = vrot.lane.b32.xlu0 %v1928, 96
        %v2056 = vpop.permute.xlu0 %2055
        %2057 = vrot.lane.b32.xlu0 %v1930, 96
        %v2058 = vpop.permute.xlu0 %2057
        %2059 = vrot.lane.b32.xlu0 %v1932, 96
        %v2060 = vpop.permute.xlu0 %2059
        %2061 = vrot.lane.b32.xlu0 %v1934, 96
        %v2062 = vpop.permute.xlu0 %2061
        %2063 = vrot.lane.b32.xlu0 %v1936, 96
        %v2064 = vpop.permute.xlu0 %2063
        %2065 = vrot.lane.b32.xlu0 %v1938, 96
        %v2066 = vpop.permute.xlu0 %2065
        %2067 = vrot.lane.b32.xlu0 %v1940, 96
        %v2068 = vpop.permute.xlu0 %2067
        %2069 = vrot.lane.b32.xlu0 %v1942, 96
        %v2070 = vpop.permute.xlu0 %2069
        %2071 = vrot.lane.b32.xlu0 %v1944, 96
        %v2072 = vpop.permute.xlu0 %2071
        %2073 = vrot.lane.b32.xlu0 %v1946, 96
        %v2074 = vpop.permute.xlu0 %2073
        %2075 = vrot.lane.b32.xlu0 %v1948, 96
        %v2076 = vpop.permute.xlu0 %2075
        %2077 = vrot.lane.b32.xlu0 %v1950, 96
        %v2078 = vpop.permute.xlu0 %2077
        %2079 = vrot.lane.b32.xlu0 %v1952, 96
        %v2080 = vpop.permute.xlu0 %2079
        %2081 = vrot.lane.b32.xlu0 %v1954, 96
        %v2082 = vpop.permute.xlu0 %2081
        %2083 = vrot.lane.b32.xlu0 %v1956, 96
        %v2084 = vpop.permute.xlu0 %2083
        %2085 = vrot.lane.b32.xlu0 %v1958, 96
        %v2086 = vpop.permute.xlu0 %2085
        %2087 = vrot.lane.b32.xlu0 %v1960, 96
        %v2088 = vpop.permute.xlu0 %2087
        %v2153 = vsel %vm1833, 0.0, %v1962
        %vm2154 = vcmp.lt.s32.totalorder %v1705, 0
        %v2155 = vsub.s32 0, %v1705
        %v2156 = vsel %vm2154, %v2155, %v1705
        %v2157 = vshrl.u32 %v2156, 8
        %v2158 = vand.u32 %v2156, 255
        %v2159 = vsub.s32 0, %v2158
        %v2160 = vsel %vm2154, %v2159, %v2158
        %vm2161 = vcmp.lt.s32.totalorder %v1706, 0
        %v2162 = vsub.s32 0, %v1706
        %v2163 = vsel %vm2161, %v2162, %v1706
        %v2164 = vshrl.u32 %v2163, 8
        %v2165 = vand.u32 %v2163, 255
        %v2166 = vsub.s32 0, %v2165
        %v2167 = vsel %vm2161, %v2166, %v2165
        %vm2168 = vcmp.lt.s32.totalorder %v1707, 0
        %v2169 = vsub.s32 0, %v1707
        %v2170 = vsel %vm2168, %v2169, %v1707
        %v2171 = vshrl.u32 %v2170, 8
        %v2172 = vand.u32 %v2170, 255
        %v2173 = vsub.s32 0, %v2172
        %v2174 = vsel %vm2168, %v2173, %v2172
        %vm2175 = vcmp.lt.s32.totalorder %v1708, 0
        %v2176 = vsub.s32 0, %v1708
        %v2177 = vsel %vm2175, %v2176, %v1708
        %v2178 = vshrl.u32 %v2177, 8
        %v2179 = vand.u32 %v2177, 255
        %v2180 = vsub.s32 0, %v2179
        %v2181 = vsel %vm2175, %v2180, %v2179
        %vm2182 = vcmp.lt.s32.totalorder %v1709, 0
        %v2183 = vsub.s32 0, %v1709
        %v2184 = vsel %vm2182, %v2183, %v1709
        %v2185 = vshrl.u32 %v2184, 8
        %v2186 = vand.u32 %v2184, 255
        %v2187 = vsub.s32 0, %v2186
        %v2188 = vsel %vm2182, %v2187, %v2186
        %vm2189 = vcmp.lt.s32.totalorder %v1710, 0
        %v2190 = vsub.s32 0, %v1710
        %v2191 = vsel %vm2189, %v2190, %v1710
        %v2192 = vshrl.u32 %v2191, 8
        %v2193 = vand.u32 %v2191, 255
        %v2194 = vsub.s32 0, %v2193
        %v2195 = vsel %vm2189, %v2194, %v2193
        %vm2196 = vcmp.lt.s32.totalorder %v1711, 0
        %v2197 = vsub.s32 0, %v1711
        %v2198 = vsel %vm2196, %v2197, %v1711
        %v2199 = vshrl.u32 %v2198, 8
        %v2200 = vand.u32 %v2198, 255
        %v2201 = vsub.s32 0, %v2200
        %v2202 = vsel %vm2196, %v2201, %v2200
        %vm2203 = vcmp.lt.s32.totalorder %v1712, 0
        %v2204 = vsub.s32 0, %v1712
        %v2205 = vsel %vm2203, %v2204, %v1712
        %v2206 = vshrl.u32 %v2205, 8
        %v2207 = vand.u32 %v2205, 255
        %v2208 = vsub.s32 0, %v2207
        %v2209 = vsel %vm2203, %v2208, %v2207
        %vm2210 = vcmp.lt.s32.totalorder %v1713, 0
        %v2211 = vsub.s32 0, %v1713
        %v2212 = vsel %vm2210, %v2211, %v1713
        %v2213 = vshrl.u32 %v2212, 8
        %v2214 = vand.u32 %v2212, 255
        %v2215 = vsub.s32 0, %v2214
        %v2216 = vsel %vm2210, %v2215, %v2214
        %vm2217 = vcmp.lt.s32.totalorder %v1714, 0
        %v2218 = vsub.s32 0, %v1714
        %v2219 = vsel %vm2217, %v2218, %v1714
        %v2220 = vshrl.u32 %v2219, 8
        %v2221 = vand.u32 %v2219, 255
        %v2222 = vsub.s32 0, %v2221
        %v2223 = vsel %vm2217, %v2222, %v2221
        %vm2224 = vcmp.lt.s32.totalorder %v1715, 0
        %v2225 = vsub.s32 0, %v1715
        %v2226 = vsel %vm2224, %v2225, %v1715
        %v2227 = vshrl.u32 %v2226, 8
        %v2228 = vand.u32 %v2226, 255
        %v2229 = vsub.s32 0, %v2228
        %v2230 = vsel %vm2224, %v2229, %v2228
        %vm2231 = vcmp.lt.s32.totalorder %v1716, 0
        %v2232 = vsub.s32 0, %v1716
        %v2233 = vsel %vm2231, %v2232, %v1716
        %v2234 = vshrl.u32 %v2233, 8
        %v2235 = vand.u32 %v2233, 255
        %v2236 = vsub.s32 0, %v2235
        %v2237 = vsel %vm2231, %v2236, %v2235
        %vm2238 = vcmp.lt.s32.totalorder %v1717, 0
        %v2239 = vsub.s32 0, %v1717
        %v2240 = vsel %vm2238, %v2239, %v1717
        %v2241 = vshrl.u32 %v2240, 8
        %v2242 = vand.u32 %v2240, 255
        %v2243 = vsub.s32 0, %v2242
        %v2244 = vsel %vm2238, %v2243, %v2242
        %vm2245 = vcmp.lt.s32.totalorder %v1718, 0
        %v2246 = vsub.s32 0, %v1718
        %v2247 = vsel %vm2245, %v2246, %v1718
        %v2248 = vshrl.u32 %v2247, 8
        %v2249 = vand.u32 %v2247, 255
        %v2250 = vsub.s32 0, %v2249
        %v2251 = vsel %vm2245, %v2250, %v2249
        %vm2252 = vcmp.lt.s32.totalorder %v1719, 0
        %v2253 = vsub.s32 0, %v1719
        %v2254 = vsel %vm2252, %v2253, %v1719
        %v2255 = vshrl.u32 %v2254, 8
        %v2256 = vand.u32 %v2254, 255
        %v2257 = vsub.s32 0, %v2256
        %v2258 = vsel %vm2252, %v2257, %v2256
        %vm2259 = vcmp.lt.s32.totalorder %v1720, 0
        %v2260 = vsub.s32 0, %v1720
        %v2261 = vsel %vm2259, %v2260, %v1720
        %v2262 = vshrl.u32 %v2261, 8
        %v2263 = vand.u32 %v2261, 255
        %v2264 = vsub.s32 0, %v2263
        %v2265 = vsel %vm2259, %v2264, %v2263
        %vm2266 = vcmp.lt.s32.totalorder %v1721, 0
        %v2267 = vsub.s32 0, %v1721
        %v2268 = vsel %vm2266, %v2267, %v1721
        %v2269 = vshrl.u32 %v2268, 8
        %v2270 = vand.u32 %v2268, 255
        %v2271 = vsub.s32 0, %v2270
        %v2272 = vsel %vm2266, %v2271, %v2270
        %vm2273 = vcmp.lt.s32.totalorder %v1722, 0
        %v2274 = vsub.s32 0, %v1722
        %v2275 = vsel %vm2273, %v2274, %v1722
        %v2276 = vshrl.u32 %v2275, 8
        %v2277 = vand.u32 %v2275, 255
        %v2278 = vsub.s32 0, %v2277
        %v2279 = vsel %vm2273, %v2278, %v2277
        %vm2280 = vcmp.lt.s32.totalorder %v1723, 0
        %v2281 = vsub.s32 0, %v1723
        %v2282 = vsel %vm2280, %v2281, %v1723
        %v2283 = vshrl.u32 %v2282, 8
        %v2284 = vand.u32 %v2282, 255
        %v2285 = vsub.s32 0, %v2284
        %v2286 = vsel %vm2280, %v2285, %v2284
        %vm2287 = vcmp.lt.s32.totalorder %v1724, 0
        %v2288 = vsub.s32 0, %v1724
        %v2289 = vsel %vm2287, %v2288, %v1724
        %v2290 = vshrl.u32 %v2289, 8
        %v2291 = vand.u32 %v2289, 255
        %v2292 = vsub.s32 0, %v2291
        %v2293 = vsel %vm2287, %v2292, %v2291
        %vm2294 = vcmp.lt.s32.totalorder %v1725, 0
        %v2295 = vsub.s32 0, %v1725
        %v2296 = vsel %vm2294, %v2295, %v1725
        %v2297 = vshrl.u32 %v2296, 8
        %v2298 = vand.u32 %v2296, 255
        %v2299 = vsub.s32 0, %v2298
        %v2300 = vsel %vm2294, %v2299, %v2298
        %vm2301 = vcmp.lt.s32.totalorder %v1726, 0
        %v2302 = vsub.s32 0, %v1726
        %v2303 = vsel %vm2301, %v2302, %v1726
        %v2304 = vshrl.u32 %v2303, 8
        %v2305 = vand.u32 %v2303, 255
        %v2306 = vsub.s32 0, %v2305
        %v2307 = vsel %vm2301, %v2306, %v2305
        %vm2308 = vcmp.lt.s32.totalorder %v1727, 0
        %v2309 = vsub.s32 0, %v1727
        %v2310 = vsel %vm2308, %v2309, %v1727
        %v2311 = vshrl.u32 %v2310, 8
        %v2312 = vand.u32 %v2310, 255
        %v2313 = vsub.s32 0, %v2312
        %v2314 = vsel %vm2308, %v2313, %v2312
        %vm2315 = vcmp.lt.s32.totalorder %v1728, 0
        %v2316 = vsub.s32 0, %v1728
        %v2317 = vsel %vm2315, %v2316, %v1728
        %v2318 = vshrl.u32 %v2317, 8
        %v2319 = vand.u32 %v2317, 255
        %v2320 = vsub.s32 0, %v2319
        %v2321 = vsel %vm2315, %v2320, %v2319
        %vm2322 = vcmp.lt.s32.totalorder %v1729, 0
        %v2323 = vsub.s32 0, %v1729
        %v2324 = vsel %vm2322, %v2323, %v1729
        %v2325 = vshrl.u32 %v2324, 8
        %v2326 = vand.u32 %v2324, 255
        %v2327 = vsub.s32 0, %v2326
        %v2328 = vsel %vm2322, %v2327, %v2326
        %vm2329 = vcmp.lt.s32.totalorder %v1730, 0
        %v2330 = vsub.s32 0, %v1730
        %v2331 = vsel %vm2329, %v2330, %v1730
        %v2332 = vshrl.u32 %v2331, 8
        %v2333 = vand.u32 %v2331, 255
        %v2334 = vsub.s32 0, %v2333
        %v2335 = vsel %vm2329, %v2334, %v2333
        %vm2336 = vcmp.lt.s32.totalorder %v1731, 0
        %v2337 = vsub.s32 0, %v1731
        %v2338 = vsel %vm2336, %v2337, %v1731
        %v2339 = vshrl.u32 %v2338, 8
        %v2340 = vand.u32 %v2338, 255
        %v2341 = vsub.s32 0, %v2340
        %v2342 = vsel %vm2336, %v2341, %v2340
        %vm2343 = vcmp.lt.s32.totalorder %v1732, 0
        %v2344 = vsub.s32 0, %v1732
        %v2345 = vsel %vm2343, %v2344, %v1732
        %v2346 = vshrl.u32 %v2345, 8
        %v2347 = vand.u32 %v2345, 255
        %v2348 = vsub.s32 0, %v2347
        %v2349 = vsel %vm2343, %v2348, %v2347
        %vm2350 = vcmp.lt.s32.totalorder %v1733, 0
        %v2351 = vsub.s32 0, %v1733
        %v2352 = vsel %vm2350, %v2351, %v1733
        %v2353 = vshrl.u32 %v2352, 8
        %v2354 = vand.u32 %v2352, 255
        %v2355 = vsub.s32 0, %v2354
        %v2356 = vsel %vm2350, %v2355, %v2354
        %vm2357 = vcmp.lt.s32.totalorder %v1734, 0
        %v2358 = vsub.s32 0, %v1734
        %v2359 = vsel %vm2357, %v2358, %v1734
        %v2360 = vshrl.u32 %v2359, 8
        %v2361 = vand.u32 %v2359, 255
        %v2362 = vsub.s32 0, %v2361
        %v2363 = vsel %vm2357, %v2362, %v2361
        %vm2364 = vcmp.lt.s32.totalorder %v1735, 0
        %v2365 = vsub.s32 0, %v1735
        %v2366 = vsel %vm2364, %v2365, %v1735
        %v2367 = vshrl.u32 %v2366, 8
        %v2368 = vand.u32 %v2366, 255
        %v2369 = vsub.s32 0, %v2368
        %v2370 = vsel %vm2364, %v2369, %v2368
        %vm2371 = vcmp.lt.s32.totalorder %v1736, 0
        %v2372 = vsub.s32 0, %v1736
        %v2373 = vsel %vm2371, %v2372, %v1736
        %v2374 = vshrl.u32 %v2373, 8
        %v2375 = vand.u32 %v2373, 255
        %v2376 = vsub.s32 0, %v2375
        %v2377 = vsel %vm2371, %v2376, %v2375
        %vm2378 = vcmp.lt.s32.totalorder %v1737, 0
        %v2379 = vsub.s32 0, %v1737
        %v2380 = vsel %vm2378, %v2379, %v1737
        %v2381 = vshrl.u32 %v2380, 8
        %v2382 = vand.u32 %v2380, 255
        %v2383 = vsub.s32 0, %v2382
        %v2384 = vsel %vm2378, %v2383, %v2382
        %vm2385 = vcmp.lt.s32.totalorder %v1738, 0
        %v2386 = vsub.s32 0, %v1738
        %v2387 = vsel %vm2385, %v2386, %v1738
        %v2388 = vshrl.u32 %v2387, 8
        %v2389 = vand.u32 %v2387, 255
        %v2390 = vsub.s32 0, %v2389
        %v2391 = vsel %vm2385, %v2390, %v2389
        %vm2392 = vcmp.lt.s32.totalorder %v1739, 0
        %v2393 = vsub.s32 0, %v1739
        %v2394 = vsel %vm2392, %v2393, %v1739
        %v2395 = vshrl.u32 %v2394, 8
        %v2396 = vand.u32 %v2394, 255
        %v2397 = vsub.s32 0, %v2396
        %v2398 = vsel %vm2392, %v2397, %v2396
        %vm2399 = vcmp.lt.s32.totalorder %v1740, 0
        %v2400 = vsub.s32 0, %v1740
        %v2401 = vsel %vm2399, %v2400, %v1740
        %v2402 = vshrl.u32 %v2401, 8
        %v2403 = vand.u32 %v2401, 255
        %v2404 = vsub.s32 0, %v2403
        %v2405 = vsel %vm2399, %v2404, %v2403
        %vm2406 = vcmp.lt.s32.totalorder %v1741, 0
        %v2407 = vsub.s32 0, %v1741
        %v2408 = vsel %vm2406, %v2407, %v1741
        %v2409 = vshrl.u32 %v2408, 8
        %v2410 = vand.u32 %v2408, 255
        %v2411 = vsub.s32 0, %v2410
        %v2412 = vsel %vm2406, %v2411, %v2410
        %vm2413 = vcmp.lt.s32.totalorder %v1742, 0
        %v2414 = vsub.s32 0, %v1742
        %v2415 = vsel %vm2413, %v2414, %v1742
        %v2416 = vshrl.u32 %v2415, 8
        %v2417 = vand.u32 %v2415, 255
        %v2418 = vsub.s32 0, %v2417
        %v2419 = vsel %vm2413, %v2418, %v2417
        %vm2420 = vcmp.lt.s32.totalorder %v1743, 0
        %v2421 = vsub.s32 0, %v1743
        %v2422 = vsel %vm2420, %v2421, %v1743
        %v2423 = vshrl.u32 %v2422, 8
        %v2424 = vand.u32 %v2422, 255
        %v2425 = vsub.s32 0, %v2424
        %v2426 = vsel %vm2420, %v2425, %v2424
        %vm2427 = vcmp.lt.s32.totalorder %v1744, 0
        %v2428 = vsub.s32 0, %v1744
        %v2429 = vsel %vm2427, %v2428, %v1744
        %v2430 = vshrl.u32 %v2429, 8
        %v2431 = vand.u32 %v2429, 255
        %v2432 = vsub.s32 0, %v2431
        %v2433 = vsel %vm2427, %v2432, %v2431
        %vm2434 = vcmp.lt.s32.totalorder %v1745, 0
        %v2435 = vsub.s32 0, %v1745
        %v2436 = vsel %vm2434, %v2435, %v1745
        %v2437 = vshrl.u32 %v2436, 8
        %v2438 = vand.u32 %v2436, 255
        %v2439 = vsub.s32 0, %v2438
        %v2440 = vsel %vm2434, %v2439, %v2438
        %vm2441 = vcmp.lt.s32.totalorder %v1746, 0
        %v2442 = vsub.s32 0, %v1746
        %v2443 = vsel %vm2441, %v2442, %v1746
        %v2444 = vshrl.u32 %v2443, 8
        %v2445 = vand.u32 %v2443, 255
        %v2446 = vsub.s32 0, %v2445
        %v2447 = vsel %vm2441, %v2446, %v2445
        %vm2448 = vcmp.lt.s32.totalorder %v1747, 0
        %v2449 = vsub.s32 0, %v1747
        %v2450 = vsel %vm2448, %v2449, %v1747
        %v2451 = vshrl.u32 %v2450, 8
        %v2452 = vand.u32 %v2450, 255
        %v2453 = vsub.s32 0, %v2452
        %v2454 = vsel %vm2448, %v2453, %v2452
        %vm2455 = vcmp.lt.s32.totalorder %v1748, 0
        %v2456 = vsub.s32 0, %v1748
        %v2457 = vsel %vm2455, %v2456, %v1748
        %v2458 = vshrl.u32 %v2457, 8
        %v2459 = vand.u32 %v2457, 255
        %v2460 = vsub.s32 0, %v2459
        %v2461 = vsel %vm2455, %v2460, %v2459
        %vm2462 = vcmp.lt.s32.totalorder %v1749, 0
        %v2463 = vsub.s32 0, %v1749
        %v2464 = vsel %vm2462, %v2463, %v1749
        %v2465 = vshrl.u32 %v2464, 8
        %v2466 = vand.u32 %v2464, 255
        %v2467 = vsub.s32 0, %v2466
        %v2468 = vsel %vm2462, %v2467, %v2466
        %vm2469 = vcmp.lt.s32.totalorder %v1750, 0
        %v2470 = vsub.s32 0, %v1750
        %v2471 = vsel %vm2469, %v2470, %v1750
        %v2472 = vshrl.u32 %v2471, 8
        %v2473 = vand.u32 %v2471, 255
        %v2474 = vsub.s32 0, %v2473
        %v2475 = vsel %vm2469, %v2474, %v2473
        %vm2476 = vcmp.lt.s32.totalorder %v1751, 0
        %v2477 = vsub.s32 0, %v1751
        %v2478 = vsel %vm2476, %v2477, %v1751
        %v2479 = vshrl.u32 %v2478, 8
        %v2480 = vand.u32 %v2478, 255
        %v2481 = vsub.s32 0, %v2480
        %v2482 = vsel %vm2476, %v2481, %v2480
        %vm2483 = vcmp.lt.s32.totalorder %v1752, 0
        %v2484 = vsub.s32 0, %v1752
        %v2485 = vsel %vm2483, %v2484, %v1752
        %v2486 = vshrl.u32 %v2485, 8
        %v2487 = vand.u32 %v2485, 255
        %v2488 = vsub.s32 0, %v2487
        %v2489 = vsel %vm2483, %v2488, %v2487
        %vm2490 = vcmp.lt.s32.totalorder %v1753, 0
        %v2491 = vsub.s32 0, %v1753
        %v2492 = vsel %vm2490, %v2491, %v1753
        %v2493 = vshrl.u32 %v2492, 8
        %v2494 = vand.u32 %v2492, 255
        %v2495 = vsub.s32 0, %v2494
        %v2496 = vsel %vm2490, %v2495, %v2494
        %vm2497 = vcmp.lt.s32.totalorder %v1754, 0
        %v2498 = vsub.s32 0, %v1754
        %v2499 = vsel %vm2497, %v2498, %v1754
        %v2500 = vshrl.u32 %v2499, 8
        %v2501 = vand.u32 %v2499, 255
        %v2502 = vsub.s32 0, %v2501
        %v2503 = vsel %vm2497, %v2502, %v2501
        %vm2504 = vcmp.lt.s32.totalorder %v1755, 0
        %v2505 = vsub.s32 0, %v1755
        %v2506 = vsel %vm2504, %v2505, %v1755
        %v2507 = vshrl.u32 %v2506, 8
        %v2508 = vand.u32 %v2506, 255
        %v2509 = vsub.s32 0, %v2508
        %v2510 = vsel %vm2504, %v2509, %v2508
        %vm2511 = vcmp.lt.s32.totalorder %v1756, 0
        %v2512 = vsub.s32 0, %v1756
        %v2513 = vsel %vm2511, %v2512, %v1756
        %v2514 = vshrl.u32 %v2513, 8
        %v2515 = vand.u32 %v2513, 255
        %v2516 = vsub.s32 0, %v2515
        %v2517 = vsel %vm2511, %v2516, %v2515
        %vm2518 = vcmp.lt.s32.totalorder %v1757, 0
        %v2519 = vsub.s32 0, %v1757
        %v2520 = vsel %vm2518, %v2519, %v1757
        %v2521 = vshrl.u32 %v2520, 8
        %v2522 = vand.u32 %v2520, 255
        %v2523 = vsub.s32 0, %v2522
        %v2524 = vsel %vm2518, %v2523, %v2522
        %vm2525 = vcmp.lt.s32.totalorder %v1758, 0
        %v2526 = vsub.s32 0, %v1758
        %v2527 = vsel %vm2525, %v2526, %v1758
        %v2528 = vshrl.u32 %v2527, 8
        %v2529 = vand.u32 %v2527, 255
        %v2530 = vsub.s32 0, %v2529
        %v2531 = vsel %vm2525, %v2530, %v2529
        %vm2532 = vcmp.lt.s32.totalorder %v1759, 0
        %v2533 = vsub.s32 0, %v1759
        %v2534 = vsel %vm2532, %v2533, %v1759
        %v2535 = vshrl.u32 %v2534, 8
        %v2536 = vand.u32 %v2534, 255
        %v2537 = vsub.s32 0, %v2536
        %v2538 = vsel %vm2532, %v2537, %v2536
        %vm2539 = vcmp.lt.s32.totalorder %v1760, 0
        %v2540 = vsub.s32 0, %v1760
        %v2541 = vsel %vm2539, %v2540, %v1760
        %v2542 = vshrl.u32 %v2541, 8
        %v2543 = vand.u32 %v2541, 255
        %v2544 = vsub.s32 0, %v2543
        %v2545 = vsel %vm2539, %v2544, %v2543
        %vm2546 = vcmp.lt.s32.totalorder %v1761, 0
        %v2547 = vsub.s32 0, %v1761
        %v2548 = vsel %vm2546, %v2547, %v1761
        %v2549 = vshrl.u32 %v2548, 8
        %v2550 = vand.u32 %v2548, 255
        %v2551 = vsub.s32 0, %v2550
        %v2552 = vsel %vm2546, %v2551, %v2550
        %vm2553 = vcmp.lt.s32.totalorder %v1762, 0
        %v2554 = vsub.s32 0, %v1762
        %v2555 = vsel %vm2553, %v2554, %v1762
        %v2556 = vshrl.u32 %v2555, 8
        %v2557 = vand.u32 %v2555, 255
        %v2558 = vsub.s32 0, %v2557
        %v2559 = vsel %vm2553, %v2558, %v2557
        %vm2560 = vcmp.lt.s32.totalorder %v1763, 0
        %v2561 = vsub.s32 0, %v1763
        %v2562 = vsel %vm2560, %v2561, %v1763
        %v2563 = vshrl.u32 %v2562, 8
        %v2564 = vand.u32 %v2562, 255
        %v2565 = vsub.s32 0, %v2564
        %v2566 = vsel %vm2560, %v2565, %v2564
        %vm2567 = vcmp.lt.s32.totalorder %v1764, 0
        %v2568 = vsub.s32 0, %v1764
        %v2569 = vsel %vm2567, %v2568, %v1764
        %v2570 = vshrl.u32 %v2569, 8
        %v2571 = vand.u32 %v2569, 255
        %v2572 = vsub.s32 0, %v2571
        %v2573 = vsel %vm2567, %v2572, %v2571
        %vm2574 = vcmp.lt.s32.totalorder %v1765, 0
        %v2575 = vsub.s32 0, %v1765
        %v2576 = vsel %vm2574, %v2575, %v1765
        %v2577 = vshrl.u32 %v2576, 8
        %v2578 = vand.u32 %v2576, 255
        %v2579 = vsub.s32 0, %v2578
        %v2580 = vsel %vm2574, %v2579, %v2578
        %vm2581 = vcmp.lt.s32.totalorder %v1766, 0
        %v2582 = vsub.s32 0, %v1766
        %v2583 = vsel %vm2581, %v2582, %v1766
        %v2584 = vshrl.u32 %v2583, 8
        %v2585 = vand.u32 %v2583, 255
        %v2586 = vsub.s32 0, %v2585
        %v2587 = vsel %vm2581, %v2586, %v2585
        %vm2588 = vcmp.lt.s32.totalorder %v1767, 0
        %v2589 = vsub.s32 0, %v1767
        %v2590 = vsel %vm2588, %v2589, %v1767
        %v2591 = vshrl.u32 %v2590, 8
        %v2592 = vand.u32 %v2590, 255
        %v2593 = vsub.s32 0, %v2592
        %v2594 = vsel %vm2588, %v2593, %v2592
        %vm2595 = vcmp.lt.s32.totalorder %v1768, 0
        %v2596 = vsub.s32 0, %v1768
        %v2597 = vsel %vm2595, %v2596, %v1768
        %v2598 = vshrl.u32 %v2597, 8
        %v2599 = vand.u32 %v2597, 255
        %v2600 = vsub.s32 0, %v2599
        %v2601 = vsel %vm2595, %v2600, %v2599
        %vm2602 = vcmp.ne.s32.totalorder %v2160, 0
        %vm2603 = vcmp.ne.s32.totalorder %v2167, 0
        %vm2604 = vcmp.ne.s32.totalorder %v2174, 0
        %vm2605 = vcmp.ne.s32.totalorder %v2181, 0
        %vm2606 = vcmp.ne.s32.totalorder %v2188, 0
        %vm2607 = vcmp.ne.s32.totalorder %v2195, 0
        %vm2608 = vcmp.ne.s32.totalorder %v2202, 0
        %vm2609 = vcmp.ne.s32.totalorder %v2209, 0
        %vm2610 = vcmp.ne.s32.totalorder %v2216, 0
        %vm2611 = vcmp.ne.s32.totalorder %v2223, 0
        %vm2612 = vcmp.ne.s32.totalorder %v2230, 0
        %vm2613 = vcmp.ne.s32.totalorder %v2237, 0
        %vm2614 = vcmp.ne.s32.totalorder %v2244, 0
        %vm2615 = vcmp.ne.s32.totalorder %v2251, 0
        %vm2616 = vcmp.ne.s32.totalorder %v2258, 0
        %vm2617 = vcmp.ne.s32.totalorder %v2265, 0
        %vm2618 = vcmp.ne.s32.totalorder %v2272, 0
        %vm2619 = vcmp.ne.s32.totalorder %v2279, 0
        %vm2620 = vcmp.ne.s32.totalorder %v2286, 0
        %vm2621 = vcmp.ne.s32.totalorder %v2293, 0
        %vm2622 = vcmp.ne.s32.totalorder %v2300, 0
        %vm2623 = vcmp.ne.s32.totalorder %v2307, 0
        %vm2624 = vcmp.ne.s32.totalorder %v2314, 0
        %vm2625 = vcmp.ne.s32.totalorder %v2321, 0
        %vm2626 = vcmp.ne.s32.totalorder %v2328, 0
        %vm2627 = vcmp.ne.s32.totalorder %v2335, 0
        %vm2628 = vcmp.ne.s32.totalorder %v2342, 0
        %vm2629 = vcmp.ne.s32.totalorder %v2349, 0
        %vm2630 = vcmp.ne.s32.totalorder %v2356, 0
        %vm2631 = vcmp.ne.s32.totalorder %v2363, 0
        %vm2632 = vcmp.ne.s32.totalorder %v2370, 0
        %vm2633 = vcmp.ne.s32.totalorder %v2377, 0
        %vm2634 = vcmp.ne.s32.totalorder %v2384, 0
        %vm2635 = vcmp.ne.s32.totalorder %v2391, 0
        %vm2636 = vcmp.ne.s32.totalorder %v2398, 0
        %vm2637 = vcmp.ne.s32.totalorder %v2405, 0
        %vm2638 = vcmp.ne.s32.totalorder %v2412, 0
        %vm2639 = vcmp.ne.s32.totalorder %v2419, 0
        %vm2640 = vcmp.ne.s32.totalorder %v2426, 0
        %vm2641 = vcmp.ne.s32.totalorder %v2433, 0
        %vm2642 = vcmp.ne.s32.totalorder %v2440, 0
        %vm2643 = vcmp.ne.s32.totalorder %v2447, 0
        %vm2644 = vcmp.ne.s32.totalorder %v2454, 0
        %vm2645 = vcmp.ne.s32.totalorder %v2461, 0
        %vm2646 = vcmp.ne.s32.totalorder %v2468, 0
        %vm2647 = vcmp.ne.s32.totalorder %v2475, 0
        %vm2648 = vcmp.ne.s32.totalorder %v2482, 0
        %vm2649 = vcmp.ne.s32.totalorder %v2489, 0
        %vm2650 = vcmp.ne.s32.totalorder %v2496, 0
        %vm2651 = vcmp.ne.s32.totalorder %v2503, 0
        %vm2652 = vcmp.ne.s32.totalorder %v2510, 0
        %vm2653 = vcmp.ne.s32.totalorder %v2517, 0
        %vm2654 = vcmp.ne.s32.totalorder %v2524, 0
        %vm2655 = vcmp.ne.s32.totalorder %v2531, 0
        %vm2656 = vcmp.ne.s32.totalorder %v2538, 0
        %vm2657 = vcmp.ne.s32.totalorder %v2545, 0
        %vm2658 = vcmp.ne.s32.totalorder %v2552, 0
        %vm2659 = vcmp.ne.s32.totalorder %v2559, 0
        %vm2660 = vcmp.ne.s32.totalorder %v2566, 0
        %vm2661 = vcmp.ne.s32.totalorder %v2573, 0
        %vm2662 = vcmp.ne.s32.totalorder %v2580, 0
        %vm2663 = vcmp.ne.s32.totalorder %v2587, 0
        %vm2664 = vcmp.ne.s32.totalorder %v2594, 0
        %vm2665 = vcmp.ne.s32.totalorder %v2601, 0
        %vm2666 = vcmp.lt.s32.totalorder %v2160, 0
        %vm2667 = vcmp.lt.s32.totalorder %v2167, 0
        %vm2668 = vcmp.lt.s32.totalorder %v2174, 0
        %vm2669 = vcmp.lt.s32.totalorder %v2181, 0
        %vm2670 = vcmp.lt.s32.totalorder %v2188, 0
        %vm2671 = vcmp.lt.s32.totalorder %v2195, 0
        %vm2672 = vcmp.lt.s32.totalorder %v2202, 0
        %vm2673 = vcmp.lt.s32.totalorder %v2209, 0
        %vm2674 = vcmp.lt.s32.totalorder %v2216, 0
        %vm2675 = vcmp.lt.s32.totalorder %v2223, 0
        %vm2676 = vcmp.lt.s32.totalorder %v2230, 0
        %vm2677 = vcmp.lt.s32.totalorder %v2237, 0
        %vm2678 = vcmp.lt.s32.totalorder %v2244, 0
        %vm2679 = vcmp.lt.s32.totalorder %v2251, 0
        %vm2680 = vcmp.lt.s32.totalorder %v2258, 0
        %vm2681 = vcmp.lt.s32.totalorder %v2265, 0
        %vm2682 = vcmp.lt.s32.totalorder %v2272, 0
        %vm2683 = vcmp.lt.s32.totalorder %v2279, 0
        %vm2684 = vcmp.lt.s32.totalorder %v2286, 0
        %vm2685 = vcmp.lt.s32.totalorder %v2293, 0
        %vm2686 = vcmp.lt.s32.totalorder %v2300, 0
        %vm2687 = vcmp.lt.s32.totalorder %v2307, 0
        %vm2688 = vcmp.lt.s32.totalorder %v2314, 0
        %vm2689 = vcmp.lt.s32.totalorder %v2321, 0
        %vm2690 = vcmp.lt.s32.totalorder %v2328, 0
        %vm2691 = vcmp.lt.s32.totalorder %v2335, 0
        %vm2692 = vcmp.lt.s32.totalorder %v2342, 0
        %vm2693 = vcmp.lt.s32.totalorder %v2349, 0
        %vm2694 = vcmp.lt.s32.totalorder %v2356, 0
        %vm2695 = vcmp.lt.s32.totalorder %v2363, 0
        %vm2696 = vcmp.lt.s32.totalorder %v2370, 0
        %vm2697 = vcmp.lt.s32.totalorder %v2377, 0
        %vm2698 = vcmp.lt.s32.totalorder %v2384, 0
        %vm2699 = vcmp.lt.s32.totalorder %v2391, 0
        %vm2700 = vcmp.lt.s32.totalorder %v2398, 0
        %vm2701 = vcmp.lt.s32.totalorder %v2405, 0
        %vm2702 = vcmp.lt.s32.totalorder %v2412, 0
        %vm2703 = vcmp.lt.s32.totalorder %v2419, 0
        %vm2704 = vcmp.lt.s32.totalorder %v2426, 0
        %vm2705 = vcmp.lt.s32.totalorder %v2433, 0
        %vm2706 = vcmp.lt.s32.totalorder %v2440, 0
        %vm2707 = vcmp.lt.s32.totalorder %v2447, 0
        %vm2708 = vcmp.lt.s32.totalorder %v2454, 0
        %vm2709 = vcmp.lt.s32.totalorder %v2461, 0
        %vm2710 = vcmp.lt.s32.totalorder %v2468, 0
        %vm2711 = vcmp.lt.s32.totalorder %v2475, 0
        %vm2712 = vcmp.lt.s32.totalorder %v2482, 0
        %vm2713 = vcmp.lt.s32.totalorder %v2489, 0
        %vm2714 = vcmp.lt.s32.totalorder %v2496, 0
        %vm2715 = vcmp.lt.s32.totalorder %v2503, 0
        %vm2716 = vcmp.lt.s32.totalorder %v2510, 0
        %vm2717 = vcmp.lt.s32.totalorder %v2517, 0
        %vm2718 = vcmp.lt.s32.totalorder %v2524, 0
        %vm2719 = vcmp.lt.s32.totalorder %v2531, 0
        %vm2720 = vcmp.lt.s32.totalorder %v2538, 0
        %vm2721 = vcmp.lt.s32.totalorder %v2545, 0
        %vm2722 = vcmp.lt.s32.totalorder %v2552, 0
        %vm2723 = vcmp.lt.s32.totalorder %v2559, 0
        %vm2724 = vcmp.lt.s32.totalorder %v2566, 0
        %vm2725 = vcmp.lt.s32.totalorder %v2573, 0
        %vm2726 = vcmp.lt.s32.totalorder %v2580, 0
        %vm2727 = vcmp.lt.s32.totalorder %v2587, 0
        %vm2728 = vcmp.lt.s32.totalorder %v2594, 0
        %vm2729 = vcmp.lt.s32.totalorder %v2601, 0
        %vm2730 = vmand %vm2666, %vm2602
        %vm2731 = vmand %vm2667, %vm2603
        %vm2732 = vmand %vm2668, %vm2604
        %vm2733 = vmand %vm2669, %vm2605
        %vm2734 = vmand %vm2670, %vm2606
        %vm2735 = vmand %vm2671, %vm2607
        %vm2736 = vmand %vm2672, %vm2608
        %vm2737 = vmand %vm2673, %vm2609
        %vm2738 = vmand %vm2674, %vm2610
        %vm2739 = vmand %vm2675, %vm2611
        %vm2740 = vmand %vm2676, %vm2612
        %vm2741 = vmand %vm2677, %vm2613
        %vm2742 = vmand %vm2678, %vm2614
        %vm2743 = vmand %vm2679, %vm2615
        %vm2744 = vmand %vm2680, %vm2616
        %vm2745 = vmand %vm2681, %vm2617
        %vm2746 = vmand %vm2682, %vm2618
        %vm2747 = vmand %vm2683, %vm2619
        %vm2748 = vmand %vm2684, %vm2620
        %vm2749 = vmand %vm2685, %vm2621
        %vm2750 = vmand %vm2686, %vm2622
        %vm2751 = vmand %vm2687, %vm2623
        %vm2752 = vmand %vm2688, %vm2624
        %vm2753 = vmand %vm2689, %vm2625
        %vm2754 = vmand %vm2690, %vm2626
        %vm2755 = vmand %vm2691, %vm2627
        %vm2756 = vmand %vm2692, %vm2628
        %vm2757 = vmand %vm2693, %vm2629
        %vm2758 = vmand %vm2694, %vm2630
        %vm2759 = vmand %vm2695, %vm2631
        %vm2760 = vmand %vm2696, %vm2632
        %vm2761 = vmand %vm2697, %vm2633
        %vm2762 = vmand %vm2698, %vm2634
        %vm2763 = vmand %vm2699, %vm2635
        %vm2764 = vmand %vm2700, %vm2636
        %vm2765 = vmand %vm2701, %vm2637
        %vm2766 = vmand %vm2702, %vm2638
        %vm2767 = vmand %vm2703, %vm2639
        %vm2768 = vmand %vm2704, %vm2640
        %vm2769 = vmand %vm2705, %vm2641
        %vm2770 = vmand %vm2706, %vm2642
        %vm2771 = vmand %vm2707, %vm2643
        %vm2772 = vmand %vm2708, %vm2644
        %vm2773 = vmand %vm2709, %vm2645
        %vm2774 = vmand %vm2710, %vm2646
        %vm2775 = vmand %vm2711, %vm2647
        %vm2776 = vmand %vm2712, %vm2648
        %vm2777 = vmand %vm2713, %vm2649
        %vm2778 = vmand %vm2714, %vm2650
        %vm2779 = vmand %vm2715, %vm2651
        %vm2780 = vmand %vm2716, %vm2652
        %vm2781 = vmand %vm2717, %vm2653
        %vm2782 = vmand %vm2718, %vm2654
        %vm2783 = vmand %vm2719, %vm2655
        %vm2784 = vmand %vm2720, %vm2656
        %vm2785 = vmand %vm2721, %vm2657
        %vm2786 = vmand %vm2722, %vm2658
        %vm2787 = vmand %vm2723, %vm2659
        %vm2788 = vmand %vm2724, %vm2660
        %vm2789 = vmand %vm2725, %vm2661
        %vm2790 = vmand %vm2726, %vm2662
        %vm2791 = vmand %vm2727, %vm2663
        %vm2792 = vmand %vm2728, %vm2664
        %vm2793 = vmand %vm2729, %vm2665
        %v2794 = vadd.s32 %v2160, 256
        %v2795 = vadd.s32 %v2167, 256
        %v2796 = vadd.s32 %v2174, 256
        %v2797 = vadd.s32 %v2181, 256
        %v2798 = vadd.s32 %v2188, 256
        %v2799 = vadd.s32 %v2195, 256
        %v2800 = vadd.s32 %v2202, 256
        %v2801 = vadd.s32 %v2209, 256
        %v2802 = vadd.s32 %v2216, 256
        %v2803 = vadd.s32 %v2223, 256
        %v2804 = vadd.s32 %v2230, 256
        %v2805 = vadd.s32 %v2237, 256
        %v2806 = vadd.s32 %v2244, 256
        %v2807 = vadd.s32 %v2251, 256
        %v2808 = vadd.s32 %v2258, 256
        %v2809 = vadd.s32 %v2265, 256
        %v2810 = vadd.s32 %v2272, 256
        %v2811 = vadd.s32 %v2279, 256
        %v2812 = vadd.s32 %v2286, 256
        %v2813 = vadd.s32 %v2293, 256
        %v2814 = vadd.s32 %v2300, 256
        %v2815 = vadd.s32 %v2307, 256
        %v2816 = vadd.s32 %v2314, 256
        %v2817 = vadd.s32 %v2321, 256
        %v2818 = vadd.s32 %v2328, 256
        %v2819 = vadd.s32 %v2335, 256
        %v2820 = vadd.s32 %v2342, 256
        %v2821 = vadd.s32 %v2349, 256
        %v2822 = vadd.s32 %v2356, 256
        %v2823 = vadd.s32 %v2363, 256
        %v2824 = vadd.s32 %v2370, 256
        %v2825 = vadd.s32 %v2377, 256
        %v2826 = vadd.s32 %v2384, 256
        %v2827 = vadd.s32 %v2391, 256
        %v2828 = vadd.s32 %v2398, 256
        %v2829 = vadd.s32 %v2405, 256
        %v2830 = vadd.s32 %v2412, 256
        %v2831 = vadd.s32 %v2419, 256
        %v2832 = vadd.s32 %v2426, 256
        %v2833 = vadd.s32 %v2433, 256
        %v2834 = vadd.s32 %v2440, 256
        %v2835 = vadd.s32 %v2447, 256
        %v2836 = vadd.s32 %v2454, 256
        %v2837 = vadd.s32 %v2461, 256
        %v2838 = vadd.s32 %v2468, 256
        %v2839 = vadd.s32 %v2475, 256
        %v2840 = vadd.s32 %v2482, 256
        %v2841 = vadd.s32 %v2489, 256
        %v2842 = vadd.s32 %v2496, 256
        %v2843 = vadd.s32 %v2503, 256
        %v2844 = vadd.s32 %v2510, 256
        %v2845 = vadd.s32 %v2517, 256
        %v2846 = vadd.s32 %v2524, 256
        %v2847 = vadd.s32 %v2531, 256
        %v2848 = vadd.s32 %v2538, 256
        %v2849 = vadd.s32 %v2545, 256
        %v2850 = vadd.s32 %v2552, 256
        %v2851 = vadd.s32 %v2559, 256
        %v2852 = vadd.s32 %v2566, 256
        %v2853 = vadd.s32 %v2573, 256
        %v2854 = vadd.s32 %v2580, 256
        %v2855 = vadd.s32 %v2587, 256
        %v2856 = vadd.s32 %v2594, 256
        %v2857 = vadd.s32 %v2601, 256
        %v2858 = vsel %vm2730, %v2794, %v2160
        %v2859 = vsel %vm2731, %v2795, %v2167
        %v2860 = vsel %vm2732, %v2796, %v2174
        %v2861 = vsel %vm2733, %v2797, %v2181
        %v2862 = vsel %vm2734, %v2798, %v2188
        %v2863 = vsel %vm2735, %v2799, %v2195
        %v2864 = vsel %vm2736, %v2800, %v2202
        %v2865 = vsel %vm2737, %v2801, %v2209
        %v2866 = vsel %vm2738, %v2802, %v2216
        %v2867 = vsel %vm2739, %v2803, %v2223
        %v2868 = vsel %vm2740, %v2804, %v2230
        %v2869 = vsel %vm2741, %v2805, %v2237
        %v2870 = vsel %vm2742, %v2806, %v2244
        %v2871 = vsel %vm2743, %v2807, %v2251
        %v2872 = vsel %vm2744, %v2808, %v2258
        %v2873 = vsel %vm2745, %v2809, %v2265
        %v2874 = vsel %vm2746, %v2810, %v2272
        %v2875 = vsel %vm2747, %v2811, %v2279
        %v2876 = vsel %vm2748, %v2812, %v2286
        %v2877 = vsel %vm2749, %v2813, %v2293
        %v2878 = vsel %vm2750, %v2814, %v2300
        %v2879 = vsel %vm2751, %v2815, %v2307
        %v2880 = vsel %vm2752, %v2816, %v2314
        %v2881 = vsel %vm2753, %v2817, %v2321
        %v2882 = vsel %vm2754, %v2818, %v2328
        %v2883 = vsel %vm2755, %v2819, %v2335
        %v2884 = vsel %vm2756, %v2820, %v2342
        %v2885 = vsel %vm2757, %v2821, %v2349
        %v2886 = vsel %vm2758, %v2822, %v2356
        %v2887 = vsel %vm2759, %v2823, %v2363
        %v2888 = vsel %vm2760, %v2824, %v2370
        %v2889 = vsel %vm2761, %v2825, %v2377
        %v2890 = vsel %vm2762, %v2826, %v2384
        %v2891 = vsel %vm2763, %v2827, %v2391
        %v2892 = vsel %vm2764, %v2828, %v2398
        %v2893 = vsel %vm2765, %v2829, %v2405
        %v2894 = vsel %vm2766, %v2830, %v2412
        %v2895 = vsel %vm2767, %v2831, %v2419
        %v2896 = vsel %vm2768, %v2832, %v2426
        %v2897 = vsel %vm2769, %v2833, %v2433
        %v2898 = vsel %vm2770, %v2834, %v2440
        %v2899 = vsel %vm2771, %v2835, %v2447
        %v2900 = vsel %vm2772, %v2836, %v2454
        %v2901 = vsel %vm2773, %v2837, %v2461
        %v2902 = vsel %vm2774, %v2838, %v2468
        %v2903 = vsel %vm2775, %v2839, %v2475
        %v2904 = vsel %vm2776, %v2840, %v2482
        %v2905 = vsel %vm2777, %v2841, %v2489
        %v2906 = vsel %vm2778, %v2842, %v2496
        %v2907 = vsel %vm2779, %v2843, %v2503
        %v2908 = vsel %vm2780, %v2844, %v2510
        %v2909 = vsel %vm2781, %v2845, %v2517
        %v2910 = vsel %vm2782, %v2846, %v2524
        %v2911 = vsel %vm2783, %v2847, %v2531
        %v2912 = vsel %vm2784, %v2848, %v2538
        %v2913 = vsel %vm2785, %v2849, %v2545
        %v2914 = vsel %vm2786, %v2850, %v2552
        %v2915 = vsel %vm2787, %v2851, %v2559
        %v2916 = vsel %vm2788, %v2852, %v2566
        %v2917 = vsel %vm2789, %v2853, %v2573
        %v2918 = vsel %vm2790, %v2854, %v2580
        %v2919 = vsel %vm2791, %v2855, %v2587
        %v2920 = vsel %vm2792, %v2856, %v2594
        %v2921 = vsel %vm2793, %v2857, %v2601
        %vm2922 = vcmp.eq.s32.totalorder %v2858, 0
        %vm2923 = vcmp.eq.s32.totalorder %v2859, 0
        %vm2924 = vcmp.eq.s32.totalorder %v2860, 0
        %vm2925 = vcmp.eq.s32.totalorder %v2861, 0
        %vm2926 = vcmp.eq.s32.totalorder %v2862, 0
        %vm2927 = vcmp.eq.s32.totalorder %v2863, 0
        %vm2928 = vcmp.eq.s32.totalorder %v2864, 0
        %vm2929 = vcmp.eq.s32.totalorder %v2865, 0
        %vm2930 = vcmp.eq.s32.totalorder %v2866, 0
        %vm2931 = vcmp.eq.s32.totalorder %v2867, 0
        %vm2932 = vcmp.eq.s32.totalorder %v2868, 0
        %vm2933 = vcmp.eq.s32.totalorder %v2869, 0
        %vm2934 = vcmp.eq.s32.totalorder %v2870, 0
        %vm2935 = vcmp.eq.s32.totalorder %v2871, 0
        %vm2936 = vcmp.eq.s32.totalorder %v2872, 0
        %vm2937 = vcmp.eq.s32.totalorder %v2873, 0
        %vm2938 = vcmp.eq.s32.totalorder %v2874, 0
        %vm2939 = vcmp.eq.s32.totalorder %v2875, 0
        %vm2940 = vcmp.eq.s32.totalorder %v2876, 0
        %vm2941 = vcmp.eq.s32.totalorder %v2877, 0
        %vm2942 = vcmp.eq.s32.totalorder %v2878, 0
        %vm2943 = vcmp.eq.s32.totalorder %v2879, 0
        %vm2944 = vcmp.eq.s32.totalorder %v2880, 0
        %vm2945 = vcmp.eq.s32.totalorder %v2881, 0
        %vm2946 = vcmp.eq.s32.totalorder %v2882, 0
        %vm2947 = vcmp.eq.s32.totalorder %v2883, 0
        %vm2948 = vcmp.eq.s32.totalorder %v2884, 0
        %vm2949 = vcmp.eq.s32.totalorder %v2885, 0
        %vm2950 = vcmp.eq.s32.totalorder %v2886, 0
        %vm2951 = vcmp.eq.s32.totalorder %v2887, 0
        %vm2952 = vcmp.eq.s32.totalorder %v2888, 0
        %vm2953 = vcmp.eq.s32.totalorder %v2889, 0
        %vm2954 = vcmp.eq.s32.totalorder %v2890, 0
        %vm2955 = vcmp.eq.s32.totalorder %v2891, 0
        %vm2956 = vcmp.eq.s32.totalorder %v2892, 0
        %vm2957 = vcmp.eq.s32.totalorder %v2893, 0
        %vm2958 = vcmp.eq.s32.totalorder %v2894, 0
        %vm2959 = vcmp.eq.s32.totalorder %v2895, 0
        %vm2960 = vcmp.eq.s32.totalorder %v2896, 0
        %vm2961 = vcmp.eq.s32.totalorder %v2897, 0
        %vm2962 = vcmp.eq.s32.totalorder %v2898, 0
        %vm2963 = vcmp.eq.s32.totalorder %v2899, 0
        %vm2964 = vcmp.eq.s32.totalorder %v2900, 0
        %vm2965 = vcmp.eq.s32.totalorder %v2901, 0
        %vm2966 = vcmp.eq.s32.totalorder %v2902, 0
        %vm2967 = vcmp.eq.s32.totalorder %v2903, 0
        %vm2968 = vcmp.eq.s32.totalorder %v2904, 0
        %vm2969 = vcmp.eq.s32.totalorder %v2905, 0
        %vm2970 = vcmp.eq.s32.totalorder %v2906, 0
        %vm2971 = vcmp.eq.s32.totalorder %v2907, 0
        %vm2972 = vcmp.eq.s32.totalorder %v2908, 0
        %vm2973 = vcmp.eq.s32.totalorder %v2909, 0
        %vm2974 = vcmp.eq.s32.totalorder %v2910, 0
        %vm2975 = vcmp.eq.s32.totalorder %v2911, 0
        %vm2976 = vcmp.eq.s32.totalorder %v2912, 0
        %vm2977 = vcmp.eq.s32.totalorder %v2913, 0
        %vm2978 = vcmp.eq.s32.totalorder %v2914, 0
        %vm2979 = vcmp.eq.s32.totalorder %v2915, 0
        %vm2980 = vcmp.eq.s32.totalorder %v2916, 0
        %vm2981 = vcmp.eq.s32.totalorder %v2917, 0
        %vm2982 = vcmp.eq.s32.totalorder %v2918, 0
        %vm2983 = vcmp.eq.s32.totalorder %v2919, 0
        %vm2984 = vcmp.eq.s32.totalorder %v2920, 0
        %vm2985 = vcmp.eq.s32.totalorder %v2921, 0
        %v2986 = vsel %vm2922, 1, 0
        %v2987 = vsel %vm2923, 1, 0
        %v2988 = vsel %vm2924, 1, 0
        %v2989 = vsel %vm2925, 1, 0
        %v2990 = vsel %vm2926, 1, 0
        %v2991 = vsel %vm2927, 1, 0
        %v2992 = vsel %vm2928, 1, 0
        %v2993 = vsel %vm2929, 1, 0
        %v2994 = vsel %vm2930, 1, 0
        %v2995 = vsel %vm2931, 1, 0
        %v2996 = vsel %vm2932, 1, 0
        %v2997 = vsel %vm2933, 1, 0
        %v2998 = vsel %vm2934, 1, 0
        %v2999 = vsel %vm2935, 1, 0
        %v3000 = vsel %vm2936, 1, 0
        %v3001 = vsel %vm2937, 1, 0
        %v3002 = vsel %vm2938, 1, 0
        %v3003 = vsel %vm2939, 1, 0
        %v3004 = vsel %vm2940, 1, 0
        %v3005 = vsel %vm2941, 1, 0
        %v3006 = vsel %vm2942, 1, 0
        %v3007 = vsel %vm2943, 1, 0
        %v3008 = vsel %vm2944, 1, 0
        %v3009 = vsel %vm2945, 1, 0
        %v3010 = vsel %vm2946, 1, 0
        %v3011 = vsel %vm2947, 1, 0
        %v3012 = vsel %vm2948, 1, 0
        %v3013 = vsel %vm2949, 1, 0
        %v3014 = vsel %vm2950, 1, 0
        %v3015 = vsel %vm2951, 1, 0
        %v3016 = vsel %vm2952, 1, 0
        %v3017 = vsel %vm2953, 1, 0
        %v3018 = vsel %vm2954, 1, 0
        %v3019 = vsel %vm2955, 1, 0
        %v3020 = vsel %vm2956, 1, 0
        %v3021 = vsel %vm2957, 1, 0
        %v3022 = vsel %vm2958, 1, 0
        %v3023 = vsel %vm2959, 1, 0
        %v3024 = vsel %vm2960, 1, 0
        %v3025 = vsel %vm2961, 1, 0
        %v3026 = vsel %vm2962, 1, 0
        %v3027 = vsel %vm2963, 1, 0
        %v3028 = vsel %vm2964, 1, 0
        %v3029 = vsel %vm2965, 1, 0
        %v3030 = vsel %vm2966, 1, 0
        %v3031 = vsel %vm2967, 1, 0
        %v3032 = vsel %vm2968, 1, 0
        %v3033 = vsel %vm2969, 1, 0
        %v3034 = vsel %vm2970, 1, 0
        %v3035 = vsel %vm2971, 1, 0
        %v3036 = vsel %vm2972, 1, 0
        %v3037 = vsel %vm2973, 1, 0
        %v3038 = vsel %vm2974, 1, 0
        %v3039 = vsel %vm2975, 1, 0
        %v3040 = vsel %vm2976, 1, 0
        %v3041 = vsel %vm2977, 1, 0
        %v3042 = vsel %vm2978, 1, 0
        %v3043 = vsel %vm2979, 1, 0
        %v3044 = vsel %vm2980, 1, 0
        %v3045 = vsel %vm2981, 1, 0
        %v3046 = vsel %vm2982, 1, 0
        %v3047 = vsel %vm2983, 1, 0
        %v3048 = vsel %vm2984, 1, 0
        %v3049 = vsel %vm2985, 1, 0
        %vm3050 = vcmp.eq.s32.totalorder %v2986, 1
        %vm3051 = vcmp.eq.s32.totalorder %v2987, 1
        %vm3052 = vcmp.eq.s32.totalorder %v2988, 1
        %vm3053 = vcmp.eq.s32.totalorder %v2989, 1
        %vm3054 = vcmp.eq.s32.totalorder %v2990, 1
        %vm3055 = vcmp.eq.s32.totalorder %v2991, 1
        %vm3056 = vcmp.eq.s32.totalorder %v2992, 1
        %vm3057 = vcmp.eq.s32.totalorder %v2993, 1
        %vm3058 = vcmp.eq.s32.totalorder %v2994, 1
        %vm3059 = vcmp.eq.s32.totalorder %v2995, 1
        %vm3060 = vcmp.eq.s32.totalorder %v2996, 1
        %vm3061 = vcmp.eq.s32.totalorder %v2997, 1
        %vm3062 = vcmp.eq.s32.totalorder %v2998, 1
        %vm3063 = vcmp.eq.s32.totalorder %v2999, 1
        %vm3064 = vcmp.eq.s32.totalorder %v3000, 1
        %vm3065 = vcmp.eq.s32.totalorder %v3001, 1
        %vm3066 = vcmp.eq.s32.totalorder %v3002, 1
        %vm3067 = vcmp.eq.s32.totalorder %v3003, 1
        %vm3068 = vcmp.eq.s32.totalorder %v3004, 1
        %vm3069 = vcmp.eq.s32.totalorder %v3005, 1
        %vm3070 = vcmp.eq.s32.totalorder %v3006, 1
        %vm3071 = vcmp.eq.s32.totalorder %v3007, 1
        %vm3072 = vcmp.eq.s32.totalorder %v3008, 1
        %vm3073 = vcmp.eq.s32.totalorder %v3009, 1
        %vm3074 = vcmp.eq.s32.totalorder %v3010, 1
        %vm3075 = vcmp.eq.s32.totalorder %v3011, 1
        %vm3076 = vcmp.eq.s32.totalorder %v3012, 1
        %vm3077 = vcmp.eq.s32.totalorder %v3013, 1
        %vm3078 = vcmp.eq.s32.totalorder %v3014, 1
        %vm3079 = vcmp.eq.s32.totalorder %v3015, 1
        %vm3080 = vcmp.eq.s32.totalorder %v3016, 1
        %vm3081 = vcmp.eq.s32.totalorder %v3017, 1
        %vm3082 = vcmp.eq.s32.totalorder %v3018, 1
        %vm3083 = vcmp.eq.s32.totalorder %v3019, 1
        %vm3084 = vcmp.eq.s32.totalorder %v3020, 1
        %vm3085 = vcmp.eq.s32.totalorder %v3021, 1
        %vm3086 = vcmp.eq.s32.totalorder %v3022, 1
        %vm3087 = vcmp.eq.s32.totalorder %v3023, 1
        %vm3088 = vcmp.eq.s32.totalorder %v3024, 1
        %vm3089 = vcmp.eq.s32.totalorder %v3025, 1
        %vm3090 = vcmp.eq.s32.totalorder %v3026, 1
        %vm3091 = vcmp.eq.s32.totalorder %v3027, 1
        %vm3092 = vcmp.eq.s32.totalorder %v3028, 1
        %vm3093 = vcmp.eq.s32.totalorder %v3029, 1
        %vm3094 = vcmp.eq.s32.totalorder %v3030, 1
        %vm3095 = vcmp.eq.s32.totalorder %v3031, 1
        %vm3096 = vcmp.eq.s32.totalorder %v3032, 1
        %vm3097 = vcmp.eq.s32.totalorder %v3033, 1
        %vm3098 = vcmp.eq.s32.totalorder %v3034, 1
        %vm3099 = vcmp.eq.s32.totalorder %v3035, 1
        %vm3100 = vcmp.eq.s32.totalorder %v3036, 1
        %vm3101 = vcmp.eq.s32.totalorder %v3037, 1
        %vm3102 = vcmp.eq.s32.totalorder %v3038, 1
        %vm3103 = vcmp.eq.s32.totalorder %v3039, 1
        %vm3104 = vcmp.eq.s32.totalorder %v3040, 1
        %vm3105 = vcmp.eq.s32.totalorder %v3041, 1
        %vm3106 = vcmp.eq.s32.totalorder %v3042, 1
        %vm3107 = vcmp.eq.s32.totalorder %v3043, 1
        %vm3108 = vcmp.eq.s32.totalorder %v3044, 1
        %vm3109 = vcmp.eq.s32.totalorder %v3045, 1
        %vm3110 = vcmp.eq.s32.totalorder %v3046, 1
        %vm3111 = vcmp.eq.s32.totalorder %v3047, 1
        %vm3112 = vcmp.eq.s32.totalorder %v3048, 1
        %vm3113 = vcmp.eq.s32.totalorder %v3049, 1
        %v3114 = vsel %vm3050, 0.0, %v2153
        %v3115 = vsel %vm3051, 0.0, %v1964
        %v3116 = vsel %vm3052, 0.0, %v1966
        %v3117 = vsel %vm3053, 0.0, %v1968
        %v3118 = vsel %vm3054, 0.0, %v1970
        %v3119 = vsel %vm3055, 0.0, %v1972
        %v3120 = vsel %vm3056, 0.0, %v1974
        %v3121 = vsel %vm3057, 0.0, %v1976
        %v3122 = vsel %vm3058, 0.0, %v1978
        %v3123 = vsel %vm3059, 0.0, %v1980
        %v3124 = vsel %vm3060, 0.0, %v1982
        %v3125 = vsel %vm3061, 0.0, %v1984
        %v3126 = vsel %vm3062, 0.0, %v1986
        %v3127 = vsel %vm3063, 0.0, %v1988
        %v3128 = vsel %vm3064, 0.0, %v1990
        %v3129 = vsel %vm3065, 0.0, %v1992
        %v3130 = vsel %vm3066, 0.0, %v1994
        %v3131 = vsel %vm3067, 0.0, %v1996
        %v3132 = vsel %vm3068, 0.0, %v1998
        %v3133 = vsel %vm3069, 0.0, %v2000
        %v3134 = vsel %vm3070, 0.0, %v2002
        %v3135 = vsel %vm3071, 0.0, %v2004
        %v3136 = vsel %vm3072, 0.0, %v2006
        %v3137 = vsel %vm3073, 0.0, %v2008
        %v3138 = vsel %vm3074, 0.0, %v2010
        %v3139 = vsel %vm3075, 0.0, %v2012
        %v3140 = vsel %vm3076, 0.0, %v2014
        %v3141 = vsel %vm3077, 0.0, %v2016
        %v3142 = vsel %vm3078, 0.0, %v2018
        %v3143 = vsel %vm3079, 0.0, %v2020
        %v3144 = vsel %vm3080, 0.0, %v2022
        %v3145 = vsel %vm3081, 0.0, %v2024
        %v3146 = vsel %vm3082, 0.0, %v2026
        %v3147 = vsel %vm3083, 0.0, %v2028
        %v3148 = vsel %vm3084, 0.0, %v2030
        %v3149 = vsel %vm3085, 0.0, %v2032
        %v3150 = vsel %vm3086, 0.0, %v2034
        %v3151 = vsel %vm3087, 0.0, %v2036
        %v3152 = vsel %vm3088, 0.0, %v2038
        %v3153 = vsel %vm3089, 0.0, %v2040
        %v3154 = vsel %vm3090, 0.0, %v2042
        %v3155 = vsel %vm3091, 0.0, %v2044
        %v3156 = vsel %vm3092, 0.0, %v2046
        %v3157 = vsel %vm3093, 0.0, %v2048
        %v3158 = vsel %vm3094, 0.0, %v2050
        %v3159 = vsel %vm3095, 0.0, %v2052
        %v3160 = vsel %vm3096, 0.0, %v2054
        %v3161 = vsel %vm3097, 0.0, %v2056
        %v3162 = vsel %vm3098, 0.0, %v2058
        %v3163 = vsel %vm3099, 0.0, %v2060
        %v3164 = vsel %vm3100, 0.0, %v2062
        %v3165 = vsel %vm3101, 0.0, %v2064
        %v3166 = vsel %vm3102, 0.0, %v2066
        %v3167 = vsel %vm3103, 0.0, %v2068
        %v3168 = vsel %vm3104, 0.0, %v2070
        %v3169 = vsel %vm3105, 0.0, %v2072
        %v3170 = vsel %vm3106, 0.0, %v2074
        %v3171 = vsel %vm3107, 0.0, %v2076
        %v3172 = vsel %vm3108, 0.0, %v2078
        %v3173 = vsel %vm3109, 0.0, %v2080
        %v3174 = vsel %vm3110, 0.0, %v2082
        %v3175 = vsel %vm3111, 0.0, %v2084
        %v3176 = vsel %vm3112, 0.0, %v2086
        %v3177 = vsel %vm3113, 0.0, %v2088
        %vm3178 = vcmask 1046528
        %v3179 = vrot.slane %v1640, 1
        %v3180 = vrot.slane %v1641, 1
        %v3181 = vsel %vm3178, %v3179, %v3180
        %v3182 = vrot.slane %v1642, 1
        %v3183 = vsel %vm3178, %v3180, %v3182
        %v3184 = vrot.slane %v1643, 1
        %v3185 = vsel %vm3178, %v3182, %v3184
        %v3186 = vrot.slane %v1644, 1
        %v3187 = vsel %vm3178, %v3184, %v3186
        %v3188 = vrot.slane %v1645, 1
        %v3189 = vsel %vm3178, %v3186, %v3188
        %v3190 = vrot.slane %v1646, 1
        %v3191 = vsel %vm3178, %v3188, %v3190
        %v3192 = vrot.slane %v1647, 1
        %v3193 = vsel %vm3178, %v3190, %v3192
        %v3194 = vrot.slane %v1648, 1
        %v3195 = vsel %vm3178, %v3192, %v3194
        %v3196 = vrot.slane %v1649, 1
        %v3197 = vsel %vm3178, %v3194, %v3196
        %v3198 = vrot.slane %v1650, 1
        %v3199 = vsel %vm3178, %v3196, %v3198
        %v3200 = vrot.slane %v1651, 1
        %v3201 = vsel %vm3178, %v3198, %v3200
        %v3202 = vrot.slane %v1652, 1
        %v3203 = vsel %vm3178, %v3200, %v3202
        %v3204 = vrot.slane %v1653, 1
        %v3205 = vsel %vm3178, %v3202, %v3204
        %v3206 = vrot.slane %v1654, 1
        %v3207 = vsel %vm3178, %v3204, %v3206
        %v3208 = vrot.slane %v1655, 1
        %v3209 = vsel %vm3178, %v3206, %v3208
        %v3210 = vrot.slane %v1656, 1
        %v3211 = vsel %vm3178, %v3208, %v3210
        %v3212 = vrot.slane %v1657, 1
        %v3213 = vsel %vm3178, %v3210, %v3212
        %v3214 = vrot.slane %v1658, 1
        %v3215 = vsel %vm3178, %v3212, %v3214
        %v3216 = vrot.slane %v1659, 1
        %v3217 = vsel %vm3178, %v3214, %v3216
        %v3218 = vrot.slane %v1660, 1
        %v3219 = vsel %vm3178, %v3216, %v3218
        %v3220 = vrot.slane %v1661, 1
        %v3221 = vsel %vm3178, %v3218, %v3220
        %v3222 = vrot.slane %v1662, 1
        %v3223 = vsel %vm3178, %v3220, %v3222
        %v3224 = vrot.slane %v1663, 1
        %v3225 = vsel %vm3178, %v3222, %v3224
        %v3226 = vrot.slane %v1664, 1
        %v3227 = vsel %vm3178, %v3224, %v3226
        %v3228 = vrot.slane %v1665, 1
        %v3229 = vsel %vm3178, %v3226, %v3228
        %v3230 = vrot.slane %v1666, 1
        %v3231 = vsel %vm3178, %v3228, %v3230
        %v3232 = vrot.slane %v1667, 1
        %v3233 = vsel %vm3178, %v3230, %v3232
        %v3234 = vrot.slane %v1668, 1
        %v3235 = vsel %vm3178, %v3232, %v3234
        %v3236 = vrot.slane %v1669, 1
        %v3237 = vsel %vm3178, %v3234, %v3236
        %v3238 = vrot.slane %v1670, 1
        %v3239 = vsel %vm3178, %v3236, %v3238
        %v3240 = vrot.slane %v1671, 1
        %v3241 = vsel %vm3178, %v3238, %v3240
        %v3242 = vrot.slane %v1672, 1
        %v3243 = vsel %vm3178, %v3240, %v3242
        %v3244 = vrot.slane %v1673, 1
        %v3245 = vsel %vm3178, %v3242, %v3244
        %v3246 = vrot.slane %v1674, 1
        %v3247 = vsel %vm3178, %v3244, %v3246
        %v3248 = vrot.slane %v1675, 1
        %v3249 = vsel %vm3178, %v3246, %v3248
        %v3250 = vrot.slane %v1676, 1
        %v3251 = vsel %vm3178, %v3248, %v3250
        %v3252 = vrot.slane %v1677, 1
        %v3253 = vsel %vm3178, %v3250, %v3252
        %v3254 = vrot.slane %v1678, 1
        %v3255 = vsel %vm3178, %v3252, %v3254
        %v3256 = vrot.slane %v1679, 1
        %v3257 = vsel %vm3178, %v3254, %v3256
        %v3258 = vrot.slane %v1680, 1
        %v3259 = vsel %vm3178, %v3256, %v3258
        %v3260 = vrot.slane %v1681, 1
        %v3261 = vsel %vm3178, %v3258, %v3260
        %v3262 = vrot.slane %v1682, 1
        %v3263 = vsel %vm3178, %v3260, %v3262
        %v3264 = vrot.slane %v1683, 1
        %v3265 = vsel %vm3178, %v3262, %v3264
        %v3266 = vrot.slane %v1684, 1
        %v3267 = vsel %vm3178, %v3264, %v3266
        %v3268 = vrot.slane %v1685, 1
        %v3269 = vsel %vm3178, %v3266, %v3268
        %v3270 = vrot.slane %v1686, 1
        %v3271 = vsel %vm3178, %v3268, %v3270
        %v3272 = vrot.slane %v1687, 1
        %v3273 = vsel %vm3178, %v3270, %v3272
        %v3274 = vrot.slane %v1688, 1
        %v3275 = vsel %vm3178, %v3272, %v3274
        %v3276 = vrot.slane %v1689, 1
        %v3277 = vsel %vm3178, %v3274, %v3276
        %v3278 = vrot.slane %v1690, 1
        %v3279 = vsel %vm3178, %v3276, %v3278
        %v3280 = vrot.slane %v1691, 1
        %v3281 = vsel %vm3178, %v3278, %v3280
        %v3282 = vrot.slane %v1692, 1
        %v3283 = vsel %vm3178, %v3280, %v3282
        %v3284 = vrot.slane %v1693, 1
        %v3285 = vsel %vm3178, %v3282, %v3284
        %v3286 = vrot.slane %v1694, 1
        %v3287 = vsel %vm3178, %v3284, %v3286
        %v3288 = vrot.slane %v1695, 1
        %v3289 = vsel %vm3178, %v3286, %v3288
        %v3290 = vrot.slane %v1696, 1
        %v3291 = vsel %vm3178, %v3288, %v3290
        %v3292 = vrot.slane %v1697, 1
        %v3293 = vsel %vm3178, %v3290, %v3292
        %v3294 = vrot.slane %v1698, 1
        %v3295 = vsel %vm3178, %v3292, %v3294
        %v3296 = vrot.slane %v1699, 1
        %v3297 = vsel %vm3178, %v3294, %v3296
        %v3298 = vrot.slane %v1700, 1
        %v3299 = vsel %vm3178, %v3296, %v3298
        %v3300 = vrot.slane %v1701, 1
        %v3301 = vsel %vm3178, %v3298, %v3300
        %v3302 = vrot.slane %v1702, 1
        %v3303 = vsel %vm3178, %v3300, %v3302
        %v3304 = vrot.slane %v1703, 1
        %v3305 = vsel %vm3178, %v3302, %v3304
        %v3370 = vsel %vm3178, %v3304, 0.0
        %vm3371 = vcmp.eq.s32.totalorder %v2858, 255
        %vm3372 = vcmp.eq.s32.totalorder %v2859, 255
        %vm3373 = vcmp.eq.s32.totalorder %v2860, 255
        %vm3374 = vcmp.eq.s32.totalorder %v2861, 255
        %vm3375 = vcmp.eq.s32.totalorder %v2862, 255
        %vm3376 = vcmp.eq.s32.totalorder %v2863, 255
        %vm3377 = vcmp.eq.s32.totalorder %v2864, 255
        %vm3378 = vcmp.eq.s32.totalorder %v2865, 255
        %vm3379 = vcmp.eq.s32.totalorder %v2866, 255
        %vm3380 = vcmp.eq.s32.totalorder %v2867, 255
        %vm3381 = vcmp.eq.s32.totalorder %v2868, 255
        %vm3382 = vcmp.eq.s32.totalorder %v2869, 255
        %vm3383 = vcmp.eq.s32.totalorder %v2870, 255
        %vm3384 = vcmp.eq.s32.totalorder %v2871, 255
        %vm3385 = vcmp.eq.s32.totalorder %v2872, 255
        %vm3386 = vcmp.eq.s32.totalorder %v2873, 255
        %vm3387 = vcmp.eq.s32.totalorder %v2874, 255
        %vm3388 = vcmp.eq.s32.totalorder %v2875, 255
        %vm3389 = vcmp.eq.s32.totalorder %v2876, 255
        %vm3390 = vcmp.eq.s32.totalorder %v2877, 255
        %vm3391 = vcmp.eq.s32.totalorder %v2878, 255
        %vm3392 = vcmp.eq.s32.totalorder %v2879, 255
        %vm3393 = vcmp.eq.s32.totalorder %v2880, 255
        %vm3394 = vcmp.eq.s32.totalorder %v2881, 255
        %vm3395 = vcmp.eq.s32.totalorder %v2882, 255
        %vm3396 = vcmp.eq.s32.totalorder %v2883, 255
        %vm3397 = vcmp.eq.s32.totalorder %v2884, 255
        %vm3398 = vcmp.eq.s32.totalorder %v2885, 255
        %vm3399 = vcmp.eq.s32.totalorder %v2886, 255
        %vm3400 = vcmp.eq.s32.totalorder %v2887, 255
        %vm3401 = vcmp.eq.s32.totalorder %v2888, 255
        %vm3402 = vcmp.eq.s32.totalorder %v2889, 255
        %vm3403 = vcmp.eq.s32.totalorder %v2890, 255
        %vm3404 = vcmp.eq.s32.totalorder %v2891, 255
        %vm3405 = vcmp.eq.s32.totalorder %v2892, 255
        %vm3406 = vcmp.eq.s32.totalorder %v2893, 255
        %vm3407 = vcmp.eq.s32.totalorder %v2894, 255
        %vm3408 = vcmp.eq.s32.totalorder %v2895, 255
        %vm3409 = vcmp.eq.s32.totalorder %v2896, 255
        %vm3410 = vcmp.eq.s32.totalorder %v2897, 255
        %vm3411 = vcmp.eq.s32.totalorder %v2898, 255
        %vm3412 = vcmp.eq.s32.totalorder %v2899, 255
        %vm3413 = vcmp.eq.s32.totalorder %v2900, 255
        %vm3414 = vcmp.eq.s32.totalorder %v2901, 255
        %vm3415 = vcmp.eq.s32.totalorder %v2902, 255
        %vm3416 = vcmp.eq.s32.totalorder %v2903, 255
        %vm3417 = vcmp.eq.s32.totalorder %v2904, 255
        %vm3418 = vcmp.eq.s32.totalorder %v2905, 255
        %vm3419 = vcmp.eq.s32.totalorder %v2906, 255
        %vm3420 = vcmp.eq.s32.totalorder %v2907, 255
        %vm3421 = vcmp.eq.s32.totalorder %v2908, 255
        %vm3422 = vcmp.eq.s32.totalorder %v2909, 255
        %vm3423 = vcmp.eq.s32.totalorder %v2910, 255
        %vm3424 = vcmp.eq.s32.totalorder %v2911, 255
        %vm3425 = vcmp.eq.s32.totalorder %v2912, 255
        %vm3426 = vcmp.eq.s32.totalorder %v2913, 255
        %vm3427 = vcmp.eq.s32.totalorder %v2914, 255
        %vm3428 = vcmp.eq.s32.totalorder %v2915, 255
        %vm3429 = vcmp.eq.s32.totalorder %v2916, 255
        %vm3430 = vcmp.eq.s32.totalorder %v2917, 255
        %vm3431 = vcmp.eq.s32.totalorder %v2918, 255
        %vm3432 = vcmp.eq.s32.totalorder %v2919, 255
        %vm3433 = vcmp.eq.s32.totalorder %v2920, 255
        %vm3434 = vcmp.eq.s32.totalorder %v2921, 255
        %v3435 = vsel %vm3371, 1, 0
        %v3436 = vsel %vm3372, 1, 0
        %v3437 = vsel %vm3373, 1, 0
        %v3438 = vsel %vm3374, 1, 0
        %v3439 = vsel %vm3375, 1, 0
        %v3440 = vsel %vm3376, 1, 0
        %v3441 = vsel %vm3377, 1, 0
        %v3442 = vsel %vm3378, 1, 0
        %v3443 = vsel %vm3379, 1, 0
        %v3444 = vsel %vm3380, 1, 0
        %v3445 = vsel %vm3381, 1, 0
        %v3446 = vsel %vm3382, 1, 0
        %v3447 = vsel %vm3383, 1, 0
        %v3448 = vsel %vm3384, 1, 0
        %v3449 = vsel %vm3385, 1, 0
        %v3450 = vsel %vm3386, 1, 0
        %v3451 = vsel %vm3387, 1, 0
        %v3452 = vsel %vm3388, 1, 0
        %v3453 = vsel %vm3389, 1, 0
        %v3454 = vsel %vm3390, 1, 0
        %v3455 = vsel %vm3391, 1, 0
        %v3456 = vsel %vm3392, 1, 0
        %v3457 = vsel %vm3393, 1, 0
        %v3458 = vsel %vm3394, 1, 0
        %v3459 = vsel %vm3395, 1, 0
        %v3460 = vsel %vm3396, 1, 0
        %v3461 = vsel %vm3397, 1, 0
        %v3462 = vsel %vm3398, 1, 0
        %v3463 = vsel %vm3399, 1, 0
        %v3464 = vsel %vm3400, 1, 0
        %v3465 = vsel %vm3401, 1, 0
        %v3466 = vsel %vm3402, 1, 0
        %v3467 = vsel %vm3403, 1, 0
        %v3468 = vsel %vm3404, 1, 0
        %v3469 = vsel %vm3405, 1, 0
        %v3470 = vsel %vm3406, 1, 0
        %v3471 = vsel %vm3407, 1, 0
        %v3472 = vsel %vm3408, 1, 0
        %v3473 = vsel %vm3409, 1, 0
        %v3474 = vsel %vm3410, 1, 0
        %v3475 = vsel %vm3411, 1, 0
        %v3476 = vsel %vm3412, 1, 0
        %v3477 = vsel %vm3413, 1, 0
        %v3478 = vsel %vm3414, 1, 0
        %v3479 = vsel %vm3415, 1, 0
        %v3480 = vsel %vm3416, 1, 0
        %v3481 = vsel %vm3417, 1, 0
        %v3482 = vsel %vm3418, 1, 0
        %v3483 = vsel %vm3419, 1, 0
        %v3484 = vsel %vm3420, 1, 0
        %v3485 = vsel %vm3421, 1, 0
        %v3486 = vsel %vm3422, 1, 0
        %v3487 = vsel %vm3423, 1, 0
        %v3488 = vsel %vm3424, 1, 0
        %v3489 = vsel %vm3425, 1, 0
        %v3490 = vsel %vm3426, 1, 0
        %v3491 = vsel %vm3427, 1, 0
        %v3492 = vsel %vm3428, 1, 0
        %v3493 = vsel %vm3429, 1, 0
        %v3494 = vsel %vm3430, 1, 0
        %v3495 = vsel %vm3431, 1, 0
        %v3496 = vsel %vm3432, 1, 0
        %v3497 = vsel %vm3433, 1, 0
        %v3498 = vsel %vm3434, 1, 0
        %vm3499 = vcmp.eq.s32.totalorder %v3435, 1
        %vm3500 = vcmp.eq.s32.totalorder %v3436, 1
        %vm3501 = vcmp.eq.s32.totalorder %v3437, 1
        %vm3502 = vcmp.eq.s32.totalorder %v3438, 1
        %vm3503 = vcmp.eq.s32.totalorder %v3439, 1
        %vm3504 = vcmp.eq.s32.totalorder %v3440, 1
        %vm3505 = vcmp.eq.s32.totalorder %v3441, 1
        %vm3506 = vcmp.eq.s32.totalorder %v3442, 1
        %vm3507 = vcmp.eq.s32.totalorder %v3443, 1
        %vm3508 = vcmp.eq.s32.totalorder %v3444, 1
        %vm3509 = vcmp.eq.s32.totalorder %v3445, 1
        %vm3510 = vcmp.eq.s32.totalorder %v3446, 1
        %vm3511 = vcmp.eq.s32.totalorder %v3447, 1
        %vm3512 = vcmp.eq.s32.totalorder %v3448, 1
        %vm3513 = vcmp.eq.s32.totalorder %v3449, 1
        %vm3514 = vcmp.eq.s32.totalorder %v3450, 1
        %vm3515 = vcmp.eq.s32.totalorder %v3451, 1
        %vm3516 = vcmp.eq.s32.totalorder %v3452, 1
        %vm3517 = vcmp.eq.s32.totalorder %v3453, 1
        %vm3518 = vcmp.eq.s32.totalorder %v3454, 1
        %vm3519 = vcmp.eq.s32.totalorder %v3455, 1
        %vm3520 = vcmp.eq.s32.totalorder %v3456, 1
        %vm3521 = vcmp.eq.s32.totalorder %v3457, 1
        %vm3522 = vcmp.eq.s32.totalorder %v3458, 1
        %vm3523 = vcmp.eq.s32.totalorder %v3459, 1
        %vm3524 = vcmp.eq.s32.totalorder %v3460, 1
        %vm3525 = vcmp.eq.s32.totalorder %v3461, 1
        %vm3526 = vcmp.eq.s32.totalorder %v3462, 1
        %vm3527 = vcmp.eq.s32.totalorder %v3463, 1
        %vm3528 = vcmp.eq.s32.totalorder %v3464, 1
        %vm3529 = vcmp.eq.s32.totalorder %v3465, 1
        %vm3530 = vcmp.eq.s32.totalorder %v3466, 1
        %vm3531 = vcmp.eq.s32.totalorder %v3467, 1
        %vm3532 = vcmp.eq.s32.totalorder %v3468, 1
        %vm3533 = vcmp.eq.s32.totalorder %v3469, 1
        %vm3534 = vcmp.eq.s32.totalorder %v3470, 1
        %vm3535 = vcmp.eq.s32.totalorder %v3471, 1
        %vm3536 = vcmp.eq.s32.totalorder %v3472, 1
        %vm3537 = vcmp.eq.s32.totalorder %v3473, 1
        %vm3538 = vcmp.eq.s32.totalorder %v3474, 1
        %vm3539 = vcmp.eq.s32.totalorder %v3475, 1
        %vm3540 = vcmp.eq.s32.totalorder %v3476, 1
        %vm3541 = vcmp.eq.s32.totalorder %v3477, 1
        %vm3542 = vcmp.eq.s32.totalorder %v3478, 1
        %vm3543 = vcmp.eq.s32.totalorder %v3479, 1
        %vm3544 = vcmp.eq.s32.totalorder %v3480, 1
        %vm3545 = vcmp.eq.s32.totalorder %v3481, 1
        %vm3546 = vcmp.eq.s32.totalorder %v3482, 1
        %vm3547 = vcmp.eq.s32.totalorder %v3483, 1
        %vm3548 = vcmp.eq.s32.totalorder %v3484, 1
        %vm3549 = vcmp.eq.s32.totalorder %v3485, 1
        %vm3550 = vcmp.eq.s32.totalorder %v3486, 1
        %vm3551 = vcmp.eq.s32.totalorder %v3487, 1
        %vm3552 = vcmp.eq.s32.totalorder %v3488, 1
        %vm3553 = vcmp.eq.s32.totalorder %v3489, 1
        %vm3554 = vcmp.eq.s32.totalorder %v3490, 1
        %vm3555 = vcmp.eq.s32.totalorder %v3491, 1
        %vm3556 = vcmp.eq.s32.totalorder %v3492, 1
        %vm3557 = vcmp.eq.s32.totalorder %v3493, 1
        %vm3558 = vcmp.eq.s32.totalorder %v3494, 1
        %vm3559 = vcmp.eq.s32.totalorder %v3495, 1
        %vm3560 = vcmp.eq.s32.totalorder %v3496, 1
        %vm3561 = vcmp.eq.s32.totalorder %v3497, 1
        %vm3562 = vcmp.eq.s32.totalorder %v3498, 1
        %v3563 = vsel %vm3499, 0.0, %v3181
        %v3564 = vsel %vm3500, 0.0, %v3183
        %v3565 = vsel %vm3501, 0.0, %v3185
        %v3566 = vsel %vm3502, 0.0, %v3187
        %v3567 = vsel %vm3503, 0.0, %v3189
        %v3568 = vsel %vm3504, 0.0, %v3191
        %v3569 = vsel %vm3505, 0.0, %v3193
        %v3570 = vsel %vm3506, 0.0, %v3195
        %v3571 = vsel %vm3507, 0.0, %v3197
        %v3572 = vsel %vm3508, 0.0, %v3199
        %v3573 = vsel %vm3509, 0.0, %v3201
        %v3574 = vsel %vm3510, 0.0, %v3203
        %v3575 = vsel %vm3511, 0.0, %v3205
        %v3576 = vsel %vm3512, 0.0, %v3207
        %v3577 = vsel %vm3513, 0.0, %v3209
        %v3578 = vsel %vm3514, 0.0, %v3211
        %v3579 = vsel %vm3515, 0.0, %v3213
        %v3580 = vsel %vm3516, 0.0, %v3215
        %v3581 = vsel %vm3517, 0.0, %v3217
        %v3582 = vsel %vm3518, 0.0, %v3219
        %v3583 = vsel %vm3519, 0.0, %v3221
        %v3584 = vsel %vm3520, 0.0, %v3223
        %v3585 = vsel %vm3521, 0.0, %v3225
        %v3586 = vsel %vm3522, 0.0, %v3227
        %v3587 = vsel %vm3523, 0.0, %v3229
        %v3588 = vsel %vm3524, 0.0, %v3231
        %v3589 = vsel %vm3525, 0.0, %v3233
        %v3590 = vsel %vm3526, 0.0, %v3235
        %v3591 = vsel %vm3527, 0.0, %v3237
        %v3592 = vsel %vm3528, 0.0, %v3239
        %v3593 = vsel %vm3529, 0.0, %v3241
        %v3594 = vsel %vm3530, 0.0, %v3243
        %v3595 = vsel %vm3531, 0.0, %v3245
        %v3596 = vsel %vm3532, 0.0, %v3247
        %v3597 = vsel %vm3533, 0.0, %v3249
        %v3598 = vsel %vm3534, 0.0, %v3251
        %v3599 = vsel %vm3535, 0.0, %v3253
        %v3600 = vsel %vm3536, 0.0, %v3255
        %v3601 = vsel %vm3537, 0.0, %v3257
        %v3602 = vsel %vm3538, 0.0, %v3259
        %v3603 = vsel %vm3539, 0.0, %v3261
        %v3604 = vsel %vm3540, 0.0, %v3263
        %v3605 = vsel %vm3541, 0.0, %v3265
        %v3606 = vsel %vm3542, 0.0, %v3267
        %v3607 = vsel %vm3543, 0.0, %v3269
        %v3608 = vsel %vm3544, 0.0, %v3271
        %v3609 = vsel %vm3545, 0.0, %v3273
        %v3610 = vsel %vm3546, 0.0, %v3275
        %v3611 = vsel %vm3547, 0.0, %v3277
        %v3612 = vsel %vm3548, 0.0, %v3279
        %v3613 = vsel %vm3549, 0.0, %v3281
        %v3614 = vsel %vm3550, 0.0, %v3283
        %v3615 = vsel %vm3551, 0.0, %v3285
        %v3616 = vsel %vm3552, 0.0, %v3287
        %v3617 = vsel %vm3553, 0.0, %v3289
        %v3618 = vsel %vm3554, 0.0, %v3291
        %v3619 = vsel %vm3555, 0.0, %v3293
        %v3620 = vsel %vm3556, 0.0, %v3295
        %v3621 = vsel %vm3557, 0.0, %v3297
        %v3622 = vsel %vm3558, 0.0, %v3299
        %v3623 = vsel %vm3559, 0.0, %v3301
        %v3624 = vsel %vm3560, 0.0, %v3303
        %v3625 = vsel %vm3561, 0.0, %v3305
        %v3626 = vsel %vm3562, 0.0, %v3370
        %3627 = vrot.lane.b32.xlu0 %v1640, 32
        %v3628 = vpop.permute.xlu0 %3627
        %3629 = vrot.lane.b32.xlu0 %v1641, 32
        %v3630 = vpop.permute.xlu0 %3629
        %3631 = vrot.lane.b32.xlu0 %v1642, 32
        %v3632 = vpop.permute.xlu0 %3631
        %3633 = vrot.lane.b32.xlu0 %v1643, 32
        %v3634 = vpop.permute.xlu0 %3633
        %3635 = vrot.lane.b32.xlu0 %v1644, 32
        %v3636 = vpop.permute.xlu0 %3635
        %3637 = vrot.lane.b32.xlu0 %v1645, 32
        %v3638 = vpop.permute.xlu0 %3637
        %3639 = vrot.lane.b32.xlu0 %v1646, 32
        %v3640 = vpop.permute.xlu0 %3639
        %3641 = vrot.lane.b32.xlu0 %v1647, 32
        %v3642 = vpop.permute.xlu0 %3641
        %3643 = vrot.lane.b32.xlu0 %v1648, 32
        %v3644 = vpop.permute.xlu0 %3643
        %3645 = vrot.lane.b32.xlu0 %v1649, 32
        %v3646 = vpop.permute.xlu0 %3645
        %3647 = vrot.lane.b32.xlu0 %v1650, 32
        %v3648 = vpop.permute.xlu0 %3647
        %3649 = vrot.lane.b32.xlu0 %v1651, 32
        %v3650 = vpop.permute.xlu0 %3649
        %3651 = vrot.lane.b32.xlu0 %v1652, 32
        %v3652 = vpop.permute.xlu0 %3651
        %3653 = vrot.lane.b32.xlu0 %v1653, 32
        %v3654 = vpop.permute.xlu0 %3653
        %3655 = vrot.lane.b32.xlu0 %v1654, 32
        %v3656 = vpop.permute.xlu0 %3655
        %3657 = vrot.lane.b32.xlu0 %v1655, 32
        %v3658 = vpop.permute.xlu0 %3657
        %3659 = vrot.lane.b32.xlu0 %v1656, 32
        %v3660 = vpop.permute.xlu0 %3659
        %3661 = vrot.lane.b32.xlu0 %v1657, 32
        %v3662 = vpop.permute.xlu0 %3661
        %3663 = vrot.lane.b32.xlu0 %v1658, 32
        %v3664 = vpop.permute.xlu0 %3663
        %3665 = vrot.lane.b32.xlu0 %v1659, 32
        %v3666 = vpop.permute.xlu0 %3665
        %3667 = vrot.lane.b32.xlu0 %v1660, 32
        %v3668 = vpop.permute.xlu0 %3667
        %3669 = vrot.lane.b32.xlu0 %v1661, 32
        %v3670 = vpop.permute.xlu0 %3669
        %3671 = vrot.lane.b32.xlu0 %v1662, 32
        %v3672 = vpop.permute.xlu0 %3671
        %3673 = vrot.lane.b32.xlu0 %v1663, 32
        %v3674 = vpop.permute.xlu0 %3673
        %3675 = vrot.lane.b32.xlu0 %v1664, 32
        %v3676 = vpop.permute.xlu0 %3675
        %3677 = vrot.lane.b32.xlu0 %v1665, 32
        %v3678 = vpop.permute.xlu0 %3677
        %3679 = vrot.lane.b32.xlu0 %v1666, 32
        %v3680 = vpop.permute.xlu0 %3679
        %3681 = vrot.lane.b32.xlu0 %v1667, 32
        %v3682 = vpop.permute.xlu0 %3681
        %3683 = vrot.lane.b32.xlu0 %v1668, 32
        %v3684 = vpop.permute.xlu0 %3683
        %3685 = vrot.lane.b32.xlu0 %v1669, 32
        %v3686 = vpop.permute.xlu0 %3685
        %3687 = vrot.lane.b32.xlu0 %v1670, 32
        %v3688 = vpop.permute.xlu0 %3687
        %3689 = vrot.lane.b32.xlu0 %v1671, 32
        %v3690 = vpop.permute.xlu0 %3689
        %3691 = vrot.lane.b32.xlu0 %v1672, 32
        %v3692 = vpop.permute.xlu0 %3691
        %3693 = vrot.lane.b32.xlu0 %v1673, 32
        %v3694 = vpop.permute.xlu0 %3693
        %3695 = vrot.lane.b32.xlu0 %v1674, 32
        %v3696 = vpop.permute.xlu0 %3695
        %3697 = vrot.lane.b32.xlu0 %v1675, 32
        %v3698 = vpop.permute.xlu0 %3697
        %3699 = vrot.lane.b32.xlu0 %v1676, 32
        %v3700 = vpop.permute.xlu0 %3699
        %3701 = vrot.lane.b32.xlu0 %v1677, 32
        %v3702 = vpop.permute.xlu0 %3701
        %3703 = vrot.lane.b32.xlu0 %v1678, 32
        %v3704 = vpop.permute.xlu0 %3703
        %3705 = vrot.lane.b32.xlu0 %v1679, 32
        %v3706 = vpop.permute.xlu0 %3705
        %3707 = vrot.lane.b32.xlu0 %v1680, 32
        %v3708 = vpop.permute.xlu0 %3707
        %3709 = vrot.lane.b32.xlu0 %v1681, 32
        %v3710 = vpop.permute.xlu0 %3709
        %3711 = vrot.lane.b32.xlu0 %v1682, 32
        %v3712 = vpop.permute.xlu0 %3711
        %3713 = vrot.lane.b32.xlu0 %v1683, 32
        %v3714 = vpop.permute.xlu0 %3713
        %3715 = vrot.lane.b32.xlu0 %v1684, 32
        %v3716 = vpop.permute.xlu0 %3715
        %3717 = vrot.lane.b32.xlu0 %v1685, 32
        %v3718 = vpop.permute.xlu0 %3717
        %3719 = vrot.lane.b32.xlu0 %v1686, 32
        %v3720 = vpop.permute.xlu0 %3719
        %3721 = vrot.lane.b32.xlu0 %v1687, 32
        %v3722 = vpop.permute.xlu0 %3721
        %3723 = vrot.lane.b32.xlu0 %v1688, 32
        %v3724 = vpop.permute.xlu0 %3723
        %3725 = vrot.lane.b32.xlu0 %v1689, 32
        %v3726 = vpop.permute.xlu0 %3725
        %3727 = vrot.lane.b32.xlu0 %v1690, 32
        %v3728 = vpop.permute.xlu0 %3727
        %3729 = vrot.lane.b32.xlu0 %v1691, 32
        %v3730 = vpop.permute.xlu0 %3729
        %3731 = vrot.lane.b32.xlu0 %v1692, 32
        %v3732 = vpop.permute.xlu0 %3731
        %3733 = vrot.lane.b32.xlu0 %v1693, 32
        %v3734 = vpop.permute.xlu0 %3733
        %3735 = vrot.lane.b32.xlu0 %v1694, 32
        %v3736 = vpop.permute.xlu0 %3735
        %3737 = vrot.lane.b32.xlu0 %v1695, 32
        %v3738 = vpop.permute.xlu0 %3737
        %3739 = vrot.lane.b32.xlu0 %v1696, 32
        %v3740 = vpop.permute.xlu0 %3739
        %3741 = vrot.lane.b32.xlu0 %v1697, 32
        %v3742 = vpop.permute.xlu0 %3741
        %3743 = vrot.lane.b32.xlu0 %v1698, 32
        %v3744 = vpop.permute.xlu0 %3743
        %3745 = vrot.lane.b32.xlu0 %v1699, 32
        %v3746 = vpop.permute.xlu0 %3745
        %3747 = vrot.lane.b32.xlu0 %v1700, 32
        %v3748 = vpop.permute.xlu0 %3747
        %3749 = vrot.lane.b32.xlu0 %v1701, 32
        %v3750 = vpop.permute.xlu0 %3749
        %3751 = vrot.lane.b32.xlu0 %v1702, 32
        %v3752 = vpop.permute.xlu0 %3751
        %3753 = vrot.lane.b32.xlu0 %v1703, 32
        %v3754 = vpop.permute.xlu0 %3753
        %3883 = vrot.lane.b32.xlu0 %v3563, 96
        %v3884 = vpop.permute.xlu0 %3883
        %3885 = vrot.lane.b32.xlu0 %v3564, 96
        %v3886 = vpop.permute.xlu0 %3885
        %3887 = vrot.lane.b32.xlu0 %v3565, 96
        %v3888 = vpop.permute.xlu0 %3887
        %3889 = vrot.lane.b32.xlu0 %v3566, 96
        %v3890 = vpop.permute.xlu0 %3889
        %3891 = vrot.lane.b32.xlu0 %v3567, 96
        %v3892 = vpop.permute.xlu0 %3891
        %3893 = vrot.lane.b32.xlu0 %v3568, 96
        %v3894 = vpop.permute.xlu0 %3893
        %3895 = vrot.lane.b32.xlu0 %v3569, 96
        %v3896 = vpop.permute.xlu0 %3895
        %3897 = vrot.lane.b32.xlu0 %v3570, 96
        %v3898 = vpop.permute.xlu0 %3897
        %3899 = vrot.lane.b32.xlu0 %v3571, 96
        %v3900 = vpop.permute.xlu0 %3899
        %3901 = vrot.lane.b32.xlu0 %v3572, 96
        %v3902 = vpop.permute.xlu0 %3901
        %3903 = vrot.lane.b32.xlu0 %v3573, 96
        %v3904 = vpop.permute.xlu0 %3903
        %3905 = vrot.lane.b32.xlu0 %v3574, 96
        %v3906 = vpop.permute.xlu0 %3905
        %3907 = vrot.lane.b32.xlu0 %v3575, 96
        %v3908 = vpop.permute.xlu0 %3907
        %3909 = vrot.lane.b32.xlu0 %v3576, 96
        %v3910 = vpop.permute.xlu0 %3909
        %3911 = vrot.lane.b32.xlu0 %v3577, 96
        %v3912 = vpop.permute.xlu0 %3911
        %3913 = vrot.lane.b32.xlu0 %v3578, 96
        %v3914 = vpop.permute.xlu0 %3913
        %3915 = vrot.lane.b32.xlu0 %v3579, 96
        %v3916 = vpop.permute.xlu0 %3915
        %3917 = vrot.lane.b32.xlu0 %v3580, 96
        %v3918 = vpop.permute.xlu0 %3917
        %3919 = vrot.lane.b32.xlu0 %v3581, 96
        %v3920 = vpop.permute.xlu0 %3919
        %3921 = vrot.lane.b32.xlu0 %v3582, 96
        %v3922 = vpop.permute.xlu0 %3921
        %3923 = vrot.lane.b32.xlu0 %v3583, 96
        %v3924 = vpop.permute.xlu0 %3923
        %3925 = vrot.lane.b32.xlu0 %v3584, 96
        %v3926 = vpop.permute.xlu0 %3925
        %3927 = vrot.lane.b32.xlu0 %v3585, 96
        %v3928 = vpop.permute.xlu0 %3927
        %3929 = vrot.lane.b32.xlu0 %v3586, 96
        %v3930 = vpop.permute.xlu0 %3929
        %3931 = vrot.lane.b32.xlu0 %v3587, 96
        %v3932 = vpop.permute.xlu0 %3931
        %3933 = vrot.lane.b32.xlu0 %v3588, 96
        %v3934 = vpop.permute.xlu0 %3933
        %3935 = vrot.lane.b32.xlu0 %v3589, 96
        %v3936 = vpop.permute.xlu0 %3935
        %3937 = vrot.lane.b32.xlu0 %v3590, 96
        %v3938 = vpop.permute.xlu0 %3937
        %3939 = vrot.lane.b32.xlu0 %v3591, 96
        %v3940 = vpop.permute.xlu0 %3939
        %3941 = vrot.lane.b32.xlu0 %v3592, 96
        %v3942 = vpop.permute.xlu0 %3941
        %3943 = vrot.lane.b32.xlu0 %v3593, 96
        %v3944 = vpop.permute.xlu0 %3943
        %3945 = vrot.lane.b32.xlu0 %v3594, 96
        %v3946 = vpop.permute.xlu0 %3945
        %3947 = vrot.lane.b32.xlu0 %v3595, 96
        %v3948 = vpop.permute.xlu0 %3947
        %3949 = vrot.lane.b32.xlu0 %v3596, 96
        %v3950 = vpop.permute.xlu0 %3949
        %3951 = vrot.lane.b32.xlu0 %v3597, 96
        %v3952 = vpop.permute.xlu0 %3951
        %3953 = vrot.lane.b32.xlu0 %v3598, 96
        %v3954 = vpop.permute.xlu0 %3953
        %3955 = vrot.lane.b32.xlu0 %v3599, 96
        %v3956 = vpop.permute.xlu0 %3955
        %3957 = vrot.lane.b32.xlu0 %v3600, 96
        %v3958 = vpop.permute.xlu0 %3957
        %3959 = vrot.lane.b32.xlu0 %v3601, 96
        %v3960 = vpop.permute.xlu0 %3959
        %3961 = vrot.lane.b32.xlu0 %v3602, 96
        %v3962 = vpop.permute.xlu0 %3961
        %3963 = vrot.lane.b32.xlu0 %v3603, 96
        %v3964 = vpop.permute.xlu0 %3963
        %3965 = vrot.lane.b32.xlu0 %v3604, 96
        %v3966 = vpop.permute.xlu0 %3965
        %3967 = vrot.lane.b32.xlu0 %v3605, 96
        %v3968 = vpop.permute.xlu0 %3967
        %3969 = vrot.lane.b32.xlu0 %v3606, 96
        %v3970 = vpop.permute.xlu0 %3969
        %3971 = vrot.lane.b32.xlu0 %v3607, 96
        %v3972 = vpop.permute.xlu0 %3971
        %3973 = vrot.lane.b32.xlu0 %v3608, 96
        %v3974 = vpop.permute.xlu0 %3973
        %3975 = vrot.lane.b32.xlu0 %v3609, 96
        %v3976 = vpop.permute.xlu0 %3975
        %3977 = vrot.lane.b32.xlu0 %v3610, 96
        %v3978 = vpop.permute.xlu0 %3977
        %3979 = vrot.lane.b32.xlu0 %v3611, 96
        %v3980 = vpop.permute.xlu0 %3979
        %3981 = vrot.lane.b32.xlu0 %v3612, 96
        %v3982 = vpop.permute.xlu0 %3981
        %3983 = vrot.lane.b32.xlu0 %v3613, 96
        %v3984 = vpop.permute.xlu0 %3983
        %3985 = vrot.lane.b32.xlu0 %v3614, 96
        %v3986 = vpop.permute.xlu0 %3985
        %3987 = vrot.lane.b32.xlu0 %v3615, 96
        %v3988 = vpop.permute.xlu0 %3987
        %3989 = vrot.lane.b32.xlu0 %v3616, 96
        %v3990 = vpop.permute.xlu0 %3989
        %3991 = vrot.lane.b32.xlu0 %v3617, 96
        %v3992 = vpop.permute.xlu0 %3991
        %3993 = vrot.lane.b32.xlu0 %v3618, 96
        %v3994 = vpop.permute.xlu0 %3993
        %3995 = vrot.lane.b32.xlu0 %v3619, 96
        %v3996 = vpop.permute.xlu0 %3995
        %3997 = vrot.lane.b32.xlu0 %v3620, 96
        %v3998 = vpop.permute.xlu0 %3997
        %3999 = vrot.lane.b32.xlu0 %v3621, 96
        %v4000 = vpop.permute.xlu0 %3999
        %4001 = vrot.lane.b32.xlu0 %v3622, 96
        %v4002 = vpop.permute.xlu0 %4001
        %4003 = vrot.lane.b32.xlu0 %v3623, 96
        %v4004 = vpop.permute.xlu0 %4003
        %4005 = vrot.lane.b32.xlu0 %v3624, 96
        %v4006 = vpop.permute.xlu0 %4005
        %4007 = vrot.lane.b32.xlu0 %v3625, 96
        %v4008 = vpop.permute.xlu0 %4007
        %4009 = vrot.lane.b32.xlu0 %v3626, 96
        %v4010 = vpop.permute.xlu0 %4009
        %v4075 = vsel %vm1504, %v3114, %v3628
        %v4076 = vsel %vm1504, %v3115, %v3630
        %v4077 = vsel %vm1504, %v3116, %v3632
        %v4078 = vsel %vm1504, %v3117, %v3634
        %v4079 = vsel %vm1504, %v3118, %v3636
        %v4080 = vsel %vm1504, %v3119, %v3638
        %v4081 = vsel %vm1504, %v3120, %v3640
        %v4082 = vsel %vm1504, %v3121, %v3642
        %v4083 = vsel %vm1504, %v3122, %v3644
        %v4084 = vsel %vm1504, %v3123, %v3646
        %v4085 = vsel %vm1504, %v3124, %v3648
        %v4086 = vsel %vm1504, %v3125, %v3650
        %v4087 = vsel %vm1504, %v3126, %v3652
        %v4088 = vsel %vm1504, %v3127, %v3654
        %v4089 = vsel %vm1504, %v3128, %v3656
        %v4090 = vsel %vm1504, %v3129, %v3658
        %v4091 = vsel %vm1504, %v3130, %v3660
        %v4092 = vsel %vm1504, %v3131, %v3662
        %v4093 = vsel %vm1504, %v3132, %v3664
        %v4094 = vsel %vm1504, %v3133, %v3666
        %v4095 = vsel %vm1504, %v3134, %v3668
        %v4096 = vsel %vm1504, %v3135, %v3670
        %v4097 = vsel %vm1504, %v3136, %v3672
        %v4098 = vsel %vm1504, %v3137, %v3674
        %v4099 = vsel %vm1504, %v3138, %v3676
        %v4100 = vsel %vm1504, %v3139, %v3678
        %v4101 = vsel %vm1504, %v3140, %v3680
        %v4102 = vsel %vm1504, %v3141, %v3682
        %v4103 = vsel %vm1504, %v3142, %v3684
        %v4104 = vsel %vm1504, %v3143, %v3686
        %v4105 = vsel %vm1504, %v3144, %v3688
        %v4106 = vsel %vm1504, %v3145, %v3690
        %v4107 = vsel %vm1504, %v3146, %v3692
        %v4108 = vsel %vm1504, %v3147, %v3694
        %v4109 = vsel %vm1504, %v3148, %v3696
        %v4110 = vsel %vm1504, %v3149, %v3698
        %v4111 = vsel %vm1504, %v3150, %v3700
        %v4112 = vsel %vm1504, %v3151, %v3702
        %v4113 = vsel %vm1504, %v3152, %v3704
        %v4114 = vsel %vm1504, %v3153, %v3706
        %v4115 = vsel %vm1504, %v3154, %v3708
        %v4116 = vsel %vm1504, %v3155, %v3710
        %v4117 = vsel %vm1504, %v3156, %v3712
        %v4118 = vsel %vm1504, %v3157, %v3714
        %v4119 = vsel %vm1504, %v3158, %v3716
        %v4120 = vsel %vm1504, %v3159, %v3718
        %v4121 = vsel %vm1504, %v3160, %v3720
        %v4122 = vsel %vm1504, %v3161, %v3722
        %v4123 = vsel %vm1504, %v3162, %v3724
        %v4124 = vsel %vm1504, %v3163, %v3726
        %v4125 = vsel %vm1504, %v3164, %v3728
        %v4126 = vsel %vm1504, %v3165, %v3730
        %v4127 = vsel %vm1504, %v3166, %v3732
        %v4128 = vsel %vm1504, %v3167, %v3734
        %v4129 = vsel %vm1504, %v3168, %v3736
        %v4130 = vsel %vm1504, %v3169, %v3738
        %v4131 = vsel %vm1504, %v3170, %v3740
        %v4132 = vsel %vm1504, %v3171, %v3742
        %v4133 = vsel %vm1504, %v3172, %v3744
        %v4134 = vsel %vm1504, %v3173, %v3746
        %v4135 = vsel %vm1504, %v3174, %v3748
        %v4136 = vsel %vm1504, %v3175, %v3750
        %v4137 = vsel %vm1504, %v3176, %v3752
        %v4138 = vsel %vm1504, %v3177, %v3754
        %vm4139 = vcmask 785408
        %v4140 = vsel %vm4139, %v4075, %v3884
        %v4141 = vsel %vm4139, %v4076, %v3886
        %v4142 = vsel %vm4139, %v4077, %v3888
        %v4143 = vsel %vm4139, %v4078, %v3890
        %v4144 = vsel %vm4139, %v4079, %v3892
        %v4145 = vsel %vm4139, %v4080, %v3894
        %v4146 = vsel %vm4139, %v4081, %v3896
        %v4147 = vsel %vm4139, %v4082, %v3898
        %v4148 = vsel %vm4139, %v4083, %v3900
        %v4149 = vsel %vm4139, %v4084, %v3902
        %v4150 = vsel %vm4139, %v4085, %v3904
        %v4151 = vsel %vm4139, %v4086, %v3906
        %v4152 = vsel %vm4139, %v4087, %v3908
        %v4153 = vsel %vm4139, %v4088, %v3910
        %v4154 = vsel %vm4139, %v4089, %v3912
        %v4155 = vsel %vm4139, %v4090, %v3914
        %v4156 = vsel %vm4139, %v4091, %v3916
        %v4157 = vsel %vm4139, %v4092, %v3918
        %v4158 = vsel %vm4139, %v4093, %v3920
        %v4159 = vsel %vm4139, %v4094, %v3922
        %v4160 = vsel %vm4139, %v4095, %v3924
        %v4161 = vsel %vm4139, %v4096, %v3926
        %v4162 = vsel %vm4139, %v4097, %v3928
        %v4163 = vsel %vm4139, %v4098, %v3930
        %v4164 = vsel %vm4139, %v4099, %v3932
        %v4165 = vsel %vm4139, %v4100, %v3934
        %v4166 = vsel %vm4139, %v4101, %v3936
        %v4167 = vsel %vm4139, %v4102, %v3938
        %v4168 = vsel %vm4139, %v4103, %v3940
        %v4169 = vsel %vm4139, %v4104, %v3942
        %v4170 = vsel %vm4139, %v4105, %v3944
        %v4171 = vsel %vm4139, %v4106, %v3946
        %v4172 = vsel %vm4139, %v4107, %v3948
        %v4173 = vsel %vm4139, %v4108, %v3950
        %v4174 = vsel %vm4139, %v4109, %v3952
        %v4175 = vsel %vm4139, %v4110, %v3954
        %v4176 = vsel %vm4139, %v4111, %v3956
        %v4177 = vsel %vm4139, %v4112, %v3958
        %v4178 = vsel %vm4139, %v4113, %v3960
        %v4179 = vsel %vm4139, %v4114, %v3962
        %v4180 = vsel %vm4139, %v4115, %v3964
        %v4181 = vsel %vm4139, %v4116, %v3966
        %v4182 = vsel %vm4139, %v4117, %v3968
        %v4183 = vsel %vm4139, %v4118, %v3970
        %v4184 = vsel %vm4139, %v4119, %v3972
        %v4185 = vsel %vm4139, %v4120, %v3974
        %v4186 = vsel %vm4139, %v4121, %v3976
        %v4187 = vsel %vm4139, %v4122, %v3978
        %v4188 = vsel %vm4139, %v4123, %v3980
        %v4189 = vsel %vm4139, %v4124, %v3982
        %v4190 = vsel %vm4139, %v4125, %v3984
        %v4191 = vsel %vm4139, %v4126, %v3986
        %v4192 = vsel %vm4139, %v4127, %v3988
        %v4193 = vsel %vm4139, %v4128, %v3990
        %v4194 = vsel %vm4139, %v4129, %v3992
        %v4195 = vsel %vm4139, %v4130, %v3994
        %v4196 = vsel %vm4139, %v4131, %v3996
        %v4197 = vsel %vm4139, %v4132, %v3998
        %v4198 = vsel %vm4139, %v4133, %v4000
        %v4199 = vsel %vm4139, %v4134, %v4002
        %v4200 = vsel %vm4139, %v4135, %v4004
        %v4201 = vsel %vm4139, %v4136, %v4006
        %v4202 = vsel %vm4139, %v4137, %v4008
        %v4203 = vsel %vm4139, %v4138, %v4010
        %v4204 = vld [vmem:[#allocation6] sm:$0xff]
        %v4205 = vld [vmem:[#allocation6 + $0x8] sm:$0xff]
        %v4206 = vld [vmem:[#allocation6 + $0x10] sm:$0xff]
        %v4207 = vld [vmem:[#allocation6 + $0x18] sm:$0xff]
        %v4208 = vld [vmem:[#allocation6 + $0x20] sm:$0xff]
        %v4209 = vld [vmem:[#allocation6 + $0x28] sm:$0xff]
        %v4210 = vld [vmem:[#allocation6 + $0x30] sm:$0xff]
        %v4211 = vld [vmem:[#allocation6 + $0x38] sm:$0xff]
        %v4212 = vld [vmem:[#allocation6 + $0x40] sm:$0xff]
        %v4213 = vld [vmem:[#allocation6 + $0x48] sm:$0xff]
        %v4214 = vld [vmem:[#allocation6 + $0x50] sm:$0xff]
        %v4215 = vld [vmem:[#allocation6 + $0x58] sm:$0xff]
        %v4216 = vld [vmem:[#allocation6 + $0x60] sm:$0xff]
        %v4217 = vld [vmem:[#allocation6 + $0x68] sm:$0xff]
        %v4218 = vld [vmem:[#allocation6 + $0x70] sm:$0xff]
        %v4219 = vld [vmem:[#allocation6 + $0x78] sm:$0xff]
        %4220 = vmatprep.subr.mxu0 0.0
        %4221 = vmatpush1.msra.mxu0 %v4219
        %4222 = vmatprep.subr.mxu0 0.0
        %4223 = vmatpush1.msra.mxu0 %v4218
        %4224 = vmatprep.subr.mxu0 0.0
        %4225 = vmatpush1.msra.mxu0 %v4217
        %4226 = vmatprep.subr.mxu0 0.0
        %4227 = vmatpush1.msra.mxu0 %v4216
        %4228 = vmatprep.subr.mxu0 0.0
        %4229 = vmatpush1.msra.mxu0 %v4215
        %4230 = vmatprep.subr.mxu0 0.0
        %4231 = vmatpush1.msra.mxu0 %v4214
        %4232 = vmatprep.subr.mxu0 0.0
        %4233 = vmatpush1.msra.mxu0 %v4213
        %4234 = vmatprep.subr.mxu0 0.0
        %4235 = vmatpush1.msra.mxu0 %v4212
        %4236 = vmatprep.subr.mxu0 0.0
        %4237 = vmatpush1.msra.mxu0 %v4211
        %4238 = vmatprep.subr.mxu0 0.0
        %4239 = vmatpush1.msra.mxu0 %v4210
        %4240 = vmatprep.subr.mxu0 0.0
        %4241 = vmatpush1.msra.mxu0 %v4209
        %4242 = vmatprep.subr.mxu0 0.0
        %4243 = vmatpush1.msra.mxu0 %v4208
        %4244 = vmatprep.subr.mxu0 0.0
        %4245 = vmatpush1.msra.mxu0 %v4207
        %4246 = vmatprep.subr.mxu0 0.0
        %4247 = vmatpush1.msra.mxu0 %v4206
        %4248 = vmatprep.subr.mxu0 0.0
        %4249 = vmatpush1.msra.mxu0 %v4205
        %4250 = vmatprep.subr.mxu0 0.0
        %4251 = vmatpush1.msra.mxu0 %v4204
        %4252 = vmatprep.subr.mxu0 0.0
        %4253 = vmatpush2.msra.mxu0 0.0
        %4254 = vmatprep.subr.mxu0 0.0
        %4255 = vmatpush2.msra.mxu0 0.0
        %4256 = vmatprep.subr.mxu0 0.0
        %4257 = vmatpush2.msra.mxu0 0.0
        %4258 = vmatprep.subr.mxu0 0.0
        %4259 = vmatpush2.msra.mxu0 0.0
        %4260 = vmatprep.subr.mxu0 0.0
        %4261 = vmatpush2.msra.mxu0 0.0
        %4262 = vmatprep.subr.mxu0 0.0
        %4263 = vmatpush2.msra.mxu0 0.0
        %4264 = vmatprep.subr.mxu0 0.0
        %4265 = vmatpush2.msra.mxu0 0.0
        %4266 = vmatprep.subr.mxu0 0.0
        %4267 = vmatpush2.msra.mxu0 0.0
        %4268 = vmatprep.subr.mxu0 0.0
        %4269 = vmatpush2.msra.mxu0 0.0
        %4270 = vmatprep.subr.mxu0 0.0
        %4271 = vmatpush2.msra.mxu0 0.0
        %4272 = vmatprep.subr.mxu0 0.0
        %4273 = vmatpush2.msra.mxu0 0.0
        %4274 = vmatprep.subr.mxu0 0.0
        %4275 = vmatpush2.msra.mxu0 0.0
        %4276 = vmatprep.subr.mxu0 0.0
        %4277 = vmatpush2.msra.mxu0 0.0
        %4278 = vmatprep.subr.mxu0 0.0
        %4279 = vmatpush2.msra.mxu0 0.0
        %4280 = vmatprep.subr.mxu0 0.0
        %4281 = vmatpush2.msra.mxu0 0.0
        %4282 = vmatprep.subr.mxu0 0.0
        %4283 = vmatpush2.msra.mxu0 0.0
        %4284 = vmatprep.mubr.f32.mxu0 0.0
        %4285 = vmatmul.mubr.f32.gmra.mxu0 %v4140
        %v4286 = vpop.f32.mrf.mxu0
        %v4287 = vadd.f32 0.0, %v4286
        %v4288 = vpop.f32.mrf.mxu0
        %4289 = vmatprep.mubr.f32.mxu0 0.0
        %4290 = vmatmul.mubr.f32.gmra.mxu0 %v4141
        %v4291 = vpop.f32.mrf.mxu0
        %v4292 = vadd.f32 0.0, %v4291
        %v4293 = vpop.f32.mrf.mxu0
        %4294 = vmatprep.mubr.f32.mxu0 0.0
        %4295 = vmatmul.mubr.f32.gmra.mxu0 %v4142
        %v4296 = vpop.f32.mrf.mxu0
        %v4297 = vadd.f32 0.0, %v4296
        %v4298 = vpop.f32.mrf.mxu0
        %4299 = vmatprep.mubr.f32.mxu0 0.0
        %4300 = vmatmul.mubr.f32.gmra.mxu0 %v4143
        %v4301 = vpop.f32.mrf.mxu0
        %v4302 = vadd.f32 0.0, %v4301
        %v4303 = vpop.f32.mrf.mxu0
        %4304 = vmatprep.mubr.f32.mxu0 0.0
        %4305 = vmatmul.mubr.f32.gmra.mxu0 %v4144
        %v4306 = vpop.f32.mrf.mxu0
        %v4307 = vadd.f32 0.0, %v4306
        %v4308 = vpop.f32.mrf.mxu0
        %4309 = vmatprep.mubr.f32.mxu0 0.0
        %4310 = vmatmul.mubr.f32.gmra.mxu0 %v4145
        %v4311 = vpop.f32.mrf.mxu0
        %v4312 = vadd.f32 0.0, %v4311
        %v4313 = vpop.f32.mrf.mxu0
        %4314 = vmatprep.mubr.f32.mxu0 0.0
        %4315 = vmatmul.mubr.f32.gmra.mxu0 %v4146
        %v4316 = vpop.f32.mrf.mxu0
        %v4317 = vadd.f32 0.0, %v4316
        %v4318 = vpop.f32.mrf.mxu0
        %4319 = vmatprep.mubr.f32.mxu0 0.0
        %4320 = vmatmul.mubr.f32.gmra.mxu0 %v4147
        %v4321 = vpop.f32.mrf.mxu0
        %v4322 = vadd.f32 0.0, %v4321
        %v4323 = vpop.f32.mrf.mxu0
        %4324 = vmatprep.mubr.f32.mxu0 0.0
        %4325 = vmatmul.mubr.f32.gmra.mxu0 %v4148
        %v4326 = vpop.f32.mrf.mxu0
        %v4327 = vadd.f32 0.0, %v4326
        %v4328 = vpop.f32.mrf.mxu0
        %4329 = vmatprep.mubr.f32.mxu0 0.0
        %4330 = vmatmul.mubr.f32.gmra.mxu0 %v4149
        %v4331 = vpop.f32.mrf.mxu0
        %v4332 = vadd.f32 0.0, %v4331
        %v4333 = vpop.f32.mrf.mxu0
        %4334 = vmatprep.mubr.f32.mxu0 0.0
        %4335 = vmatmul.mubr.f32.gmra.mxu0 %v4150
        %v4336 = vpop.f32.mrf.mxu0
        %v4337 = vadd.f32 0.0, %v4336
        %v4338 = vpop.f32.mrf.mxu0
        %4339 = vmatprep.mubr.f32.mxu0 0.0
        %4340 = vmatmul.mubr.f32.gmra.mxu0 %v4151
        %v4341 = vpop.f32.mrf.mxu0
        %v4342 = vadd.f32 0.0, %v4341
        %v4343 = vpop.f32.mrf.mxu0
        %4344 = vmatprep.mubr.f32.mxu0 0.0
        %4345 = vmatmul.mubr.f32.gmra.mxu0 %v4152
        %v4346 = vpop.f32.mrf.mxu0
        %v4347 = vadd.f32 0.0, %v4346
        %v4348 = vpop.f32.mrf.mxu0
        %4349 = vmatprep.mubr.f32.mxu0 0.0
        %4350 = vmatmul.mubr.f32.gmra.mxu0 %v4153
        %v4351 = vpop.f32.mrf.mxu0
        %v4352 = vadd.f32 0.0, %v4351
        %v4353 = vpop.f32.mrf.mxu0
        %4354 = vmatprep.mubr.f32.mxu0 0.0
        %4355 = vmatmul.mubr.f32.gmra.mxu0 %v4154
        %v4356 = vpop.f32.mrf.mxu0
        %v4357 = vadd.f32 0.0, %v4356
        %v4358 = vpop.f32.mrf.mxu0
        %4359 = vmatprep.mubr.f32.mxu0 0.0
        %4360 = vmatmul.mubr.f32.gmra.mxu0 %v4155
        %v4361 = vpop.f32.mrf.mxu0
        %v4362 = vadd.f32 0.0, %v4361
        %v4363 = vpop.f32.mrf.mxu0
        %4364 = vmatprep.mubr.f32.mxu0 0.0
        %4365 = vmatmul.mubr.f32.gmra.mxu0 %v4156
        %v4366 = vpop.f32.mrf.mxu0
        %v4367 = vadd.f32 0.0, %v4366
        %v4368 = vpop.f32.mrf.mxu0
        %4369 = vmatprep.mubr.f32.mxu0 0.0
        %4370 = vmatmul.mubr.f32.gmra.mxu0 %v4157
        %v4371 = vpop.f32.mrf.mxu0
        %v4372 = vadd.f32 0.0, %v4371
        %v4373 = vpop.f32.mrf.mxu0
        %4374 = vmatprep.mubr.f32.mxu0 0.0
        %4375 = vmatmul.mubr.f32.gmra.mxu0 %v4158
        %v4376 = vpop.f32.mrf.mxu0
        %v4377 = vadd.f32 0.0, %v4376
        %v4378 = vpop.f32.mrf.mxu0
        %4379 = vmatprep.mubr.f32.mxu0 0.0
        %4380 = vmatmul.mubr.f32.gmra.mxu0 %v4159
        %v4381 = vpop.f32.mrf.mxu0
        %v4382 = vadd.f32 0.0, %v4381
        %v4383 = vpop.f32.mrf.mxu0
        %4384 = vmatprep.mubr.f32.mxu0 0.0
        %4385 = vmatmul.mubr.f32.gmra.mxu0 %v4160
        %v4386 = vpop.f32.mrf.mxu0
        %v4387 = vadd.f32 0.0, %v4386
        %v4388 = vpop.f32.mrf.mxu0
        %4389 = vmatprep.mubr.f32.mxu0 0.0
        %4390 = vmatmul.mubr.f32.gmra.mxu0 %v4161
        %v4391 = vpop.f32.mrf.mxu0
        %v4392 = vadd.f32 0.0, %v4391
        %v4393 = vpop.f32.mrf.mxu0
        %4394 = vmatprep.mubr.f32.mxu0 0.0
        %4395 = vmatmul.mubr.f32.gmra.mxu0 %v4162
        %v4396 = vpop.f32.mrf.mxu0
        %v4397 = vadd.f32 0.0, %v4396
        %v4398 = vpop.f32.mrf.mxu0
        %4399 = vmatprep.mubr.f32.mxu0 0.0
        %4400 = vmatmul.mubr.f32.gmra.mxu0 %v4163
        %v4401 = vpop.f32.mrf.mxu0
        %v4402 = vadd.f32 0.0, %v4401
        %v4403 = vpop.f32.mrf.mxu0
        %4404 = vmatprep.mubr.f32.mxu0 0.0
        %4405 = vmatmul.mubr.f32.gmra.mxu0 %v4164
        %v4406 = vpop.f32.mrf.mxu0
        %v4407 = vadd.f32 0.0, %v4406
        %v4408 = vpop.f32.mrf.mxu0
        %4409 = vmatprep.mubr.f32.mxu0 0.0
        %4410 = vmatmul.mubr.f32.gmra.mxu0 %v4165
        %v4411 = vpop.f32.mrf.mxu0
        %v4412 = vadd.f32 0.0, %v4411
        %v4413 = vpop.f32.mrf.mxu0
        %4414 = vmatprep.mubr.f32.mxu0 0.0
        %4415 = vmatmul.mubr.f32.gmra.mxu0 %v4166
        %v4416 = vpop.f32.mrf.mxu0
        %v4417 = vadd.f32 0.0, %v4416
        %v4418 = vpop.f32.mrf.mxu0
        %4419 = vmatprep.mubr.f32.mxu0 0.0
        %4420 = vmatmul.mubr.f32.gmra.mxu0 %v4167
        %v4421 = vpop.f32.mrf.mxu0
        %v4422 = vadd.f32 0.0, %v4421
        %v4423 = vpop.f32.mrf.mxu0
        %4424 = vmatprep.mubr.f32.mxu0 0.0
        %4425 = vmatmul.mubr.f32.gmra.mxu0 %v4168
        %v4426 = vpop.f32.mrf.mxu0
        %v4427 = vadd.f32 0.0, %v4426
        %v4428 = vpop.f32.mrf.mxu0
        %4429 = vmatprep.mubr.f32.mxu0 0.0
        %4430 = vmatmul.mubr.f32.gmra.mxu0 %v4169
        %v4431 = vpop.f32.mrf.mxu0
        %v4432 = vadd.f32 0.0, %v4431
        %v4433 = vpop.f32.mrf.mxu0
        %4434 = vmatprep.mubr.f32.mxu0 0.0
        %4435 = vmatmul.mubr.f32.gmra.mxu0 %v4170
        %v4436 = vpop.f32.mrf.mxu0
        %v4437 = vadd.f32 0.0, %v4436
        %v4438 = vpop.f32.mrf.mxu0
        %4439 = vmatprep.mubr.f32.mxu0 0.0
        %4440 = vmatmul.mubr.f32.gmra.mxu0 %v4171
        %v4441 = vpop.f32.mrf.mxu0
        %v4442 = vadd.f32 0.0, %v4441
        %v4443 = vpop.f32.mrf.mxu0
        %4444 = vmatprep.mubr.f32.mxu0 0.0
        %4445 = vmatmul.mubr.f32.gmra.mxu0 %v4172
        %v4446 = vpop.f32.mrf.mxu0
        %v4447 = vadd.f32 0.0, %v4446
        %v4448 = vpop.f32.mrf.mxu0
        %4449 = vmatprep.mubr.f32.mxu0 0.0
        %4450 = vmatmul.mubr.f32.gmra.mxu0 %v4173
        %v4451 = vpop.f32.mrf.mxu0
        %v4452 = vadd.f32 0.0, %v4451
        %v4453 = vpop.f32.mrf.mxu0
        %4454 = vmatprep.mubr.f32.mxu0 0.0
        %4455 = vmatmul.mubr.f32.gmra.mxu0 %v4174
        %v4456 = vpop.f32.mrf.mxu0
        %v4457 = vadd.f32 0.0, %v4456
        %v4458 = vpop.f32.mrf.mxu0
        %4459 = vmatprep.mubr.f32.mxu0 0.0
        %4460 = vmatmul.mubr.f32.gmra.mxu0 %v4175
        %v4461 = vpop.f32.mrf.mxu0
        %v4462 = vadd.f32 0.0, %v4461
        %v4463 = vpop.f32.mrf.mxu0
        %4464 = vmatprep.mubr.f32.mxu0 0.0
        %4465 = vmatmul.mubr.f32.gmra.mxu0 %v4176
        %v4466 = vpop.f32.mrf.mxu0
        %v4467 = vadd.f32 0.0, %v4466
        %v4468 = vpop.f32.mrf.mxu0
        %4469 = vmatprep.mubr.f32.mxu0 0.0
        %4470 = vmatmul.mubr.f32.gmra.mxu0 %v4177
        %v4471 = vpop.f32.mrf.mxu0
        %v4472 = vadd.f32 0.0, %v4471
        %v4473 = vpop.f32.mrf.mxu0
        %4474 = vmatprep.mubr.f32.mxu0 0.0
        %4475 = vmatmul.mubr.f32.gmra.mxu0 %v4178
        %v4476 = vpop.f32.mrf.mxu0
        %v4477 = vadd.f32 0.0, %v4476
        %v4478 = vpop.f32.mrf.mxu0
        %4479 = vmatprep.mubr.f32.mxu0 0.0
        %4480 = vmatmul.mubr.f32.gmra.mxu0 %v4179
        %v4481 = vpop.f32.mrf.mxu0
        %v4482 = vadd.f32 0.0, %v4481
        %v4483 = vpop.f32.mrf.mxu0
        %4484 = vmatprep.mubr.f32.mxu0 0.0
        %4485 = vmatmul.mubr.f32.gmra.mxu0 %v4180
        %v4486 = vpop.f32.mrf.mxu0
        %v4487 = vadd.f32 0.0, %v4486
        %v4488 = vpop.f32.mrf.mxu0
        %4489 = vmatprep.mubr.f32.mxu0 0.0
        %4490 = vmatmul.mubr.f32.gmra.mxu0 %v4181
        %v4491 = vpop.f32.mrf.mxu0
        %v4492 = vadd.f32 0.0, %v4491
        %v4493 = vpop.f32.mrf.mxu0
        %4494 = vmatprep.mubr.f32.mxu0 0.0
        %4495 = vmatmul.mubr.f32.gmra.mxu0 %v4182
        %v4496 = vpop.f32.mrf.mxu0
        %v4497 = vadd.f32 0.0, %v4496
        %v4498 = vpop.f32.mrf.mxu0
        %4499 = vmatprep.mubr.f32.mxu0 0.0
        %4500 = vmatmul.mubr.f32.gmra.mxu0 %v4183
        %v4501 = vpop.f32.mrf.mxu0
        %v4502 = vadd.f32 0.0, %v4501
        %v4503 = vpop.f32.mrf.mxu0
        %4504 = vmatprep.mubr.f32.mxu0 0.0
        %4505 = vmatmul.mubr.f32.gmra.mxu0 %v4184
        %v4506 = vpop.f32.mrf.mxu0
        %v4507 = vadd.f32 0.0, %v4506
        %v4508 = vpop.f32.mrf.mxu0
        %4509 = vmatprep.mubr.f32.mxu0 0.0
        %4510 = vmatmul.mubr.f32.gmra.mxu0 %v4185
        %v4511 = vpop.f32.mrf.mxu0
        %v4512 = vadd.f32 0.0, %v4511
        %v4513 = vpop.f32.mrf.mxu0
        %4514 = vmatprep.mubr.f32.mxu0 0.0
        %4515 = vmatmul.mubr.f32.gmra.mxu0 %v4186
        %v4516 = vpop.f32.mrf.mxu0
        %v4517 = vadd.f32 0.0, %v4516
        %v4518 = vpop.f32.mrf.mxu0
        %4519 = vmatprep.mubr.f32.mxu0 0.0
        %4520 = vmatmul.mubr.f32.gmra.mxu0 %v4187
        %v4521 = vpop.f32.mrf.mxu0
        %v4522 = vadd.f32 0.0, %v4521
        %v4523 = vpop.f32.mrf.mxu0
        %4524 = vmatprep.mubr.f32.mxu0 0.0
        %4525 = vmatmul.mubr.f32.gmra.mxu0 %v4188
        %v4526 = vpop.f32.mrf.mxu0
        %v4527 = vadd.f32 0.0, %v4526
        %v4528 = vpop.f32.mrf.mxu0
        %4529 = vmatprep.mubr.f32.mxu0 0.0
        %4530 = vmatmul.mubr.f32.gmra.mxu0 %v4189
        %v4531 = vpop.f32.mrf.mxu0
        %v4532 = vadd.f32 0.0, %v4531
        %v4533 = vpop.f32.mrf.mxu0
        %4534 = vmatprep.mubr.f32.mxu0 0.0
        %4535 = vmatmul.mubr.f32.gmra.mxu0 %v4190
        %v4536 = vpop.f32.mrf.mxu0
        %v4537 = vadd.f32 0.0, %v4536
        %v4538 = vpop.f32.mrf.mxu0
        %4539 = vmatprep.mubr.f32.mxu0 0.0
        %4540 = vmatmul.mubr.f32.gmra.mxu0 %v4191
        %v4541 = vpop.f32.mrf.mxu0
        %v4542 = vadd.f32 0.0, %v4541
        %v4543 = vpop.f32.mrf.mxu0
        %4544 = vmatprep.mubr.f32.mxu0 0.0
        %4545 = vmatmul.mubr.f32.gmra.mxu0 %v4192
        %v4546 = vpop.f32.mrf.mxu0
        %v4547 = vadd.f32 0.0, %v4546
        %v4548 = vpop.f32.mrf.mxu0
        %4549 = vmatprep.mubr.f32.mxu0 0.0
        %4550 = vmatmul.mubr.f32.gmra.mxu0 %v4193
        %v4551 = vpop.f32.mrf.mxu0
        %v4552 = vadd.f32 0.0, %v4551
        %v4553 = vpop.f32.mrf.mxu0
        %4554 = vmatprep.mubr.f32.mxu0 0.0
        %4555 = vmatmul.mubr.f32.gmra.mxu0 %v4194
        %v4556 = vpop.f32.mrf.mxu0
        %v4557 = vadd.f32 0.0, %v4556
        %v4558 = vpop.f32.mrf.mxu0
        %4559 = vmatprep.mubr.f32.mxu0 0.0
        %4560 = vmatmul.mubr.f32.gmra.mxu0 %v4195
        %v4561 = vpop.f32.mrf.mxu0
        %v4562 = vadd.f32 0.0, %v4561
        %v4563 = vpop.f32.mrf.mxu0
        %4564 = vmatprep.mubr.f32.mxu0 0.0
        %4565 = vmatmul.mubr.f32.gmra.mxu0 %v4196
        %v4566 = vpop.f32.mrf.mxu0
        %v4567 = vadd.f32 0.0, %v4566
        %v4568 = vpop.f32.mrf.mxu0
        %4569 = vmatprep.mubr.f32.mxu0 0.0
        %4570 = vmatmul.mubr.f32.gmra.mxu0 %v4197
        %v4571 = vpop.f32.mrf.mxu0
        %v4572 = vadd.f32 0.0, %v4571
        %v4573 = vpop.f32.mrf.mxu0
        %4574 = vmatprep.mubr.f32.mxu0 0.0
        %4575 = vmatmul.mubr.f32.gmra.mxu0 %v4198
        %v4576 = vpop.f32.mrf.mxu0
        %v4577 = vadd.f32 0.0, %v4576
        %v4578 = vpop.f32.mrf.mxu0
        %4579 = vmatprep.mubr.f32.mxu0 0.0
        %4580 = vmatmul.mubr.f32.gmra.mxu0 %v4199
        %v4581 = vpop.f32.mrf.mxu0
        %v4582 = vadd.f32 0.0, %v4581
        %v4583 = vpop.f32.mrf.mxu0
        %4584 = vmatprep.mubr.f32.mxu0 0.0
        %4585 = vmatmul.mubr.f32.gmra.mxu0 %v4200
        %v4586 = vpop.f32.mrf.mxu0
        %v4587 = vadd.f32 0.0, %v4586
        %v4588 = vpop.f32.mrf.mxu0
        %4589 = vmatprep.mubr.f32.mxu0 0.0
        %4590 = vmatmul.mubr.f32.gmra.mxu0 %v4201
        %v4591 = vpop.f32.mrf.mxu0
        %v4592 = vadd.f32 0.0, %v4591
        %v4593 = vpop.f32.mrf.mxu0
        %4594 = vmatprep.mubr.f32.mxu0 0.0
        %4595 = vmatmul.mubr.f32.gmra.mxu0 %v4202
        %v4596 = vpop.f32.mrf.mxu0
        %v4597 = vadd.f32 0.0, %v4596
        %v4598 = vpop.f32.mrf.mxu0
        %4599 = vmatprep.mubr.f32.mxu0 0.0
        %4600 = vmatmul.mubr.f32.gmra.mxu0 %v4203
        %v4601 = vpop.f32.mrf.mxu0
        %v4602 = vadd.f32 0.0, %v4601
        %v4603 = vpop.f32.mrf.mxu0
        %4604 = vdwg.mxu0
        %4669 = vrot.lane.b32.xlu0 %v4287, 64
        %v4670 = vpop.permute.xlu0 %4669
        %4671 = vrot.lane.b32.xlu0 %v4292, 64
        %v4672 = vpop.permute.xlu0 %4671
        %4673 = vrot.lane.b32.xlu0 %v4297, 64
        %v4674 = vpop.permute.xlu0 %4673
        %4675 = vrot.lane.b32.xlu0 %v4302, 64
        %v4676 = vpop.permute.xlu0 %4675
        %4677 = vrot.lane.b32.xlu0 %v4307, 64
        %v4678 = vpop.permute.xlu0 %4677
        %4679 = vrot.lane.b32.xlu0 %v4312, 64
        %v4680 = vpop.permute.xlu0 %4679
        %4681 = vrot.lane.b32.xlu0 %v4317, 64
        %v4682 = vpop.permute.xlu0 %4681
        %4683 = vrot.lane.b32.xlu0 %v4322, 64
        %v4684 = vpop.permute.xlu0 %4683
        %4685 = vrot.lane.b32.xlu0 %v4327, 64
        %v4686 = vpop.permute.xlu0 %4685
        %4687 = vrot.lane.b32.xlu0 %v4332, 64
        %v4688 = vpop.permute.xlu0 %4687
        %4689 = vrot.lane.b32.xlu0 %v4337, 64
        %v4690 = vpop.permute.xlu0 %4689
        %4691 = vrot.lane.b32.xlu0 %v4342, 64
        %v4692 = vpop.permute.xlu0 %4691
        %4693 = vrot.lane.b32.xlu0 %v4347, 64
        %v4694 = vpop.permute.xlu0 %4693
        %4695 = vrot.lane.b32.xlu0 %v4352, 64
        %v4696 = vpop.permute.xlu0 %4695
        %4697 = vrot.lane.b32.xlu0 %v4357, 64
        %v4698 = vpop.permute.xlu0 %4697
        %4699 = vrot.lane.b32.xlu0 %v4362, 64
        %v4700 = vpop.permute.xlu0 %4699
        %4701 = vrot.lane.b32.xlu0 %v4367, 64
        %v4702 = vpop.permute.xlu0 %4701
        %4703 = vrot.lane.b32.xlu0 %v4372, 64
        %v4704 = vpop.permute.xlu0 %4703
        %4705 = vrot.lane.b32.xlu0 %v4377, 64
        %v4706 = vpop.permute.xlu0 %4705
        %4707 = vrot.lane.b32.xlu0 %v4382, 64
        %v4708 = vpop.permute.xlu0 %4707
        %4709 = vrot.lane.b32.xlu0 %v4387, 64
        %v4710 = vpop.permute.xlu0 %4709
        %4711 = vrot.lane.b32.xlu0 %v4392, 64
        %v4712 = vpop.permute.xlu0 %4711
        %4713 = vrot.lane.b32.xlu0 %v4397, 64
        %v4714 = vpop.permute.xlu0 %4713
        %4715 = vrot.lane.b32.xlu0 %v4402, 64
        %v4716 = vpop.permute.xlu0 %4715
        %4717 = vrot.lane.b32.xlu0 %v4407, 64
        %v4718 = vpop.permute.xlu0 %4717
        %4719 = vrot.lane.b32.xlu0 %v4412, 64
        %v4720 = vpop.permute.xlu0 %4719
        %4721 = vrot.lane.b32.xlu0 %v4417, 64
        %v4722 = vpop.permute.xlu0 %4721
        %4723 = vrot.lane.b32.xlu0 %v4422, 64
        %v4724 = vpop.permute.xlu0 %4723
        %4725 = vrot.lane.b32.xlu0 %v4427, 64
        %v4726 = vpop.permute.xlu0 %4725
        %4727 = vrot.lane.b32.xlu0 %v4432, 64
        %v4728 = vpop.permute.xlu0 %4727
        %4729 = vrot.lane.b32.xlu0 %v4437, 64
        %v4730 = vpop.permute.xlu0 %4729
        %4731 = vrot.lane.b32.xlu0 %v4442, 64
        %v4732 = vpop.permute.xlu0 %4731
        %4733 = vrot.lane.b32.xlu0 %v4447, 64
        %v4734 = vpop.permute.xlu0 %4733
        %4735 = vrot.lane.b32.xlu0 %v4452, 64
        %v4736 = vpop.permute.xlu0 %4735
        %4737 = vrot.lane.b32.xlu0 %v4457, 64
        %v4738 = vpop.permute.xlu0 %4737
        %4739 = vrot.lane.b32.xlu0 %v4462, 64
        %v4740 = vpop.permute.xlu0 %4739
        %4741 = vrot.lane.b32.xlu0 %v4467, 64
        %v4742 = vpop.permute.xlu0 %4741
        %4743 = vrot.lane.b32.xlu0 %v4472, 64
        %v4744 = vpop.permute.xlu0 %4743
        %4745 = vrot.lane.b32.xlu0 %v4477, 64
        %v4746 = vpop.permute.xlu0 %4745
        %4747 = vrot.lane.b32.xlu0 %v4482, 64
        %v4748 = vpop.permute.xlu0 %4747
        %4749 = vrot.lane.b32.xlu0 %v4487, 64
        %v4750 = vpop.permute.xlu0 %4749
        %4751 = vrot.lane.b32.xlu0 %v4492, 64
        %v4752 = vpop.permute.xlu0 %4751
        %4753 = vrot.lane.b32.xlu0 %v4497, 64
        %v4754 = vpop.permute.xlu0 %4753
        %4755 = vrot.lane.b32.xlu0 %v4502, 64
        %v4756 = vpop.permute.xlu0 %4755
        %4757 = vrot.lane.b32.xlu0 %v4507, 64
        %v4758 = vpop.permute.xlu0 %4757
        %4759 = vrot.lane.b32.xlu0 %v4512, 64
        %v4760 = vpop.permute.xlu0 %4759
        %4761 = vrot.lane.b32.xlu0 %v4517, 64
        %v4762 = vpop.permute.xlu0 %4761
        %4763 = vrot.lane.b32.xlu0 %v4522, 64
        %v4764 = vpop.permute.xlu0 %4763
        %4765 = vrot.lane.b32.xlu0 %v4527, 64
        %v4766 = vpop.permute.xlu0 %4765
        %4767 = vrot.lane.b32.xlu0 %v4532, 64
        %v4768 = vpop.permute.xlu0 %4767
        %4769 = vrot.lane.b32.xlu0 %v4537, 64
        %v4770 = vpop.permute.xlu0 %4769
        %4771 = vrot.lane.b32.xlu0 %v4542, 64
        %v4772 = vpop.permute.xlu0 %4771
        %4773 = vrot.lane.b32.xlu0 %v4547, 64
        %v4774 = vpop.permute.xlu0 %4773
        %4775 = vrot.lane.b32.xlu0 %v4552, 64
        %v4776 = vpop.permute.xlu0 %4775
        %4777 = vrot.lane.b32.xlu0 %v4557, 64
        %v4778 = vpop.permute.xlu0 %4777
        %4779 = vrot.lane.b32.xlu0 %v4562, 64
        %v4780 = vpop.permute.xlu0 %4779
        %4781 = vrot.lane.b32.xlu0 %v4567, 64
        %v4782 = vpop.permute.xlu0 %4781
        %4783 = vrot.lane.b32.xlu0 %v4572, 64
        %v4784 = vpop.permute.xlu0 %4783
        %4785 = vrot.lane.b32.xlu0 %v4577, 64
        %v4786 = vpop.permute.xlu0 %4785
        %4787 = vrot.lane.b32.xlu0 %v4582, 64
        %v4788 = vpop.permute.xlu0 %4787
        %4789 = vrot.lane.b32.xlu0 %v4587, 64
        %v4790 = vpop.permute.xlu0 %4789
        %4791 = vrot.lane.b32.xlu0 %v4592, 64
        %v4792 = vpop.permute.xlu0 %4791
        %4793 = vrot.lane.b32.xlu0 %v4597, 64
        %v4794 = vpop.permute.xlu0 %4793
        %4795 = vrot.lane.b32.xlu0 %v4602, 64
        %v4796 = vpop.permute.xlu0 %4795
        %v4861 = vmax.f32 %v4287, %v4670
        %v4862 = vmax.f32 %v4292, %v4672
        %v4863 = vmax.f32 %v4297, %v4674
        %v4864 = vmax.f32 %v4302, %v4676
        %v4865 = vmax.f32 %v4307, %v4678
        %v4866 = vmax.f32 %v4312, %v4680
        %v4867 = vmax.f32 %v4317, %v4682
        %v4868 = vmax.f32 %v4322, %v4684
        %v4869 = vmax.f32 %v4327, %v4686
        %v4870 = vmax.f32 %v4332, %v4688
        %v4871 = vmax.f32 %v4337, %v4690
        %v4872 = vmax.f32 %v4342, %v4692
        %v4873 = vmax.f32 %v4347, %v4694
        %v4874 = vmax.f32 %v4352, %v4696
        %v4875 = vmax.f32 %v4357, %v4698
        %v4876 = vmax.f32 %v4362, %v4700
        %v4877 = vmax.f32 %v4367, %v4702
        %v4878 = vmax.f32 %v4372, %v4704
        %v4879 = vmax.f32 %v4377, %v4706
        %v4880 = vmax.f32 %v4382, %v4708
        %v4881 = vmax.f32 %v4387, %v4710
        %v4882 = vmax.f32 %v4392, %v4712
        %v4883 = vmax.f32 %v4397, %v4714
        %v4884 = vmax.f32 %v4402, %v4716
        %v4885 = vmax.f32 %v4407, %v4718
        %v4886 = vmax.f32 %v4412, %v4720
        %v4887 = vmax.f32 %v4417, %v4722
        %v4888 = vmax.f32 %v4422, %v4724
        %v4889 = vmax.f32 %v4427, %v4726
        %v4890 = vmax.f32 %v4432, %v4728
        %v4891 = vmax.f32 %v4437, %v4730
        %v4892 = vmax.f32 %v4442, %v4732
        %v4893 = vmax.f32 %v4447, %v4734
        %v4894 = vmax.f32 %v4452, %v4736
        %v4895 = vmax.f32 %v4457, %v4738
        %v4896 = vmax.f32 %v4462, %v4740
        %v4897 = vmax.f32 %v4467, %v4742
        %v4898 = vmax.f32 %v4472, %v4744
        %v4899 = vmax.f32 %v4477, %v4746
        %v4900 = vmax.f32 %v4482, %v4748
        %v4901 = vmax.f32 %v4487, %v4750
        %v4902 = vmax.f32 %v4492, %v4752
        %v4903 = vmax.f32 %v4497, %v4754
        %v4904 = vmax.f32 %v4502, %v4756
        %v4905 = vmax.f32 %v4507, %v4758
        %v4906 = vmax.f32 %v4512, %v4760
        %v4907 = vmax.f32 %v4517, %v4762
        %v4908 = vmax.f32 %v4522, %v4764
        %v4909 = vmax.f32 %v4527, %v4766
        %v4910 = vmax.f32 %v4532, %v4768
        %v4911 = vmax.f32 %v4537, %v4770
        %v4912 = vmax.f32 %v4542, %v4772
        %v4913 = vmax.f32 %v4547, %v4774
        %v4914 = vmax.f32 %v4552, %v4776
        %v4915 = vmax.f32 %v4557, %v4778
        %v4916 = vmax.f32 %v4562, %v4780
        %v4917 = vmax.f32 %v4567, %v4782
        %v4918 = vmax.f32 %v4572, %v4784
        %v4919 = vmax.f32 %v4577, %v4786
        %v4920 = vmax.f32 %v4582, %v4788
        %v4921 = vmax.f32 %v4587, %v4790
        %v4922 = vmax.f32 %v4592, %v4792
        %v4923 = vmax.f32 %v4597, %v4794
        %v4924 = vmax.f32 %v4602, %v4796
        %v4925 = vld [vmem:[#allocation7] sm:$0x1]
        %v4927 = vlaneseq
        %v4928 = vshrl.u32 %v4927, 7
        %v4929 = vsub.s32 0, %v4928
        %v4930 = vrot.slane %v4925, %v4929
        %v4932 = vadd.f32 %v4861, %v4930
        %v4933 = vadd.f32 %v4862, %v4930
        %v4934 = vadd.f32 %v4863, %v4930
        %v4935 = vadd.f32 %v4864, %v4930
        %v4936 = vadd.f32 %v4865, %v4930
        %v4937 = vadd.f32 %v4866, %v4930
        %v4938 = vadd.f32 %v4867, %v4930
        %v4939 = vadd.f32 %v4868, %v4930
        %v4940 = vadd.f32 %v4869, %v4930
        %v4941 = vadd.f32 %v4870, %v4930
        %v4942 = vadd.f32 %v4871, %v4930
        %v4943 = vadd.f32 %v4872, %v4930
        %v4944 = vadd.f32 %v4873, %v4930
        %v4945 = vadd.f32 %v4874, %v4930
        %v4946 = vadd.f32 %v4875, %v4930
        %v4947 = vadd.f32 %v4876, %v4930
        %v4948 = vadd.f32 %v4877, %v4930
        %v4949 = vadd.f32 %v4878, %v4930
        %v4950 = vadd.f32 %v4879, %v4930
        %v4951 = vadd.f32 %v4880, %v4930
        %v4952 = vadd.f32 %v4881, %v4930
        %v4953 = vadd.f32 %v4882, %v4930
        %v4954 = vadd.f32 %v4883, %v4930
        %v4955 = vadd.f32 %v4884, %v4930
        %v4956 = vadd.f32 %v4885, %v4930
        %v4957 = vadd.f32 %v4886, %v4930
        %v4958 = vadd.f32 %v4887, %v4930
        %v4959 = vadd.f32 %v4888, %v4930
        %v4960 = vadd.f32 %v4889, %v4930
        %v4961 = vadd.f32 %v4890, %v4930
        %v4962 = vadd.f32 %v4891, %v4930
        %v4963 = vadd.f32 %v4892, %v4930
        %v4964 = vadd.f32 %v4893, %v4930
        %v4965 = vadd.f32 %v4894, %v4930
        %v4966 = vadd.f32 %v4895, %v4930
        %v4967 = vadd.f32 %v4896, %v4930
        %v4968 = vadd.f32 %v4897, %v4930
        %v4969 = vadd.f32 %v4898, %v4930
        %v4970 = vadd.f32 %v4899, %v4930
        %v4971 = vadd.f32 %v4900, %v4930
        %v4972 = vadd.f32 %v4901, %v4930
        %v4973 = vadd.f32 %v4902, %v4930
        %v4974 = vadd.f32 %v4903, %v4930
        %v4975 = vadd.f32 %v4904, %v4930
        %v4976 = vadd.f32 %v4905, %v4930
        %v4977 = vadd.f32 %v4906, %v4930
        %v4978 = vadd.f32 %v4907, %v4930
        %v4979 = vadd.f32 %v4908, %v4930
        %v4980 = vadd.f32 %v4909, %v4930
        %v4981 = vadd.f32 %v4910, %v4930
        %v4982 = vadd.f32 %v4911, %v4930
        %v4983 = vadd.f32 %v4912, %v4930
        %v4984 = vadd.f32 %v4913, %v4930
        %v4985 = vadd.f32 %v4914, %v4930
        %v4986 = vadd.f32 %v4915, %v4930
        %v4987 = vadd.f32 %v4916, %v4930
        %v4988 = vadd.f32 %v4917, %v4930
        %v4989 = vadd.f32 %v4918, %v4930
        %v4990 = vadd.f32 %v4919, %v4930
        %v4991 = vadd.f32 %v4920, %v4930
        %v4992 = vadd.f32 %v4921, %v4930
        %v4993 = vadd.f32 %v4922, %v4930
        %v4994 = vadd.f32 %v4923, %v4930
        %v4995 = vadd.f32 %v4924, %v4930
        %v4996 = vmax.f32 %v4932, 0.0
        %v4997 = vmax.f32 %v4933, 0.0
        %v4998 = vmax.f32 %v4934, 0.0
        %v4999 = vmax.f32 %v4935, 0.0
        %v5000 = vmax.f32 %v4936, 0.0
        %v5001 = vmax.f32 %v4937, 0.0
        %v5002 = vmax.f32 %v4938, 0.0
        %v5003 = vmax.f32 %v4939, 0.0
        %v5004 = vmax.f32 %v4940, 0.0
        %v5005 = vmax.f32 %v4941, 0.0
        %v5006 = vmax.f32 %v4942, 0.0
        %v5007 = vmax.f32 %v4943, 0.0
        %v5008 = vmax.f32 %v4944, 0.0
        %v5009 = vmax.f32 %v4945, 0.0
        %v5010 = vmax.f32 %v4946, 0.0
        %v5011 = vmax.f32 %v4947, 0.0
        %v5012 = vmax.f32 %v4948, 0.0
        %v5013 = vmax.f32 %v4949, 0.0
        %v5014 = vmax.f32 %v4950, 0.0
        %v5015 = vmax.f32 %v4951, 0.0
        %v5016 = vmax.f32 %v4952, 0.0
        %v5017 = vmax.f32 %v4953, 0.0
        %v5018 = vmax.f32 %v4954, 0.0
        %v5019 = vmax.f32 %v4955, 0.0
        %v5020 = vmax.f32 %v4956, 0.0
        %v5021 = vmax.f32 %v4957, 0.0
        %v5022 = vmax.f32 %v4958, 0.0
        %v5023 = vmax.f32 %v4959, 0.0
        %v5024 = vmax.f32 %v4960, 0.0
        %v5025 = vmax.f32 %v4961, 0.0
        %v5026 = vmax.f32 %v4962, 0.0
        %v5027 = vmax.f32 %v4963, 0.0
        %v5028 = vmax.f32 %v4964, 0.0
        %v5029 = vmax.f32 %v4965, 0.0
        %v5030 = vmax.f32 %v4966, 0.0
        %v5031 = vmax.f32 %v4967, 0.0
        %v5032 = vmax.f32 %v4968, 0.0
        %v5033 = vmax.f32 %v4969, 0.0
        %v5034 = vmax.f32 %v4970, 0.0
        %v5035 = vmax.f32 %v4971, 0.0
        %v5036 = vmax.f32 %v4972, 0.0
        %v5037 = vmax.f32 %v4973, 0.0
        %v5038 = vmax.f32 %v4974, 0.0
        %v5039 = vmax.f32 %v4975, 0.0
        %v5040 = vmax.f32 %v4976, 0.0
        %v5041 = vmax.f32 %v4977, 0.0
        %v5042 = vmax.f32 %v4978, 0.0
        %v5043 = vmax.f32 %v4979, 0.0
        %v5044 = vmax.f32 %v4980, 0.0
        %v5045 = vmax.f32 %v4981, 0.0
        %v5046 = vmax.f32 %v4982, 0.0
        %v5047 = vmax.f32 %v4983, 0.0
        %v5048 = vmax.f32 %v4984, 0.0
        %v5049 = vmax.f32 %v4985, 0.0
        %v5050 = vmax.f32 %v4986, 0.0
        %v5051 = vmax.f32 %v4987, 0.0
        %v5052 = vmax.f32 %v4988, 0.0
        %v5053 = vmax.f32 %v4989, 0.0
        %v5054 = vmax.f32 %v4990, 0.0
        %v5055 = vmax.f32 %v4991, 0.0
        %v5056 = vmax.f32 %v4992, 0.0
        %v5057 = vmax.f32 %v4993, 0.0
        %v5058 = vmax.f32 %v4994, 0.0
        %v5059 = vmax.f32 %v4995, 0.0
        %vm5060 = vcmask 523264
        %5061 = vst.msk [vmem:[%s279] sm:$0xff] %vm5060, %v4996
        %5062 = vst.msk [vmem:[%s279 + $0x8] sm:$0xff] %vm5060, %v4997
        %5063 = vst.msk [vmem:[%s279 + $0x10] sm:$0xff] %vm5060, %v4998
        %5064 = vst.msk [vmem:[%s279 + $0x18] sm:$0xff] %vm5060, %v4999
        %5065 = vst.msk [vmem:[%s279 + $0x20] sm:$0xff] %vm5060, %v5000
        %5066 = vst.msk [vmem:[%s279 + $0x28] sm:$0xff] %vm5060, %v5001
        %5067 = vst.msk [vmem:[%s279 + $0x30] sm:$0xff] %vm5060, %v5002
        %5068 = vst.msk [vmem:[%s279 + $0x38] sm:$0xff] %vm5060, %v5003
        %5069 = vst.msk [vmem:[%s279 + $0x40] sm:$0xff] %vm5060, %v5004
        %5070 = vst.msk [vmem:[%s279 + $0x48] sm:$0xff] %vm5060, %v5005
        %5071 = vst.msk [vmem:[%s279 + $0x50] sm:$0xff] %vm5060, %v5006
        %5072 = vst.msk [vmem:[%s279 + $0x58] sm:$0xff] %vm5060, %v5007
        %5073 = vst.msk [vmem:[%s279 + $0x60] sm:$0xff] %vm5060, %v5008
        %5074 = vst.msk [vmem:[%s279 + $0x68] sm:$0xff] %vm5060, %v5009
        %5075 = vst.msk [vmem:[%s279 + $0x70] sm:$0xff] %vm5060, %v5010
        %5076 = vst.msk [vmem:[%s279 + $0x78] sm:$0xff] %vm5060, %v5011
        %5077 = vst.msk [vmem:[%s279 + $0x80] sm:$0xff] %vm5060, %v5012
        %5078 = vst.msk [vmem:[%s279 + $0x88] sm:$0xff] %vm5060, %v5013
        %5079 = vst.msk [vmem:[%s279 + $0x90] sm:$0xff] %vm5060, %v5014
        %5080 = vst.msk [vmem:[%s279 + $0x98] sm:$0xff] %vm5060, %v5015
        %5081 = vst.msk [vmem:[%s279 + $0xa0] sm:$0xff] %vm5060, %v5016
        %5082 = vst.msk [vmem:[%s279 + $0xa8] sm:$0xff] %vm5060, %v5017
        %5083 = vst.msk [vmem:[%s279 + $0xb0] sm:$0xff] %vm5060, %v5018
        %5084 = vst.msk [vmem:[%s279 + $0xb8] sm:$0xff] %vm5060, %v5019
        %5085 = vst.msk [vmem:[%s279 + $0xc0] sm:$0xff] %vm5060, %v5020
        %5086 = vst.msk [vmem:[%s279 + $0xc8] sm:$0xff] %vm5060, %v5021
        %5087 = vst.msk [vmem:[%s279 + $0xd0] sm:$0xff] %vm5060, %v5022
        %5088 = vst.msk [vmem:[%s279 + $0xd8] sm:$0xff] %vm5060, %v5023
        %5089 = vst.msk [vmem:[%s279 + $0xe0] sm:$0xff] %vm5060, %v5024
        %5090 = vst.msk [vmem:[%s279 + $0xe8] sm:$0xff] %vm5060, %v5025
        %5091 = vst.msk [vmem:[%s279 + $0xf0] sm:$0xff] %vm5060, %v5026
        %5092 = vst.msk [vmem:[%s279 + $0xf8] sm:$0xff] %vm5060, %v5027
        %5093 = vst.msk [vmem:[%s279 + $0x100] sm:$0xff] %vm5060, %v5028
        %5094 = vst.msk [vmem:[%s279 + $0x108] sm:$0xff] %vm5060, %v5029
        %5095 = vst.msk [vmem:[%s279 + $0x110] sm:$0xff] %vm5060, %v5030
        %5096 = vst.msk [vmem:[%s279 + $0x118] sm:$0xff] %vm5060, %v5031
        %5097 = vst.msk [vmem:[%s279 + $0x120] sm:$0xff] %vm5060, %v5032
        %5098 = vst.msk [vmem:[%s279 + $0x128] sm:$0xff] %vm5060, %v5033
        %5099 = vst.msk [vmem:[%s279 + $0x130] sm:$0xff] %vm5060, %v5034
        %5100 = vst.msk [vmem:[%s279 + $0x138] sm:$0xff] %vm5060, %v5035
        %5101 = vst.msk [vmem:[%s279 + $0x140] sm:$0xff] %vm5060, %v5036
        %5102 = vst.msk [vmem:[%s279 + $0x148] sm:$0xff] %vm5060, %v5037
        %5103 = vst.msk [vmem:[%s279 + $0x150] sm:$0xff] %vm5060, %v5038
        %5104 = vst.msk [vmem:[%s279 + $0x158] sm:$0xff] %vm5060, %v5039
        %5105 = vst.msk [vmem:[%s279 + $0x160] sm:$0xff] %vm5060, %v5040
        %5106 = vst.msk [vmem:[%s279 + $0x168] sm:$0xff] %vm5060, %v5041
        %5107 = vst.msk [vmem:[%s279 + $0x170] sm:$0xff] %vm5060, %v5042
        %5108 = vst.msk [vmem:[%s279 + $0x178] sm:$0xff] %vm5060, %v5043
        %5109 = vst.msk [vmem:[%s279 + $0x180] sm:$0xff] %vm5060, %v5044
        %5110 = vst.msk [vmem:[%s279 + $0x188] sm:$0xff] %vm5060, %v5045
        %5111 = vst.msk [vmem:[%s279 + $0x190] sm:$0xff] %vm5060, %v5046
        %5112 = vst.msk [vmem:[%s279 + $0x198] sm:$0xff] %vm5060, %v5047
        %5113 = vst.msk [vmem:[%s279 + $0x1a0] sm:$0xff] %vm5060, %v5048
        %5114 = vst.msk [vmem:[%s279 + $0x1a8] sm:$0xff] %vm5060, %v5049
        %5115 = vst.msk [vmem:[%s279 + $0x1b0] sm:$0xff] %vm5060, %v5050
        %5116 = vst.msk [vmem:[%s279 + $0x1b8] sm:$0xff] %vm5060, %v5051
        %5117 = vst.msk [vmem:[%s279 + $0x1c0] sm:$0xff] %vm5060, %v5052
        %5118 = vst.msk [vmem:[%s279 + $0x1c8] sm:$0xff] %vm5060, %v5053
        %5119 = vst.msk [vmem:[%s279 + $0x1d0] sm:$0xff] %vm5060, %v5054
        %5120 = vst.msk [vmem:[%s279 + $0x1d8] sm:$0xff] %vm5060, %v5055
        %5121 = vst.msk [vmem:[%s279 + $0x1e0] sm:$0xff] %vm5060, %v5056
        %5122 = vst.msk [vmem:[%s279 + $0x1e8] sm:$0xff] %vm5060, %v5057
        %5123 = vst.msk [vmem:[%s279 + $0x1f0] sm:$0xff] %vm5060, %v5058
        %5124 = vst.msk [vmem:[%s279 + $0x1f8] sm:$0xff] %vm5060, %v5059
        %s5125 = smul.u32 64, %s19
        %p5126 = scmp.lt.s32.totalorder %s5125, 127
        %s5127 = scalar_select %p5126, %s5125, 127
        %s5128 = smul.addr %s5127, 8
        %s5129 = scalar_lea.vmem %s5, %s5128
        // Predicated region
        $region57: #{_forward.2} parent=39 // pred_check
          %p5130 = pneg %p147
        $region58: #{_forward.2} parent=39 // pred_check_branch
          %5132 = sbr.rel (%p5130) target = $region60
        $region59: #{_forward.2} parent=39 // pred_region
          %s5133 = smul.u32 64, %s19
        $region60: #{_forward.2} parent=39 // pred_fallthru
          _
      $region40: #{_forward.2} parent=5 // pred_fallthru
        _
      %p5134 = scmp.le.s32.totalorder 2, %s14
      // Predicated region
      $region61: #{_forward.2} parent=5 // pred_check
        %p5135 = pneg %p5134
      $region62: #{_forward.2} parent=5 // pred_check_branch
        %5137 = sbr.rel (%p5135) target = $region64
      $region63: #{_forward.2} parent=5 // pred_region
        %s5138 = ssub.s32 %s14, 2
        // Predicated region
        $region65: #{_forward.2} parent=63 // pred_check
          %p5139 = pneg %p153
        $region66: #{_forward.2} parent=63 // pred_check_branch
          %5141 = sbr.rel (%p5139) target = $region68
        $region67: #{_forward.2} parent=63 // pred_region
          %s5142 = smul.u32 64, %s20
          %p5143 = scmp.lt.s32.totalorder %s5142, 127
          %s5144 = scalar_select %p5143, %s5142, 127
          %s5145 = smul.addr %s5144, 8
          %s5146 = scalar_lea.vmem %s5, %s5145
        $region68: #{_forward.2} parent=63 // pred_fallthru
          _
      $region64: #{_forward.2} parent=5 // pred_fallthru
        _
    $region6: #{_forward.2} parent=1 // loop_footer
      %s18 = sadd.s32 1, %s14
    $region7: #{_forward.2} parent=1 // loop_footer_branch
      %13 = sbr.rel target = $region3
    $region8: #{_forward.2} parent=1 // loop_exit
      _
    %5147 = vsyncpa [#allocation3], 1
    %s5148 = scalar_lea.sflag [#allocation3], 1
    %5149 = vsyncpa %s5148, 1
    %5150 = vsyncpa [#allocation5], 1
    %5151 = vsyncpa [#allocation8], 1

// kernel: _forward.3
$region0: #{_forward.3}
  #allocation0 [shape = 'u32[]', space=smem, size = 0x4, offset = 0x4, fixed_abs, tag = 'smem constant byte address 0x4 - core index']
  #allocation1 [shape = 'u32[144,128]{1,0:T(1,128)}', space=vmem, size = 0x12000, scoped, tag = 'internal scratch']
  #allocation2 [shape = 'f32[4,384]{1,0:T(4,128)}', space=vmem, size = 0x1800, scoped, tag = 'scratch operand']
  %s0 = inlined_call_operand.vmem [shape: f32[4,16384], index: 0, kind: input, shape index: {}]
  %s1 = inlined_call_operand.hbm [shape: bf16[16384,384], index: 1, kind: input, shape index: {}]
  %s2 = inlined_call_operand.hbm [shape: f32[1,384], index: 2, kind: input, shape index: {}]
  %s3 = inlined_call_operand.vmem [shape: f32[128,32], index: 3, kind: input, shape index: {}]
  %s4 = inlined_call_operand.hbm [shape: f32[1,32], index: 4, kind: input, shape index: {}]
  %s5 = inlined_call_operand.hbm [shape: f32[4,32], index: 5, kind: output, shape index: {}]
  %s6 = sld [smem:[#allocation0]]
  $region73: #{_forward.3} parent=0
    _
  %s8 = ssub.s32 1, %s6
  %s9 = scalar_select 0, %s8, %s6
  $region1: #{_forward.3} parent=0
    #allocation3 [shape = 'u8[6291456]{0}', space=vmem, size = 0x600000, scoped, tag = 'input window, operand 1']
    #allocation4 [shape = 's32[2]{0}', space=sflag, size = 0x8, scoped, tag = 'scoped memory for _forward.3']
    #allocation5 [shape = 's32[2]{0}', space=sflag, size = 0x8, scoped, tag = 'scoped memory for _forward.3']
    #allocation6 [shape = 'u8[1536]{0}', space=vmem, size = 0x800, scoped, tag = 'input window, operand 2, single buffered']
    #allocation7 [shape = 's32[1]{0}', space=sflag, size = 0x4, scoped, tag = 'scoped memory for _forward.3']
    #allocation8 [shape = 'u8[512]{0}', space=vmem, size = 0x400, scoped, tag = 'input window, operand 4, single buffered']
    #allocation9 [shape = 'u8[2048]{0}', space=vmem, size = 0x800, scoped, tag = 'output window, operand 0, single buffered']
    %10 = vsyncpa [#allocation4], 0
    %s11 = scalar_lea.sflag [#allocation4], 1
    %12 = vsyncpa %s11, 0
    %13 = vsyncpa [#allocation7], 0
    %14 = vsyncpa [#allocation5], 0
    loop: start=0, step=1, limit=6
    $region2: #{_forward.3} parent=1 // loop_pre_header
      _
    $region3: #{_forward.3} parent=1 // loop_header
      %s16 = sphi 0, %s20
      %p17 = scmp.ge.s32.totalorder %s16, 6
      %s26 = sphi 0, %s28
      %s29 = sphi 0, %s26
      %s30 = sphi 0, %s29
      %s46 = sphi 0, %s30
      %s52 = sphi 0, %s54
      %s55 = sphi 0, %s52
      %s56 = sphi 0, %s55
      %s72 = sphi 0, %s56
      %s76 = sphi 0, %s76
      %s78 = sphi 0, %s76
      %s79 = sphi 0, %s78
      %s93 = sphi 0, %s79
      %s97 = sphi 0, %s97
      %s99 = sphi 0, %s97
      %s100 = sphi 0, %s99
      %s114 = sphi 0, %s100
      %s118 = sphi 0, %s118
      %s120 = sphi 0, %s118
      %s121 = sphi 0, %s120
      %s135 = sphi 0, %s121
      %s139 = sphi 0, %s139
      %s141 = sphi 0, %s139
      %s142 = sphi 0, %s141
      %s156 = sphi 0, %s142
    $region4: #{_forward.3} parent=1 // loop_header_branch
      %19 = sbr.rel (%p17) target = $region8
    $region5: #{_forward.3} parent=1 // loop_body
      %s21 = ssub.s32 %s16, 1
      %s22 = ssub.s32 %s16, 2
      %s23 = sadd.s32 %s16, 1
      %s24 = ssub.s32 %s16, %s23
      %p25 = scmp.eq.s32.totalorder %s24, 0
      %s27 = sadd.s32 %s26, 1
      %s28 = scalar_select %p25, %s26, %s27
      %p31 = pneg %p25
      %p32 = scmp.eq.s32.totalorder %s16, 3
      %p33 = por %p31, %p32
      %p34 = scmp.ne.s32.totalorder %s26, %s29
      %p35 = scmp.eq.s32.totalorder %s16, 0
      %p36 = por %p34, %p35
      %p37 = scmp.ne.s32.totalorder %s26, %s29
      %p38 = scmp.eq.s32.totalorder %s21, 3
      %p39 = por %p37, %p38
      %p40 = scmp.ne.s32.totalorder %s29, %s30
      %p41 = scmp.eq.s32.totalorder %s21, 0
      %p42 = por %p40, %p41
      %p43 = scmp.ne.s32.totalorder %s29, %s30
      %p44 = scmp.eq.s32.totalorder %s22, 3
      %p45 = por %p43, %p44
      %p47 = scmp.ne.s32.totalorder %s30, %s46
      %p48 = scmp.eq.s32.totalorder %s22, 0
      %p49 = por %p47, %p48
      %s50 = ssub.s32 %s16, %s23
      %p51 = scmp.eq.s32.totalorder %s50, 0
      %s53 = sadd.s32 %s52, 1
      %s54 = scalar_select %p51, %s52, %s53
      %p57 = pneg %p51
      %p58 = scmp.eq.s32.totalorder %s16, 3
      %p59 = por %p57, %p58
      %p60 = scmp.ne.s32.totalorder %s52, %s55
      %p61 = scmp.eq.s32.totalorder %s16, 0
      %p62 = por %p60, %p61
      %p63 = scmp.ne.s32.totalorder %s52, %s55
      %p64 = scmp.eq.s32.totalorder %s21, 3
      %p65 = por %p63, %p64
      %p66 = scmp.ne.s32.totalorder %s55, %s56
      %p67 = scmp.eq.s32.totalorder %s21, 0
      %p68 = por %p66, %p67
      %p69 = scmp.ne.s32.totalorder %s55, %s56
      %p70 = scmp.eq.s32.totalorder %s22, 3
      %p71 = por %p69, %p70
      %p73 = scmp.ne.s32.totalorder %s56, %s72
      %p74 = scmp.eq.s32.totalorder %s22, 0
      %p75 = por %p73, %p74
      %s77 = sadd.s32 %s76, 1
      %p80 = scmp.eq.s32.totalorder %s16, 3
      %p81 = scmp.ne.s32.totalorder %s76, %s78
      %p82 = scmp.eq.s32.totalorder %s16, 0
      %p83 = por %p81, %p82
      %p84 = scmp.ne.s32.totalorder %s76, %s78
      %p85 = scmp.eq.s32.totalorder %s21, 3
      %p86 = por %p84, %p85
      %p87 = scmp.ne.s32.totalorder %s78, %s79
      %p88 = scmp.eq.s32.totalorder %s21, 0
      %p89 = por %p87, %p88
      %p90 = scmp.ne.s32.totalorder %s78, %s79
      %p91 = scmp.eq.s32.totalorder %s22, 3
      %p92 = por %p90, %p91
      %p94 = scmp.ne.s32.totalorder %s79, %s93
      %p95 = scmp.eq.s32.totalorder %s22, 0
      %p96 = por %p94, %p95
      %s98 = sadd.s32 %s97, 1
      %p101 = scmp.eq.s32.totalorder %s16, 3
      %p102 = scmp.ne.s32.totalorder %s97, %s99
      %p103 = scmp.eq.s32.totalorder %s16, 0
      %p104 = por %p102, %p103
      %p105 = scmp.ne.s32.totalorder %s97, %s99
      %p106 = scmp.eq.s32.totalorder %s21, 3
      %p107 = por %p105, %p106
      %p108 = scmp.ne.s32.totalorder %s99, %s100
      %p109 = scmp.eq.s32.totalorder %s21, 0
      %p110 = por %p108, %p109
      %p111 = scmp.ne.s32.totalorder %s99, %s100
      %p112 = scmp.eq.s32.totalorder %s22, 3
      %p113 = por %p111, %p112
      %p115 = scmp.ne.s32.totalorder %s100, %s114
      %p116 = scmp.eq.s32.totalorder %s22, 0
      %p117 = por %p115, %p116
      %s119 = sadd.s32 %s118, 1
      %p122 = scmp.eq.s32.totalorder %s16, 3
      %p123 = scmp.ne.s32.totalorder %s118, %s120
      %p124 = scmp.eq.s32.totalorder %s16, 0
      %p125 = por %p123, %p124
      %p126 = scmp.ne.s32.totalorder %s118, %s120
      %p127 = scmp.eq.s32.totalorder %s21, 3
      %p128 = por %p126, %p127
      %p129 = scmp.ne.s32.totalorder %s120, %s121
      %p130 = scmp.eq.s32.totalorder %s21, 0
      %p131 = por %p129, %p130
      %p132 = scmp.ne.s32.totalorder %s120, %s121
      %p133 = scmp.eq.s32.totalorder %s22, 3
      %p134 = por %p132, %p133
      %p136 = scmp.ne.s32.totalorder %s121, %s135
      %p137 = scmp.eq.s32.totalorder %s22, 0
      %p138 = por %p136, %p137
      %s140 = sadd.s32 %s139, 1
      %p143 = scmp.eq.s32.totalorder %s16, 3
      %p144 = scmp.ne.s32.totalorder %s139, %s141
      %p145 = scmp.eq.s32.totalorder %s16, 0
      %p146 = por %p144, %p145
      %p147 = scmp.ne.s32.totalorder %s139, %s141
      %p148 = scmp.eq.s32.totalorder %s21, 3
      %p149 = por %p147, %p148
      %p150 = scmp.ne.s32.totalorder %s141, %s142
      %p151 = scmp.eq.s32.totalorder %s21, 0
      %p152 = por %p150, %p151
      %p153 = scmp.ne.s32.totalorder %s141, %s142
      %p154 = scmp.eq.s32.totalorder %s22, 3
      %p155 = por %p153, %p154
      %p157 = scmp.ne.s32.totalorder %s142, %s156
      %p158 = scmp.eq.s32.totalorder %s22, 0
      %p159 = por %p157, %p158
      %p160 = scmp.le.s32.totalorder 1, %s16
      %p161 = scmp.lt.s32.totalorder %s16, 5
      %p162 = pnand %p160, %p161
      %p163 = pneg %p162
      // Predicated region
      $region9: #{_forward.3} parent=5 // pred_check
        _
      $region10: #{_forward.3} parent=5 // pred_check_branch
        %165 = sbr.rel (%p162) target = $region12
      $region11: #{_forward.3} parent=5 // pred_region
        %s166 = ssub.s32 %s16, 1
        // Predicated region
        $region13: #{_forward.3} parent=11 // pred_check
          %p167 = pneg %p89
        $region14: #{_forward.3} parent=11 // pred_check_branch
          %169 = sbr.rel (%p167) target = $region16
        $region15: #{_forward.3} parent=11 // pred_region
          %s171 = ssub.s32 48, 48
          %172 = vsyncadd [#allocation7], %s171
          %s174 = sshll.u32 [#allocation6], 4
          %s175 = int_to_ptr.vmem [resolvable:$true] %s174
          %177 = dma.hbm_to_vmem [thread:$0]  %s2, 48, %s175, [#allocation7]
        $region16: #{_forward.3} parent=11 // pred_fallthru
          _
        // Predicated region
        $region17: #{_forward.3} parent=11 // pred_check
          %p178 = pneg %p110
        $region18: #{_forward.3} parent=11 // pred_check_branch
          %180 = sbr.rel (%p178) target = $region20
        $region19: #{_forward.3} parent=11 // pred_region
          _
        $region20: #{_forward.3} parent=11 // pred_fallthru
          _
        // Predicated region
        $region21: #{_forward.3} parent=11 // pred_check
          %p181 = pneg %p131
        $region22: #{_forward.3} parent=11 // pred_check_branch
          %183 = sbr.rel (%p181) target = $region24
        $region23: #{_forward.3} parent=11 // pred_region
          %s185 = ssub.s32 16, 16
          %186 = vsyncadd [#allocation7], %s185
          %s188 = sshll.u32 [#allocation8], 4
          %s189 = int_to_ptr.vmem [resolvable:$true] %s188
          %191 = dma.hbm_to_vmem [thread:$0]  %s4, 16, %s189, [#allocation7]
        $region24: #{_forward.3} parent=11 // pred_fallthru
          _
      $region12: #{_forward.3} parent=5 // pred_fallthru
        _
      %p192 = scmp.lt.s32.totalorder %s16, 4
      // Predicated region
      $region25: #{_forward.3} parent=5 // pred_check
        %p193 = pneg %p192
      $region26: #{_forward.3} parent=5 // pred_check_branch
        %195 = sbr.rel (%p193) target = $region28
      $region27: #{_forward.3} parent=5 // pred_region
        // Predicated region
        $region29: #{_forward.3} parent=27 // pred_check
          %p196 = pneg %p36
        $region30: #{_forward.3} parent=27 // pred_check_branch
          %198 = sbr.rel (%p196) target = $region32
        $region31: #{_forward.3} parent=27 // pred_region
          %s199 = smul.u32 32, %s16
          %p200 = scmp.lt.s32.totalorder %s199, 127
          %s201 = scalar_select %p200, %s199, 127
          %s202 = smul.addr %s201, 4
          %s203 = scalar_lea.vmem %s0, %s202
          %s204 = smul.u32 32, %s16
        $region32: #{_forward.3} parent=27 // pred_fallthru
          _
        // Predicated region
        $region33: #{_forward.3} parent=27 // pred_check
          %p205 = pneg %p62
        $region34: #{_forward.3} parent=27 // pred_check_branch
          %207 = sbr.rel (%p205) target = $region36
        $region35: #{_forward.3} parent=27 // pred_region
          %s208 = sand.u32 %s52, 1
          %s209 = scalar_lea.sflag [#allocation4], %s208
          %s210 = sand.u32 %s52, 1
          %s211 = smul.addr %s210, 6144
          %s212 = scalar_lea.vmem [#allocation3], %s211
          %s213 = smul.u32 512, %s16
          %s215 = ssub.s32 98304, 98304
          %216 = vsyncadd %s209, %s215
          %s217 = smul.addr %s213, 3
          %s218 = smul.addr %s217, 64
          %s219 = scalar_lea.hbm %s1, %s218
          %s220 = sshll.u32 %s212, 4
          %s221 = int_to_ptr.vmem [resolvable:$true] %s220
          %226 = dma.hbm_to_vmem [thread:$0]  %s219, 98304, %s221, %s209, 192, 192, 12
        $region36: #{_forward.3} parent=27 // pred_fallthru
          _
      $region28: #{_forward.3} parent=5 // pred_fallthru
        _
      %p227 = scmp.le.s32.totalorder 1, %s16
      %p228 = scmp.lt.s32.totalorder %s16, 5
      %p229 = pnand %p227, %p228
      %p230 = pneg %p229
      // Predicated region
      $region37: #{_forward.3} parent=5 // pred_check
        _
      $region38: #{_forward.3} parent=5 // pred_check_branch
        %232 = sbr.rel (%p229) target = $region40
      $region39: #{_forward.3} parent=5 // pred_region
        %s233 = ssub.s32 %s16, 1
        %s234 = sand.u32 %s55, 1
        %s235 = scalar_lea.sflag [#allocation4], %s234
        %s236 = sand.u32 %s55, 1
        %s237 = smul.addr %s236, 6144
        %s238 = scalar_lea.vmem [#allocation3], %s237
        // Predicated region
        $region41: #{_forward.3} parent=39 // pred_check
          %p239 = pneg %p68
        $region42: #{_forward.3} parent=39 // pred_check_branch
          %241 = sbr.rel (%p239) target = $region44
        $region43: #{_forward.3} parent=39 // pred_region
          %242 = dma.done %s235, 98304
        $region44: #{_forward.3} parent=39 // pred_fallthru
          _
        // Predicated region
        $region45: #{_forward.3} parent=39 // pred_check
          %p243 = pneg %p89
        $region46: #{_forward.3} parent=39 // pred_check_branch
          %245 = sbr.rel (%p243) target = $region48
        $region47: #{_forward.3} parent=39 // pred_region
          %246 = dma.done [#allocation7], 48
        $region48: #{_forward.3} parent=39 // pred_fallthru
          _
        // Predicated region
        $region49: #{_forward.3} parent=39 // pred_check
          %p247 = pneg %p131
        $region50: #{_forward.3} parent=39 // pred_check_branch
          %249 = sbr.rel (%p247) target = $region52
        $region51: #{_forward.3} parent=39 // pred_region
          %250 = dma.done [#allocation7], 16
        $region52: #{_forward.3} parent=39 // pred_fallthru
          _
        %s251 = smul.u32 32, %s21
        %p252 = scmp.lt.s32.totalorder %s251, 127
        %s253 = scalar_select %p252, %s251, 127
        %s254 = smul.addr %s253, 4
        %s255 = scalar_lea.vmem %s0, %s254
        %p256 = pneg %p42
        %p257 = pneg %p39
        %s258 = sand.u32 %s55, 1
        %s259 = scalar_lea.sflag [#allocation4], %s258
        %s260 = sand.u32 %s55, 1
        %s261 = smul.addr %s260, 6144
        %s262 = scalar_lea.vmem [#allocation3], %s261
        %p263 = pneg %p68
        %p264 = pneg %p65
        %p265 = pneg %p89
        %p266 = pneg %p86
        %p267 = pneg %p110
        %p268 = pneg %p107
        %p269 = pneg %p131
        %p270 = pneg %p128
        %p271 = pneg %p152
        %p272 = pneg %p149
        %s273 = smul.u32 32, %s21
        %p274 = scmp.lt.s32.totalorder %s273, 127
        %s275 = scalar_select %p274, %s273, 127
        %s276 = smul.addr %s275, 4
        %s277 = scalar_lea.vmem %s0, %s276
        %s278 = smul.u32 32, %s21
        %s279 = smul.u32 512, %s21
        %p280 = scmp.eq.s32.totalorder %s21, 0
        // Predicated region
        $region53: #{_forward.3} parent=39 // pred_check
          %p281 = pneg %p280
        $region54: #{_forward.3} parent=39 // pred_check_branch
          %283 = sbr.rel (%p281) target = $region56
        $region55: #{_forward.3} parent=39 // pred_region
          %284 = vst [vmem:[#allocation2] sm:$0xff] 0.0
          %285 = vst [vmem:[#allocation2 + $0x8] sm:$0xf] 0.0
        $region56: #{_forward.3} parent=39 // pred_fallthru
          _
        %v286 = vld [vmem:[#allocation2] sm:$0xff]
        %v287 = vld [vmem:[#allocation2 + $0x8] sm:$0xf]
        %v288 = vld [vmem:[%s277] sm:$0xff]
        %v289 = vld [vmem:[%s277 + $0x8] sm:$0xff]
        %v290 = vld [vmem:[%s277 + $0x10] sm:$0xff]
        %v291 = vld [vmem:[%s277 + $0x18] sm:$0xff]
        %v292 = vld [vmem:[%s277 + $0x20] sm:$0xff]
        %v293 = vld [vmem:[%s277 + $0x28] sm:$0xff]
        %v294 = vld [vmem:[%s277 + $0x30] sm:$0xff]
        %v295 = vld [vmem:[%s277 + $0x38] sm:$0xff]
        %v296 = vld [vmem:[%s277 + $0x40] sm:$0xff]
        %v297 = vld [vmem:[%s277 + $0x48] sm:$0xff]
        %v298 = vld [vmem:[%s277 + $0x50] sm:$0xff]
        %v299 = vld [vmem:[%s277 + $0x58] sm:$0xff]
        %v300 = vld [vmem:[%s277 + $0x60] sm:$0xff]
        %v301 = vld [vmem:[%s277 + $0x68] sm:$0xff]
        %v302 = vld [vmem:[%s277 + $0x70] sm:$0xff]
        %v303 = vld [vmem:[%s277 + $0x78] sm:$0xff]
        %v304 = vld [vmem:[%s238] sm:$0xff]
        %v305 = vld [vmem:[%s238 + $0x8] sm:$0xf]
        %v306 = vld [vmem:[%s238 + $0xc] sm:$0xff]
        %v307 = vld [vmem:[%s238 + $0x14] sm:$0xf]
        %v308 = vld [vmem:[%s238 + $0x18] sm:$0xff]
        %v309 = vld [vmem:[%s238 + $0x20] sm:$0xf]
        %v310 = vld [vmem:[%s238 + $0x24] sm:$0xff]
        %v311 = vld [vmem:[%s238 + $0x2c] sm:$0xf]
        %v312 = vld [vmem:[%s238 + $0x30] sm:$0xff]
        %v313 = vld [vmem:[%s238 + $0x38] sm:$0xf]
        %v314 = vld [vmem:[%s238 + $0x3c] sm:$0xff]
        %v315 = vld [vmem:[%s238 + $0x44] sm:$0xf]
        %v316 = vld [vmem:[%s238 + $0x48] sm:$0xff]
        %v317 = vld [vmem:[%s238 + $0x50] sm:$0xf]
        %v318 = vld [vmem:[%s238 + $0x54] sm:$0xff]
        %v319 = vld [vmem:[%s238 + $0x5c] sm:$0xf]
        %v320 = vld [vmem:[%s238 + $0x60] sm:$0xff]
        %v321 = vld [vmem:[%s238 + $0x68] sm:$0xf]
        %v322 = vld [vmem:[%s238 + $0x6c] sm:$0xff]
        %v323 = vld [vmem:[%s238 + $0x74] sm:$0xf]
        %v324 = vld [vmem:[%s238 + $0x78] sm:$0xff]
        %v325 = vld [vmem:[%s238 + $0x80] sm:$0xf]
        %v326 = vld [vmem:[%s238 + $0x84] sm:$0xff]
        %v327 = vld [vmem:[%s238 + $0x8c] sm:$0xf]
        %v328 = vld [vmem:[%s238 + $0x90] sm:$0xff]
        %v329 = vld [vmem:[%s238 + $0x98] sm:$0xf]
        %v330 = vld [vmem:[%s238 + $0x9c] sm:$0xff]
        %v331 = vld [vmem:[%s238 + $0xa4] sm:$0xf]
        %v332 = vld [vmem:[%s238 + $0xa8] sm:$0xff]
        %v333 = vld [vmem:[%s238 + $0xb0] sm:$0xf]
        %v334 = vld [vmem:[%s238 + $0xb4] sm:$0xff]
        %v335 = vld [vmem:[%s238 + $0xbc] sm:$0xf]
        %v336 = vld [vmem:[%s238 + $0xc0] sm:$0xff]
        %v337 = vld [vmem:[%s238 + $0xc8] sm:$0xf]
        %v338 = vld [vmem:[%s238 + $0xcc] sm:$0xff]
        %v339 = vld [vmem:[%s238 + $0xd4] sm:$0xf]
        %v340 = vld [vmem:[%s238 + $0xd8] sm:$0xff]
        %v341 = vld [vmem:[%s238 + $0xe0] sm:$0xf]
        %v342 = vld [vmem:[%s238 + $0xe4] sm:$0xff]
        %v343 = vld [vmem:[%s238 + $0xec] sm:$0xf]
        %v344 = vld [vmem:[%s238 + $0xf0] sm:$0xff]
        %v345 = vld [vmem:[%s238 + $0xf8] sm:$0xf]
        %v346 = vld [vmem:[%s238 + $0xfc] sm:$0xff]
        %v347 = vld [vmem:[%s238 + $0x104] sm:$0xf]
        %v348 = vld [vmem:[%s238 + $0x108] sm:$0xff]
        %v349 = vld [vmem:[%s238 + $0x110] sm:$0xf]
        %v350 = vld [vmem:[%s238 + $0x114] sm:$0xff]
        %v351 = vld [vmem:[%s238 + $0x11c] sm:$0xf]
        %v352 = vld [vmem:[%s238 + $0x120] sm:$0xff]
        %v353 = vld [vmem:[%s238 + $0x128] sm:$0xf]
        %v354 = vld [vmem:[%s238 + $0x12c] sm:$0xff]
        %v355 = vld [vmem:[%s238 + $0x134] sm:$0xf]
        %v356 = vld [vmem:[%s238 + $0x138] sm:$0xff]
        %v357 = vld [vmem:[%s238 + $0x140] sm:$0xf]
        %v358 = vld [vmem:[%s238 + $0x144] sm:$0xff]
        %v359 = vld [vmem:[%s238 + $0x14c] sm:$0xf]
        %v360 = vld [vmem:[%s238 + $0x150] sm:$0xff]
        %v361 = vld [vmem:[%s238 + $0x158] sm:$0xf]
        %v362 = vld [vmem:[%s238 + $0x15c] sm:$0xff]
        %v363 = vld [vmem:[%s238 + $0x164] sm:$0xf]
        %v364 = vld [vmem:[%s238 + $0x168] sm:$0xff]
        %v365 = vld [vmem:[%s238 + $0x170] sm:$0xf]
        %v366 = vld [vmem:[%s238 + $0x174] sm:$0xff]
        %v367 = vld [vmem:[%s238 + $0x17c] sm:$0xf]
        %v368 = vld [vmem:[%s238 + $0x180] sm:$0xff]
        %v369 = vld [vmem:[%s238 + $0x188] sm:$0xf]
        %v370 = vld [vmem:[%s238 + $0x18c] sm:$0xff]
        %v371 = vld [vmem:[%s238 + $0x194] sm:$0xf]
        %v372 = vld [vmem:[%s238 + $0x198] sm:$0xff]
        %v373 = vld [vmem:[%s238 + $0x1a0] sm:$0xf]
        %v374 = vld [vmem:[%s238 + $0x1a4] sm:$0xff]
        %v375 = vld [vmem:[%s238 + $0x1ac] sm:$0xf]
        %v376 = vld [vmem:[%s238 + $0x1b0] sm:$0xff]
        %v377 = vld [vmem:[%s238 + $0x1b8] sm:$0xf]
        %v378 = vld [vmem:[%s238 + $0x1bc] sm:$0xff]
        %v379 = vld [vmem:[%s238 + $0x1c4] sm:$0xf]
        %v380 = vld [vmem:[%s238 + $0x1c8] sm:$0xff]
        %v381 = vld [vmem:[%s238 + $0x1d0] sm:$0xf]
        %v382 = vld [vmem:[%s238 + $0x1d4] sm:$0xff]
        %v383 = vld [vmem:[%s238 + $0x1dc] sm:$0xf]
        %v384 = vld [vmem:[%s238 + $0x1e0] sm:$0xff]
        %v385 = vld [vmem:[%s238 + $0x1e8] sm:$0xf]
        %v386 = vld [vmem:[%s238 + $0x1ec] sm:$0xff]
        %v387 = vld [vmem:[%s238 + $0x1f4] sm:$0xf]
        %v388 = vld [vmem:[%s238 + $0x1f8] sm:$0xff]
        %v389 = vld [vmem:[%s238 + $0x200] sm:$0xf]
        %v390 = vld [vmem:[%s238 + $0x204] sm:$0xff]
        %v391 = vld [vmem:[%s238 + $0x20c] sm:$0xf]
        %v392 = vld [vmem:[%s238 + $0x210] sm:$0xff]
        %v393 = vld [vmem:[%s238 + $0x218] sm:$0xf]
        %v394 = vld [vmem:[%s238 + $0x21c] sm:$0xff]
        %v395 = vld [vmem:[%s238 + $0x224] sm:$0xf]
        %v396 = vld [vmem:[%s238 + $0x228] sm:$0xff]
        %v397 = vld [vmem:[%s238 + $0x230] sm:$0xf]
        %v398 = vld [vmem:[%s238 + $0x234] sm:$0xff]
        %v399 = vld [vmem:[%s238 + $0x23c] sm:$0xf]
        %v400 = vld [vmem:[%s238 + $0x240] sm:$0xff]
        %v401 = vld [vmem:[%s238 + $0x248] sm:$0xf]
        %v402 = vld [vmem:[%s238 + $0x24c] sm:$0xff]
        %v403 = vld [vmem:[%s238 + $0x254] sm:$0xf]
        %v404 = vld [vmem:[%s238 + $0x258] sm:$0xff]
        %v405 = vld [vmem:[%s238 + $0x260] sm:$0xf]
        %v406 = vld [vmem:[%s238 + $0x264] sm:$0xff]
        %v407 = vld [vmem:[%s238 + $0x26c] sm:$0xf]
        %v408 = vld [vmem:[%s238 + $0x270] sm:$0xff]
        %v409 = vld [vmem:[%s238 + $0x278] sm:$0xf]
        %v410 = vld [vmem:[%s238 + $0x27c] sm:$0xff]
        %v411 = vld [vmem:[%s238 + $0x284] sm:$0xf]
        %v412 = vld [vmem:[%s238 + $0x288] sm:$0xff]
        %v413 = vld [vmem:[%s238 + $0x290] sm:$0xf]
        %v414 = vld [vmem:[%s238 + $0x294] sm:$0xff]
        %v415 = vld [vmem:[%s238 + $0x29c] sm:$0xf]
        %v416 = vld [vmem:[%s238 + $0x2a0] sm:$0xff]
        %v417 = vld [vmem:[%s238 + $0x2a8] sm:$0xf]
        %v418 = vld [vmem:[%s238 + $0x2ac] sm:$0xff]
        %v419 = vld [vmem:[%s238 + $0x2b4] sm:$0xf]
        %v420 = vld [vmem:[%s238 + $0x2b8] sm:$0xff]
        %v421 = vld [vmem:[%s238 + $0x2c0] sm:$0xf]
        %v422 = vld [vmem:[%s238 + $0x2c4] sm:$0xff]
        %v423 = vld [vmem:[%s238 + $0x2cc] sm:$0xf]
        %v424 = vld [vmem:[%s238 + $0x2d0] sm:$0xff]
        %v425 = vld [vmem:[%s238 + $0x2d8] sm:$0xf]
        %v426 = vld [vmem:[%s238 + $0x2dc] sm:$0xff]
        %v427 = vld [vmem:[%s238 + $0x2e4] sm:$0xf]
        %v428 = vld [vmem:[%s238 + $0x2e8] sm:$0xff]
        %v429 = vld [vmem:[%s238 + $0x2f0] sm:$0xf]
        %v430 = vld [vmem:[%s238 + $0x2f4] sm:$0xff]
        %v431 = vld [vmem:[%s238 + $0x2fc] sm:$0xf]
        %v432 = vld [vmem:[%s238 + $0x300] sm:$0xff]
        %v433 = vld [vmem:[%s238 + $0x308] sm:$0xf]
        %v434 = vld [vmem:[%s238 + $0x30c] sm:$0xff]
        %v435 = vld [vmem:[%s238 + $0x314] sm:$0xf]
        %v436 = vld [vmem:[%s238 + $0x318] sm:$0xff]
        %v437 = vld [vmem:[%s238 + $0x320] sm:$0xf]
        %v438 = vld [vmem:[%s238 + $0x324] sm:$0xff]
        %v439 = vld [vmem:[%s238 + $0x32c] sm:$0xf]
        %v440 = vld [vmem:[%s238 + $0x330] sm:$0xff]
        %v441 = vld [vmem:[%s238 + $0x338] sm:$0xf]
        %v442 = vld [vmem:[%s238 + $0x33c] sm:$0xff]
        %v443 = vld [vmem:[%s238 + $0x344] sm:$0xf]
        %v444 = vld [vmem:[%s238 + $0x348] sm:$0xff]
        %v445 = vld [vmem:[%s238 + $0x350] sm:$0xf]
        %v446 = vld [vmem:[%s238 + $0x354] sm:$0xff]
        %v447 = vld [vmem:[%s238 + $0x35c] sm:$0xf]
        %v448 = vld [vmem:[%s238 + $0x360] sm:$0xff]
        %v449 = vld [vmem:[%s238 + $0x368] sm:$0xf]
        %v450 = vld [vmem:[%s238 + $0x36c] sm:$0xff]
        %v451 = vld [vmem:[%s238 + $0x374] sm:$0xf]
        %v452 = vld [vmem:[%s238 + $0x378] sm:$0xff]
        %v453 = vld [vmem:[%s238 + $0x380] sm:$0xf]
        %v454 = vld [vmem:[%s238 + $0x384] sm:$0xff]
        %v455 = vld [vmem:[%s238 + $0x38c] sm:$0xf]
        %v456 = vld [vmem:[%s238 + $0x390] sm:$0xff]
        %v457 = vld [vmem:[%s238 + $0x398] sm:$0xf]
        %v458 = vld [vmem:[%s238 + $0x39c] sm:$0xff]
        %v459 = vld [vmem:[%s238 + $0x3a4] sm:$0xf]
        %v460 = vld [vmem:[%s238 + $0x3a8] sm:$0xff]
        %v461 = vld [vmem:[%s238 + $0x3b0] sm:$0xf]
        %v462 = vld [vmem:[%s238 + $0x3b4] sm:$0xff]
        %v463 = vld [vmem:[%s238 + $0x3bc] sm:$0xf]
        %v464 = vld [vmem:[%s238 + $0x3c0] sm:$0xff]
        %v465 = vld [vmem:[%s238 + $0x3c8] sm:$0xf]
        %v466 = vld [vmem:[%s238 + $0x3cc] sm:$0xff]
        %v467 = vld [vmem:[%s238 + $0x3d4] sm:$0xf]
        %v468 = vld [vmem:[%s238 + $0x3d8] sm:$0xff]
        %v469 = vld [vmem:[%s238 + $0x3e0] sm:$0xf]
        %v470 = vld [vmem:[%s238 + $0x3e4] sm:$0xff]
        %v471 = vld [vmem:[%s238 + $0x3ec] sm:$0xf]
        %v472 = vld [vmem:[%s238 + $0x3f0] sm:$0xff]
        %v473 = vld [vmem:[%s238 + $0x3f8] sm:$0xf]
        %v474 = vld [vmem:[%s238 + $0x3fc] sm:$0xff]
        %v475 = vld [vmem:[%s238 + $0x404] sm:$0xf]
        %v476 = vld [vmem:[%s238 + $0x408] sm:$0xff]
        %v477 = vld [vmem:[%s238 + $0x410] sm:$0xf]
        %v478 = vld [vmem:[%s238 + $0x414] sm:$0xff]
        %v479 = vld [vmem:[%s238 + $0x41c] sm:$0xf]
        %v480 = vld [vmem:[%s238 + $0x420] sm:$0xff]
        %v481 = vld [vmem:[%s238 + $0x428] sm:$0xf]
        %v482 = vld [vmem:[%s238 + $0x42c] sm:$0xff]
        %v483 = vld [vmem:[%s238 + $0x434] sm:$0xf]
        %v484 = vld [vmem:[%s238 + $0x438] sm:$0xff]
        %v485 = vld [vmem:[%s238 + $0x440] sm:$0xf]
        %v486 = vld [vmem:[%s238 + $0x444] sm:$0xff]
        %v487 = vld [vmem:[%s238 + $0x44c] sm:$0xf]
        %v488 = vld [vmem:[%s238 + $0x450] sm:$0xff]
        %v489 = vld [vmem:[%s238 + $0x458] sm:$0xf]
        %v490 = vld [vmem:[%s238 + $0x45c] sm:$0xff]
        %v491 = vld [vmem:[%s238 + $0x464] sm:$0xf]
        %v492 = vld [vmem:[%s238 + $0x468] sm:$0xff]
        %v493 = vld [vmem:[%s238 + $0x470] sm:$0xf]
        %v494 = vld [vmem:[%s238 + $0x474] sm:$0xff]
        %v495 = vld [vmem:[%s238 + $0x47c] sm:$0xf]
        %v496 = vld [vmem:[%s238 + $0x480] sm:$0xff]
        %v497 = vld [vmem:[%s238 + $0x488] sm:$0xf]
        %v498 = vld [vmem:[%s238 + $0x48c] sm:$0xff]
        %v499 = vld [vmem:[%s238 + $0x494] sm:$0xf]
        %v500 = vld [vmem:[%s238 + $0x498] sm:$0xff]
        %v501 = vld [vmem:[%s238 + $0x4a0] sm:$0xf]
        %v502 = vld [vmem:[%s238 + $0x4a4] sm:$0xff]
        %v503 = vld [vmem:[%s238 + $0x4ac] sm:$0xf]
        %v504 = vld [vmem:[%s238 + $0x4b0] sm:$0xff]
        %v505 = vld [vmem:[%s238 + $0x4b8] sm:$0xf]
        %v506 = vld [vmem:[%s238 + $0x4bc] sm:$0xff]
        %v507 = vld [vmem:[%s238 + $0x4c4] sm:$0xf]
        %v508 = vld [vmem:[%s238 + $0x4c8] sm:$0xff]
        %v509 = vld [vmem:[%s238 + $0x4d0] sm:$0xf]
        %v510 = vld [vmem:[%s238 + $0x4d4] sm:$0xff]
        %v511 = vld [vmem:[%s238 + $0x4dc] sm:$0xf]
        %v512 = vld [vmem:[%s238 + $0x4e0] sm:$0xff]
        %v513 = vld [vmem:[%s238 + $0x4e8] sm:$0xf]
        %v514 = vld [vmem:[%s238 + $0x4ec] sm:$0xff]
        %v515 = vld [vmem:[%s238 + $0x4f4] sm:$0xf]
        %v516 = vld [vmem:[%s238 + $0x4f8] sm:$0xff]
        %v517 = vld [vmem:[%s238 + $0x500] sm:$0xf]
        %v518 = vld [vmem:[%s238 + $0x504] sm:$0xff]
        %v519 = vld [vmem:[%s238 + $0x50c] sm:$0xf]
        %v520 = vld [vmem:[%s238 + $0x510] sm:$0xff]
        %v521 = vld [vmem:[%s238 + $0x518] sm:$0xf]
        %v522 = vld [vmem:[%s238 + $0x51c] sm:$0xff]
        %v523 = vld [vmem:[%s238 + $0x524] sm:$0xf]
        %v524 = vld [vmem:[%s238 + $0x528] sm:$0xff]
        %v525 = vld [vmem:[%s238 + $0x530] sm:$0xf]
        %v526 = vld [vmem:[%s238 + $0x534] sm:$0xff]
        %v527 = vld [vmem:[%s238 + $0x53c] sm:$0xf]
        %v528 = vld [vmem:[%s238 + $0x540] sm:$0xff]
        %v529 = vld [vmem:[%s238 + $0x548] sm:$0xf]
        %v530 = vld [vmem:[%s238 + $0x54c] sm:$0xff]
        %v531 = vld [vmem:[%s238 + $0x554] sm:$0xf]
        %v532 = vld [vmem:[%s238 + $0x558] sm:$0xff]
        %v533 = vld [vmem:[%s238 + $0x560] sm:$0xf]
        %v534 = vld [vmem:[%s238 + $0x564] sm:$0xff]
        %v535 = vld [vmem:[%s238 + $0x56c] sm:$0xf]
        %v536 = vld [vmem:[%s238 + $0x570] sm:$0xff]
        %v537 = vld [vmem:[%s238 + $0x578] sm:$0xf]
        %v538 = vld [vmem:[%s238 + $0x57c] sm:$0xff]
        %v539 = vld [vmem:[%s238 + $0x584] sm:$0xf]
        %v540 = vld [vmem:[%s238 + $0x588] sm:$0xff]
        %v541 = vld [vmem:[%s238 + $0x590] sm:$0xf]
        %v542 = vld [vmem:[%s238 + $0x594] sm:$0xff]
        %v543 = vld [vmem:[%s238 + $0x59c] sm:$0xf]
        %v544 = vld [vmem:[%s238 + $0x5a0] sm:$0xff]
        %v545 = vld [vmem:[%s238 + $0x5a8] sm:$0xf]
        %v546 = vld [vmem:[%s238 + $0x5ac] sm:$0xff]
        %v547 = vld [vmem:[%s238 + $0x5b4] sm:$0xf]
        %v548 = vld [vmem:[%s238 + $0x5b8] sm:$0xff]
        %v549 = vld [vmem:[%s238 + $0x5c0] sm:$0xf]
        %v550 = vld [vmem:[%s238 + $0x5c4] sm:$0xff]
        %v551 = vld [vmem:[%s238 + $0x5cc] sm:$0xf]
        %v552 = vld [vmem:[%s238 + $0x5d0] sm:$0xff]
        %v553 = vld [vmem:[%s238 + $0x5d8] sm:$0xf]
        %v554 = vld [vmem:[%s238 + $0x5dc] sm:$0xff]
        %v555 = vld [vmem:[%s238 + $0x5e4] sm:$0xf]
        %v556 = vld [vmem:[%s238 + $0x5e8] sm:$0xff]
        %v557 = vld [vmem:[%s238 + $0x5f0] sm:$0xf]
        %v558 = vld [vmem:[%s238 + $0x5f4] sm:$0xff]
        %v559 = vld [vmem:[%s238 + $0x5fc] sm:$0xf]
        %v560 = vld [vmem:[%s238 + $0x600] sm:$0xff]
        %v561 = vld [vmem:[%s238 + $0x608] sm:$0xf]
        %v562 = vld [vmem:[%s238 + $0x60c] sm:$0xff]
        %v563 = vld [vmem:[%s238 + $0x614] sm:$0xf]
        %v564 = vld [vmem:[%s238 + $0x618] sm:$0xff]
        %v565 = vld [vmem:[%s238 + $0x620] sm:$0xf]
        %v566 = vld [vmem:[%s238 + $0x624] sm:$0xff]
        %v567 = vld [vmem:[%s238 + $0x62c] sm:$0xf]
        %v568 = vld [vmem:[%s238 + $0x630] sm:$0xff]
        %v569 = vld [vmem:[%s238 + $0x638] sm:$0xf]
        %v570 = vld [vmem:[%s238 + $0x63c] sm:$0xff]
        %v571 = vld [vmem:[%s238 + $0x644] sm:$0xf]
        %v572 = vld [vmem:[%s238 + $0x648] sm:$0xff]
        %v573 = vld [vmem:[%s238 + $0x650] sm:$0xf]
        %v574 = vld [vmem:[%s238 + $0x654] sm:$0xff]
        %v575 = vld [vmem:[%s238 + $0x65c] sm:$0xf]
        %v576 = vld [vmem:[%s238 + $0x660] sm:$0xff]
        %v577 = vld [vmem:[%s238 + $0x668] sm:$0xf]
        %v578 = vld [vmem:[%s238 + $0x66c] sm:$0xff]
        %v579 = vld [vmem:[%s238 + $0x674] sm:$0xf]
        %v580 = vld [vmem:[%s238 + $0x678] sm:$0xff]
        %v581 = vld [vmem:[%s238 + $0x680] sm:$0xf]
        %v582 = vld [vmem:[%s238 + $0x684] sm:$0xff]
        %v583 = vld [vmem:[%s238 + $0x68c] sm:$0xf]
        %v584 = vld [vmem:[%s238 + $0x690] sm:$0xff]
        %v585 = vld [vmem:[%s238 + $0x698] sm:$0xf]
        %v586 = vld [vmem:[%s238 + $0x69c] sm:$0xff]
        %v587 = vld [vmem:[%s238 + $0x6a4] sm:$0xf]
        %v588 = vld [vmem:[%s238 + $0x6a8] sm:$0xff]
        %v589 = vld [vmem:[%s238 + $0x6b0] sm:$0xf]
        %v590 = vld [vmem:[%s238 + $0x6b4] sm:$0xff]
        %v591 = vld [vmem:[%s238 + $0x6bc] sm:$0xf]
        %v592 = vld [vmem:[%s238 + $0x6c0] sm:$0xff]
        %v593 = vld [vmem:[%s238 + $0x6c8] sm:$0xf]
        %v594 = vld [vmem:[%s238 + $0x6cc] sm:$0xff]
        %v595 = vld [vmem:[%s238 + $0x6d4] sm:$0xf]
        %v596 = vld [vmem:[%s238 + $0x6d8] sm:$0xff]
        %v597 = vld [vmem:[%s238 + $0x6e0] sm:$0xf]
        %v598 = vld [vmem:[%s238 + $0x6e4] sm:$0xff]
        %v599 = vld [vmem:[%s238 + $0x6ec] sm:$0xf]
        %v600 = vld [vmem:[%s238 + $0x6f0] sm:$0xff]
        %v601 = vld [vmem:[%s238 + $0x6f8] sm:$0xf]
        %v602 = vld [vmem:[%s238 + $0x6fc] sm:$0xff]
        %v603 = vld [vmem:[%s238 + $0x704] sm:$0xf]
        %v604 = vld [vmem:[%s238 + $0x708] sm:$0xff]
        %v605 = vld [vmem:[%s238 + $0x710] sm:$0xf]
        %v606 = vld [vmem:[%s238 + $0x714] sm:$0xff]
        %v607 = vld [vmem:[%s238 + $0x71c] sm:$0xf]
        %v608 = vld [vmem:[%s238 + $0x720] sm:$0xff]
        %v609 = vld [vmem:[%s238 + $0x728] sm:$0xf]
        %v610 = vld [vmem:[%s238 + $0x72c] sm:$0xff]
        %v611 = vld [vmem:[%s238 + $0x734] sm:$0xf]
        %v612 = vld [vmem:[%s238 + $0x738] sm:$0xff]
        %v613 = vld [vmem:[%s238 + $0x740] sm:$0xf]
        %v614 = vld [vmem:[%s238 + $0x744] sm:$0xff]
        %v615 = vld [vmem:[%s238 + $0x74c] sm:$0xf]
        %v616 = vld [vmem:[%s238 + $0x750] sm:$0xff]
        %v617 = vld [vmem:[%s238 + $0x758] sm:$0xf]
        %v618 = vld [vmem:[%s238 + $0x75c] sm:$0xff]
        %v619 = vld [vmem:[%s238 + $0x764] sm:$0xf]
        %v620 = vld [vmem:[%s238 + $0x768] sm:$0xff]
        %v621 = vld [vmem:[%s238 + $0x770] sm:$0xf]
        %v622 = vld [vmem:[%s238 + $0x774] sm:$0xff]
        %v623 = vld [vmem:[%s238 + $0x77c] sm:$0xf]
        %v624 = vld [vmem:[%s238 + $0x780] sm:$0xff]
        %v625 = vld [vmem:[%s238 + $0x788] sm:$0xf]
        %v626 = vld [vmem:[%s238 + $0x78c] sm:$0xff]
        %v627 = vld [vmem:[%s238 + $0x794] sm:$0xf]
        %v628 = vld [vmem:[%s238 + $0x798] sm:$0xff]
        %v629 = vld [vmem:[%s238 + $0x7a0] sm:$0xf]
        %v630 = vld [vmem:[%s238 + $0x7a4] sm:$0xff]
        %v631 = vld [vmem:[%s238 + $0x7ac] sm:$0xf]
        %v632 = vld [vmem:[%s238 + $0x7b0] sm:$0xff]
        %v633 = vld [vmem:[%s238 + $0x7b8] sm:$0xf]
        %v634 = vld [vmem:[%s238 + $0x7bc] sm:$0xff]
        %v635 = vld [vmem:[%s238 + $0x7c4] sm:$0xf]
        %v636 = vld [vmem:[%s238 + $0x7c8] sm:$0xff]
        %v637 = vld [vmem:[%s238 + $0x7d0] sm:$0xf]
        %v638 = vld [vmem:[%s238 + $0x7d4] sm:$0xff]
        %v639 = vld [vmem:[%s238 + $0x7dc] sm:$0xf]
        %v640 = vld [vmem:[%s238 + $0x7e0] sm:$0xff]
        %v641 = vld [vmem:[%s238 + $0x7e8] sm:$0xf]
        %v642 = vld [vmem:[%s238 + $0x7ec] sm:$0xff]
        %v643 = vld [vmem:[%s238 + $0x7f4] sm:$0xf]
        %v644 = vld [vmem:[%s238 + $0x7f8] sm:$0xff]
        %v645 = vld [vmem:[%s238 + $0x800] sm:$0xf]
        %v646 = vld [vmem:[%s238 + $0x804] sm:$0xff]
        %v647 = vld [vmem:[%s238 + $0x80c] sm:$0xf]
        %v648 = vld [vmem:[%s238 + $0x810] sm:$0xff]
        %v649 = vld [vmem:[%s238 + $0x818] sm:$0xf]
        %v650 = vld [vmem:[%s238 + $0x81c] sm:$0xff]
        %v651 = vld [vmem:[%s238 + $0x824] sm:$0xf]
        %v652 = vld [vmem:[%s238 + $0x828] sm:$0xff]
        %v653 = vld [vmem:[%s238 + $0x830] sm:$0xf]
        %v654 = vld [vmem:[%s238 + $0x834] sm:$0xff]
        %v655 = vld [vmem:[%s238 + $0x83c] sm:$0xf]
        %v656 = vld [vmem:[%s238 + $0x840] sm:$0xff]
        %v657 = vld [vmem:[%s238 + $0x848] sm:$0xf]
        %v658 = vld [vmem:[%s238 + $0x84c] sm:$0xff]
        %v659 = vld [vmem:[%s238 + $0x854] sm:$0xf]
        %v660 = vld [vmem:[%s238 + $0x858] sm:$0xff]
        %v661 = vld [vmem:[%s238 + $0x860] sm:$0xf]
        %v662 = vld [vmem:[%s238 + $0x864] sm:$0xff]
        %v663 = vld [vmem:[%s238 + $0x86c] sm:$0xf]
        %v664 = vld [vmem:[%s238 + $0x870] sm:$0xff]
        %v665 = vld [vmem:[%s238 + $0x878] sm:$0xf]
        %v666 = vld [vmem:[%s238 + $0x87c] sm:$0xff]
        %v667 = vld [vmem:[%s238 + $0x884] sm:$0xf]
        %v668 = vld [vmem:[%s238 + $0x888] sm:$0xff]
        %v669 = vld [vmem:[%s238 + $0x890] sm:$0xf]
        %v670 = vld [vmem:[%s238 + $0x894] sm:$0xff]
        %v671 = vld [vmem:[%s238 + $0x89c] sm:$0xf]
        %v672 = vld [vmem:[%s238 + $0x8a0] sm:$0xff]
        %v673 = vld [vmem:[%s238 + $0x8a8] sm:$0xf]
        %v674 = vld [vmem:[%s238 + $0x8ac] sm:$0xff]
        %v675 = vld [vmem:[%s238 + $0x8b4] sm:$0xf]
        %v676 = vld [vmem:[%s238 + $0x8b8] sm:$0xff]
        %v677 = vld [vmem:[%s238 + $0x8c0] sm:$0xf]
        %v678 = vld [vmem:[%s238 + $0x8c4] sm:$0xff]
        %v679 = vld [vmem:[%s238 + $0x8cc] sm:$0xf]
        %v680 = vld [vmem:[%s238 + $0x8d0] sm:$0xff]
        %v681 = vld [vmem:[%s238 + $0x8d8] sm:$0xf]
        %v682 = vld [vmem:[%s238 + $0x8dc] sm:$0xff]
        %v683 = vld [vmem:[%s238 + $0x8e4] sm:$0xf]
        %v684 = vld [vmem:[%s238 + $0x8e8] sm:$0xff]
        %v685 = vld [vmem:[%s238 + $0x8f0] sm:$0xf]
        %v686 = vld [vmem:[%s238 + $0x8f4] sm:$0xff]
        %v687 = vld [vmem:[%s238 + $0x8fc] sm:$0xf]
        %v688 = vld [vmem:[%s238 + $0x900] sm:$0xff]
        %v689 = vld [vmem:[%s238 + $0x908] sm:$0xf]
        %v690 = vld [vmem:[%s238 + $0x90c] sm:$0xff]
        %v691 = vld [vmem:[%s238 + $0x914] sm:$0xf]
        %v692 = vld [vmem:[%s238 + $0x918] sm:$0xff]
        %v693 = vld [vmem:[%s238 + $0x920] sm:$0xf]
        %v694 = vld [vmem:[%s238 + $0x924] sm:$0xff]
        %v695 = vld [vmem:[%s238 + $0x92c] sm:$0xf]
        %v696 = vld [vmem:[%s238 + $0x930] sm:$0xff]
        %v697 = vld [vmem:[%s238 + $0x938] sm:$0xf]
        %v698 = vld [vmem:[%s238 + $0x93c] sm:$0xff]
        %v699 = vld [vmem:[%s238 + $0x944] sm:$0xf]
        %v700 = vld [vmem:[%s238 + $0x948] sm:$0xff]
        %v701 = vld [vmem:[%s238 + $0x950] sm:$0xf]
        %v702 = vld [vmem:[%s238 + $0x954] sm:$0xff]
        %v703 = vld [vmem:[%s238 + $0x95c] sm:$0xf]
        %v704 = vld [vmem:[%s238 + $0x960] sm:$0xff]
        %v705 = vld [vmem:[%s238 + $0x968] sm:$0xf]
        %v706 = vld [vmem:[%s238 + $0x96c] sm:$0xff]
        %v707 = vld [vmem:[%s238 + $0x974] sm:$0xf]
        %v708 = vld [vmem:[%s238 + $0x978] sm:$0xff]
        %v709 = vld [vmem:[%s238 + $0x980] sm:$0xf]
        %v710 = vld [vmem:[%s238 + $0x984] sm:$0xff]
        %v711 = vld [vmem:[%s238 + $0x98c] sm:$0xf]
        %v712 = vld [vmem:[%s238 + $0x990] sm:$0xff]
        %v713 = vld [vmem:[%s238 + $0x998] sm:$0xf]
        %v714 = vld [vmem:[%s238 + $0x99c] sm:$0xff]
        %v715 = vld [vmem:[%s238 + $0x9a4] sm:$0xf]
        %v716 = vld [vmem:[%s238 + $0x9a8] sm:$0xff]
        %v717 = vld [vmem:[%s238 + $0x9b0] sm:$0xf]
        %v718 = vld [vmem:[%s238 + $0x9b4] sm:$0xff]
        %v719 = vld [vmem:[%s238 + $0x9bc] sm:$0xf]
        %v720 = vld [vmem:[%s238 + $0x9c0] sm:$0xff]
        %v721 = vld [vmem:[%s238 + $0x9c8] sm:$0xf]
        %v722 = vld [vmem:[%s238 + $0x9cc] sm:$0xff]
        %v723 = vld [vmem:[%s238 + $0x9d4] sm:$0xf]
        %v724 = vld [vmem:[%s238 + $0x9d8] sm:$0xff]
        %v725 = vld [vmem:[%s238 + $0x9e0] sm:$0xf]
        %v726 = vld [vmem:[%s238 + $0x9e4] sm:$0xff]
        %v727 = vld [vmem:[%s238 + $0x9ec] sm:$0xf]
        %v728 = vld [vmem:[%s238 + $0x9f0] sm:$0xff]
        %v729 = vld [vmem:[%s238 + $0x9f8] sm:$0xf]
        %v730 = vld [vmem:[%s238 + $0x9fc] sm:$0xff]
        %v731 = vld [vmem:[%s238 + $0xa04] sm:$0xf]
        %v732 = vld [vmem:[%s238 + $0xa08] sm:$0xff]
        %v733 = vld [vmem:[%s238 + $0xa10] sm:$0xf]
        %v734 = vld [vmem:[%s238 + $0xa14] sm:$0xff]
        %v735 = vld [vmem:[%s238 + $0xa1c] sm:$0xf]
        %v736 = vld [vmem:[%s238 + $0xa20] sm:$0xff]
        %v737 = vld [vmem:[%s238 + $0xa28] sm:$0xf]
        %v738 = vld [vmem:[%s238 + $0xa2c] sm:$0xff]
        %v739 = vld [vmem:[%s238 + $0xa34] sm:$0xf]
        %v740 = vld [vmem:[%s238 + $0xa38] sm:$0xff]
        %v741 = vld [vmem:[%s238 + $0xa40] sm:$0xf]
        %v742 = vld [vmem:[%s238 + $0xa44] sm:$0xff]
        %v743 = vld [vmem:[%s238 + $0xa4c] sm:$0xf]
        %v744 = vld [vmem:[%s238 + $0xa50] sm:$0xff]
        %v745 = vld [vmem:[%s238 + $0xa58] sm:$0xf]
        %v746 = vld [vmem:[%s238 + $0xa5c] sm:$0xff]
        %v747 = vld [vmem:[%s238 + $0xa64] sm:$0xf]
        %v748 = vld [vmem:[%s238 + $0xa68] sm:$0xff]
        %v749 = vld [vmem:[%s238 + $0xa70] sm:$0xf]
        %v750 = vld [vmem:[%s238 + $0xa74] sm:$0xff]
        %v751 = vld [vmem:[%s238 + $0xa7c] sm:$0xf]
        %v752 = vld [vmem:[%s238 + $0xa80] sm:$0xff]
        %v753 = vld [vmem:[%s238 + $0xa88] sm:$0xf]
        %v754 = vld [vmem:[%s238 + $0xa8c] sm:$0xff]
        %v755 = vld [vmem:[%s238 + $0xa94] sm:$0xf]
        %v756 = vld [vmem:[%s238 + $0xa98] sm:$0xff]
        %v757 = vld [vmem:[%s238 + $0xaa0] sm:$0xf]
        %v758 = vld [vmem:[%s238 + $0xaa4] sm:$0xff]
        %v759 = vld [vmem:[%s238 + $0xaac] sm:$0xf]
        %v760 = vld [vmem:[%s238 + $0xab0] sm:$0xff]
        %v761 = vld [vmem:[%s238 + $0xab8] sm:$0xf]
        %v762 = vld [vmem:[%s238 + $0xabc] sm:$0xff]
        %v763 = vld [vmem:[%s238 + $0xac4] sm:$0xf]
        %v764 = vld [vmem:[%s238 + $0xac8] sm:$0xff]
        %v765 = vld [vmem:[%s238 + $0xad0] sm:$0xf]
        %v766 = vld [vmem:[%s238 + $0xad4] sm:$0xff]
        %v767 = vld [vmem:[%s238 + $0xadc] sm:$0xf]
        %v768 = vld [vmem:[%s238 + $0xae0] sm:$0xff]
        %v769 = vld [vmem:[%s238 + $0xae8] sm:$0xf]
        %v770 = vld [vmem:[%s238 + $0xaec] sm:$0xff]
        %v771 = vld [vmem:[%s238 + $0xaf4] sm:$0xf]
        %v772 = vld [vmem:[%s238 + $0xaf8] sm:$0xff]
        %v773 = vld [vmem:[%s238 + $0xb00] sm:$0xf]
        %v774 = vld [vmem:[%s238 + $0xb04] sm:$0xff]
        %v775 = vld [vmem:[%s238 + $0xb0c] sm:$0xf]
        %v776 = vld [vmem:[%s238 + $0xb10] sm:$0xff]
        %v777 = vld [vmem:[%s238 + $0xb18] sm:$0xf]
        %v778 = vld [vmem:[%s238 + $0xb1c] sm:$0xff]
        %v779 = vld [vmem:[%s238 + $0xb24] sm:$0xf]
        %v780 = vld [vmem:[%s238 + $0xb28] sm:$0xff]
        %v781 = vld [vmem:[%s238 + $0xb30] sm:$0xf]
        %v782 = vld [vmem:[%s238 + $0xb34] sm:$0xff]
        %v783 = vld [vmem:[%s238 + $0xb3c] sm:$0xf]
        %v784 = vld [vmem:[%s238 + $0xb40] sm:$0xff]
        %v785 = vld [vmem:[%s238 + $0xb48] sm:$0xf]
        %v786 = vld [vmem:[%s238 + $0xb4c] sm:$0xff]
        %v787 = vld [vmem:[%s238 + $0xb54] sm:$0xf]
        %v788 = vld [vmem:[%s238 + $0xb58] sm:$0xff]
        %v789 = vld [vmem:[%s238 + $0xb60] sm:$0xf]
        %v790 = vld [vmem:[%s238 + $0xb64] sm:$0xff]
        %v791 = vld [vmem:[%s238 + $0xb6c] sm:$0xf]
        %v792 = vld [vmem:[%s238 + $0xb70] sm:$0xff]
        %v793 = vld [vmem:[%s238 + $0xb78] sm:$0xf]
        %v794 = vld [vmem:[%s238 + $0xb7c] sm:$0xff]
        %v795 = vld [vmem:[%s238 + $0xb84] sm:$0xf]
        %v796 = vld [vmem:[%s238 + $0xb88] sm:$0xff]
        %v797 = vld [vmem:[%s238 + $0xb90] sm:$0xf]
        %v798 = vld [vmem:[%s238 + $0xb94] sm:$0xff]
        %v799 = vld [vmem:[%s238 + $0xb9c] sm:$0xf]
        %v800 = vld [vmem:[%s238 + $0xba0] sm:$0xff]
        %v801 = vld [vmem:[%s238 + $0xba8] sm:$0xf]
        %v802 = vld [vmem:[%s238 + $0xbac] sm:$0xff]
        %v803 = vld [vmem:[%s238 + $0xbb4] sm:$0xf]
        %v804 = vld [vmem:[%s238 + $0xbb8] sm:$0xff]
        %v805 = vld [vmem:[%s238 + $0xbc0] sm:$0xf]
        %v806 = vld [vmem:[%s238 + $0xbc4] sm:$0xff]
        %v807 = vld [vmem:[%s238 + $0xbcc] sm:$0xf]
        %v808 = vld [vmem:[%s238 + $0xbd0] sm:$0xff]
        %v809 = vld [vmem:[%s238 + $0xbd8] sm:$0xf]
        %v810 = vld [vmem:[%s238 + $0xbdc] sm:$0xff]
        %v811 = vld [vmem:[%s238 + $0xbe4] sm:$0xf]
        %v812 = vld [vmem:[%s238 + $0xbe8] sm:$0xff]
        %v813 = vld [vmem:[%s238 + $0xbf0] sm:$0xf]
        %v814 = vld [vmem:[%s238 + $0xbf4] sm:$0xff]
        %v815 = vld [vmem:[%s238 + $0xbfc] sm:$0xf]
        %v816 = vld [vmem:[%s238 + $0xc00] sm:$0xff]
        %v817 = vld [vmem:[%s238 + $0xc08] sm:$0xf]
        %v818 = vld [vmem:[%s238 + $0xc0c] sm:$0xff]
        %v819 = vld [vmem:[%s238 + $0xc14] sm:$0xf]
        %v820 = vld [vmem:[%s238 + $0xc18] sm:$0xff]
        %v821 = vld [vmem:[%s238 + $0xc20] sm:$0xf]
        %v822 = vld [vmem:[%s238 + $0xc24] sm:$0xff]
        %v823 = vld [vmem:[%s238 + $0xc2c] sm:$0xf]
        %v824 = vld [vmem:[%s238 + $0xc30] sm:$0xff]
        %v825 = vld [vmem:[%s238 + $0xc38] sm:$0xf]
        %v826 = vld [vmem:[%s238 + $0xc3c] sm:$0xff]
        %v827 = vld [vmem:[%s238 + $0xc44] sm:$0xf]
        %v828 = vld [vmem:[%s238 + $0xc48] sm:$0xff]
        %v829 = vld [vmem:[%s238 + $0xc50] sm:$0xf]
        %v830 = vld [vmem:[%s238 + $0xc54] sm:$0xff]
        %v831 = vld [vmem:[%s238 + $0xc5c] sm:$0xf]
        %v832 = vld [vmem:[%s238 + $0xc60] sm:$0xff]
        %v833 = vld [vmem:[%s238 + $0xc68] sm:$0xf]
        %v834 = vld [vmem:[%s238 + $0xc6c] sm:$0xff]
        %v835 = vld [vmem:[%s238 + $0xc74] sm:$0xf]
        %v836 = vld [vmem:[%s238 + $0xc78] sm:$0xff]
        %v837 = vld [vmem:[%s238 + $0xc80] sm:$0xf]
        %v838 = vld [vmem:[%s238 + $0xc84] sm:$0xff]
        %v839 = vld [vmem:[%s238 + $0xc8c] sm:$0xf]
        %v840 = vld [vmem:[%s238 + $0xc90] sm:$0xff]
        %v841 = vld [vmem:[%s238 + $0xc98] sm:$0xf]
        %v842 = vld [vmem:[%s238 + $0xc9c] sm:$0xff]
        %v843 = vld [vmem:[%s238 + $0xca4] sm:$0xf]
        %v844 = vld [vmem:[%s238 + $0xca8] sm:$0xff]
        %v845 = vld [vmem:[%s238 + $0xcb0] sm:$0xf]
        %v846 = vld [vmem:[%s238 + $0xcb4] sm:$0xff]
        %v847 = vld [vmem:[%s238 + $0xcbc] sm:$0xf]
        %v848 = vld [vmem:[%s238 + $0xcc0] sm:$0xff]
        %v849 = vld [vmem:[%s238 + $0xcc8] sm:$0xf]
        %v850 = vld [vmem:[%s238 + $0xccc] sm:$0xff]
        %v851 = vld [vmem:[%s238 + $0xcd4] sm:$0xf]
        %v852 = vld [vmem:[%s238 + $0xcd8] sm:$0xff]
        %v853 = vld [vmem:[%s238 + $0xce0] sm:$0xf]
        %v854 = vld [vmem:[%s238 + $0xce4] sm:$0xff]
        %v855 = vld [vmem:[%s238 + $0xcec] sm:$0xf]
        %v856 = vld [vmem:[%s238 + $0xcf0] sm:$0xff]
        %v857 = vld [vmem:[%s238 + $0xcf8] sm:$0xf]
        %v858 = vld [vmem:[%s238 + $0xcfc] sm:$0xff]
        %v859 = vld [vmem:[%s238 + $0xd04] sm:$0xf]
        %v860 = vld [vmem:[%s238 + $0xd08] sm:$0xff]
        %v861 = vld [vmem:[%s238 + $0xd10] sm:$0xf]
        %v862 = vld [vmem:[%s238 + $0xd14] sm:$0xff]
        %v863 = vld [vmem:[%s238 + $0xd1c] sm:$0xf]
        %v864 = vld [vmem:[%s238 + $0xd20] sm:$0xff]
        %v865 = vld [vmem:[%s238 + $0xd28] sm:$0xf]
        %v866 = vld [vmem:[%s238 + $0xd2c] sm:$0xff]
        %v867 = vld [vmem:[%s238 + $0xd34] sm:$0xf]
        %v868 = vld [vmem:[%s238 + $0xd38] sm:$0xff]
        %v869 = vld [vmem:[%s238 + $0xd40] sm:$0xf]
        %v870 = vld [vmem:[%s238 + $0xd44] sm:$0xff]
        %v871 = vld [vmem:[%s238 + $0xd4c] sm:$0xf]
        %v872 = vld [vmem:[%s238 + $0xd50] sm:$0xff]
        %v873 = vld [vmem:[%s238 + $0xd58] sm:$0xf]
        %v874 = vld [vmem:[%s238 + $0xd5c] sm:$0xff]
        %v875 = vld [vmem:[%s238 + $0xd64] sm:$0xf]
        %v876 = vld [vmem:[%s238 + $0xd68] sm:$0xff]
        %v877 = vld [vmem:[%s238 + $0xd70] sm:$0xf]
        %v878 = vld [vmem:[%s238 + $0xd74] sm:$0xff]
        %v879 = vld [vmem:[%s238 + $0xd7c] sm:$0xf]
        %v880 = vld [vmem:[%s238 + $0xd80] sm:$0xff]
        %v881 = vld [vmem:[%s238 + $0xd88] sm:$0xf]
        %v882 = vld [vmem:[%s238 + $0xd8c] sm:$0xff]
        %v883 = vld [vmem:[%s238 + $0xd94] sm:$0xf]
        %v884 = vld [vmem:[%s238 + $0xd98] sm:$0xff]
        %v885 = vld [vmem:[%s238 + $0xda0] sm:$0xf]
        %v886 = vld [vmem:[%s238 + $0xda4] sm:$0xff]
        %v887 = vld [vmem:[%s238 + $0xdac] sm:$0xf]
        %v888 = vld [vmem:[%s238 + $0xdb0] sm:$0xff]
        %v889 = vld [vmem:[%s238 + $0xdb8] sm:$0xf]
        %v890 = vld [vmem:[%s238 + $0xdbc] sm:$0xff]
        %v891 = vld [vmem:[%s238 + $0xdc4] sm:$0xf]
        %v892 = vld [vmem:[%s238 + $0xdc8] sm:$0xff]
        %v893 = vld [vmem:[%s238 + $0xdd0] sm:$0xf]
        %v894 = vld [vmem:[%s238 + $0xdd4] sm:$0xff]
        %v895 = vld [vmem:[%s238 + $0xddc] sm:$0xf]
        %v896 = vld [vmem:[%s238 + $0xde0] sm:$0xff]
        %v897 = vld [vmem:[%s238 + $0xde8] sm:$0xf]
        %v898 = vld [vmem:[%s238 + $0xdec] sm:$0xff]
        %v899 = vld [vmem:[%s238 + $0xdf4] sm:$0xf]
        %v900 = vld [vmem:[%s238 + $0xdf8] sm:$0xff]
        %v901 = vld [vmem:[%s238 + $0xe00] sm:$0xf]
        %v902 = vld [vmem:[%s238 + $0xe04] sm:$0xff]
        %v903 = vld [vmem:[%s238 + $0xe0c] sm:$0xf]
        %v904 = vld [vmem:[%s238 + $0xe10] sm:$0xff]
        %v905 = vld [vmem:[%s238 + $0xe18] sm:$0xf]
        %v906 = vld [vmem:[%s238 + $0xe1c] sm:$0xff]
        %v907 = vld [vmem:[%s238 + $0xe24] sm:$0xf]
        %v908 = vld [vmem:[%s238 + $0xe28] sm:$0xff]
        %v909 = vld [vmem:[%s238 + $0xe30] sm:$0xf]
        %v910 = vld [vmem:[%s238 + $0xe34] sm:$0xff]
        %v911 = vld [vmem:[%s238 + $0xe3c] sm:$0xf]
        %v912 = vld [vmem:[%s238 + $0xe40] sm:$0xff]
        %v913 = vld [vmem:[%s238 + $0xe48] sm:$0xf]
        %v914 = vld [vmem:[%s238 + $0xe4c] sm:$0xff]
        %v915 = vld [vmem:[%s238 + $0xe54] sm:$0xf]
        %v916 = vld [vmem:[%s238 + $0xe58] sm:$0xff]
        %v917 = vld [vmem:[%s238 + $0xe60] sm:$0xf]
        %v918 = vld [vmem:[%s238 + $0xe64] sm:$0xff]
        %v919 = vld [vmem:[%s238 + $0xe6c] sm:$0xf]
        %v920 = vld [vmem:[%s238 + $0xe70] sm:$0xff]
        %v921 = vld [vmem:[%s238 + $0xe78] sm:$0xf]
        %v922 = vld [vmem:[%s238 + $0xe7c] sm:$0xff]
        %v923 = vld [vmem:[%s238 + $0xe84] sm:$0xf]
        %v924 = vld [vmem:[%s238 + $0xe88] sm:$0xff]
        %v925 = vld [vmem:[%s238 + $0xe90] sm:$0xf]
        %v926 = vld [vmem:[%s238 + $0xe94] sm:$0xff]
        %v927 = vld [vmem:[%s238 + $0xe9c] sm:$0xf]
        %v928 = vld [vmem:[%s238 + $0xea0] sm:$0xff]
        %v929 = vld [vmem:[%s238 + $0xea8] sm:$0xf]
        %v930 = vld [vmem:[%s238 + $0xeac] sm:$0xff]
        %v931 = vld [vmem:[%s238 + $0xeb4] sm:$0xf]
        %v932 = vld [vmem:[%s238 + $0xeb8] sm:$0xff]
        %v933 = vld [vmem:[%s238 + $0xec0] sm:$0xf]
        %v934 = vld [vmem:[%s238 + $0xec4] sm:$0xff]
        %v935 = vld [vmem:[%s238 + $0xecc] sm:$0xf]
        %v936 = vld [vmem:[%s238 + $0xed0] sm:$0xff]
        %v937 = vld [vmem:[%s238 + $0xed8] sm:$0xf]
        %v938 = vld [vmem:[%s238 + $0xedc] sm:$0xff]
        %v939 = vld [vmem:[%s238 + $0xee4] sm:$0xf]
        %v940 = vld [vmem:[%s238 + $0xee8] sm:$0xff]
        %v941 = vld [vmem:[%s238 + $0xef0] sm:$0xf]
        %v942 = vld [vmem:[%s238 + $0xef4] sm:$0xff]
        %v943 = vld [vmem:[%s238 + $0xefc] sm:$0xf]
        %v944 = vld [vmem:[%s238 + $0xf00] sm:$0xff]
        %v945 = vld [vmem:[%s238 + $0xf08] sm:$0xf]
        %v946 = vld [vmem:[%s238 + $0xf0c] sm:$0xff]
        %v947 = vld [vmem:[%s238 + $0xf14] sm:$0xf]
        %v948 = vld [vmem:[%s238 + $0xf18] sm:$0xff]
        %v949 = vld [vmem:[%s238 + $0xf20] sm:$0xf]
        %v950 = vld [vmem:[%s238 + $0xf24] sm:$0xff]
        %v951 = vld [vmem:[%s238 + $0xf2c] sm:$0xf]
        %v952 = vld [vmem:[%s238 + $0xf30] sm:$0xff]
        %v953 = vld [vmem:[%s238 + $0xf38] sm:$0xf]
        %v954 = vld [vmem:[%s238 + $0xf3c] sm:$0xff]
        %v955 = vld [vmem:[%s238 + $0xf44] sm:$0xf]
        %v956 = vld [vmem:[%s238 + $0xf48] sm:$0xff]
        %v957 = vld [vmem:[%s238 + $0xf50] sm:$0xf]
        %v958 = vld [vmem:[%s238 + $0xf54] sm:$0xff]
        %v959 = vld [vmem:[%s238 + $0xf5c] sm:$0xf]
        %v960 = vld [vmem:[%s238 + $0xf60] sm:$0xff]
        %v961 = vld [vmem:[%s238 + $0xf68] sm:$0xf]
        %v962 = vld [vmem:[%s238 + $0xf6c] sm:$0xff]
        %v963 = vld [vmem:[%s238 + $0xf74] sm:$0xf]
        %v964 = vld [vmem:[%s238 + $0xf78] sm:$0xff]
        %v965 = vld [vmem:[%s238 + $0xf80] sm:$0xf]
        %v966 = vld [vmem:[%s238 + $0xf84] sm:$0xff]
        %v967 = vld [vmem:[%s238 + $0xf8c] sm:$0xf]
        %v968 = vld [vmem:[%s238 + $0xf90] sm:$0xff]
        %v969 = vld [vmem:[%s238 + $0xf98] sm:$0xf]
        %v970 = vld [vmem:[%s238 + $0xf9c] sm:$0xff]
        %v971 = vld [vmem:[%s238 + $0xfa4] sm:$0xf]
        %v972 = vld [vmem:[%s238 + $0xfa8] sm:$0xff]
        %v973 = vld [vmem:[%s238 + $0xfb0] sm:$0xf]
        %v974 = vld [vmem:[%s238 + $0xfb4] sm:$0xff]
        %v975 = vld [vmem:[%s238 + $0xfbc] sm:$0xf]
        %v976 = vld [vmem:[%s238 + $0xfc0] sm:$0xff]
        %v977 = vld [vmem:[%s238 + $0xfc8] sm:$0xf]
        %v978 = vld [vmem:[%s238 + $0xfcc] sm:$0xff]
        %v979 = vld [vmem:[%s238 + $0xfd4] sm:$0xf]
        %v980 = vld [vmem:[%s238 + $0xfd8] sm:$0xff]
        %v981 = vld [vmem:[%s238 + $0xfe0] sm:$0xf]
        %v982 = vld [vmem:[%s238 + $0xfe4] sm:$0xff]
        %v983 = vld [vmem:[%s238 + $0xfec] sm:$0xf]
        %v984 = vld [vmem:[%s238 + $0xff0] sm:$0xff]
        %v985 = vld [vmem:[%s238 + $0xff8] sm:$0xf]
        %v986 = vld [vmem:[%s238 + $0xffc] sm:$0xff]
        %v987 = vld [vmem:[%s238 + $0x1004] sm:$0xf]
        %v988 = vld [vmem:[%s238 + $0x1008] sm:$0xff]
        %v989 = vld [vmem:[%s238 + $0x1010] sm:$0xf]
        %v990 = vld [vmem:[%s238 + $0x1014] sm:$0xff]
        %v991 = vld [vmem:[%s238 + $0x101c] sm:$0xf]
        %v992 = vld [vmem:[%s238 + $0x1020] sm:$0xff]
        %v993 = vld [vmem:[%s238 + $0x1028] sm:$0xf]
        %v994 = vld [vmem:[%s238 + $0x102c] sm:$0xff]
        %v995 = vld [vmem:[%s238 + $0x1034] sm:$0xf]
        %v996 = vld [vmem:[%s238 + $0x1038] sm:$0xff]
        %v997 = vld [vmem:[%s238 + $0x1040] sm:$0xf]
        %v998 = vld [vmem:[%s238 + $0x1044] sm:$0xff]
        %v999 = vld [vmem:[%s238 + $0x104c] sm:$0xf]
        %v1000 = vld [vmem:[%s238 + $0x1050] sm:$0xff]
        %v1001 = vld [vmem:[%s238 + $0x1058] sm:$0xf]
        %v1002 = vld [vmem:[%s238 + $0x105c] sm:$0xff]
        %v1003 = vld [vmem:[%s238 + $0x1064] sm:$0xf]
        %v1004 = vld [vmem:[%s238 + $0x1068] sm:$0xff]
        %v1005 = vld [vmem:[%s238 + $0x1070] sm:$0xf]
        %v1006 = vld [vmem:[%s238 + $0x1074] sm:$0xff]
        %v1007 = vld [vmem:[%s238 + $0x107c] sm:$0xf]
        %v1008 = vld [vmem:[%s238 + $0x1080] sm:$0xff]
        %v1009 = vld [vmem:[%s238 + $0x1088] sm:$0xf]
        %v1010 = vld [vmem:[%s238 + $0x108c] sm:$0xff]
        %v1011 = vld [vmem:[%s238 + $0x1094] sm:$0xf]
        %v1012 = vld [vmem:[%s238 + $0x1098] sm:$0xff]
        %v1013 = vld [vmem:[%s238 + $0x10a0] sm:$0xf]
        %v1014 = vld [vmem:[%s238 + $0x10a4] sm:$0xff]
        %v1015 = vld [vmem:[%s238 + $0x10ac] sm:$0xf]
        %v1016 = vld [vmem:[%s238 + $0x10b0] sm:$0xff]
        %v1017 = vld [vmem:[%s238 + $0x10b8] sm:$0xf]
        %v1018 = vld [vmem:[%s238 + $0x10bc] sm:$0xff]
        %v1019 = vld [vmem:[%s238 + $0x10c4] sm:$0xf]
        %v1020 = vld [vmem:[%s238 + $0x10c8] sm:$0xff]
        %v1021 = vld [vmem:[%s238 + $0x10d0] sm:$0xf]
        %v1022 = vld [vmem:[%s238 + $0x10d4] sm:$0xff]
        %v1023 = vld [vmem:[%s238 + $0x10dc] sm:$0xf]
        %v1024 = vld [vmem:[%s238 + $0x10e0] sm:$0xff]
        %v1025 = vld [vmem:[%s238 + $0x10e8] sm:$0xf]
        %v1026 = vld [vmem:[%s238 + $0x10ec] sm:$0xff]
        %v1027 = vld [vmem:[%s238 + $0x10f4] sm:$0xf]
        %v1028 = vld [vmem:[%s238 + $0x10f8] sm:$0xff]
        %v1029 = vld [vmem:[%s238 + $0x1100] sm:$0xf]
        %v1030 = vld [vmem:[%s238 + $0x1104] sm:$0xff]
        %v1031 = vld [vmem:[%s238 + $0x110c] sm:$0xf]
        %v1032 = vld [vmem:[%s238 + $0x1110] sm:$0xff]
        %v1033 = vld [vmem:[%s238 + $0x1118] sm:$0xf]
        %v1034 = vld [vmem:[%s238 + $0x111c] sm:$0xff]
        %v1035 = vld [vmem:[%s238 + $0x1124] sm:$0xf]
        %v1036 = vld [vmem:[%s238 + $0x1128] sm:$0xff]
        %v1037 = vld [vmem:[%s238 + $0x1130] sm:$0xf]
        %v1038 = vld [vmem:[%s238 + $0x1134] sm:$0xff]
        %v1039 = vld [vmem:[%s238 + $0x113c] sm:$0xf]
        %v1040 = vld [vmem:[%s238 + $0x1140] sm:$0xff]
        %v1041 = vld [vmem:[%s238 + $0x1148] sm:$0xf]
        %v1042 = vld [vmem:[%s238 + $0x114c] sm:$0xff]
        %v1043 = vld [vmem:[%s238 + $0x1154] sm:$0xf]
        %v1044 = vld [vmem:[%s238 + $0x1158] sm:$0xff]
        %v1045 = vld [vmem:[%s238 + $0x1160] sm:$0xf]
        %v1046 = vld [vmem:[%s238 + $0x1164] sm:$0xff]
        %v1047 = vld [vmem:[%s238 + $0x116c] sm:$0xf]
        %v1048 = vld [vmem:[%s238 + $0x1170] sm:$0xff]
        %v1049 = vld [vmem:[%s238 + $0x1178] sm:$0xf]
        %v1050 = vld [vmem:[%s238 + $0x117c] sm:$0xff]
        %v1051 = vld [vmem:[%s238 + $0x1184] sm:$0xf]
        %v1052 = vld [vmem:[%s238 + $0x1188] sm:$0xff]
        %v1053 = vld [vmem:[%s238 + $0x1190] sm:$0xf]
        %v1054 = vld [vmem:[%s238 + $0x1194] sm:$0xff]
        %v1055 = vld [vmem:[%s238 + $0x119c] sm:$0xf]
        %v1056 = vld [vmem:[%s238 + $0x11a0] sm:$0xff]
        %v1057 = vld [vmem:[%s238 + $0x11a8] sm:$0xf]
        %v1058 = vld [vmem:[%s238 + $0x11ac] sm:$0xff]
        %v1059 = vld [vmem:[%s238 + $0x11b4] sm:$0xf]
        %v1060 = vld [vmem:[%s238 + $0x11b8] sm:$0xff]
        %v1061 = vld [vmem:[%s238 + $0x11c0] sm:$0xf]
        %v1062 = vld [vmem:[%s238 + $0x11c4] sm:$0xff]
        %v1063 = vld [vmem:[%s238 + $0x11cc] sm:$0xf]
        %v1064 = vld [vmem:[%s238 + $0x11d0] sm:$0xff]
        %v1065 = vld [vmem:[%s238 + $0x11d8] sm:$0xf]
        %v1066 = vld [vmem:[%s238 + $0x11dc] sm:$0xff]
        %v1067 = vld [vmem:[%s238 + $0x11e4] sm:$0xf]
        %v1068 = vld [vmem:[%s238 + $0x11e8] sm:$0xff]
        %v1069 = vld [vmem:[%s238 + $0x11f0] sm:$0xf]
        %v1070 = vld [vmem:[%s238 + $0x11f4] sm:$0xff]
        %v1071 = vld [vmem:[%s238 + $0x11fc] sm:$0xf]
        %v1072 = vld [vmem:[%s238 + $0x1200] sm:$0xff]
        %v1073 = vld [vmem:[%s238 + $0x1208] sm:$0xf]
        %v1074 = vld [vmem:[%s238 + $0x120c] sm:$0xff]
        %v1075 = vld [vmem:[%s238 + $0x1214] sm:$0xf]
        %v1076 = vld [vmem:[%s238 + $0x1218] sm:$0xff]
        %v1077 = vld [vmem:[%s238 + $0x1220] sm:$0xf]
        %v1078 = vld [vmem:[%s238 + $0x1224] sm:$0xff]
        %v1079 = vld [vmem:[%s238 + $0x122c] sm:$0xf]
        %v1080 = vld [vmem:[%s238 + $0x1230] sm:$0xff]
        %v1081 = vld [vmem:[%s238 + $0x1238] sm:$0xf]
        %v1082 = vld [vmem:[%s238 + $0x123c] sm:$0xff]
        %v1083 = vld [vmem:[%s238 + $0x1244] sm:$0xf]
        %v1084 = vld [vmem:[%s238 + $0x1248] sm:$0xff]
        %v1085 = vld [vmem:[%s238 + $0x1250] sm:$0xf]
        %v1086 = vld [vmem:[%s238 + $0x1254] sm:$0xff]
        %v1087 = vld [vmem:[%s238 + $0x125c] sm:$0xf]
        %v1088 = vld [vmem:[%s238 + $0x1260] sm:$0xff]
        %v1089 = vld [vmem:[%s238 + $0x1268] sm:$0xf]
        %v1090 = vld [vmem:[%s238 + $0x126c] sm:$0xff]
        %v1091 = vld [vmem:[%s238 + $0x1274] sm:$0xf]
        %v1092 = vld [vmem:[%s238 + $0x1278] sm:$0xff]
        %v1093 = vld [vmem:[%s238 + $0x1280] sm:$0xf]
        %v1094 = vld [vmem:[%s238 + $0x1284] sm:$0xff]
        %v1095 = vld [vmem:[%s238 + $0x128c] sm:$0xf]
        %v1096 = vld [vmem:[%s238 + $0x1290] sm:$0xff]
        %v1097 = vld [vmem:[%s238 + $0x1298] sm:$0xf]
        %v1098 = vld [vmem:[%s238 + $0x129c] sm:$0xff]
        %v1099 = vld [vmem:[%s238 + $0x12a4] sm:$0xf]
        %v1100 = vld [vmem:[%s238 + $0x12a8] sm:$0xff]
        %v1101 = vld [vmem:[%s238 + $0x12b0] sm:$0xf]
        %v1102 = vld [vmem:[%s238 + $0x12b4] sm:$0xff]
        %v1103 = vld [vmem:[%s238 + $0x12bc] sm:$0xf]
        %v1104 = vld [vmem:[%s238 + $0x12c0] sm:$0xff]
        %v1105 = vld [vmem:[%s238 + $0x12c8] sm:$0xf]
        %v1106 = vld [vmem:[%s238 + $0x12cc] sm:$0xff]
        %v1107 = vld [vmem:[%s238 + $0x12d4] sm:$0xf]
        %v1108 = vld [vmem:[%s238 + $0x12d8] sm:$0xff]
        %v1109 = vld [vmem:[%s238 + $0x12e0] sm:$0xf]
        %v1110 = vld [vmem:[%s238 + $0x12e4] sm:$0xff]
        %v1111 = vld [vmem:[%s238 + $0x12ec] sm:$0xf]
        %v1112 = vld [vmem:[%s238 + $0x12f0] sm:$0xff]
        %v1113 = vld [vmem:[%s238 + $0x12f8] sm:$0xf]
        %v1114 = vld [vmem:[%s238 + $0x12fc] sm:$0xff]
        %v1115 = vld [vmem:[%s238 + $0x1304] sm:$0xf]
        %v1116 = vld [vmem:[%s238 + $0x1308] sm:$0xff]
        %v1117 = vld [vmem:[%s238 + $0x1310] sm:$0xf]
        %v1118 = vld [vmem:[%s238 + $0x1314] sm:$0xff]
        %v1119 = vld [vmem:[%s238 + $0x131c] sm:$0xf]
        %v1120 = vld [vmem:[%s238 + $0x1320] sm:$0xff]
        %v1121 = vld [vmem:[%s238 + $0x1328] sm:$0xf]
        %v1122 = vld [vmem:[%s238 + $0x132c] sm:$0xff]
        %v1123 = vld [vmem:[%s238 + $0x1334] sm:$0xf]
        %v1124 = vld [vmem:[%s238 + $0x1338] sm:$0xff]
        %v1125 = vld [vmem:[%s238 + $0x1340] sm:$0xf]
        %v1126 = vld [vmem:[%s238 + $0x1344] sm:$0xff]
        %v1127 = vld [vmem:[%s238 + $0x134c] sm:$0xf]
        %v1128 = vld [vmem:[%s238 + $0x1350] sm:$0xff]
        %v1129 = vld [vmem:[%s238 + $0x1358] sm:$0xf]
        %v1130 = vld [vmem:[%s238 + $0x135c] sm:$0xff]
        %v1131 = vld [vmem:[%s238 + $0x1364] sm:$0xf]
        %v1132 = vld [vmem:[%s238 + $0x1368] sm:$0xff]
        %v1133 = vld [vmem:[%s238 + $0x1370] sm:$0xf]
        %v1134 = vld [vmem:[%s238 + $0x1374] sm:$0xff]
        %v1135 = vld [vmem:[%s238 + $0x137c] sm:$0xf]
        %v1136 = vld [vmem:[%s238 + $0x1380] sm:$0xff]
        %v1137 = vld [vmem:[%s238 + $0x1388] sm:$0xf]
        %v1138 = vld [vmem:[%s238 + $0x138c] sm:$0xff]
        %v1139 = vld [vmem:[%s238 + $0x1394] sm:$0xf]
        %v1140 = vld [vmem:[%s238 + $0x1398] sm:$0xff]
        %v1141 = vld [vmem:[%s238 + $0x13a0] sm:$0xf]
        %v1142 = vld [vmem:[%s238 + $0x13a4] sm:$0xff]
        %v1143 = vld [vmem:[%s238 + $0x13ac] sm:$0xf]
        %v1144 = vld [vmem:[%s238 + $0x13b0] sm:$0xff]
        %v1145 = vld [vmem:[%s238 + $0x13b8] sm:$0xf]
        %v1146 = vld [vmem:[%s238 + $0x13bc] sm:$0xff]
        %v1147 = vld [vmem:[%s238 + $0x13c4] sm:$0xf]
        %v1148 = vld [vmem:[%s238 + $0x13c8] sm:$0xff]
        %v1149 = vld [vmem:[%s238 + $0x13d0] sm:$0xf]
        %v1150 = vld [vmem:[%s238 + $0x13d4] sm:$0xff]
        %v1151 = vld [vmem:[%s238 + $0x13dc] sm:$0xf]
        %v1152 = vld [vmem:[%s238 + $0x13e0] sm:$0xff]
        %v1153 = vld [vmem:[%s238 + $0x13e8] sm:$0xf]
        %v1154 = vld [vmem:[%s238 + $0x13ec] sm:$0xff]
        %v1155 = vld [vmem:[%s238 + $0x13f4] sm:$0xf]
        %v1156 = vld [vmem:[%s238 + $0x13f8] sm:$0xff]
        %v1157 = vld [vmem:[%s238 + $0x1400] sm:$0xf]
        %v1158 = vld [vmem:[%s238 + $0x1404] sm:$0xff]
        %v1159 = vld [vmem:[%s238 + $0x140c] sm:$0xf]
        %v1160 = vld [vmem:[%s238 + $0x1410] sm:$0xff]
        %v1161 = vld [vmem:[%s238 + $0x1418] sm:$0xf]
        %v1162 = vld [vmem:[%s238 + $0x141c] sm:$0xff]
        %v1163 = vld [vmem:[%s238 + $0x1424] sm:$0xf]
        %v1164 = vld [vmem:[%s238 + $0x1428] sm:$0xff]
        %v1165 = vld [vmem:[%s238 + $0x1430] sm:$0xf]
        %v1166 = vld [vmem:[%s238 + $0x1434] sm:$0xff]
        %v1167 = vld [vmem:[%s238 + $0x143c] sm:$0xf]
        %v1168 = vld [vmem:[%s238 + $0x1440] sm:$0xff]
        %v1169 = vld [vmem:[%s238 + $0x1448] sm:$0xf]
        %v1170 = vld [vmem:[%s238 + $0x144c] sm:$0xff]
        %v1171 = vld [vmem:[%s238 + $0x1454] sm:$0xf]
        %v1172 = vld [vmem:[%s238 + $0x1458] sm:$0xff]
        %v1173 = vld [vmem:[%s238 + $0x1460] sm:$0xf]
        %v1174 = vld [vmem:[%s238 + $0x1464] sm:$0xff]
        %v1175 = vld [vmem:[%s238 + $0x146c] sm:$0xf]
        %v1176 = vld [vmem:[%s238 + $0x1470] sm:$0xff]
        %v1177 = vld [vmem:[%s238 + $0x1478] sm:$0xf]
        %v1178 = vld [vmem:[%s238 + $0x147c] sm:$0xff]
        %v1179 = vld [vmem:[%s238 + $0x1484] sm:$0xf]
        %v1180 = vld [vmem:[%s238 + $0x1488] sm:$0xff]
        %v1181 = vld [vmem:[%s238 + $0x1490] sm:$0xf]
        %v1182 = vld [vmem:[%s238 + $0x1494] sm:$0xff]
        %v1183 = vld [vmem:[%s238 + $0x149c] sm:$0xf]
        %v1184 = vld [vmem:[%s238 + $0x14a0] sm:$0xff]
        %v1185 = vld [vmem:[%s238 + $0x14a8] sm:$0xf]
        %v1186 = vld [vmem:[%s238 + $0x14ac] sm:$0xff]
        %v1187 = vld [vmem:[%s238 + $0x14b4] sm:$0xf]
        %v1188 = vld [vmem:[%s238 + $0x14b8] sm:$0xff]
        %v1189 = vld [vmem:[%s238 + $0x14c0] sm:$0xf]
        %v1190 = vld [vmem:[%s238 + $0x14c4] sm:$0xff]
        %v1191 = vld [vmem:[%s238 + $0x14cc] sm:$0xf]
        %v1192 = vld [vmem:[%s238 + $0x14d0] sm:$0xff]
        %v1193 = vld [vmem:[%s238 + $0x14d8] sm:$0xf]
        %v1194 = vld [vmem:[%s238 + $0x14dc] sm:$0xff]
        %v1195 = vld [vmem:[%s238 + $0x14e4] sm:$0xf]
        %v1196 = vld [vmem:[%s238 + $0x14e8] sm:$0xff]
        %v1197 = vld [vmem:[%s238 + $0x14f0] sm:$0xf]
        %v1198 = vld [vmem:[%s238 + $0x14f4] sm:$0xff]
        %v1199 = vld [vmem:[%s238 + $0x14fc] sm:$0xf]
        %v1200 = vld [vmem:[%s238 + $0x1500] sm:$0xff]
        %v1201 = vld [vmem:[%s238 + $0x1508] sm:$0xf]
        %v1202 = vld [vmem:[%s238 + $0x150c] sm:$0xff]
        %v1203 = vld [vmem:[%s238 + $0x1514] sm:$0xf]
        %v1204 = vld [vmem:[%s238 + $0x1518] sm:$0xff]
        %v1205 = vld [vmem:[%s238 + $0x1520] sm:$0xf]
        %v1206 = vld [vmem:[%s238 + $0x1524] sm:$0xff]
        %v1207 = vld [vmem:[%s238 + $0x152c] sm:$0xf]
        %v1208 = vld [vmem:[%s238 + $0x1530] sm:$0xff]
        %v1209 = vld [vmem:[%s238 + $0x1538] sm:$0xf]
        %v1210 = vld [vmem:[%s238 + $0x153c] sm:$0xff]
        %v1211 = vld [vmem:[%s238 + $0x1544] sm:$0xf]
        %v1212 = vld [vmem:[%s238 + $0x1548] sm:$0xff]
        %v1213 = vld [vmem:[%s238 + $0x1550] sm:$0xf]
        %v1214 = vld [vmem:[%s238 + $0x1554] sm:$0xff]
        %v1215 = vld [vmem:[%s238 + $0x155c] sm:$0xf]
        %v1216 = vld [vmem:[%s238 + $0x1560] sm:$0xff]
        %v1217 = vld [vmem:[%s238 + $0x1568] sm:$0xf]
        %v1218 = vld [vmem:[%s238 + $0x156c] sm:$0xff]
        %v1219 = vld [vmem:[%s238 + $0x1574] sm:$0xf]
        %v1220 = vld [vmem:[%s238 + $0x1578] sm:$0xff]
        %v1221 = vld [vmem:[%s238 + $0x1580] sm:$0xf]
        %v1222 = vld [vmem:[%s238 + $0x1584] sm:$0xff]
        %v1223 = vld [vmem:[%s238 + $0x158c] sm:$0xf]
        %v1224 = vld [vmem:[%s238 + $0x1590] sm:$0xff]
        %v1225 = vld [vmem:[%s238 + $0x1598] sm:$0xf]
        %v1226 = vld [vmem:[%s238 + $0x159c] sm:$0xff]
        %v1227 = vld [vmem:[%s238 + $0x15a4] sm:$0xf]
        %v1228 = vld [vmem:[%s238 + $0x15a8] sm:$0xff]
        %v1229 = vld [vmem:[%s238 + $0x15b0] sm:$0xf]
        %v1230 = vld [vmem:[%s238 + $0x15b4] sm:$0xff]
        %v1231 = vld [vmem:[%s238 + $0x15bc] sm:$0xf]
        %v1232 = vld [vmem:[%s238 + $0x15c0] sm:$0xff]
        %v1233 = vld [vmem:[%s238 + $0x15c8] sm:$0xf]
        %v1234 = vld [vmem:[%s238 + $0x15cc] sm:$0xff]
        %v1235 = vld [vmem:[%s238 + $0x15d4] sm:$0xf]
        %v1236 = vld [vmem:[%s238 + $0x15d8] sm:$0xff]
        %v1237 = vld [vmem:[%s238 + $0x15e0] sm:$0xf]
        %v1238 = vld [vmem:[%s238 + $0x15e4] sm:$0xff]
        %v1239 = vld [vmem:[%s238 + $0x15ec] sm:$0xf]
        %v1240 = vld [vmem:[%s238 + $0x15f0] sm:$0xff]
        %v1241 = vld [vmem:[%s238 + $0x15f8] sm:$0xf]
        %v1242 = vld [vmem:[%s238 + $0x15fc] sm:$0xff]
        %v1243 = vld [vmem:[%s238 + $0x1604] sm:$0xf]
        %v1244 = vld [vmem:[%s238 + $0x1608] sm:$0xff]
        %v1245 = vld [vmem:[%s238 + $0x1610] sm:$0xf]
        %v1246 = vld [vmem:[%s238 + $0x1614] sm:$0xff]
        %v1247 = vld [vmem:[%s238 + $0x161c] sm:$0xf]
        %v1248 = vld [vmem:[%s238 + $0x1620] sm:$0xff]
        %v1249 = vld [vmem:[%s238 + $0x1628] sm:$0xf]
        %v1250 = vld [vmem:[%s238 + $0x162c] sm:$0xff]
        %v1251 = vld [vmem:[%s238 + $0x1634] sm:$0xf]
        %v1252 = vld [vmem:[%s238 + $0x1638] sm:$0xff]
        %v1253 = vld [vmem:[%s238 + $0x1640] sm:$0xf]
        %v1254 = vld [vmem:[%s238 + $0x1644] sm:$0xff]
        %v1255 = vld [vmem:[%s238 + $0x164c] sm:$0xf]
        %v1256 = vld [vmem:[%s238 + $0x1650] sm:$0xff]
        %v1257 = vld [vmem:[%s238 + $0x1658] sm:$0xf]
        %v1258 = vld [vmem:[%s238 + $0x165c] sm:$0xff]
        %v1259 = vld [vmem:[%s238 + $0x1664] sm:$0xf]
        %v1260 = vld [vmem:[%s238 + $0x1668] sm:$0xff]
        %v1261 = vld [vmem:[%s238 + $0x1670] sm:$0xf]
        %v1262 = vld [vmem:[%s238 + $0x1674] sm:$0xff]
        %v1263 = vld [vmem:[%s238 + $0x167c] sm:$0xf]
        %v1264 = vld [vmem:[%s238 + $0x1680] sm:$0xff]
        %v1265 = vld [vmem:[%s238 + $0x1688] sm:$0xf]
        %v1266 = vld [vmem:[%s238 + $0x168c] sm:$0xff]
        %v1267 = vld [vmem:[%s238 + $0x1694] sm:$0xf]
        %v1268 = vld [vmem:[%s238 + $0x1698] sm:$0xff]
        %v1269 = vld [vmem:[%s238 + $0x16a0] sm:$0xf]
        %v1270 = vld [vmem:[%s238 + $0x16a4] sm:$0xff]
        %v1271 = vld [vmem:[%s238 + $0x16ac] sm:$0xf]
        %v1272 = vld [vmem:[%s238 + $0x16b0] sm:$0xff]
        %v1273 = vld [vmem:[%s238 + $0x16b8] sm:$0xf]
        %v1274 = vld [vmem:[%s238 + $0x16bc] sm:$0xff]
        %v1275 = vld [vmem:[%s238 + $0x16c4] sm:$0xf]
        %v1276 = vld [vmem:[%s238 + $0x16c8] sm:$0xff]
        %v1277 = vld [vmem:[%s238 + $0x16d0] sm:$0xf]
        %v1278 = vld [vmem:[%s238 + $0x16d4] sm:$0xff]
        %v1279 = vld [vmem:[%s238 + $0x16dc] sm:$0xf]
        %v1280 = vld [vmem:[%s238 + $0x16e0] sm:$0xff]
        %v1281 = vld [vmem:[%s238 + $0x16e8] sm:$0xf]
        %v1282 = vld [vmem:[%s238 + $0x16ec] sm:$0xff]
        %v1283 = vld [vmem:[%s238 + $0x16f4] sm:$0xf]
        %v1284 = vld [vmem:[%s238 + $0x16f8] sm:$0xff]
        %v1285 = vld [vmem:[%s238 + $0x1700] sm:$0xf]
        %v1286 = vld [vmem:[%s238 + $0x1704] sm:$0xff]
        %v1287 = vld [vmem:[%s238 + $0x170c] sm:$0xf]
        %v1288 = vld [vmem:[%s238 + $0x1710] sm:$0xff]
        %v1289 = vld [vmem:[%s238 + $0x1718] sm:$0xf]
        %v1290 = vld [vmem:[%s238 + $0x171c] sm:$0xff]
        %v1291 = vld [vmem:[%s238 + $0x1724] sm:$0xf]
        %v1292 = vld [vmem:[%s238 + $0x1728] sm:$0xff]
        %v1293 = vld [vmem:[%s238 + $0x1730] sm:$0xf]
        %v1294 = vld [vmem:[%s238 + $0x1734] sm:$0xff]
        %v1295 = vld [vmem:[%s238 + $0x173c] sm:$0xf]
        %v1296 = vld [vmem:[%s238 + $0x1740] sm:$0xff]
        %v1297 = vld [vmem:[%s238 + $0x1748] sm:$0xf]
        %v1298 = vld [vmem:[%s238 + $0x174c] sm:$0xff]
        %v1299 = vld [vmem:[%s238 + $0x1754] sm:$0xf]
        %v1300 = vld [vmem:[%s238 + $0x1758] sm:$0xff]
        %v1301 = vld [vmem:[%s238 + $0x1760] sm:$0xf]
        %v1302 = vld [vmem:[%s238 + $0x1764] sm:$0xff]
        %v1303 = vld [vmem:[%s238 + $0x176c] sm:$0xf]
        %v1304 = vld [vmem:[%s238 + $0x1770] sm:$0xff]
        %v1305 = vld [vmem:[%s238 + $0x1778] sm:$0xf]
        %v1306 = vld [vmem:[%s238 + $0x177c] sm:$0xff]
        %v1307 = vld [vmem:[%s238 + $0x1784] sm:$0xf]
        %v1308 = vld [vmem:[%s238 + $0x1788] sm:$0xff]
        %v1309 = vld [vmem:[%s238 + $0x1790] sm:$0xf]
        %v1310 = vld [vmem:[%s238 + $0x1794] sm:$0xff]
        %v1311 = vld [vmem:[%s238 + $0x179c] sm:$0xf]
        %v1312 = vld [vmem:[%s238 + $0x17a0] sm:$0xff]
        %v1313 = vld [vmem:[%s238 + $0x17a8] sm:$0xf]
        %v1314 = vld [vmem:[%s238 + $0x17ac] sm:$0xff]
        %v1315 = vld [vmem:[%s238 + $0x17b4] sm:$0xf]
        %v1316 = vld [vmem:[%s238 + $0x17b8] sm:$0xff]
        %v1317 = vld [vmem:[%s238 + $0x17c0] sm:$0xf]
        %v1318 = vld [vmem:[%s238 + $0x17c4] sm:$0xff]
        %v1319 = vld [vmem:[%s238 + $0x17cc] sm:$0xf]
        %v1320 = vld [vmem:[%s238 + $0x17d0] sm:$0xff]
        %v1321 = vld [vmem:[%s238 + $0x17d8] sm:$0xf]
        %v1322 = vld [vmem:[%s238 + $0x17dc] sm:$0xff]
        %v1323 = vld [vmem:[%s238 + $0x17e4] sm:$0xf]
        %v1324 = vld [vmem:[%s238 + $0x17e8] sm:$0xff]
        %v1325 = vld [vmem:[%s238 + $0x17f0] sm:$0xf]
        %v1326 = vld [vmem:[%s238 + $0x17f4] sm:$0xff]
        %v1327 = vld [vmem:[%s238 + $0x17fc] sm:$0xf]
        %v1328 = vunpack.c.l.bf16 %v304
        %v1329 = vunpack.c.h.bf16 %v304
        %v1330 = vunpack.c.l.bf16 %v305
        %v1331 = vunpack.c.l.bf16 %v306
        %v1332 = vunpack.c.h.bf16 %v306
        %v1333 = vunpack.c.l.bf16 %v307
        %v1334 = vunpack.c.l.bf16 %v308
        %v1335 = vunpack.c.h.bf16 %v308
        %v1336 = vunpack.c.l.bf16 %v309
        %v1337 = vunpack.c.l.bf16 %v310
        %v1338 = vunpack.c.h.bf16 %v310
        %v1339 = vunpack.c.l.bf16 %v311
        %v1340 = vunpack.c.l.bf16 %v312
        %v1341 = vunpack.c.h.bf16 %v312
        %v1342 = vunpack.c.l.bf16 %v313
        %v1343 = vunpack.c.l.bf16 %v314
        %v1344 = vunpack.c.h.bf16 %v314
        %v1345 = vunpack.c.l.bf16 %v315
        %v1346 = vunpack.c.l.bf16 %v316
        %v1347 = vunpack.c.h.bf16 %v316
        %v1348 = vunpack.c.l.bf16 %v317
        %v1349 = vunpack.c.l.bf16 %v318
        %v1350 = vunpack.c.h.bf16 %v318
        %v1351 = vunpack.c.l.bf16 %v319
        %v1352 = vunpack.c.l.bf16 %v320
        %v1353 = vunpack.c.h.bf16 %v320
        %v1354 = vunpack.c.l.bf16 %v321
        %v1355 = vunpack.c.l.bf16 %v322
        %v1356 = vunpack.c.h.bf16 %v322
        %v1357 = vunpack.c.l.bf16 %v323
        %v1358 = vunpack.c.l.bf16 %v324
        %v1359 = vunpack.c.h.bf16 %v324
        %v1360 = vunpack.c.l.bf16 %v325
        %v1361 = vunpack.c.l.bf16 %v326
        %v1362 = vunpack.c.h.bf16 %v326
        %v1363 = vunpack.c.l.bf16 %v327
        %v1364 = vunpack.c.l.bf16 %v328
        %v1365 = vunpack.c.h.bf16 %v328
        %v1366 = vunpack.c.l.bf16 %v329
        %v1367 = vunpack.c.l.bf16 %v330
        %v1368 = vunpack.c.h.bf16 %v330
        %v1369 = vunpack.c.l.bf16 %v331
        %v1370 = vunpack.c.l.bf16 %v332
        %v1371 = vunpack.c.h.bf16 %v332
        %v1372 = vunpack.c.l.bf16 %v333
        %v1373 = vunpack.c.l.bf16 %v334
        %v1374 = vunpack.c.h.bf16 %v334
        %v1375 = vunpack.c.l.bf16 %v335
        %v1376 = vunpack.c.l.bf16 %v336
        %v1377 = vunpack.c.h.bf16 %v336
        %v1378 = vunpack.c.l.bf16 %v337
        %v1379 = vunpack.c.l.bf16 %v338
        %v1380 = vunpack.c.h.bf16 %v338
        %v1381 = vunpack.c.l.bf16 %v339
        %v1382 = vunpack.c.l.bf16 %v340
        %v1383 = vunpack.c.h.bf16 %v340
        %v1384 = vunpack.c.l.bf16 %v341
        %v1385 = vunpack.c.l.bf16 %v342
        %v1386 = vunpack.c.h.bf16 %v342
        %v1387 = vunpack.c.l.bf16 %v343
        %v1388 = vunpack.c.l.bf16 %v344
        %v1389 = vunpack.c.h.bf16 %v344
        %v1390 = vunpack.c.l.bf16 %v345
        %v1391 = vunpack.c.l.bf16 %v346
        %v1392 = vunpack.c.h.bf16 %v346
        %v1393 = vunpack.c.l.bf16 %v347
        %v1394 = vunpack.c.l.bf16 %v348
        %v1395 = vunpack.c.h.bf16 %v348
        %v1396 = vunpack.c.l.bf16 %v349
        %v1397 = vunpack.c.l.bf16 %v350
        %v1398 = vunpack.c.h.bf16 %v350
        %v1399 = vunpack.c.l.bf16 %v351
        %v1400 = vunpack.c.l.bf16 %v352
        %v1401 = vunpack.c.h.bf16 %v352
        %v1402 = vunpack.c.l.bf16 %v353
        %v1403 = vunpack.c.l.bf16 %v354
        %v1404 = vunpack.c.h.bf16 %v354
        %v1405 = vunpack.c.l.bf16 %v355
        %v1406 = vunpack.c.l.bf16 %v356
        %v1407 = vunpack.c.h.bf16 %v356
        %v1408 = vunpack.c.l.bf16 %v357
        %v1409 = vunpack.c.l.bf16 %v358
        %v1410 = vunpack.c.h.bf16 %v358
        %v1411 = vunpack.c.l.bf16 %v359
        %v1412 = vunpack.c.l.bf16 %v360
        %v1413 = vunpack.c.h.bf16 %v360
        %v1414 = vunpack.c.l.bf16 %v361
        %v1415 = vunpack.c.l.bf16 %v362
        %v1416 = vunpack.c.h.bf16 %v362
        %v1417 = vunpack.c.l.bf16 %v363
        %v1418 = vunpack.c.l.bf16 %v364
        %v1419 = vunpack.c.h.bf16 %v364
        %v1420 = vunpack.c.l.bf16 %v365
        %v1421 = vunpack.c.l.bf16 %v366
        %v1422 = vunpack.c.h.bf16 %v366
        %v1423 = vunpack.c.l.bf16 %v367
        %v1424 = vunpack.c.l.bf16 %v368
        %v1425 = vunpack.c.h.bf16 %v368
        %v1426 = vunpack.c.l.bf16 %v369
        %v1427 = vunpack.c.l.bf16 %v370
        %v1428 = vunpack.c.h.bf16 %v370
        %v1429 = vunpack.c.l.bf16 %v371
        %v1430 = vunpack.c.l.bf16 %v372
        %v1431 = vunpack.c.h.bf16 %v372
        %v1432 = vunpack.c.l.bf16 %v373
        %v1433 = vunpack.c.l.bf16 %v374
        %v1434 = vunpack.c.h.bf16 %v374
        %v1435 = vunpack.c.l.bf16 %v375
        %v1436 = vunpack.c.l.bf16 %v376
        %v1437 = vunpack.c.h.bf16 %v376
        %v1438 = vunpack.c.l.bf16 %v377
        %v1439 = vunpack.c.l.bf16 %v378
        %v1440 = vunpack.c.h.bf16 %v378
        %v1441 = vunpack.c.l.bf16 %v379
        %v1442 = vunpack.c.l.bf16 %v380
        %v1443 = vunpack.c.h.bf16 %v380
        %v1444 = vunpack.c.l.bf16 %v381
        %v1445 = vunpack.c.l.bf16 %v382
        %v1446 = vunpack.c.h.bf16 %v382
        %v1447 = vunpack.c.l.bf16 %v383
        %v1448 = vunpack.c.l.bf16 %v384
        %v1449 = vunpack.c.h.bf16 %v384
        %v1450 = vunpack.c.l.bf16 %v385
        %v1451 = vunpack.c.l.bf16 %v386
        %v1452 = vunpack.c.h.bf16 %v386
        %v1453 = vunpack.c.l.bf16 %v387
        %v1454 = vunpack.c.l.bf16 %v388
        %v1455 = vunpack.c.h.bf16 %v388
        %v1456 = vunpack.c.l.bf16 %v389
        %v1457 = vunpack.c.l.bf16 %v390
        %v1458 = vunpack.c.h.bf16 %v390
        %v1459 = vunpack.c.l.bf16 %v391
        %v1460 = vunpack.c.l.bf16 %v392
        %v1461 = vunpack.c.h.bf16 %v392
        %v1462 = vunpack.c.l.bf16 %v393
        %v1463 = vunpack.c.l.bf16 %v394
        %v1464 = vunpack.c.h.bf16 %v394
        %v1465 = vunpack.c.l.bf16 %v395
        %v1466 = vunpack.c.l.bf16 %v396
        %v1467 = vunpack.c.h.bf16 %v396
        %v1468 = vunpack.c.l.bf16 %v397
        %v1469 = vunpack.c.l.bf16 %v398
        %v1470 = vunpack.c.h.bf16 %v398
        %v1471 = vunpack.c.l.bf16 %v399
        %v1472 = vunpack.c.l.bf16 %v400
        %v1473 = vunpack.c.h.bf16 %v400
        %v1474 = vunpack.c.l.bf16 %v401
        %v1475 = vunpack.c.l.bf16 %v402
        %v1476 = vunpack.c.h.bf16 %v402
        %v1477 = vunpack.c.l.bf16 %v403
        %v1478 = vunpack.c.l.bf16 %v404
        %v1479 = vunpack.c.h.bf16 %v404
        %v1480 = vunpack.c.l.bf16 %v405
        %v1481 = vunpack.c.l.bf16 %v406
        %v1482 = vunpack.c.h.bf16 %v406
        %v1483 = vunpack.c.l.bf16 %v407
        %v1484 = vunpack.c.l.bf16 %v408
        %v1485 = vunpack.c.h.bf16 %v408
        %v1486 = vunpack.c.l.bf16 %v409
        %v1487 = vunpack.c.l.bf16 %v410
        %v1488 = vunpack.c.h.bf16 %v410
        %v1489 = vunpack.c.l.bf16 %v411
        %v1490 = vunpack.c.l.bf16 %v412
        %v1491 = vunpack.c.h.bf16 %v412
        %v1492 = vunpack.c.l.bf16 %v413
        %v1493 = vunpack.c.l.bf16 %v414
        %v1494 = vunpack.c.h.bf16 %v414
        %v1495 = vunpack.c.l.bf16 %v415
        %v1496 = vunpack.c.l.bf16 %v416
        %v1497 = vunpack.c.h.bf16 %v416
        %v1498 = vunpack.c.l.bf16 %v417
        %v1499 = vunpack.c.l.bf16 %v418
        %v1500 = vunpack.c.h.bf16 %v418
        %v1501 = vunpack.c.l.bf16 %v419
        %v1502 = vunpack.c.l.bf16 %v420
        %v1503 = vunpack.c.h.bf16 %v420
        %v1504 = vunpack.c.l.bf16 %v421
        %v1505 = vunpack.c.l.bf16 %v422
        %v1506 = vunpack.c.h.bf16 %v422
        %v1507 = vunpack.c.l.bf16 %v423
        %v1508 = vunpack.c.l.bf16 %v424
        %v1509 = vunpack.c.h.bf16 %v424
        %v1510 = vunpack.c.l.bf16 %v425
        %v1511 = vunpack.c.l.bf16 %v426
        %v1512 = vunpack.c.h.bf16 %v426
        %v1513 = vunpack.c.l.bf16 %v427
        %v1514 = vunpack.c.l.bf16 %v428
        %v1515 = vunpack.c.h.bf16 %v428
        %v1516 = vunpack.c.l.bf16 %v429
        %v1517 = vunpack.c.l.bf16 %v430
        %v1518 = vunpack.c.h.bf16 %v430
        %v1519 = vunpack.c.l.bf16 %v431
        %v1520 = vunpack.c.l.bf16 %v432
        %v1521 = vunpack.c.h.bf16 %v432
        %v1522 = vunpack.c.l.bf16 %v433
        %v1523 = vunpack.c.l.bf16 %v434
        %v1524 = vunpack.c.h.bf16 %v434
        %v1525 = vunpack.c.l.bf16 %v435
        %v1526 = vunpack.c.l.bf16 %v436
        %v1527 = vunpack.c.h.bf16 %v436
        %v1528 = vunpack.c.l.bf16 %v437
        %v1529 = vunpack.c.l.bf16 %v438
        %v1530 = vunpack.c.h.bf16 %v438
        %v1531 = vunpack.c.l.bf16 %v439
        %v1532 = vunpack.c.l.bf16 %v440
        %v1533 = vunpack.c.h.bf16 %v440
        %v1534 = vunpack.c.l.bf16 %v441
        %v1535 = vunpack.c.l.bf16 %v442
        %v1536 = vunpack.c.h.bf16 %v442
        %v1537 = vunpack.c.l.bf16 %v443
        %v1538 = vunpack.c.l.bf16 %v444
        %v1539 = vunpack.c.h.bf16 %v444
        %v1540 = vunpack.c.l.bf16 %v445
        %v1541 = vunpack.c.l.bf16 %v446
        %v1542 = vunpack.c.h.bf16 %v446
        %v1543 = vunpack.c.l.bf16 %v447
        %v1544 = vunpack.c.l.bf16 %v448
        %v1545 = vunpack.c.h.bf16 %v448
        %v1546 = vunpack.c.l.bf16 %v449
        %v1547 = vunpack.c.l.bf16 %v450
        %v1548 = vunpack.c.h.bf16 %v450
        %v1549 = vunpack.c.l.bf16 %v451
        %v1550 = vunpack.c.l.bf16 %v452
        %v1551 = vunpack.c.h.bf16 %v452
        %v1552 = vunpack.c.l.bf16 %v453
        %v1553 = vunpack.c.l.bf16 %v454
        %v1554 = vunpack.c.h.bf16 %v454
        %v1555 = vunpack.c.l.bf16 %v455
        %v1556 = vunpack.c.l.bf16 %v456
        %v1557 = vunpack.c.h.bf16 %v456
        %v1558 = vunpack.c.l.bf16 %v457
        %v1559 = vunpack.c.l.bf16 %v458
        %v1560 = vunpack.c.h.bf16 %v458
        %v1561 = vunpack.c.l.bf16 %v459
        %v1562 = vunpack.c.l.bf16 %v460
        %v1563 = vunpack.c.h.bf16 %v460
        %v1564 = vunpack.c.l.bf16 %v461
        %v1565 = vunpack.c.l.bf16 %v462
        %v1566 = vunpack.c.h.bf16 %v462
        %v1567 = vunpack.c.l.bf16 %v463
        %v1568 = vunpack.c.l.bf16 %v464
        %v1569 = vunpack.c.h.bf16 %v464
        %v1570 = vunpack.c.l.bf16 %v465
        %v1571 = vunpack.c.l.bf16 %v466
        %v1572 = vunpack.c.h.bf16 %v466
        %v1573 = vunpack.c.l.bf16 %v467
        %v1574 = vunpack.c.l.bf16 %v468
        %v1575 = vunpack.c.h.bf16 %v468
        %v1576 = vunpack.c.l.bf16 %v469
        %v1577 = vunpack.c.l.bf16 %v470
        %v1578 = vunpack.c.h.bf16 %v470
        %v1579 = vunpack.c.l.bf16 %v471
        %v1580 = vunpack.c.l.bf16 %v472
        %v1581 = vunpack.c.h.bf16 %v472
        %v1582 = vunpack.c.l.bf16 %v473
        %v1583 = vunpack.c.l.bf16 %v474
        %v1584 = vunpack.c.h.bf16 %v474
        %v1585 = vunpack.c.l.bf16 %v475
        %v1586 = vunpack.c.l.bf16 %v476
        %v1587 = vunpack.c.h.bf16 %v476
        %v1588 = vunpack.c.l.bf16 %v477
        %v1589 = vunpack.c.l.bf16 %v478
        %v1590 = vunpack.c.h.bf16 %v478
        %v1591 = vunpack.c.l.bf16 %v479
        %v1592 = vunpack.c.l.bf16 %v480
        %v1593 = vunpack.c.h.bf16 %v480
        %v1594 = vunpack.c.l.bf16 %v481
        %v1595 = vunpack.c.l.bf16 %v482
        %v1596 = vunpack.c.h.bf16 %v482
        %v1597 = vunpack.c.l.bf16 %v483
        %v1598 = vunpack.c.l.bf16 %v484
        %v1599 = vunpack.c.h.bf16 %v484
        %v1600 = vunpack.c.l.bf16 %v485
        %v1601 = vunpack.c.l.bf16 %v486
        %v1602 = vunpack.c.h.bf16 %v486
        %v1603 = vunpack.c.l.bf16 %v487
        %v1604 = vunpack.c.l.bf16 %v488
        %v1605 = vunpack.c.h.bf16 %v488
        %v1606 = vunpack.c.l.bf16 %v489
        %v1607 = vunpack.c.l.bf16 %v490
        %v1608 = vunpack.c.h.bf16 %v490
        %v1609 = vunpack.c.l.bf16 %v491
        %v1610 = vunpack.c.l.bf16 %v492
        %v1611 = vunpack.c.h.bf16 %v492
        %v1612 = vunpack.c.l.bf16 %v493
        %v1613 = vunpack.c.l.bf16 %v494
        %v1614 = vunpack.c.h.bf16 %v494
        %v1615 = vunpack.c.l.bf16 %v495
        %v1616 = vunpack.c.l.bf16 %v496
        %v1617 = vunpack.c.h.bf16 %v496
        %v1618 = vunpack.c.l.bf16 %v497
        %v1619 = vunpack.c.l.bf16 %v498
        %v1620 = vunpack.c.h.bf16 %v498
        %v1621 = vunpack.c.l.bf16 %v499
        %v1622 = vunpack.c.l.bf16 %v500
        %v1623 = vunpack.c.h.bf16 %v500
        %v1624 = vunpack.c.l.bf16 %v501
        %v1625 = vunpack.c.l.bf16 %v502
        %v1626 = vunpack.c.h.bf16 %v502
        %v1627 = vunpack.c.l.bf16 %v503
        %v1628 = vunpack.c.l.bf16 %v504
        %v1629 = vunpack.c.h.bf16 %v504
        %v1630 = vunpack.c.l.bf16 %v505
        %v1631 = vunpack.c.l.bf16 %v506
        %v1632 = vunpack.c.h.bf16 %v506
        %v1633 = vunpack.c.l.bf16 %v507
        %v1634 = vunpack.c.l.bf16 %v508
        %v1635 = vunpack.c.h.bf16 %v508
        %v1636 = vunpack.c.l.bf16 %v509
        %v1637 = vunpack.c.l.bf16 %v510
        %v1638 = vunpack.c.h.bf16 %v510
        %v1639 = vunpack.c.l.bf16 %v511
        %v1640 = vunpack.c.l.bf16 %v512
        %v1641 = vunpack.c.h.bf16 %v512
        %v1642 = vunpack.c.l.bf16 %v513
        %v1643 = vunpack.c.l.bf16 %v514
        %v1644 = vunpack.c.h.bf16 %v514
        %v1645 = vunpack.c.l.bf16 %v515
        %v1646 = vunpack.c.l.bf16 %v516
        %v1647 = vunpack.c.h.bf16 %v516
        %v1648 = vunpack.c.l.bf16 %v517
        %v1649 = vunpack.c.l.bf16 %v518
        %v1650 = vunpack.c.h.bf16 %v518
        %v1651 = vunpack.c.l.bf16 %v519
        %v1652 = vunpack.c.l.bf16 %v520
        %v1653 = vunpack.c.h.bf16 %v520
        %v1654 = vunpack.c.l.bf16 %v521
        %v1655 = vunpack.c.l.bf16 %v522
        %v1656 = vunpack.c.h.bf16 %v522
        %v1657 = vunpack.c.l.bf16 %v523
        %v1658 = vunpack.c.l.bf16 %v524
        %v1659 = vunpack.c.h.bf16 %v524
        %v1660 = vunpack.c.l.bf16 %v525
        %v1661 = vunpack.c.l.bf16 %v526
        %v1662 = vunpack.c.h.bf16 %v526
        %v1663 = vunpack.c.l.bf16 %v527
        %v1664 = vunpack.c.l.bf16 %v528
        %v1665 = vunpack.c.h.bf16 %v528
        %v1666 = vunpack.c.l.bf16 %v529
        %v1667 = vunpack.c.l.bf16 %v530
        %v1668 = vunpack.c.h.bf16 %v530
        %v1669 = vunpack.c.l.bf16 %v531
        %v1670 = vunpack.c.l.bf16 %v532
        %v1671 = vunpack.c.h.bf16 %v532
        %v1672 = vunpack.c.l.bf16 %v533
        %v1673 = vunpack.c.l.bf16 %v534
        %v1674 = vunpack.c.h.bf16 %v534
        %v1675 = vunpack.c.l.bf16 %v535
        %v1676 = vunpack.c.l.bf16 %v536
        %v1677 = vunpack.c.h.bf16 %v536
        %v1678 = vunpack.c.l.bf16 %v537
        %v1679 = vunpack.c.l.bf16 %v538
        %v1680 = vunpack.c.h.bf16 %v538
        %v1681 = vunpack.c.l.bf16 %v539
        %v1682 = vunpack.c.l.bf16 %v540
        %v1683 = vunpack.c.h.bf16 %v540
        %v1684 = vunpack.c.l.bf16 %v541
        %v1685 = vunpack.c.l.bf16 %v542
        %v1686 = vunpack.c.h.bf16 %v542
        %v1687 = vunpack.c.l.bf16 %v543
        %v1688 = vunpack.c.l.bf16 %v544
        %v1689 = vunpack.c.h.bf16 %v544
        %v1690 = vunpack.c.l.bf16 %v545
        %v1691 = vunpack.c.l.bf16 %v546
        %v1692 = vunpack.c.h.bf16 %v546
        %v1693 = vunpack.c.l.bf16 %v547
        %v1694 = vunpack.c.l.bf16 %v548
        %v1695 = vunpack.c.h.bf16 %v548
        %v1696 = vunpack.c.l.bf16 %v549
        %v1697 = vunpack.c.l.bf16 %v550
        %v1698 = vunpack.c.h.bf16 %v550
        %v1699 = vunpack.c.l.bf16 %v551
        %v1700 = vunpack.c.l.bf16 %v552
        %v1701 = vunpack.c.h.bf16 %v552
        %v1702 = vunpack.c.l.bf16 %v553
        %v1703 = vunpack.c.l.bf16 %v554
        %v1704 = vunpack.c.h.bf16 %v554
        %v1705 = vunpack.c.l.bf16 %v555
        %v1706 = vunpack.c.l.bf16 %v556
        %v1707 = vunpack.c.h.bf16 %v556
        %v1708 = vunpack.c.l.bf16 %v557
        %v1709 = vunpack.c.l.bf16 %v558
        %v1710 = vunpack.c.h.bf16 %v558
        %v1711 = vunpack.c.l.bf16 %v559
        %v1712 = vunpack.c.l.bf16 %v560
        %v1713 = vunpack.c.h.bf16 %v560
        %v1714 = vunpack.c.l.bf16 %v561
        %v1715 = vunpack.c.l.bf16 %v562
        %v1716 = vunpack.c.h.bf16 %v562
        %v1717 = vunpack.c.l.bf16 %v563
        %v1718 = vunpack.c.l.bf16 %v564
        %v1719 = vunpack.c.h.bf16 %v564
        %v1720 = vunpack.c.l.bf16 %v565
        %v1721 = vunpack.c.l.bf16 %v566
        %v1722 = vunpack.c.h.bf16 %v566
        %v1723 = vunpack.c.l.bf16 %v567
        %v1724 = vunpack.c.l.bf16 %v568
        %v1725 = vunpack.c.h.bf16 %v568
        %v1726 = vunpack.c.l.bf16 %v569
        %v1727 = vunpack.c.l.bf16 %v570
        %v1728 = vunpack.c.h.bf16 %v570
        %v1729 = vunpack.c.l.bf16 %v571
        %v1730 = vunpack.c.l.bf16 %v572
        %v1731 = vunpack.c.h.bf16 %v572
        %v1732 = vunpack.c.l.bf16 %v573
        %v1733 = vunpack.c.l.bf16 %v574
        %v1734 = vunpack.c.h.bf16 %v574
        %v1735 = vunpack.c.l.bf16 %v575
        %v1736 = vunpack.c.l.bf16 %v576
        %v1737 = vunpack.c.h.bf16 %v576
        %v1738 = vunpack.c.l.bf16 %v577
        %v1739 = vunpack.c.l.bf16 %v578
        %v1740 = vunpack.c.h.bf16 %v578
        %v1741 = vunpack.c.l.bf16 %v579
        %v1742 = vunpack.c.l.bf16 %v580
        %v1743 = vunpack.c.h.bf16 %v580
        %v1744 = vunpack.c.l.bf16 %v581
        %v1745 = vunpack.c.l.bf16 %v582
        %v1746 = vunpack.c.h.bf16 %v582
        %v1747 = vunpack.c.l.bf16 %v583
        %v1748 = vunpack.c.l.bf16 %v584
        %v1749 = vunpack.c.h.bf16 %v584
        %v1750 = vunpack.c.l.bf16 %v585
        %v1751 = vunpack.c.l.bf16 %v586
        %v1752 = vunpack.c.h.bf16 %v586
        %v1753 = vunpack.c.l.bf16 %v587
        %v1754 = vunpack.c.l.bf16 %v588
        %v1755 = vunpack.c.h.bf16 %v588
        %v1756 = vunpack.c.l.bf16 %v589
        %v1757 = vunpack.c.l.bf16 %v590
        %v1758 = vunpack.c.h.bf16 %v590
        %v1759 = vunpack.c.l.bf16 %v591
        %v1760 = vunpack.c.l.bf16 %v592
        %v1761 = vunpack.c.h.bf16 %v592
        %v1762 = vunpack.c.l.bf16 %v593
        %v1763 = vunpack.c.l.bf16 %v594
        %v1764 = vunpack.c.h.bf16 %v594
        %v1765 = vunpack.c.l.bf16 %v595
        %v1766 = vunpack.c.l.bf16 %v596
        %v1767 = vunpack.c.h.bf16 %v596
        %v1768 = vunpack.c.l.bf16 %v597
        %v1769 = vunpack.c.l.bf16 %v598
        %v1770 = vunpack.c.h.bf16 %v598
        %v1771 = vunpack.c.l.bf16 %v599
        %v1772 = vunpack.c.l.bf16 %v600
        %v1773 = vunpack.c.h.bf16 %v600
        %v1774 = vunpack.c.l.bf16 %v601
        %v1775 = vunpack.c.l.bf16 %v602
        %v1776 = vunpack.c.h.bf16 %v602
        %v1777 = vunpack.c.l.bf16 %v603
        %v1778 = vunpack.c.l.bf16 %v604
        %v1779 = vunpack.c.h.bf16 %v604
        %v1780 = vunpack.c.l.bf16 %v605
        %v1781 = vunpack.c.l.bf16 %v606
        %v1782 = vunpack.c.h.bf16 %v606
        %v1783 = vunpack.c.l.bf16 %v607
        %v1784 = vunpack.c.l.bf16 %v608
        %v1785 = vunpack.c.h.bf16 %v608
        %v1786 = vunpack.c.l.bf16 %v609
        %v1787 = vunpack.c.l.bf16 %v610
        %v1788 = vunpack.c.h.bf16 %v610
        %v1789 = vunpack.c.l.bf16 %v611
        %v1790 = vunpack.c.l.bf16 %v612
        %v1791 = vunpack.c.h.bf16 %v612
        %v1792 = vunpack.c.l.bf16 %v613
        %v1793 = vunpack.c.l.bf16 %v614
        %v1794 = vunpack.c.h.bf16 %v614
        %v1795 = vunpack.c.l.bf16 %v615
        %v1796 = vunpack.c.l.bf16 %v616
        %v1797 = vunpack.c.h.bf16 %v616
        %v1798 = vunpack.c.l.bf16 %v617
        %v1799 = vunpack.c.l.bf16 %v618
        %v1800 = vunpack.c.h.bf16 %v618
        %v1801 = vunpack.c.l.bf16 %v619
        %v1802 = vunpack.c.l.bf16 %v620
        %v1803 = vunpack.c.h.bf16 %v620
        %v1804 = vunpack.c.l.bf16 %v621
        %v1805 = vunpack.c.l.bf16 %v622
        %v1806 = vunpack.c.h.bf16 %v622
        %v1807 = vunpack.c.l.bf16 %v623
        %v1808 = vunpack.c.l.bf16 %v624
        %v1809 = vunpack.c.h.bf16 %v624
        %v1810 = vunpack.c.l.bf16 %v625
        %v1811 = vunpack.c.l.bf16 %v626
        %v1812 = vunpack.c.h.bf16 %v626
        %v1813 = vunpack.c.l.bf16 %v627
        %v1814 = vunpack.c.l.bf16 %v628
        %v1815 = vunpack.c.h.bf16 %v628
        %v1816 = vunpack.c.l.bf16 %v629
        %v1817 = vunpack.c.l.bf16 %v630
        %v1818 = vunpack.c.h.bf16 %v630
        %v1819 = vunpack.c.l.bf16 %v631
        %v1820 = vunpack.c.l.bf16 %v632
        %v1821 = vunpack.c.h.bf16 %v632
        %v1822 = vunpack.c.l.bf16 %v633
        %v1823 = vunpack.c.l.bf16 %v634
        %v1824 = vunpack.c.h.bf16 %v634
        %v1825 = vunpack.c.l.bf16 %v635
        %v1826 = vunpack.c.l.bf16 %v636
        %v1827 = vunpack.c.h.bf16 %v636
        %v1828 = vunpack.c.l.bf16 %v637
        %v1829 = vunpack.c.l.bf16 %v638
        %v1830 = vunpack.c.h.bf16 %v638
        %v1831 = vunpack.c.l.bf16 %v639
        %v1832 = vunpack.c.l.bf16 %v640
        %v1833 = vunpack.c.h.bf16 %v640
        %v1834 = vunpack.c.l.bf16 %v641
        %v1835 = vunpack.c.l.bf16 %v642
        %v1836 = vunpack.c.h.bf16 %v642
        %v1837 = vunpack.c.l.bf16 %v643
        %v1838 = vunpack.c.l.bf16 %v644
        %v1839 = vunpack.c.h.bf16 %v644
        %v1840 = vunpack.c.l.bf16 %v645
        %v1841 = vunpack.c.l.bf16 %v646
        %v1842 = vunpack.c.h.bf16 %v646
        %v1843 = vunpack.c.l.bf16 %v647
        %v1844 = vunpack.c.l.bf16 %v648
        %v1845 = vunpack.c.h.bf16 %v648
        %v1846 = vunpack.c.l.bf16 %v649
        %v1847 = vunpack.c.l.bf16 %v650
        %v1848 = vunpack.c.h.bf16 %v650
        %v1849 = vunpack.c.l.bf16 %v651
        %v1850 = vunpack.c.l.bf16 %v652
        %v1851 = vunpack.c.h.bf16 %v652
        %v1852 = vunpack.c.l.bf16 %v653
        %v1853 = vunpack.c.l.bf16 %v654
        %v1854 = vunpack.c.h.bf16 %v654
        %v1855 = vunpack.c.l.bf16 %v655
        %v1856 = vunpack.c.l.bf16 %v656
        %v1857 = vunpack.c.h.bf16 %v656
        %v1858 = vunpack.c.l.bf16 %v657
        %v1859 = vunpack.c.l.bf16 %v658
        %v1860 = vunpack.c.h.bf16 %v658
        %v1861 = vunpack.c.l.bf16 %v659
        %v1862 = vunpack.c.l.bf16 %v660
        %v1863 = vunpack.c.h.bf16 %v660
        %v1864 = vunpack.c.l.bf16 %v661
        %v1865 = vunpack.c.l.bf16 %v662
        %v1866 = vunpack.c.h.bf16 %v662
        %v1867 = vunpack.c.l.bf16 %v663
        %v1868 = vunpack.c.l.bf16 %v664
        %v1869 = vunpack.c.h.bf16 %v664
        %v1870 = vunpack.c.l.bf16 %v665
        %v1871 = vunpack.c.l.bf16 %v666
        %v1872 = vunpack.c.h.bf16 %v666
        %v1873 = vunpack.c.l.bf16 %v667
        %v1874 = vunpack.c.l.bf16 %v668
        %v1875 = vunpack.c.h.bf16 %v668
        %v1876 = vunpack.c.l.bf16 %v669
        %v1877 = vunpack.c.l.bf16 %v670
        %v1878 = vunpack.c.h.bf16 %v670
        %v1879 = vunpack.c.l.bf16 %v671
        %v1880 = vunpack.c.l.bf16 %v672
        %v1881 = vunpack.c.h.bf16 %v672
        %v1882 = vunpack.c.l.bf16 %v673
        %v1883 = vunpack.c.l.bf16 %v674
        %v1884 = vunpack.c.h.bf16 %v674
        %v1885 = vunpack.c.l.bf16 %v675
        %v1886 = vunpack.c.l.bf16 %v676
        %v1887 = vunpack.c.h.bf16 %v676
        %v1888 = vunpack.c.l.bf16 %v677
        %v1889 = vunpack.c.l.bf16 %v678
        %v1890 = vunpack.c.h.bf16 %v678
        %v1891 = vunpack.c.l.bf16 %v679
        %v1892 = vunpack.c.l.bf16 %v680
        %v1893 = vunpack.c.h.bf16 %v680
        %v1894 = vunpack.c.l.bf16 %v681
        %v1895 = vunpack.c.l.bf16 %v682
        %v1896 = vunpack.c.h.bf16 %v682
        %v1897 = vunpack.c.l.bf16 %v683
        %v1898 = vunpack.c.l.bf16 %v684
        %v1899 = vunpack.c.h.bf16 %v684
        %v1900 = vunpack.c.l.bf16 %v685
        %v1901 = vunpack.c.l.bf16 %v686
        %v1902 = vunpack.c.h.bf16 %v686
        %v1903 = vunpack.c.l.bf16 %v687
        %v1904 = vunpack.c.l.bf16 %v688
        %v1905 = vunpack.c.h.bf16 %v688
        %v1906 = vunpack.c.l.bf16 %v689
        %v1907 = vunpack.c.l.bf16 %v690
        %v1908 = vunpack.c.h.bf16 %v690
        %v1909 = vunpack.c.l.bf16 %v691
        %v1910 = vunpack.c.l.bf16 %v692
        %v1911 = vunpack.c.h.bf16 %v692
        %v1912 = vunpack.c.l.bf16 %v693
        %v1913 = vunpack.c.l.bf16 %v694
        %v1914 = vunpack.c.h.bf16 %v694
        %v1915 = vunpack.c.l.bf16 %v695
        %v1916 = vunpack.c.l.bf16 %v696
        %v1917 = vunpack.c.h.bf16 %v696
        %v1918 = vunpack.c.l.bf16 %v697
        %v1919 = vunpack.c.l.bf16 %v698
        %v1920 = vunpack.c.h.bf16 %v698
        %v1921 = vunpack.c.l.bf16 %v699
        %v1922 = vunpack.c.l.bf16 %v700
        %v1923 = vunpack.c.h.bf16 %v700
        %v1924 = vunpack.c.l.bf16 %v701
        %v1925 = vunpack.c.l.bf16 %v702
        %v1926 = vunpack.c.h.bf16 %v702
        %v1927 = vunpack.c.l.bf16 %v703
        %v1928 = vunpack.c.l.bf16 %v704
        %v1929 = vunpack.c.h.bf16 %v704
        %v1930 = vunpack.c.l.bf16 %v705
        %v1931 = vunpack.c.l.bf16 %v706
        %v1932 = vunpack.c.h.bf16 %v706
        %v1933 = vunpack.c.l.bf16 %v707
        %v1934 = vunpack.c.l.bf16 %v708
        %v1935 = vunpack.c.h.bf16 %v708
        %v1936 = vunpack.c.l.bf16 %v709
        %v1937 = vunpack.c.l.bf16 %v710
        %v1938 = vunpack.c.h.bf16 %v710
        %v1939 = vunpack.c.l.bf16 %v711
        %v1940 = vunpack.c.l.bf16 %v712
        %v1941 = vunpack.c.h.bf16 %v712
        %v1942 = vunpack.c.l.bf16 %v713
        %v1943 = vunpack.c.l.bf16 %v714
        %v1944 = vunpack.c.h.bf16 %v714
        %v1945 = vunpack.c.l.bf16 %v715
        %v1946 = vunpack.c.l.bf16 %v716
        %v1947 = vunpack.c.h.bf16 %v716
        %v1948 = vunpack.c.l.bf16 %v717
        %v1949 = vunpack.c.l.bf16 %v718
        %v1950 = vunpack.c.h.bf16 %v718
        %v1951 = vunpack.c.l.bf16 %v719
        %v1952 = vunpack.c.l.bf16 %v720
        %v1953 = vunpack.c.h.bf16 %v720
        %v1954 = vunpack.c.l.bf16 %v721
        %v1955 = vunpack.c.l.bf16 %v722
        %v1956 = vunpack.c.h.bf16 %v722
        %v1957 = vunpack.c.l.bf16 %v723
        %v1958 = vunpack.c.l.bf16 %v724
        %v1959 = vunpack.c.h.bf16 %v724
        %v1960 = vunpack.c.l.bf16 %v725
        %v1961 = vunpack.c.l.bf16 %v726
        %v1962 = vunpack.c.h.bf16 %v726
        %v1963 = vunpack.c.l.bf16 %v727
        %v1964 = vunpack.c.l.bf16 %v728
        %v1965 = vunpack.c.h.bf16 %v728
        %v1966 = vunpack.c.l.bf16 %v729
        %v1967 = vunpack.c.l.bf16 %v730
        %v1968 = vunpack.c.h.bf16 %v730
        %v1969 = vunpack.c.l.bf16 %v731
        %v1970 = vunpack.c.l.bf16 %v732
        %v1971 = vunpack.c.h.bf16 %v732
        %v1972 = vunpack.c.l.bf16 %v733
        %v1973 = vunpack.c.l.bf16 %v734
        %v1974 = vunpack.c.h.bf16 %v734
        %v1975 = vunpack.c.l.bf16 %v735
        %v1976 = vunpack.c.l.bf16 %v736
        %v1977 = vunpack.c.h.bf16 %v736
        %v1978 = vunpack.c.l.bf16 %v737
        %v1979 = vunpack.c.l.bf16 %v738
        %v1980 = vunpack.c.h.bf16 %v738
        %v1981 = vunpack.c.l.bf16 %v739
        %v1982 = vunpack.c.l.bf16 %v740
        %v1983 = vunpack.c.h.bf16 %v740
        %v1984 = vunpack.c.l.bf16 %v741
        %v1985 = vunpack.c.l.bf16 %v742
        %v1986 = vunpack.c.h.bf16 %v742
        %v1987 = vunpack.c.l.bf16 %v743
        %v1988 = vunpack.c.l.bf16 %v744
        %v1989 = vunpack.c.h.bf16 %v744
        %v1990 = vunpack.c.l.bf16 %v745
        %v1991 = vunpack.c.l.bf16 %v746
        %v1992 = vunpack.c.h.bf16 %v746
        %v1993 = vunpack.c.l.bf16 %v747
        %v1994 = vunpack.c.l.bf16 %v748
        %v1995 = vunpack.c.h.bf16 %v748
        %v1996 = vunpack.c.l.bf16 %v749
        %v1997 = vunpack.c.l.bf16 %v750
        %v1998 = vunpack.c.h.bf16 %v750
        %v1999 = vunpack.c.l.bf16 %v751
        %v2000 = vunpack.c.l.bf16 %v752
        %v2001 = vunpack.c.h.bf16 %v752
        %v2002 = vunpack.c.l.bf16 %v753
        %v2003 = vunpack.c.l.bf16 %v754
        %v2004 = vunpack.c.h.bf16 %v754
        %v2005 = vunpack.c.l.bf16 %v755
        %v2006 = vunpack.c.l.bf16 %v756
        %v2007 = vunpack.c.h.bf16 %v756
        %v2008 = vunpack.c.l.bf16 %v757
        %v2009 = vunpack.c.l.bf16 %v758
        %v2010 = vunpack.c.h.bf16 %v758
        %v2011 = vunpack.c.l.bf16 %v759
        %v2012 = vunpack.c.l.bf16 %v760
        %v2013 = vunpack.c.h.bf16 %v760
        %v2014 = vunpack.c.l.bf16 %v761
        %v2015 = vunpack.c.l.bf16 %v762
        %v2016 = vunpack.c.h.bf16 %v762
        %v2017 = vunpack.c.l.bf16 %v763
        %v2018 = vunpack.c.l.bf16 %v764
        %v2019 = vunpack.c.h.bf16 %v764
        %v2020 = vunpack.c.l.bf16 %v765
        %v2021 = vunpack.c.l.bf16 %v766
        %v2022 = vunpack.c.h.bf16 %v766
        %v2023 = vunpack.c.l.bf16 %v767
        %v2024 = vunpack.c.l.bf16 %v768
        %v2025 = vunpack.c.h.bf16 %v768
        %v2026 = vunpack.c.l.bf16 %v769
        %v2027 = vunpack.c.l.bf16 %v770
        %v2028 = vunpack.c.h.bf16 %v770
        %v2029 = vunpack.c.l.bf16 %v771
        %v2030 = vunpack.c.l.bf16 %v772
        %v2031 = vunpack.c.h.bf16 %v772
        %v2032 = vunpack.c.l.bf16 %v773
        %v2033 = vunpack.c.l.bf16 %v774
        %v2034 = vunpack.c.h.bf16 %v774
        %v2035 = vunpack.c.l.bf16 %v775
        %v2036 = vunpack.c.l.bf16 %v776
        %v2037 = vunpack.c.h.bf16 %v776
        %v2038 = vunpack.c.l.bf16 %v777
        %v2039 = vunpack.c.l.bf16 %v778
        %v2040 = vunpack.c.h.bf16 %v778
        %v2041 = vunpack.c.l.bf16 %v779
        %v2042 = vunpack.c.l.bf16 %v780
        %v2043 = vunpack.c.h.bf16 %v780
        %v2044 = vunpack.c.l.bf16 %v781
        %v2045 = vunpack.c.l.bf16 %v782
        %v2046 = vunpack.c.h.bf16 %v782
        %v2047 = vunpack.c.l.bf16 %v783
        %v2048 = vunpack.c.l.bf16 %v784
        %v2049 = vunpack.c.h.bf16 %v784
        %v2050 = vunpack.c.l.bf16 %v785
        %v2051 = vunpack.c.l.bf16 %v786
        %v2052 = vunpack.c.h.bf16 %v786
        %v2053 = vunpack.c.l.bf16 %v787
        %v2054 = vunpack.c.l.bf16 %v788
        %v2055 = vunpack.c.h.bf16 %v788
        %v2056 = vunpack.c.l.bf16 %v789
        %v2057 = vunpack.c.l.bf16 %v790
        %v2058 = vunpack.c.h.bf16 %v790
        %v2059 = vunpack.c.l.bf16 %v791
        %v2060 = vunpack.c.l.bf16 %v792
        %v2061 = vunpack.c.h.bf16 %v792
        %v2062 = vunpack.c.l.bf16 %v793
        %v2063 = vunpack.c.l.bf16 %v794
        %v2064 = vunpack.c.h.bf16 %v794
        %v2065 = vunpack.c.l.bf16 %v795
        %v2066 = vunpack.c.l.bf16 %v796
        %v2067 = vunpack.c.h.bf16 %v796
        %v2068 = vunpack.c.l.bf16 %v797
        %v2069 = vunpack.c.l.bf16 %v798
        %v2070 = vunpack.c.h.bf16 %v798
        %v2071 = vunpack.c.l.bf16 %v799
        %v2072 = vunpack.c.l.bf16 %v800
        %v2073 = vunpack.c.h.bf16 %v800
        %v2074 = vunpack.c.l.bf16 %v801
        %v2075 = vunpack.c.l.bf16 %v802
        %v2076 = vunpack.c.h.bf16 %v802
        %v2077 = vunpack.c.l.bf16 %v803
        %v2078 = vunpack.c.l.bf16 %v804
        %v2079 = vunpack.c.h.bf16 %v804
        %v2080 = vunpack.c.l.bf16 %v805
        %v2081 = vunpack.c.l.bf16 %v806
        %v2082 = vunpack.c.h.bf16 %v806
        %v2083 = vunpack.c.l.bf16 %v807
        %v2084 = vunpack.c.l.bf16 %v808
        %v2085 = vunpack.c.h.bf16 %v808
        %v2086 = vunpack.c.l.bf16 %v809
        %v2087 = vunpack.c.l.bf16 %v810
        %v2088 = vunpack.c.h.bf16 %v810
        %v2089 = vunpack.c.l.bf16 %v811
        %v2090 = vunpack.c.l.bf16 %v812
        %v2091 = vunpack.c.h.bf16 %v812
        %v2092 = vunpack.c.l.bf16 %v813
        %v2093 = vunpack.c.l.bf16 %v814
        %v2094 = vunpack.c.h.bf16 %v814
        %v2095 = vunpack.c.l.bf16 %v815
        %v2096 = vunpack.c.l.bf16 %v816
        %v2097 = vunpack.c.h.bf16 %v816
        %v2098 = vunpack.c.l.bf16 %v817
        %v2099 = vunpack.c.l.bf16 %v818
        %v2100 = vunpack.c.h.bf16 %v818
        %v2101 = vunpack.c.l.bf16 %v819
        %v2102 = vunpack.c.l.bf16 %v820
        %v2103 = vunpack.c.h.bf16 %v820
        %v2104 = vunpack.c.l.bf16 %v821
        %v2105 = vunpack.c.l.bf16 %v822
        %v2106 = vunpack.c.h.bf16 %v822
        %v2107 = vunpack.c.l.bf16 %v823
        %v2108 = vunpack.c.l.bf16 %v824
        %v2109 = vunpack.c.h.bf16 %v824
        %v2110 = vunpack.c.l.bf16 %v825
        %v2111 = vunpack.c.l.bf16 %v826
        %v2112 = vunpack.c.h.bf16 %v826
        %v2113 = vunpack.c.l.bf16 %v827
        %v2114 = vunpack.c.l.bf16 %v828
        %v2115 = vunpack.c.h.bf16 %v828
        %v2116 = vunpack.c.l.bf16 %v829
        %v2117 = vunpack.c.l.bf16 %v830
        %v2118 = vunpack.c.h.bf16 %v830
        %v2119 = vunpack.c.l.bf16 %v831
        %v2120 = vunpack.c.l.bf16 %v832
        %v2121 = vunpack.c.h.bf16 %v832
        %v2122 = vunpack.c.l.bf16 %v833
        %v2123 = vunpack.c.l.bf16 %v834
        %v2124 = vunpack.c.h.bf16 %v834
        %v2125 = vunpack.c.l.bf16 %v835
        %v2126 = vunpack.c.l.bf16 %v836
        %v2127 = vunpack.c.h.bf16 %v836
        %v2128 = vunpack.c.l.bf16 %v837
        %v2129 = vunpack.c.l.bf16 %v838
        %v2130 = vunpack.c.h.bf16 %v838
        %v2131 = vunpack.c.l.bf16 %v839
        %v2132 = vunpack.c.l.bf16 %v840
        %v2133 = vunpack.c.h.bf16 %v840
        %v2134 = vunpack.c.l.bf16 %v841
        %v2135 = vunpack.c.l.bf16 %v842
        %v2136 = vunpack.c.h.bf16 %v842
        %v2137 = vunpack.c.l.bf16 %v843
        %v2138 = vunpack.c.l.bf16 %v844
        %v2139 = vunpack.c.h.bf16 %v844
        %v2140 = vunpack.c.l.bf16 %v845
        %v2141 = vunpack.c.l.bf16 %v846
        %v2142 = vunpack.c.h.bf16 %v846
        %v2143 = vunpack.c.l.bf16 %v847
        %v2144 = vunpack.c.l.bf16 %v848
        %v2145 = vunpack.c.h.bf16 %v848
        %v2146 = vunpack.c.l.bf16 %v849
        %v2147 = vunpack.c.l.bf16 %v850
        %v2148 = vunpack.c.h.bf16 %v850
        %v2149 = vunpack.c.l.bf16 %v851
        %v2150 = vunpack.c.l.bf16 %v852
        %v2151 = vunpack.c.h.bf16 %v852
        %v2152 = vunpack.c.l.bf16 %v853
        %v2153 = vunpack.c.l.bf16 %v854
        %v2154 = vunpack.c.h.bf16 %v854
        %v2155 = vunpack.c.l.bf16 %v855
        %v2156 = vunpack.c.l.bf16 %v856
        %v2157 = vunpack.c.h.bf16 %v856
        %v2158 = vunpack.c.l.bf16 %v857
        %v2159 = vunpack.c.l.bf16 %v858
        %v2160 = vunpack.c.h.bf16 %v858
        %v2161 = vunpack.c.l.bf16 %v859
        %v2162 = vunpack.c.l.bf16 %v860
        %v2163 = vunpack.c.h.bf16 %v860
        %v2164 = vunpack.c.l.bf16 %v861
        %v2165 = vunpack.c.l.bf16 %v862
        %v2166 = vunpack.c.h.bf16 %v862
        %v2167 = vunpack.c.l.bf16 %v863
        %v2168 = vunpack.c.l.bf16 %v864
        %v2169 = vunpack.c.h.bf16 %v864
        %v2170 = vunpack.c.l.bf16 %v865
        %v2171 = vunpack.c.l.bf16 %v866
        %v2172 = vunpack.c.h.bf16 %v866
        %v2173 = vunpack.c.l.bf16 %v867
        %v2174 = vunpack.c.l.bf16 %v868
        %v2175 = vunpack.c.h.bf16 %v868
        %v2176 = vunpack.c.l.bf16 %v869
        %v2177 = vunpack.c.l.bf16 %v870
        %v2178 = vunpack.c.h.bf16 %v870
        %v2179 = vunpack.c.l.bf16 %v871
        %v2180 = vunpack.c.l.bf16 %v872
        %v2181 = vunpack.c.h.bf16 %v872
        %v2182 = vunpack.c.l.bf16 %v873
        %v2183 = vunpack.c.l.bf16 %v874
        %v2184 = vunpack.c.h.bf16 %v874
        %v2185 = vunpack.c.l.bf16 %v875
        %v2186 = vunpack.c.l.bf16 %v876
        %v2187 = vunpack.c.h.bf16 %v876
        %v2188 = vunpack.c.l.bf16 %v877
        %v2189 = vunpack.c.l.bf16 %v878
        %v2190 = vunpack.c.h.bf16 %v878
        %v2191 = vunpack.c.l.bf16 %v879
        %v2192 = vunpack.c.l.bf16 %v880
        %v2193 = vunpack.c.h.bf16 %v880
        %v2194 = vunpack.c.l.bf16 %v881
        %v2195 = vunpack.c.l.bf16 %v882
        %v2196 = vunpack.c.h.bf16 %v882
        %v2197 = vunpack.c.l.bf16 %v883
        %v2198 = vunpack.c.l.bf16 %v884
        %v2199 = vunpack.c.h.bf16 %v884
        %v2200 = vunpack.c.l.bf16 %v885
        %v2201 = vunpack.c.l.bf16 %v886
        %v2202 = vunpack.c.h.bf16 %v886
        %v2203 = vunpack.c.l.bf16 %v887
        %v2204 = vunpack.c.l.bf16 %v888
        %v2205 = vunpack.c.h.bf16 %v888
        %v2206 = vunpack.c.l.bf16 %v889
        %v2207 = vunpack.c.l.bf16 %v890
        %v2208 = vunpack.c.h.bf16 %v890
        %v2209 = vunpack.c.l.bf16 %v891
        %v2210 = vunpack.c.l.bf16 %v892
        %v2211 = vunpack.c.h.bf16 %v892
        %v2212 = vunpack.c.l.bf16 %v893
        %v2213 = vunpack.c.l.bf16 %v894
        %v2214 = vunpack.c.h.bf16 %v894
        %v2215 = vunpack.c.l.bf16 %v895
        %v2216 = vunpack.c.l.bf16 %v896
        %v2217 = vunpack.c.h.bf16 %v896
        %v2218 = vunpack.c.l.bf16 %v897
        %v2219 = vunpack.c.l.bf16 %v898
        %v2220 = vunpack.c.h.bf16 %v898
        %v2221 = vunpack.c.l.bf16 %v899
        %v2222 = vunpack.c.l.bf16 %v900
        %v2223 = vunpack.c.h.bf16 %v900
        %v2224 = vunpack.c.l.bf16 %v901
        %v2225 = vunpack.c.l.bf16 %v902
        %v2226 = vunpack.c.h.bf16 %v902
        %v2227 = vunpack.c.l.bf16 %v903
        %v2228 = vunpack.c.l.bf16 %v904
        %v2229 = vunpack.c.h.bf16 %v904
        %v2230 = vunpack.c.l.bf16 %v905
        %v2231 = vunpack.c.l.bf16 %v906
        %v2232 = vunpack.c.h.bf16 %v906
        %v2233 = vunpack.c.l.bf16 %v907
        %v2234 = vunpack.c.l.bf16 %v908
        %v2235 = vunpack.c.h.bf16 %v908
        %v2236 = vunpack.c.l.bf16 %v909
        %v2237 = vunpack.c.l.bf16 %v910
        %v2238 = vunpack.c.h.bf16 %v910
        %v2239 = vunpack.c.l.bf16 %v911
        %v2240 = vunpack.c.l.bf16 %v912
        %v2241 = vunpack.c.h.bf16 %v912
        %v2242 = vunpack.c.l.bf16 %v913
        %v2243 = vunpack.c.l.bf16 %v914
        %v2244 = vunpack.c.h.bf16 %v914
        %v2245 = vunpack.c.l.bf16 %v915
        %v2246 = vunpack.c.l.bf16 %v916
        %v2247 = vunpack.c.h.bf16 %v916
        %v2248 = vunpack.c.l.bf16 %v917
        %v2249 = vunpack.c.l.bf16 %v918
        %v2250 = vunpack.c.h.bf16 %v918
        %v2251 = vunpack.c.l.bf16 %v919
        %v2252 = vunpack.c.l.bf16 %v920
        %v2253 = vunpack.c.h.bf16 %v920
        %v2254 = vunpack.c.l.bf16 %v921
        %v2255 = vunpack.c.l.bf16 %v922
        %v2256 = vunpack.c.h.bf16 %v922
        %v2257 = vunpack.c.l.bf16 %v923
        %v2258 = vunpack.c.l.bf16 %v924
        %v2259 = vunpack.c.h.bf16 %v924
        %v2260 = vunpack.c.l.bf16 %v925
        %v2261 = vunpack.c.l.bf16 %v926
        %v2262 = vunpack.c.h.bf16 %v926
        %v2263 = vunpack.c.l.bf16 %v927
        %v2264 = vunpack.c.l.bf16 %v928
        %v2265 = vunpack.c.h.bf16 %v928
        %v2266 = vunpack.c.l.bf16 %v929
        %v2267 = vunpack.c.l.bf16 %v930
        %v2268 = vunpack.c.h.bf16 %v930
        %v2269 = vunpack.c.l.bf16 %v931
        %v2270 = vunpack.c.l.bf16 %v932
        %v2271 = vunpack.c.h.bf16 %v932
        %v2272 = vunpack.c.l.bf16 %v933
        %v2273 = vunpack.c.l.bf16 %v934
        %v2274 = vunpack.c.h.bf16 %v934
        %v2275 = vunpack.c.l.bf16 %v935
        %v2276 = vunpack.c.l.bf16 %v936
        %v2277 = vunpack.c.h.bf16 %v936
        %v2278 = vunpack.c.l.bf16 %v937
        %v2279 = vunpack.c.l.bf16 %v938
        %v2280 = vunpack.c.h.bf16 %v938
        %v2281 = vunpack.c.l.bf16 %v939
        %v2282 = vunpack.c.l.bf16 %v940
        %v2283 = vunpack.c.h.bf16 %v940
        %v2284 = vunpack.c.l.bf16 %v941
        %v2285 = vunpack.c.l.bf16 %v942
        %v2286 = vunpack.c.h.bf16 %v942
        %v2287 = vunpack.c.l.bf16 %v943
        %v2288 = vunpack.c.l.bf16 %v944
        %v2289 = vunpack.c.h.bf16 %v944
        %v2290 = vunpack.c.l.bf16 %v945
        %v2291 = vunpack.c.l.bf16 %v946
        %v2292 = vunpack.c.h.bf16 %v946
        %v2293 = vunpack.c.l.bf16 %v947
        %v2294 = vunpack.c.l.bf16 %v948
        %v2295 = vunpack.c.h.bf16 %v948
        %v2296 = vunpack.c.l.bf16 %v949
        %v2297 = vunpack.c.l.bf16 %v950
        %v2298 = vunpack.c.h.bf16 %v950
        %v2299 = vunpack.c.l.bf16 %v951
        %v2300 = vunpack.c.l.bf16 %v952
        %v2301 = vunpack.c.h.bf16 %v952
        %v2302 = vunpack.c.l.bf16 %v953
        %v2303 = vunpack.c.l.bf16 %v954
        %v2304 = vunpack.c.h.bf16 %v954
        %v2305 = vunpack.c.l.bf16 %v955
        %v2306 = vunpack.c.l.bf16 %v956
        %v2307 = vunpack.c.h.bf16 %v956
        %v2308 = vunpack.c.l.bf16 %v957
        %v2309 = vunpack.c.l.bf16 %v958
        %v2310 = vunpack.c.h.bf16 %v958
        %v2311 = vunpack.c.l.bf16 %v959
        %v2312 = vunpack.c.l.bf16 %v960
        %v2313 = vunpack.c.h.bf16 %v960
        %v2314 = vunpack.c.l.bf16 %v961
        %v2315 = vunpack.c.l.bf16 %v962
        %v2316 = vunpack.c.h.bf16 %v962
        %v2317 = vunpack.c.l.bf16 %v963
        %v2318 = vunpack.c.l.bf16 %v964
        %v2319 = vunpack.c.h.bf16 %v964
        %v2320 = vunpack.c.l.bf16 %v965
        %v2321 = vunpack.c.l.bf16 %v966
        %v2322 = vunpack.c.h.bf16 %v966
        %v2323 = vunpack.c.l.bf16 %v967
        %v2324 = vunpack.c.l.bf16 %v968
        %v2325 = vunpack.c.h.bf16 %v968
        %v2326 = vunpack.c.l.bf16 %v969
        %v2327 = vunpack.c.l.bf16 %v970
        %v2328 = vunpack.c.h.bf16 %v970
        %v2329 = vunpack.c.l.bf16 %v971
        %v2330 = vunpack.c.l.bf16 %v972
        %v2331 = vunpack.c.h.bf16 %v972
        %v2332 = vunpack.c.l.bf16 %v973
        %v2333 = vunpack.c.l.bf16 %v974
        %v2334 = vunpack.c.h.bf16 %v974
        %v2335 = vunpack.c.l.bf16 %v975
        %v2336 = vunpack.c.l.bf16 %v976
        %v2337 = vunpack.c.h.bf16 %v976
        %v2338 = vunpack.c.l.bf16 %v977
        %v2339 = vunpack.c.l.bf16 %v978
        %v2340 = vunpack.c.h.bf16 %v978
        %v2341 = vunpack.c.l.bf16 %v979
        %v2342 = vunpack.c.l.bf16 %v980
        %v2343 = vunpack.c.h.bf16 %v980
        %v2344 = vunpack.c.l.bf16 %v981
        %v2345 = vunpack.c.l.bf16 %v982
        %v2346 = vunpack.c.h.bf16 %v982
        %v2347 = vunpack.c.l.bf16 %v983
        %v2348 = vunpack.c.l.bf16 %v984
        %v2349 = vunpack.c.h.bf16 %v984
        %v2350 = vunpack.c.l.bf16 %v985
        %v2351 = vunpack.c.l.bf16 %v986
        %v2352 = vunpack.c.h.bf16 %v986
        %v2353 = vunpack.c.l.bf16 %v987
        %v2354 = vunpack.c.l.bf16 %v988
        %v2355 = vunpack.c.h.bf16 %v988
        %v2356 = vunpack.c.l.bf16 %v989
        %v2357 = vunpack.c.l.bf16 %v990
        %v2358 = vunpack.c.h.bf16 %v990
        %v2359 = vunpack.c.l.bf16 %v991
        %v2360 = vunpack.c.l.bf16 %v992
        %v2361 = vunpack.c.h.bf16 %v992
        %v2362 = vunpack.c.l.bf16 %v993
        %v2363 = vunpack.c.l.bf16 %v994
        %v2364 = vunpack.c.h.bf16 %v994
        %v2365 = vunpack.c.l.bf16 %v995
        %v2366 = vunpack.c.l.bf16 %v996
        %v2367 = vunpack.c.h.bf16 %v996
        %v2368 = vunpack.c.l.bf16 %v997
        %v2369 = vunpack.c.l.bf16 %v998
        %v2370 = vunpack.c.h.bf16 %v998
        %v2371 = vunpack.c.l.bf16 %v999
        %v2372 = vunpack.c.l.bf16 %v1000
        %v2373 = vunpack.c.h.bf16 %v1000
        %v2374 = vunpack.c.l.bf16 %v1001
        %v2375 = vunpack.c.l.bf16 %v1002
        %v2376 = vunpack.c.h.bf16 %v1002
        %v2377 = vunpack.c.l.bf16 %v1003
        %v2378 = vunpack.c.l.bf16 %v1004
        %v2379 = vunpack.c.h.bf16 %v1004
        %v2380 = vunpack.c.l.bf16 %v1005
        %v2381 = vunpack.c.l.bf16 %v1006
        %v2382 = vunpack.c.h.bf16 %v1006
        %v2383 = vunpack.c.l.bf16 %v1007
        %v2384 = vunpack.c.l.bf16 %v1008
        %v2385 = vunpack.c.h.bf16 %v1008
        %v2386 = vunpack.c.l.bf16 %v1009
        %v2387 = vunpack.c.l.bf16 %v1010
        %v2388 = vunpack.c.h.bf16 %v1010
        %v2389 = vunpack.c.l.bf16 %v1011
        %v2390 = vunpack.c.l.bf16 %v1012
        %v2391 = vunpack.c.h.bf16 %v1012
        %v2392 = vunpack.c.l.bf16 %v1013
        %v2393 = vunpack.c.l.bf16 %v1014
        %v2394 = vunpack.c.h.bf16 %v1014
        %v2395 = vunpack.c.l.bf16 %v1015
        %v2396 = vunpack.c.l.bf16 %v1016
        %v2397 = vunpack.c.h.bf16 %v1016
        %v2398 = vunpack.c.l.bf16 %v1017
        %v2399 = vunpack.c.l.bf16 %v1018
        %v2400 = vunpack.c.h.bf16 %v1018
        %v2401 = vunpack.c.l.bf16 %v1019
        %v2402 = vunpack.c.l.bf16 %v1020
        %v2403 = vunpack.c.h.bf16 %v1020
        %v2404 = vunpack.c.l.bf16 %v1021
        %v2405 = vunpack.c.l.bf16 %v1022
        %v2406 = vunpack.c.h.bf16 %v1022
        %v2407 = vunpack.c.l.bf16 %v1023
        %v2408 = vunpack.c.l.bf16 %v1024
        %v2409 = vunpack.c.h.bf16 %v1024
        %v2410 = vunpack.c.l.bf16 %v1025
        %v2411 = vunpack.c.l.bf16 %v1026
        %v2412 = vunpack.c.h.bf16 %v1026
        %v2413 = vunpack.c.l.bf16 %v1027
        %v2414 = vunpack.c.l.bf16 %v1028
        %v2415 = vunpack.c.h.bf16 %v1028
        %v2416 = vunpack.c.l.bf16 %v1029
        %v2417 = vunpack.c.l.bf16 %v1030
        %v2418 = vunpack.c.h.bf16 %v1030
        %v2419 = vunpack.c.l.bf16 %v1031
        %v2420 = vunpack.c.l.bf16 %v1032
        %v2421 = vunpack.c.h.bf16 %v1032
        %v2422 = vunpack.c.l.bf16 %v1033
        %v2423 = vunpack.c.l.bf16 %v1034
        %v2424 = vunpack.c.h.bf16 %v1034
        %v2425 = vunpack.c.l.bf16 %v1035
        %v2426 = vunpack.c.l.bf16 %v1036
        %v2427 = vunpack.c.h.bf16 %v1036
        %v2428 = vunpack.c.l.bf16 %v1037
        %v2429 = vunpack.c.l.bf16 %v1038
        %v2430 = vunpack.c.h.bf16 %v1038
        %v2431 = vunpack.c.l.bf16 %v1039
        %v2432 = vunpack.c.l.bf16 %v1040
        %v2433 = vunpack.c.h.bf16 %v1040
        %v2434 = vunpack.c.l.bf16 %v1041
        %v2435 = vunpack.c.l.bf16 %v1042
        %v2436 = vunpack.c.h.bf16 %v1042
        %v2437 = vunpack.c.l.bf16 %v1043
        %v2438 = vunpack.c.l.bf16 %v1044
        %v2439 = vunpack.c.h.bf16 %v1044
        %v2440 = vunpack.c.l.bf16 %v1045
        %v2441 = vunpack.c.l.bf16 %v1046
        %v2442 = vunpack.c.h.bf16 %v1046
        %v2443 = vunpack.c.l.bf16 %v1047
        %v2444 = vunpack.c.l.bf16 %v1048
        %v2445 = vunpack.c.h.bf16 %v1048
        %v2446 = vunpack.c.l.bf16 %v1049
        %v2447 = vunpack.c.l.bf16 %v1050
        %v2448 = vunpack.c.h.bf16 %v1050
        %v2449 = vunpack.c.l.bf16 %v1051
        %v2450 = vunpack.c.l.bf16 %v1052
        %v2451 = vunpack.c.h.bf16 %v1052
        %v2452 = vunpack.c.l.bf16 %v1053
        %v2453 = vunpack.c.l.bf16 %v1054
        %v2454 = vunpack.c.h.bf16 %v1054
        %v2455 = vunpack.c.l.bf16 %v1055
        %v2456 = vunpack.c.l.bf16 %v1056
        %v2457 = vunpack.c.h.bf16 %v1056
        %v2458 = vunpack.c.l.bf16 %v1057
        %v2459 = vunpack.c.l.bf16 %v1058
        %v2460 = vunpack.c.h.bf16 %v1058
        %v2461 = vunpack.c.l.bf16 %v1059
        %v2462 = vunpack.c.l.bf16 %v1060
        %v2463 = vunpack.c.h.bf16 %v1060
        %v2464 = vunpack.c.l.bf16 %v1061
        %v2465 = vunpack.c.l.bf16 %v1062
        %v2466 = vunpack.c.h.bf16 %v1062
        %v2467 = vunpack.c.l.bf16 %v1063
        %v2468 = vunpack.c.l.bf16 %v1064
        %v2469 = vunpack.c.h.bf16 %v1064
        %v2470 = vunpack.c.l.bf16 %v1065
        %v2471 = vunpack.c.l.bf16 %v1066
        %v2472 = vunpack.c.h.bf16 %v1066
        %v2473 = vunpack.c.l.bf16 %v1067
        %v2474 = vunpack.c.l.bf16 %v1068
        %v2475 = vunpack.c.h.bf16 %v1068
        %v2476 = vunpack.c.l.bf16 %v1069
        %v2477 = vunpack.c.l.bf16 %v1070
        %v2478 = vunpack.c.h.bf16 %v1070
        %v2479 = vunpack.c.l.bf16 %v1071
        %v2480 = vunpack.c.l.bf16 %v1072
        %v2481 = vunpack.c.h.bf16 %v1072
        %v2482 = vunpack.c.l.bf16 %v1073
        %v2483 = vunpack.c.l.bf16 %v1074
        %v2484 = vunpack.c.h.bf16 %v1074
        %v2485 = vunpack.c.l.bf16 %v1075
        %v2486 = vunpack.c.l.bf16 %v1076
        %v2487 = vunpack.c.h.bf16 %v1076
        %v2488 = vunpack.c.l.bf16 %v1077
        %v2489 = vunpack.c.l.bf16 %v1078
        %v2490 = vunpack.c.h.bf16 %v1078
        %v2491 = vunpack.c.l.bf16 %v1079
        %v2492 = vunpack.c.l.bf16 %v1080
        %v2493 = vunpack.c.h.bf16 %v1080
        %v2494 = vunpack.c.l.bf16 %v1081
        %v2495 = vunpack.c.l.bf16 %v1082
        %v2496 = vunpack.c.h.bf16 %v1082
        %v2497 = vunpack.c.l.bf16 %v1083
        %v2498 = vunpack.c.l.bf16 %v1084
        %v2499 = vunpack.c.h.bf16 %v1084
        %v2500 = vunpack.c.l.bf16 %v1085
        %v2501 = vunpack.c.l.bf16 %v1086
        %v2502 = vunpack.c.h.bf16 %v1086
        %v2503 = vunpack.c.l.bf16 %v1087
        %v2504 = vunpack.c.l.bf16 %v1088
        %v2505 = vunpack.c.h.bf16 %v1088
        %v2506 = vunpack.c.l.bf16 %v1089
        %v2507 = vunpack.c.l.bf16 %v1090
        %v2508 = vunpack.c.h.bf16 %v1090
        %v2509 = vunpack.c.l.bf16 %v1091
        %v2510 = vunpack.c.l.bf16 %v1092
        %v2511 = vunpack.c.h.bf16 %v1092
        %v2512 = vunpack.c.l.bf16 %v1093
        %v2513 = vunpack.c.l.bf16 %v1094
        %v2514 = vunpack.c.h.bf16 %v1094
        %v2515 = vunpack.c.l.bf16 %v1095
        %v2516 = vunpack.c.l.bf16 %v1096
        %v2517 = vunpack.c.h.bf16 %v1096
        %v2518 = vunpack.c.l.bf16 %v1097
        %v2519 = vunpack.c.l.bf16 %v1098
        %v2520 = vunpack.c.h.bf16 %v1098
        %v2521 = vunpack.c.l.bf16 %v1099
        %v2522 = vunpack.c.l.bf16 %v1100
        %v2523 = vunpack.c.h.bf16 %v1100
        %v2524 = vunpack.c.l.bf16 %v1101
        %v2525 = vunpack.c.l.bf16 %v1102
        %v2526 = vunpack.c.h.bf16 %v1102
        %v2527 = vunpack.c.l.bf16 %v1103
        %v2528 = vunpack.c.l.bf16 %v1104
        %v2529 = vunpack.c.h.bf16 %v1104
        %v2530 = vunpack.c.l.bf16 %v1105
        %v2531 = vunpack.c.l.bf16 %v1106
        %v2532 = vunpack.c.h.bf16 %v1106
        %v2533 = vunpack.c.l.bf16 %v1107
        %v2534 = vunpack.c.l.bf16 %v1108
        %v2535 = vunpack.c.h.bf16 %v1108
        %v2536 = vunpack.c.l.bf16 %v1109
        %v2537 = vunpack.c.l.bf16 %v1110
        %v2538 = vunpack.c.h.bf16 %v1110
        %v2539 = vunpack.c.l.bf16 %v1111
        %v2540 = vunpack.c.l.bf16 %v1112
        %v2541 = vunpack.c.h.bf16 %v1112
        %v2542 = vunpack.c.l.bf16 %v1113
        %v2543 = vunpack.c.l.bf16 %v1114
        %v2544 = vunpack.c.h.bf16 %v1114
        %v2545 = vunpack.c.l.bf16 %v1115
        %v2546 = vunpack.c.l.bf16 %v1116
        %v2547 = vunpack.c.h.bf16 %v1116
        %v2548 = vunpack.c.l.bf16 %v1117
        %v2549 = vunpack.c.l.bf16 %v1118
        %v2550 = vunpack.c.h.bf16 %v1118
        %v2551 = vunpack.c.l.bf16 %v1119
        %v2552 = vunpack.c.l.bf16 %v1120
        %v2553 = vunpack.c.h.bf16 %v1120
        %v2554 = vunpack.c.l.bf16 %v1121
        %v2555 = vunpack.c.l.bf16 %v1122
        %v2556 = vunpack.c.h.bf16 %v1122
        %v2557 = vunpack.c.l.bf16 %v1123
        %v2558 = vunpack.c.l.bf16 %v1124
        %v2559 = vunpack.c.h.bf16 %v1124
        %v2560 = vunpack.c.l.bf16 %v1125
        %v2561 = vunpack.c.l.bf16 %v1126
        %v2562 = vunpack.c.h.bf16 %v1126
        %v2563 = vunpack.c.l.bf16 %v1127
        %v2564 = vunpack.c.l.bf16 %v1128
        %v2565 = vunpack.c.h.bf16 %v1128
        %v2566 = vunpack.c.l.bf16 %v1129
        %v2567 = vunpack.c.l.bf16 %v1130
        %v2568 = vunpack.c.h.bf16 %v1130
        %v2569 = vunpack.c.l.bf16 %v1131
        %v2570 = vunpack.c.l.bf16 %v1132
        %v2571 = vunpack.c.h.bf16 %v1132
        %v2572 = vunpack.c.l.bf16 %v1133
        %v2573 = vunpack.c.l.bf16 %v1134
        %v2574 = vunpack.c.h.bf16 %v1134
        %v2575 = vunpack.c.l.bf16 %v1135
        %v2576 = vunpack.c.l.bf16 %v1136
        %v2577 = vunpack.c.h.bf16 %v1136
        %v2578 = vunpack.c.l.bf16 %v1137
        %v2579 = vunpack.c.l.bf16 %v1138
        %v2580 = vunpack.c.h.bf16 %v1138
        %v2581 = vunpack.c.l.bf16 %v1139
        %v2582 = vunpack.c.l.bf16 %v1140
        %v2583 = vunpack.c.h.bf16 %v1140
        %v2584 = vunpack.c.l.bf16 %v1141
        %v2585 = vunpack.c.l.bf16 %v1142
        %v2586 = vunpack.c.h.bf16 %v1142
        %v2587 = vunpack.c.l.bf16 %v1143
        %v2588 = vunpack.c.l.bf16 %v1144
        %v2589 = vunpack.c.h.bf16 %v1144
        %v2590 = vunpack.c.l.bf16 %v1145
        %v2591 = vunpack.c.l.bf16 %v1146
        %v2592 = vunpack.c.h.bf16 %v1146
        %v2593 = vunpack.c.l.bf16 %v1147
        %v2594 = vunpack.c.l.bf16 %v1148
        %v2595 = vunpack.c.h.bf16 %v1148
        %v2596 = vunpack.c.l.bf16 %v1149
        %v2597 = vunpack.c.l.bf16 %v1150
        %v2598 = vunpack.c.h.bf16 %v1150
        %v2599 = vunpack.c.l.bf16 %v1151
        %v2600 = vunpack.c.l.bf16 %v1152
        %v2601 = vunpack.c.h.bf16 %v1152
        %v2602 = vunpack.c.l.bf16 %v1153
        %v2603 = vunpack.c.l.bf16 %v1154
        %v2604 = vunpack.c.h.bf16 %v1154
        %v2605 = vunpack.c.l.bf16 %v1155
        %v2606 = vunpack.c.l.bf16 %v1156
        %v2607 = vunpack.c.h.bf16 %v1156
        %v2608 = vunpack.c.l.bf16 %v1157
        %v2609 = vunpack.c.l.bf16 %v1158
        %v2610 = vunpack.c.h.bf16 %v1158
        %v2611 = vunpack.c.l.bf16 %v1159
        %v2612 = vunpack.c.l.bf16 %v1160
        %v2613 = vunpack.c.h.bf16 %v1160
        %v2614 = vunpack.c.l.bf16 %v1161
        %v2615 = vunpack.c.l.bf16 %v1162
        %v2616 = vunpack.c.h.bf16 %v1162
        %v2617 = vunpack.c.l.bf16 %v1163
        %v2618 = vunpack.c.l.bf16 %v1164
        %v2619 = vunpack.c.h.bf16 %v1164
        %v2620 = vunpack.c.l.bf16 %v1165
        %v2621 = vunpack.c.l.bf16 %v1166
        %v2622 = vunpack.c.h.bf16 %v1166
        %v2623 = vunpack.c.l.bf16 %v1167
        %v2624 = vunpack.c.l.bf16 %v1168
        %v2625 = vunpack.c.h.bf16 %v1168
        %v2626 = vunpack.c.l.bf16 %v1169
        %v2627 = vunpack.c.l.bf16 %v1170
        %v2628 = vunpack.c.h.bf16 %v1170
        %v2629 = vunpack.c.l.bf16 %v1171
        %v2630 = vunpack.c.l.bf16 %v1172
        %v2631 = vunpack.c.h.bf16 %v1172
        %v2632 = vunpack.c.l.bf16 %v1173
        %v2633 = vunpack.c.l.bf16 %v1174
        %v2634 = vunpack.c.h.bf16 %v1174
        %v2635 = vunpack.c.l.bf16 %v1175
        %v2636 = vunpack.c.l.bf16 %v1176
        %v2637 = vunpack.c.h.bf16 %v1176
        %v2638 = vunpack.c.l.bf16 %v1177
        %v2639 = vunpack.c.l.bf16 %v1178
        %v2640 = vunpack.c.h.bf16 %v1178
        %v2641 = vunpack.c.l.bf16 %v1179
        %v2642 = vunpack.c.l.bf16 %v1180
        %v2643 = vunpack.c.h.bf16 %v1180
        %v2644 = vunpack.c.l.bf16 %v1181
        %v2645 = vunpack.c.l.bf16 %v1182
        %v2646 = vunpack.c.h.bf16 %v1182
        %v2647 = vunpack.c.l.bf16 %v1183
        %v2648 = vunpack.c.l.bf16 %v1184
        %v2649 = vunpack.c.h.bf16 %v1184
        %v2650 = vunpack.c.l.bf16 %v1185
        %v2651 = vunpack.c.l.bf16 %v1186
        %v2652 = vunpack.c.h.bf16 %v1186
        %v2653 = vunpack.c.l.bf16 %v1187
        %v2654 = vunpack.c.l.bf16 %v1188
        %v2655 = vunpack.c.h.bf16 %v1188
        %v2656 = vunpack.c.l.bf16 %v1189
        %v2657 = vunpack.c.l.bf16 %v1190
        %v2658 = vunpack.c.h.bf16 %v1190
        %v2659 = vunpack.c.l.bf16 %v1191
        %v2660 = vunpack.c.l.bf16 %v1192
        %v2661 = vunpack.c.h.bf16 %v1192
        %v2662 = vunpack.c.l.bf16 %v1193
        %v2663 = vunpack.c.l.bf16 %v1194
        %v2664 = vunpack.c.h.bf16 %v1194
        %v2665 = vunpack.c.l.bf16 %v1195
        %v2666 = vunpack.c.l.bf16 %v1196
        %v2667 = vunpack.c.h.bf16 %v1196
        %v2668 = vunpack.c.l.bf16 %v1197
        %v2669 = vunpack.c.l.bf16 %v1198
        %v2670 = vunpack.c.h.bf16 %v1198
        %v2671 = vunpack.c.l.bf16 %v1199
        %v2672 = vunpack.c.l.bf16 %v1200
        %v2673 = vunpack.c.h.bf16 %v1200
        %v2674 = vunpack.c.l.bf16 %v1201
        %v2675 = vunpack.c.l.bf16 %v1202
        %v2676 = vunpack.c.h.bf16 %v1202
        %v2677 = vunpack.c.l.bf16 %v1203
        %v2678 = vunpack.c.l.bf16 %v1204
        %v2679 = vunpack.c.h.bf16 %v1204
        %v2680 = vunpack.c.l.bf16 %v1205
        %v2681 = vunpack.c.l.bf16 %v1206
        %v2682 = vunpack.c.h.bf16 %v1206
        %v2683 = vunpack.c.l.bf16 %v1207
        %v2684 = vunpack.c.l.bf16 %v1208
        %v2685 = vunpack.c.h.bf16 %v1208
        %v2686 = vunpack.c.l.bf16 %v1209
        %v2687 = vunpack.c.l.bf16 %v1210
        %v2688 = vunpack.c.h.bf16 %v1210
        %v2689 = vunpack.c.l.bf16 %v1211
        %v2690 = vunpack.c.l.bf16 %v1212
        %v2691 = vunpack.c.h.bf16 %v1212
        %v2692 = vunpack.c.l.bf16 %v1213
        %v2693 = vunpack.c.l.bf16 %v1214
        %v2694 = vunpack.c.h.bf16 %v1214
        %v2695 = vunpack.c.l.bf16 %v1215
        %v2696 = vunpack.c.l.bf16 %v1216
        %v2697 = vunpack.c.h.bf16 %v1216
        %v2698 = vunpack.c.l.bf16 %v1217
        %v2699 = vunpack.c.l.bf16 %v1218
        %v2700 = vunpack.c.h.bf16 %v1218
        %v2701 = vunpack.c.l.bf16 %v1219
        %v2702 = vunpack.c.l.bf16 %v1220
        %v2703 = vunpack.c.h.bf16 %v1220
        %v2704 = vunpack.c.l.bf16 %v1221
        %v2705 = vunpack.c.l.bf16 %v1222
        %v2706 = vunpack.c.h.bf16 %v1222
        %v2707 = vunpack.c.l.bf16 %v1223
        %v2708 = vunpack.c.l.bf16 %v1224
        %v2709 = vunpack.c.h.bf16 %v1224
        %v2710 = vunpack.c.l.bf16 %v1225
        %v2711 = vunpack.c.l.bf16 %v1226
        %v2712 = vunpack.c.h.bf16 %v1226
        %v2713 = vunpack.c.l.bf16 %v1227
        %v2714 = vunpack.c.l.bf16 %v1228
        %v2715 = vunpack.c.h.bf16 %v1228
        %v2716 = vunpack.c.l.bf16 %v1229
        %v2717 = vunpack.c.l.bf16 %v1230
        %v2718 = vunpack.c.h.bf16 %v1230
        %v2719 = vunpack.c.l.bf16 %v1231
        %v2720 = vunpack.c.l.bf16 %v1232
        %v2721 = vunpack.c.h.bf16 %v1232
        %v2722 = vunpack.c.l.bf16 %v1233
        %v2723 = vunpack.c.l.bf16 %v1234
        %v2724 = vunpack.c.h.bf16 %v1234
        %v2725 = vunpack.c.l.bf16 %v1235
        %v2726 = vunpack.c.l.bf16 %v1236
        %v2727 = vunpack.c.h.bf16 %v1236
        %v2728 = vunpack.c.l.bf16 %v1237
        %v2729 = vunpack.c.l.bf16 %v1238
        %v2730 = vunpack.c.h.bf16 %v1238
        %v2731 = vunpack.c.l.bf16 %v1239
        %v2732 = vunpack.c.l.bf16 %v1240
        %v2733 = vunpack.c.h.bf16 %v1240
        %v2734 = vunpack.c.l.bf16 %v1241
        %v2735 = vunpack.c.l.bf16 %v1242
        %v2736 = vunpack.c.h.bf16 %v1242
        %v2737 = vunpack.c.l.bf16 %v1243
        %v2738 = vunpack.c.l.bf16 %v1244
        %v2739 = vunpack.c.h.bf16 %v1244
        %v2740 = vunpack.c.l.bf16 %v1245
        %v2741 = vunpack.c.l.bf16 %v1246
        %v2742 = vunpack.c.h.bf16 %v1246
        %v2743 = vunpack.c.l.bf16 %v1247
        %v2744 = vunpack.c.l.bf16 %v1248
        %v2745 = vunpack.c.h.bf16 %v1248
        %v2746 = vunpack.c.l.bf16 %v1249
        %v2747 = vunpack.c.l.bf16 %v1250
        %v2748 = vunpack.c.h.bf16 %v1250
        %v2749 = vunpack.c.l.bf16 %v1251
        %v2750 = vunpack.c.l.bf16 %v1252
        %v2751 = vunpack.c.h.bf16 %v1252
        %v2752 = vunpack.c.l.bf16 %v1253
        %v2753 = vunpack.c.l.bf16 %v1254
        %v2754 = vunpack.c.h.bf16 %v1254
        %v2755 = vunpack.c.l.bf16 %v1255
        %v2756 = vunpack.c.l.bf16 %v1256
        %v2757 = vunpack.c.h.bf16 %v1256
        %v2758 = vunpack.c.l.bf16 %v1257
        %v2759 = vunpack.c.l.bf16 %v1258
        %v2760 = vunpack.c.h.bf16 %v1258
        %v2761 = vunpack.c.l.bf16 %v1259
        %v2762 = vunpack.c.l.bf16 %v1260
        %v2763 = vunpack.c.h.bf16 %v1260
        %v2764 = vunpack.c.l.bf16 %v1261
        %v2765 = vunpack.c.l.bf16 %v1262
        %v2766 = vunpack.c.h.bf16 %v1262
        %v2767 = vunpack.c.l.bf16 %v1263
        %v2768 = vunpack.c.l.bf16 %v1264
        %v2769 = vunpack.c.h.bf16 %v1264
        %v2770 = vunpack.c.l.bf16 %v1265
        %v2771 = vunpack.c.l.bf16 %v1266
        %v2772 = vunpack.c.h.bf16 %v1266
        %v2773 = vunpack.c.l.bf16 %v1267
        %v2774 = vunpack.c.l.bf16 %v1268
        %v2775 = vunpack.c.h.bf16 %v1268
        %v2776 = vunpack.c.l.bf16 %v1269
        %v2777 = vunpack.c.l.bf16 %v1270
        %v2778 = vunpack.c.h.bf16 %v1270
        %v2779 = vunpack.c.l.bf16 %v1271
        %v2780 = vunpack.c.l.bf16 %v1272
        %v2781 = vunpack.c.h.bf16 %v1272
        %v2782 = vunpack.c.l.bf16 %v1273
        %v2783 = vunpack.c.l.bf16 %v1274
        %v2784 = vunpack.c.h.bf16 %v1274
        %v2785 = vunpack.c.l.bf16 %v1275
        %v2786 = vunpack.c.l.bf16 %v1276
        %v2787 = vunpack.c.h.bf16 %v1276
        %v2788 = vunpack.c.l.bf16 %v1277
        %v2789 = vunpack.c.l.bf16 %v1278
        %v2790 = vunpack.c.h.bf16 %v1278
        %v2791 = vunpack.c.l.bf16 %v1279
        %v2792 = vunpack.c.l.bf16 %v1280
        %v2793 = vunpack.c.h.bf16 %v1280
        %v2794 = vunpack.c.l.bf16 %v1281
        %v2795 = vunpack.c.l.bf16 %v1282
        %v2796 = vunpack.c.h.bf16 %v1282
        %v2797 = vunpack.c.l.bf16 %v1283
        %v2798 = vunpack.c.l.bf16 %v1284
        %v2799 = vunpack.c.h.bf16 %v1284
        %v2800 = vunpack.c.l.bf16 %v1285
        %v2801 = vunpack.c.l.bf16 %v1286
        %v2802 = vunpack.c.h.bf16 %v1286
        %v2803 = vunpack.c.l.bf16 %v1287
        %v2804 = vunpack.c.l.bf16 %v1288
        %v2805 = vunpack.c.h.bf16 %v1288
        %v2806 = vunpack.c.l.bf16 %v1289
        %v2807 = vunpack.c.l.bf16 %v1290
        %v2808 = vunpack.c.h.bf16 %v1290
        %v2809 = vunpack.c.l.bf16 %v1291
        %v2810 = vunpack.c.l.bf16 %v1292
        %v2811 = vunpack.c.h.bf16 %v1292
        %v2812 = vunpack.c.l.bf16 %v1293
        %v2813 = vunpack.c.l.bf16 %v1294
        %v2814 = vunpack.c.h.bf16 %v1294
        %v2815 = vunpack.c.l.bf16 %v1295
        %v2816 = vunpack.c.l.bf16 %v1296
        %v2817 = vunpack.c.h.bf16 %v1296
        %v2818 = vunpack.c.l.bf16 %v1297
        %v2819 = vunpack.c.l.bf16 %v1298
        %v2820 = vunpack.c.h.bf16 %v1298
        %v2821 = vunpack.c.l.bf16 %v1299
        %v2822 = vunpack.c.l.bf16 %v1300
        %v2823 = vunpack.c.h.bf16 %v1300
        %v2824 = vunpack.c.l.bf16 %v1301
        %v2825 = vunpack.c.l.bf16 %v1302
        %v2826 = vunpack.c.h.bf16 %v1302
        %v2827 = vunpack.c.l.bf16 %v1303
        %v2828 = vunpack.c.l.bf16 %v1304
        %v2829 = vunpack.c.h.bf16 %v1304
        %v2830 = vunpack.c.l.bf16 %v1305
        %v2831 = vunpack.c.l.bf16 %v1306
        %v2832 = vunpack.c.h.bf16 %v1306
        %v2833 = vunpack.c.l.bf16 %v1307
        %v2834 = vunpack.c.l.bf16 %v1308
        %v2835 = vunpack.c.h.bf16 %v1308
        %v2836 = vunpack.c.l.bf16 %v1309
        %v2837 = vunpack.c.l.bf16 %v1310
        %v2838 = vunpack.c.h.bf16 %v1310
        %v2839 = vunpack.c.l.bf16 %v1311
        %v2840 = vunpack.c.l.bf16 %v1312
        %v2841 = vunpack.c.h.bf16 %v1312
        %v2842 = vunpack.c.l.bf16 %v1313
        %v2843 = vunpack.c.l.bf16 %v1314
        %v2844 = vunpack.c.h.bf16 %v1314
        %v2845 = vunpack.c.l.bf16 %v1315
        %v2846 = vunpack.c.l.bf16 %v1316
        %v2847 = vunpack.c.h.bf16 %v1316
        %v2848 = vunpack.c.l.bf16 %v1317
        %v2849 = vunpack.c.l.bf16 %v1318
        %v2850 = vunpack.c.h.bf16 %v1318
        %v2851 = vunpack.c.l.bf16 %v1319
        %v2852 = vunpack.c.l.bf16 %v1320
        %v2853 = vunpack.c.h.bf16 %v1320
        %v2854 = vunpack.c.l.bf16 %v1321
        %v2855 = vunpack.c.l.bf16 %v1322
        %v2856 = vunpack.c.h.bf16 %v1322
        %v2857 = vunpack.c.l.bf16 %v1323
        %v2858 = vunpack.c.l.bf16 %v1324
        %v2859 = vunpack.c.h.bf16 %v1324
        %v2860 = vunpack.c.l.bf16 %v1325
        %v2861 = vunpack.c.l.bf16 %v1326
        %v2862 = vunpack.c.h.bf16 %v1326
        %v2863 = vunpack.c.l.bf16 %v1327
        %v2880 = vcombine.high %v288, %v288
        %v2881 = vcombine.high %v289, %v289
        %v2882 = vcombine.high %v290, %v290
        %v2883 = vcombine.high %v291, %v291
        %v2884 = vcombine.high %v292, %v292
        %v2885 = vcombine.high %v293, %v293
        %v2886 = vcombine.high %v294, %v294
        %v2887 = vcombine.high %v295, %v295
        %v2888 = vcombine.high %v296, %v296
        %v2889 = vcombine.high %v297, %v297
        %v2890 = vcombine.high %v298, %v298
        %v2891 = vcombine.high %v299, %v299
        %v2892 = vcombine.high %v300, %v300
        %v2893 = vcombine.high %v301, %v301
        %v2894 = vcombine.high %v302, %v302
        %v2895 = vcombine.high %v303, %v303
        %2912 = vmatprep.subr.mxu0 %v1374
        %2913 = vmatpush1.msra.mxu0 %v1373
        %2914 = vmatprep.subr.mxu0 %v1371
        %2915 = vmatpush1.msra.mxu0 %v1370
        %2916 = vmatprep.subr.mxu0 %v1368
        %2917 = vmatpush1.msra.mxu0 %v1367
        %2918 = vmatprep.subr.mxu0 %v1365
        %2919 = vmatpush1.msra.mxu0 %v1364
        %2920 = vmatprep.subr.mxu0 %v1362
        %2921 = vmatpush1.msra.mxu0 %v1361
        %2922 = vmatprep.subr.mxu0 %v1359
        %2923 = vmatpush1.msra.mxu0 %v1358
        %2924 = vmatprep.subr.mxu0 %v1356
        %2925 = vmatpush1.msra.mxu0 %v1355
        %2926 = vmatprep.subr.mxu0 %v1353
        %2927 = vmatpush1.msra.mxu0 %v1352
        %2928 = vmatprep.subr.mxu0 %v1350
        %2929 = vmatpush1.msra.mxu0 %v1349
        %2930 = vmatprep.subr.mxu0 %v1347
        %2931 = vmatpush1.msra.mxu0 %v1346
        %2932 = vmatprep.subr.mxu0 %v1344
        %2933 = vmatpush1.msra.mxu0 %v1343
        %2934 = vmatprep.subr.mxu0 %v1341
        %2935 = vmatpush1.msra.mxu0 %v1340
        %2936 = vmatprep.subr.mxu0 %v1338
        %2937 = vmatpush1.msra.mxu0 %v1337
        %2938 = vmatprep.subr.mxu0 %v1335
        %2939 = vmatpush1.msra.mxu0 %v1334
        %2940 = vmatprep.subr.mxu0 %v1332
        %2941 = vmatpush1.msra.mxu0 %v1331
        %2942 = vmatprep.subr.mxu0 %v1329
        %2943 = vmatpush1.msra.mxu0 %v1328
        %2944 = vmatprep.subr.mxu0 %v1422
        %2945 = vmatpush2.msra.mxu0 %v1421
        %2946 = vmatprep.subr.mxu0 %v1419
        %2947 = vmatpush2.msra.mxu0 %v1418
        %2948 = vmatprep.subr.mxu0 %v1416
        %2949 = vmatpush2.msra.mxu0 %v1415
        %2950 = vmatprep.subr.mxu0 %v1413
        %2951 = vmatpush2.msra.mxu0 %v1412
        %2952 = vmatprep.subr.mxu0 %v1410
        %2953 = vmatpush2.msra.mxu0 %v1409
        %2954 = vmatprep.subr.mxu0 %v1407
        %2955 = vmatpush2.msra.mxu0 %v1406
        %2956 = vmatprep.subr.mxu0 %v1404
        %2957 = vmatpush2.msra.mxu0 %v1403
        %2958 = vmatprep.subr.mxu0 %v1401
        %2959 = vmatpush2.msra.mxu0 %v1400
        %2960 = vmatprep.subr.mxu0 %v1398
        %2961 = vmatpush2.msra.mxu0 %v1397
        %2962 = vmatprep.subr.mxu0 %v1395
        %2963 = vmatpush2.msra.mxu0 %v1394
        %2964 = vmatprep.subr.mxu0 %v1392
        %2965 = vmatpush2.msra.mxu0 %v1391
        %2966 = vmatprep.subr.mxu0 %v1389
        %2967 = vmatpush2.msra.mxu0 %v1388
        %2968 = vmatprep.subr.mxu0 %v1386
        %2969 = vmatpush2.msra.mxu0 %v1385
        %2970 = vmatprep.subr.mxu0 %v1383
        %2971 = vmatpush2.msra.mxu0 %v1382
        %2972 = vmatprep.subr.mxu0 %v1380
        %2973 = vmatpush2.msra.mxu0 %v1379
        %2974 = vmatprep.subr.mxu0 %v1377
        %2975 = vmatpush2.msra.mxu0 %v1376
        %2976 = vmatprep.mubr.f32.mxu0 %v2880
        %2977 = vmatmul.mubr.f32.gmra.mxu0 %v288
        %v2978 = vpop.f32.mrf.mxu0
        %v2979 = vadd.f32 0.0, %v2978
        %v2980 = vpop.f32.mrf.mxu0
        %v2981 = vadd.f32 0.0, %v2980
        %2982 = vdwg.mxu0
        %2983 = vmatprep.subr.mxu0 %v1470
        %2984 = vmatpush1.msra.mxu0 %v1469
        %2985 = vmatprep.subr.mxu0 %v1467
        %2986 = vmatpush1.msra.mxu0 %v1466
        %2987 = vmatprep.subr.mxu0 %v1464
        %2988 = vmatpush1.msra.mxu0 %v1463
        %2989 = vmatprep.subr.mxu0 %v1461
        %2990 = vmatpush1.msra.mxu0 %v1460
        %2991 = vmatprep.subr.mxu0 %v1458
        %2992 = vmatpush1.msra.mxu0 %v1457
        %2993 = vmatprep.subr.mxu0 %v1455
        %2994 = vmatpush1.msra.mxu0 %v1454
        %2995 = vmatprep.subr.mxu0 %v1452
        %2996 = vmatpush1.msra.mxu0 %v1451
        %2997 = vmatprep.subr.mxu0 %v1449
        %2998 = vmatpush1.msra.mxu0 %v1448
        %2999 = vmatprep.subr.mxu0 %v1446
        %3000 = vmatpush1.msra.mxu0 %v1445
        %3001 = vmatprep.subr.mxu0 %v1443
        %3002 = vmatpush1.msra.mxu0 %v1442
        %3003 = vmatprep.subr.mxu0 %v1440
        %3004 = vmatpush1.msra.mxu0 %v1439
        %3005 = vmatprep.subr.mxu0 %v1437
        %3006 = vmatpush1.msra.mxu0 %v1436
        %3007 = vmatprep.subr.mxu0 %v1434
        %3008 = vmatpush1.msra.mxu0 %v1433
        %3009 = vmatprep.subr.mxu0 %v1431
        %3010 = vmatpush1.msra.mxu0 %v1430
        %3011 = vmatprep.subr.mxu0 %v1428
        %3012 = vmatpush1.msra.mxu0 %v1427
        %3013 = vmatprep.subr.mxu0 %v1425
        %3014 = vmatpush1.msra.mxu0 %v1424
        %3015 = vmatprep.subr.mxu0 %v1518
        %3016 = vmatpush2.msra.mxu0 %v1517
        %3017 = vmatprep.subr.mxu0 %v1515
        %3018 = vmatpush2.msra.mxu0 %v1514
        %3019 = vmatprep.subr.mxu0 %v1512
        %3020 = vmatpush2.msra.mxu0 %v1511
        %3021 = vmatprep.subr.mxu0 %v1509
        %3022 = vmatpush2.msra.mxu0 %v1508
        %3023 = vmatprep.subr.mxu0 %v1506
        %3024 = vmatpush2.msra.mxu0 %v1505
        %3025 = vmatprep.subr.mxu0 %v1503
        %3026 = vmatpush2.msra.mxu0 %v1502
        %3027 = vmatprep.subr.mxu0 %v1500
        %3028 = vmatpush2.msra.mxu0 %v1499
        %3029 = vmatprep.subr.mxu0 %v1497
        %3030 = vmatpush2.msra.mxu0 %v1496
        %3031 = vmatprep.subr.mxu0 %v1494
        %3032 = vmatpush2.msra.mxu0 %v1493
        %3033 = vmatprep.subr.mxu0 %v1491
        %3034 = vmatpush2.msra.mxu0 %v1490
        %3035 = vmatprep.subr.mxu0 %v1488
        %3036 = vmatpush2.msra.mxu0 %v1487
        %3037 = vmatprep.subr.mxu0 %v1485
        %3038 = vmatpush2.msra.mxu0 %v1484
        %3039 = vmatprep.subr.mxu0 %v1482
        %3040 = vmatpush2.msra.mxu0 %v1481
        %3041 = vmatprep.subr.mxu0 %v1479
        %3042 = vmatpush2.msra.mxu0 %v1478
        %3043 = vmatprep.subr.mxu0 %v1476
        %3044 = vmatpush2.msra.mxu0 %v1475
        %3045 = vmatprep.subr.mxu0 %v1473
        %3046 = vmatpush2.msra.mxu0 %v1472
        %3047 = vmatprep.mubr.f32.mxu0 %v2881
        %3048 = vmatmul.mubr.f32.gmra.mxu0 %v289
        %v3049 = vpop.f32.mrf.mxu0
        %v3050 = vadd.f32 %v2979, %v3049
        %v3051 = vpop.f32.mrf.mxu0
        %v3052 = vadd.f32 %v2981, %v3051
        %3053 = vdwg.mxu0
        %3054 = vmatprep.subr.mxu0 %v1566
        %3055 = vmatpush1.msra.mxu0 %v1565
        %3056 = vmatprep.subr.mxu0 %v1563
        %3057 = vmatpush1.msra.mxu0 %v1562
        %3058 = vmatprep.subr.mxu0 %v1560
        %3059 = vmatpush1.msra.mxu0 %v1559
        %3060 = vmatprep.subr.mxu0 %v1557
        %3061 = vmatpush1.msra.mxu0 %v1556
        %3062 = vmatprep.subr.mxu0 %v1554
        %3063 = vmatpush1.msra.mxu0 %v1553
        %3064 = vmatprep.subr.mxu0 %v1551
        %3065 = vmatpush1.msra.mxu0 %v1550
        %3066 = vmatprep.subr.mxu0 %v1548
        %3067 = vmatpush1.msra.mxu0 %v1547
        %3068 = vmatprep.subr.mxu0 %v1545
        %3069 = vmatpush1.msra.mxu0 %v1544
        %3070 = vmatprep.subr.mxu0 %v1542
        %3071 = vmatpush1.msra.mxu0 %v1541
        %3072 = vmatprep.subr.mxu0 %v1539
        %3073 = vmatpush1.msra.mxu0 %v1538
        %3074 = vmatprep.subr.mxu0 %v1536
        %3075 = vmatpush1.msra.mxu0 %v1535
        %3076 = vmatprep.subr.mxu0 %v1533
        %3077 = vmatpush1.msra.mxu0 %v1532
        %3078 = vmatprep.subr.mxu0 %v1530
        %3079 = vmatpush1.msra.mxu0 %v1529
        %3080 = vmatprep.subr.mxu0 %v1527
        %3081 = vmatpush1.msra.mxu0 %v1526
        %3082 = vmatprep.subr.mxu0 %v1524
        %3083 = vmatpush1.msra.mxu0 %v1523
        %3084 = vmatprep.subr.mxu0 %v1521
        %3085 = vmatpush1.msra.mxu0 %v1520
        %3086 = vmatprep.subr.mxu0 %v1614
        %3087 = vmatpush2.msra.mxu0 %v1613
        %3088 = vmatprep.subr.mxu0 %v1611
        %3089 = vmatpush2.msra.mxu0 %v1610
        %3090 = vmatprep.subr.mxu0 %v1608
        %3091 = vmatpush2.msra.mxu0 %v1607
        %3092 = vmatprep.subr.mxu0 %v1605
        %3093 = vmatpush2.msra.mxu0 %v1604
        %3094 = vmatprep.subr.mxu0 %v1602
        %3095 = vmatpush2.msra.mxu0 %v1601
        %3096 = vmatprep.subr.mxu0 %v1599
        %3097 = vmatpush2.msra.mxu0 %v1598
        %3098 = vmatprep.subr.mxu0 %v1596
        %3099 = vmatpush2.msra.mxu0 %v1595
        %3100 = vmatprep.subr.mxu0 %v1593
        %3101 = vmatpush2.msra.mxu0 %v1592
        %3102 = vmatprep.subr.mxu0 %v1590
        %3103 = vmatpush2.msra.mxu0 %v1589
        %3104 = vmatprep.subr.mxu0 %v1587
        %3105 = vmatpush2.msra.mxu0 %v1586
        %3106 = vmatprep.subr.mxu0 %v1584
        %3107 = vmatpush2.msra.mxu0 %v1583
        %3108 = vmatprep.subr.mxu0 %v1581
        %3109 = vmatpush2.msra.mxu0 %v1580
        %3110 = vmatprep.subr.mxu0 %v1578
        %3111 = vmatpush2.msra.mxu0 %v1577
        %3112 = vmatprep.subr.mxu0 %v1575
        %3113 = vmatpush2.msra.mxu0 %v1574
        %3114 = vmatprep.subr.mxu0 %v1572
        %3115 = vmatpush2.msra.mxu0 %v1571
        %3116 = vmatprep.subr.mxu0 %v1569
        %3117 = vmatpush2.msra.mxu0 %v1568
        %3118 = vmatprep.mubr.f32.mxu0 %v2882
        %3119 = vmatmul.mubr.f32.gmra.mxu0 %v290
        %v3120 = vpop.f32.mrf.mxu0
        %v3121 = vadd.f32 %v3050, %v3120
        %v3122 = vpop.f32.mrf.mxu0
        %v3123 = vadd.f32 %v3052, %v3122
        %3124 = vdwg.mxu0
        %3125 = vmatprep.subr.mxu0 %v1662
        %3126 = vmatpush1.msra.mxu0 %v1661
        %3127 = vmatprep.subr.mxu0 %v1659
        %3128 = vmatpush1.msra.mxu0 %v1658
        %3129 = vmatprep.subr.mxu0 %v1656
        %3130 = vmatpush1.msra.mxu0 %v1655
        %3131 = vmatprep.subr.mxu0 %v1653
        %3132 = vmatpush1.msra.mxu0 %v1652
        %3133 = vmatprep.subr.mxu0 %v1650
        %3134 = vmatpush1.msra.mxu0 %v1649
        %3135 = vmatprep.subr.mxu0 %v1647
        %3136 = vmatpush1.msra.mxu0 %v1646
        %3137 = vmatprep.subr.mxu0 %v1644
        %3138 = vmatpush1.msra.mxu0 %v1643
        %3139 = vmatprep.subr.mxu0 %v1641
        %3140 = vmatpush1.msra.mxu0 %v1640
        %3141 = vmatprep.subr.mxu0 %v1638
        %3142 = vmatpush1.msra.mxu0 %v1637
        %3143 = vmatprep.subr.mxu0 %v1635
        %3144 = vmatpush1.msra.mxu0 %v1634
        %3145 = vmatprep.subr.mxu0 %v1632
        %3146 = vmatpush1.msra.mxu0 %v1631
        %3147 = vmatprep.subr.mxu0 %v1629
        %3148 = vmatpush1.msra.mxu0 %v1628
        %3149 = vmatprep.subr.mxu0 %v1626
        %3150 = vmatpush1.msra.mxu0 %v1625
        %3151 = vmatprep.subr.mxu0 %v1623
        %3152 = vmatpush1.msra.mxu0 %v1622
        %3153 = vmatprep.subr.mxu0 %v1620
        %3154 = vmatpush1.msra.mxu0 %v1619
        %3155 = vmatprep.subr.mxu0 %v1617
        %3156 = vmatpush1.msra.mxu0 %v1616
        %3157 = vmatprep.subr.mxu0 %v1710
        %3158 = vmatpush2.msra.mxu0 %v1709
        %3159 = vmatprep.subr.mxu0 %v1707
        %3160 = vmatpush2.msra.mxu0 %v1706
        %3161 = vmatprep.subr.mxu0 %v1704
        %3162 = vmatpush2.msra.mxu0 %v1703
        %3163 = vmatprep.subr.mxu0 %v1701
        %3164 = vmatpush2.msra.mxu0 %v1700
        %3165 = vmatprep.subr.mxu0 %v1698
        %3166 = vmatpush2.msra.mxu0 %v1697
        %3167 = vmatprep.subr.mxu0 %v1695
        %3168 = vmatpush2.msra.mxu0 %v1694
        %3169 = vmatprep.subr.mxu0 %v1692
        %3170 = vmatpush2.msra.mxu0 %v1691
        %3171 = vmatprep.subr.mxu0 %v1689
        %3172 = vmatpush2.msra.mxu0 %v1688
        %3173 = vmatprep.subr.mxu0 %v1686
        %3174 = vmatpush2.msra.mxu0 %v1685
        %3175 = vmatprep.subr.mxu0 %v1683
        %3176 = vmatpush2.msra.mxu0 %v1682
        %3177 = vmatprep.subr.mxu0 %v1680
        %3178 = vmatpush2.msra.mxu0 %v1679
        %3179 = vmatprep.subr.mxu0 %v1677
        %3180 = vmatpush2.msra.mxu0 %v1676
        %3181 = vmatprep.subr.mxu0 %v1674
        %3182 = vmatpush2.msra.mxu0 %v1673
        %3183 = vmatprep.subr.mxu0 %v1671
        %3184 = vmatpush2.msra.mxu0 %v1670
        %3185 = vmatprep.subr.mxu0 %v1668
        %3186 = vmatpush2.msra.mxu0 %v1667
        %3187 = vmatprep.subr.mxu0 %v1665
        %3188 = vmatpush2.msra.mxu0 %v1664
        %3189 = vmatprep.mubr.f32.mxu0 %v2883
        %3190 = vmatmul.mubr.f32.gmra.mxu0 %v291
        %v3191 = vpop.f32.mrf.mxu0
        %v3192 = vadd.f32 %v3121, %v3191
        %v3193 = vpop.f32.mrf.mxu0
        %v3194 = vadd.f32 %v3123, %v3193
        %3195 = vdwg.mxu0
        %3196 = vmatprep.subr.mxu0 %v1758
        %3197 = vmatpush1.msra.mxu0 %v1757
        %3198 = vmatprep.subr.mxu0 %v1755
        %3199 = vmatpush1.msra.mxu0 %v1754
        %3200 = vmatprep.subr.mxu0 %v1752
        %3201 = vmatpush1.msra.mxu0 %v1751
        %3202 = vmatprep.subr.mxu0 %v1749
        %3203 = vmatpush1.msra.mxu0 %v1748
        %3204 = vmatprep.subr.mxu0 %v1746
        %3205 = vmatpush1.msra.mxu0 %v1745
        %3206 = vmatprep.subr.mxu0 %v1743
        %3207 = vmatpush1.msra.mxu0 %v1742
        %3208 = vmatprep.subr.mxu0 %v1740
        %3209 = vmatpush1.msra.mxu0 %v1739
        %3210 = vmatprep.subr.mxu0 %v1737
        %3211 = vmatpush1.msra.mxu0 %v1736
        %3212 = vmatprep.subr.mxu0 %v1734
        %3213 = vmatpush1.msra.mxu0 %v1733
        %3214 = vmatprep.subr.mxu0 %v1731
        %3215 = vmatpush1.msra.mxu0 %v1730
        %3216 = vmatprep.subr.mxu0 %v1728
        %3217 = vmatpush1.msra.mxu0 %v1727
        %3218 = vmatprep.subr.mxu0 %v1725
        %3219 = vmatpush1.msra.mxu0 %v1724
        %3220 = vmatprep.subr.mxu0 %v1722
        %3221 = vmatpush1.msra.mxu0 %v1721
        %3222 = vmatprep.subr.mxu0 %v1719
        %3223 = vmatpush1.msra.mxu0 %v1718
        %3224 = vmatprep.subr.mxu0 %v1716
        %3225 = vmatpush1.msra.mxu0 %v1715
        %3226 = vmatprep.subr.mxu0 %v1713
        %3227 = vmatpush1.msra.mxu0 %v1712
        %3228 = vmatprep.subr.mxu0 %v1806
        %3229 = vmatpush2.msra.mxu0 %v1805
        %3230 = vmatprep.subr.mxu0 %v1803
        %3231 = vmatpush2.msra.mxu0 %v1802
        %3232 = vmatprep.subr.mxu0 %v1800
        %3233 = vmatpush2.msra.mxu0 %v1799
        %3234 = vmatprep.subr.mxu0 %v1797
        %3235 = vmatpush2.msra.mxu0 %v1796
        %3236 = vmatprep.subr.mxu0 %v1794
        %3237 = vmatpush2.msra.mxu0 %v1793
        %3238 = vmatprep.subr.mxu0 %v1791
        %3239 = vmatpush2.msra.mxu0 %v1790
        %3240 = vmatprep.subr.mxu0 %v1788
        %3241 = vmatpush2.msra.mxu0 %v1787
        %3242 = vmatprep.subr.mxu0 %v1785
        %3243 = vmatpush2.msra.mxu0 %v1784
        %3244 = vmatprep.subr.mxu0 %v1782
        %3245 = vmatpush2.msra.mxu0 %v1781
        %3246 = vmatprep.subr.mxu0 %v1779
        %3247 = vmatpush2.msra.mxu0 %v1778
        %3248 = vmatprep.subr.mxu0 %v1776
        %3249 = vmatpush2.msra.mxu0 %v1775
        %3250 = vmatprep.subr.mxu0 %v1773
        %3251 = vmatpush2.msra.mxu0 %v1772
        %3252 = vmatprep.subr.mxu0 %v1770
        %3253 = vmatpush2.msra.mxu0 %v1769
        %3254 = vmatprep.subr.mxu0 %v1767
        %3255 = vmatpush2.msra.mxu0 %v1766
        %3256 = vmatprep.subr.mxu0 %v1764
        %3257 = vmatpush2.msra.mxu0 %v1763
        %3258 = vmatprep.subr.mxu0 %v1761
        %3259 = vmatpush2.msra.mxu0 %v1760
        %3260 = vmatprep.mubr.f32.mxu0 %v2884
        %3261 = vmatmul.mubr.f32.gmra.mxu0 %v292
        %v3262 = vpop.f32.mrf.mxu0
        %v3263 = vadd.f32 %v3192, %v3262
        %v3264 = vpop.f32.mrf.mxu0
        %v3265 = vadd.f32 %v3194, %v3264
        %3266 = vdwg.mxu0
        %3267 = vmatprep.subr.mxu0 %v1854
        %3268 = vmatpush1.msra.mxu0 %v1853
        %3269 = vmatprep.subr.mxu0 %v1851
        %3270 = vmatpush1.msra.mxu0 %v1850
        %3271 = vmatprep.subr.mxu0 %v1848
        %3272 = vmatpush1.msra.mxu0 %v1847
        %3273 = vmatprep.subr.mxu0 %v1845
        %3274 = vmatpush1.msra.mxu0 %v1844
        %3275 = vmatprep.subr.mxu0 %v1842
        %3276 = vmatpush1.msra.mxu0 %v1841
        %3277 = vmatprep.subr.mxu0 %v1839
        %3278 = vmatpush1.msra.mxu0 %v1838
        %3279 = vmatprep.subr.mxu0 %v1836
        %3280 = vmatpush1.msra.mxu0 %v1835
        %3281 = vmatprep.subr.mxu0 %v1833
        %3282 = vmatpush1.msra.mxu0 %v1832
        %3283 = vmatprep.subr.mxu0 %v1830
        %3284 = vmatpush1.msra.mxu0 %v1829
        %3285 = vmatprep.subr.mxu0 %v1827
        %3286 = vmatpush1.msra.mxu0 %v1826
        %3287 = vmatprep.subr.mxu0 %v1824
        %3288 = vmatpush1.msra.mxu0 %v1823
        %3289 = vmatprep.subr.mxu0 %v1821
        %3290 = vmatpush1.msra.mxu0 %v1820
        %3291 = vmatprep.subr.mxu0 %v1818
        %3292 = vmatpush1.msra.mxu0 %v1817
        %3293 = vmatprep.subr.mxu0 %v1815
        %3294 = vmatpush1.msra.mxu0 %v1814
        %3295 = vmatprep.subr.mxu0 %v1812
        %3296 = vmatpush1.msra.mxu0 %v1811
        %3297 = vmatprep.subr.mxu0 %v1809
        %3298 = vmatpush1.msra.mxu0 %v1808
        %3299 = vmatprep.subr.mxu0 %v1902
        %3300 = vmatpush2.msra.mxu0 %v1901
        %3301 = vmatprep.subr.mxu0 %v1899
        %3302 = vmatpush2.msra.mxu0 %v1898
        %3303 = vmatprep.subr.mxu0 %v1896
        %3304 = vmatpush2.msra.mxu0 %v1895
        %3305 = vmatprep.subr.mxu0 %v1893
        %3306 = vmatpush2.msra.mxu0 %v1892
        %3307 = vmatprep.subr.mxu0 %v1890
        %3308 = vmatpush2.msra.mxu0 %v1889
        %3309 = vmatprep.subr.mxu0 %v1887
        %3310 = vmatpush2.msra.mxu0 %v1886
        %3311 = vmatprep.subr.mxu0 %v1884
        %3312 = vmatpush2.msra.mxu0 %v1883
        %3313 = vmatprep.subr.mxu0 %v1881
        %3314 = vmatpush2.msra.mxu0 %v1880
        %3315 = vmatprep.subr.mxu0 %v1878
        %3316 = vmatpush2.msra.mxu0 %v1877
        %3317 = vmatprep.subr.mxu0 %v1875
        %3318 = vmatpush2.msra.mxu0 %v1874
        %3319 = vmatprep.subr.mxu0 %v1872
        %3320 = vmatpush2.msra.mxu0 %v1871
        %3321 = vmatprep.subr.mxu0 %v1869
        %3322 = vmatpush2.msra.mxu0 %v1868
        %3323 = vmatprep.subr.mxu0 %v1866
        %3324 = vmatpush2.msra.mxu0 %v1865
        %3325 = vmatprep.subr.mxu0 %v1863
        %3326 = vmatpush2.msra.mxu0 %v1862
        %3327 = vmatprep.subr.mxu0 %v1860
        %3328 = vmatpush2.msra.mxu0 %v1859
        %3329 = vmatprep.subr.mxu0 %v1857
        %3330 = vmatpush2.msra.mxu0 %v1856
        %3331 = vmatprep.mubr.f32.mxu0 %v2885
        %3332 = vmatmul.mubr.f32.gmra.mxu0 %v293
        %v3333 = vpop.f32.mrf.mxu0
        %v3334 = vadd.f32 %v3263, %v3333
        %v3335 = vpop.f32.mrf.mxu0
        %v3336 = vadd.f32 %v3265, %v3335
        %3337 = vdwg.mxu0
        %3338 = vmatprep.subr.mxu0 %v1950
        %3339 = vmatpush1.msra.mxu0 %v1949
        %3340 = vmatprep.subr.mxu0 %v1947
        %3341 = vmatpush1.msra.mxu0 %v1946
        %3342 = vmatprep.subr.mxu0 %v1944
        %3343 = vmatpush1.msra.mxu0 %v1943
        %3344 = vmatprep.subr.mxu0 %v1941
        %3345 = vmatpush1.msra.mxu0 %v1940
        %3346 = vmatprep.subr.mxu0 %v1938
        %3347 = vmatpush1.msra.mxu0 %v1937
        %3348 = vmatprep.subr.mxu0 %v1935
        %3349 = vmatpush1.msra.mxu0 %v1934
        %3350 = vmatprep.subr.mxu0 %v1932
        %3351 = vmatpush1.msra.mxu0 %v1931
        %3352 = vmatprep.subr.mxu0 %v1929
        %3353 = vmatpush1.msra.mxu0 %v1928
        %3354 = vmatprep.subr.mxu0 %v1926
        %3355 = vmatpush1.msra.mxu0 %v1925
        %3356 = vmatprep.subr.mxu0 %v1923
        %3357 = vmatpush1.msra.mxu0 %v1922
        %3358 = vmatprep.subr.mxu0 %v1920
        %3359 = vmatpush1.msra.mxu0 %v1919
        %3360 = vmatprep.subr.mxu0 %v1917
        %3361 = vmatpush1.msra.mxu0 %v1916
        %3362 = vmatprep.subr.mxu0 %v1914
        %3363 = vmatpush1.msra.mxu0 %v1913
        %3364 = vmatprep.subr.mxu0 %v1911
        %3365 = vmatpush1.msra.mxu0 %v1910
        %3366 = vmatprep.subr.mxu0 %v1908
        %3367 = vmatpush1.msra.mxu0 %v1907
        %3368 = vmatprep.subr.mxu0 %v1905
        %3369 = vmatpush1.msra.mxu0 %v1904
        %3370 = vmatprep.subr.mxu0 %v1998
        %3371 = vmatpush2.msra.mxu0 %v1997
        %3372 = vmatprep.subr.mxu0 %v1995
        %3373 = vmatpush2.msra.mxu0 %v1994
        %3374 = vmatprep.subr.mxu0 %v1992
        %3375 = vmatpush2.msra.mxu0 %v1991
        %3376 = vmatprep.subr.mxu0 %v1989
        %3377 = vmatpush2.msra.mxu0 %v1988
        %3378 = vmatprep.subr.mxu0 %v1986
        %3379 = vmatpush2.msra.mxu0 %v1985
        %3380 = vmatprep.subr.mxu0 %v1983
        %3381 = vmatpush2.msra.mxu0 %v1982
        %3382 = vmatprep.subr.mxu0 %v1980
        %3383 = vmatpush2.msra.mxu0 %v1979
        %3384 = vmatprep.subr.mxu0 %v1977
        %3385 = vmatpush2.msra.mxu0 %v1976
        %3386 = vmatprep.subr.mxu0 %v1974
        %3387 = vmatpush2.msra.mxu0 %v1973
        %3388 = vmatprep.subr.mxu0 %v1971
        %3389 = vmatpush2.msra.mxu0 %v1970
        %3390 = vmatprep.subr.mxu0 %v1968
        %3391 = vmatpush2.msra.mxu0 %v1967
        %3392 = vmatprep.subr.mxu0 %v1965
        %3393 = vmatpush2.msra.mxu0 %v1964
        %3394 = vmatprep.subr.mxu0 %v1962
        %3395 = vmatpush2.msra.mxu0 %v1961
        %3396 = vmatprep.subr.mxu0 %v1959
        %3397 = vmatpush2.msra.mxu0 %v1958
        %3398 = vmatprep.subr.mxu0 %v1956
        %3399 = vmatpush2.msra.mxu0 %v1955
        %3400 = vmatprep.subr.mxu0 %v1953
        %3401 = vmatpush2.msra.mxu0 %v1952
        %3402 = vmatprep.mubr.f32.mxu0 %v2886
        %3403 = vmatmul.mubr.f32.gmra.mxu0 %v294
        %v3404 = vpop.f32.mrf.mxu0
        %v3405 = vadd.f32 %v3334, %v3404
        %v3406 = vpop.f32.mrf.mxu0
        %v3407 = vadd.f32 %v3336, %v3406
        %3408 = vdwg.mxu0
        %3409 = vmatprep.subr.mxu0 %v2046
        %3410 = vmatpush1.msra.mxu0 %v2045
        %3411 = vmatprep.subr.mxu0 %v2043
        %3412 = vmatpush1.msra.mxu0 %v2042
        %3413 = vmatprep.subr.mxu0 %v2040
        %3414 = vmatpush1.msra.mxu0 %v2039
        %3415 = vmatprep.subr.mxu0 %v2037
        %3416 = vmatpush1.msra.mxu0 %v2036
        %3417 = vmatprep.subr.mxu0 %v2034
        %3418 = vmatpush1.msra.mxu0 %v2033
        %3419 = vmatprep.subr.mxu0 %v2031
        %3420 = vmatpush1.msra.mxu0 %v2030
        %3421 = vmatprep.subr.mxu0 %v2028
        %3422 = vmatpush1.msra.mxu0 %v2027
        %3423 = vmatprep.subr.mxu0 %v2025
        %3424 = vmatpush1.msra.mxu0 %v2024
        %3425 = vmatprep.subr.mxu0 %v2022
        %3426 = vmatpush1.msra.mxu0 %v2021
        %3427 = vmatprep.subr.mxu0 %v2019
        %3428 = vmatpush1.msra.mxu0 %v2018
        %3429 = vmatprep.subr.mxu0 %v2016
        %3430 = vmatpush1.msra.mxu0 %v2015
        %3431 = vmatprep.subr.mxu0 %v2013
        %3432 = vmatpush1.msra.mxu0 %v2012
        %3433 = vmatprep.subr.mxu0 %v2010
        %3434 = vmatpush1.msra.mxu0 %v2009
        %3435 = vmatprep.subr.mxu0 %v2007
        %3436 = vmatpush1.msra.mxu0 %v2006
        %3437 = vmatprep.subr.mxu0 %v2004
        %3438 = vmatpush1.msra.mxu0 %v2003
        %3439 = vmatprep.subr.mxu0 %v2001
        %3440 = vmatpush1.msra.mxu0 %v2000
        %3441 = vmatprep.subr.mxu0 %v2094
        %3442 = vmatpush2.msra.mxu0 %v2093
        %3443 = vmatprep.subr.mxu0 %v2091
        %3444 = vmatpush2.msra.mxu0 %v2090
        %3445 = vmatprep.subr.mxu0 %v2088
        %3446 = vmatpush2.msra.mxu0 %v2087
        %3447 = vmatprep.subr.mxu0 %v2085
        %3448 = vmatpush2.msra.mxu0 %v2084
        %3449 = vmatprep.subr.mxu0 %v2082
        %3450 = vmatpush2.msra.mxu0 %v2081
        %3451 = vmatprep.subr.mxu0 %v2079
        %3452 = vmatpush2.msra.mxu0 %v2078
        %3453 = vmatprep.subr.mxu0 %v2076
        %3454 = vmatpush2.msra.mxu0 %v2075
        %3455 = vmatprep.subr.mxu0 %v2073
        %3456 = vmatpush2.msra.mxu0 %v2072
        %3457 = vmatprep.subr.mxu0 %v2070
        %3458 = vmatpush2.msra.mxu0 %v2069
        %3459 = vmatprep.subr.mxu0 %v2067
        %3460 = vmatpush2.msra.mxu0 %v2066
        %3461 = vmatprep.subr.mxu0 %v2064
        %3462 = vmatpush2.msra.mxu0 %v2063
        %3463 = vmatprep.subr.mxu0 %v2061
        %3464 = vmatpush2.msra.mxu0 %v2060
        %3465 = vmatprep.subr.mxu0 %v2058
        %3466 = vmatpush2.msra.mxu0 %v2057
        %3467 = vmatprep.subr.mxu0 %v2055
        %3468 = vmatpush2.msra.mxu0 %v2054
        %3469 = vmatprep.subr.mxu0 %v2052
        %3470 = vmatpush2.msra.mxu0 %v2051
        %3471 = vmatprep.subr.mxu0 %v2049
        %3472 = vmatpush2.msra.mxu0 %v2048
        %3473 = vmatprep.mubr.f32.mxu0 %v2887
        %3474 = vmatmul.mubr.f32.gmra.mxu0 %v295
        %v3475 = vpop.f32.mrf.mxu0
        %v3476 = vadd.f32 %v3405, %v3475
        %v3477 = vpop.f32.mrf.mxu0
        %v3478 = vadd.f32 %v3407, %v3477
        %3479 = vdwg.mxu0
        %3480 = vmatprep.subr.mxu0 %v2142
        %3481 = vmatpush1.msra.mxu0 %v2141
        %3482 = vmatprep.subr.mxu0 %v2139
        %3483 = vmatpush1.msra.mxu0 %v2138
        %3484 = vmatprep.subr.mxu0 %v2136
        %3485 = vmatpush1.msra.mxu0 %v2135
        %3486 = vmatprep.subr.mxu0 %v2133
        %3487 = vmatpush1.msra.mxu0 %v2132
        %3488 = vmatprep.subr.mxu0 %v2130
        %3489 = vmatpush1.msra.mxu0 %v2129
        %3490 = vmatprep.subr.mxu0 %v2127
        %3491 = vmatpush1.msra.mxu0 %v2126
        %3492 = vmatprep.subr.mxu0 %v2124
        %3493 = vmatpush1.msra.mxu0 %v2123
        %3494 = vmatprep.subr.mxu0 %v2121
        %3495 = vmatpush1.msra.mxu0 %v2120
        %3496 = vmatprep.subr.mxu0 %v2118
        %3497 = vmatpush1.msra.mxu0 %v2117
        %3498 = vmatprep.subr.mxu0 %v2115
        %3499 = vmatpush1.msra.mxu0 %v2114
        %3500 = vmatprep.subr.mxu0 %v2112
        %3501 = vmatpush1.msra.mxu0 %v2111
        %3502 = vmatprep.subr.mxu0 %v2109
        %3503 = vmatpush1.msra.mxu0 %v2108
        %3504 = vmatprep.subr.mxu0 %v2106
        %3505 = vmatpush1.msra.mxu0 %v2105
        %3506 = vmatprep.subr.mxu0 %v2103
        %3507 = vmatpush1.msra.mxu0 %v2102
        %3508 = vmatprep.subr.mxu0 %v2100
        %3509 = vmatpush1.msra.mxu0 %v2099
        %3510 = vmatprep.subr.mxu0 %v2097
        %3511 = vmatpush1.msra.mxu0 %v2096
        %3512 = vmatprep.subr.mxu0 %v2190
        %3513 = vmatpush2.msra.mxu0 %v2189
        %3514 = vmatprep.subr.mxu0 %v2187
        %3515 = vmatpush2.msra.mxu0 %v2186
        %3516 = vmatprep.subr.mxu0 %v2184
        %3517 = vmatpush2.msra.mxu0 %v2183
        %3518 = vmatprep.subr.mxu0 %v2181
        %3519 = vmatpush2.msra.mxu0 %v2180
        %3520 = vmatprep.subr.mxu0 %v2178
        %3521 = vmatpush2.msra.mxu0 %v2177
        %3522 = vmatprep.subr.mxu0 %v2175
        %3523 = vmatpush2.msra.mxu0 %v2174
        %3524 = vmatprep.subr.mxu0 %v2172
        %3525 = vmatpush2.msra.mxu0 %v2171
        %3526 = vmatprep.subr.mxu0 %v2169
        %3527 = vmatpush2.msra.mxu0 %v2168
        %3528 = vmatprep.subr.mxu0 %v2166
        %3529 = vmatpush2.msra.mxu0 %v2165
        %3530 = vmatprep.subr.mxu0 %v2163
        %3531 = vmatpush2.msra.mxu0 %v2162
        %3532 = vmatprep.subr.mxu0 %v2160
        %3533 = vmatpush2.msra.mxu0 %v2159
        %3534 = vmatprep.subr.mxu0 %v2157
        %3535 = vmatpush2.msra.mxu0 %v2156
        %3536 = vmatprep.subr.mxu0 %v2154
        %3537 = vmatpush2.msra.mxu0 %v2153
        %3538 = vmatprep.subr.mxu0 %v2151
        %3539 = vmatpush2.msra.mxu0 %v2150
        %3540 = vmatprep.subr.mxu0 %v2148
        %3541 = vmatpush2.msra.mxu0 %v2147
        %3542 = vmatprep.subr.mxu0 %v2145
        %3543 = vmatpush2.msra.mxu0 %v2144
        %3544 = vmatprep.mubr.f32.mxu0 %v2888
        %3545 = vmatmul.mubr.f32.gmra.mxu0 %v296
        %v3546 = vpop.f32.mrf.mxu0
        %v3547 = vadd.f32 %v3476, %v3546
        %v3548 = vpop.f32.mrf.mxu0
        %v3549 = vadd.f32 %v3478, %v3548
        %3550 = vdwg.mxu0
        %3551 = vmatprep.subr.mxu0 %v2238
        %3552 = vmatpush1.msra.mxu0 %v2237
        %3553 = vmatprep.subr.mxu0 %v2235
        %3554 = vmatpush1.msra.mxu0 %v2234
        %3555 = vmatprep.subr.mxu0 %v2232
        %3556 = vmatpush1.msra.mxu0 %v2231
        %3557 = vmatprep.subr.mxu0 %v2229
        %3558 = vmatpush1.msra.mxu0 %v2228
        %3559 = vmatprep.subr.mxu0 %v2226
        %3560 = vmatpush1.msra.mxu0 %v2225
        %3561 = vmatprep.subr.mxu0 %v2223
        %3562 = vmatpush1.msra.mxu0 %v2222
        %3563 = vmatprep.subr.mxu0 %v2220
        %3564 = vmatpush1.msra.mxu0 %v2219
        %3565 = vmatprep.subr.mxu0 %v2217
        %3566 = vmatpush1.msra.mxu0 %v2216
        %3567 = vmatprep.subr.mxu0 %v2214
        %3568 = vmatpush1.msra.mxu0 %v2213
        %3569 = vmatprep.subr.mxu0 %v2211
        %3570 = vmatpush1.msra.mxu0 %v2210
        %3571 = vmatprep.subr.mxu0 %v2208
        %3572 = vmatpush1.msra.mxu0 %v2207
        %3573 = vmatprep.subr.mxu0 %v2205
        %3574 = vmatpush1.msra.mxu0 %v2204
        %3575 = vmatprep.subr.mxu0 %v2202
        %3576 = vmatpush1.msra.mxu0 %v2201
        %3577 = vmatprep.subr.mxu0 %v2199
        %3578 = vmatpush1.msra.mxu0 %v2198
        %3579 = vmatprep.subr.mxu0 %v2196
        %3580 = vmatpush1.msra.mxu0 %v2195
        %3581 = vmatprep.subr.mxu0 %v2193
        %3582 = vmatpush1.msra.mxu0 %v2192
        %3583 = vmatprep.subr.mxu0 %v2286
        %3584 = vmatpush2.msra.mxu0 %v2285
        %3585 = vmatprep.subr.mxu0 %v2283
        %3586 = vmatpush2.msra.mxu0 %v2282
        %3587 = vmatprep.subr.mxu0 %v2280
        %3588 = vmatpush2.msra.mxu0 %v2279
        %3589 = vmatprep.subr.mxu0 %v2277
        %3590 = vmatpush2.msra.mxu0 %v2276
        %3591 = vmatprep.subr.mxu0 %v2274
        %3592 = vmatpush2.msra.mxu0 %v2273
        %3593 = vmatprep.subr.mxu0 %v2271
        %3594 = vmatpush2.msra.mxu0 %v2270
        %3595 = vmatprep.subr.mxu0 %v2268
        %3596 = vmatpush2.msra.mxu0 %v2267
        %3597 = vmatprep.subr.mxu0 %v2265
        %3598 = vmatpush2.msra.mxu0 %v2264
        %3599 = vmatprep.subr.mxu0 %v2262
        %3600 = vmatpush2.msra.mxu0 %v2261
        %3601 = vmatprep.subr.mxu0 %v2259
        %3602 = vmatpush2.msra.mxu0 %v2258
        %3603 = vmatprep.subr.mxu0 %v2256
        %3604 = vmatpush2.msra.mxu0 %v2255
        %3605 = vmatprep.subr.mxu0 %v2253
        %3606 = vmatpush2.msra.mxu0 %v2252
        %3607 = vmatprep.subr.mxu0 %v2250
        %3608 = vmatpush2.msra.mxu0 %v2249
        %3609 = vmatprep.subr.mxu0 %v2247
        %3610 = vmatpush2.msra.mxu0 %v2246
        %3611 = vmatprep.subr.mxu0 %v2244
        %3612 = vmatpush2.msra.mxu0 %v2243
        %3613 = vmatprep.subr.mxu0 %v2241
        %3614 = vmatpush2.msra.mxu0 %v2240
        %3615 = vmatprep.mubr.f32.mxu0 %v2889
        %3616 = vmatmul.mubr.f32.gmra.mxu0 %v297
        %v3617 = vpop.f32.mrf.mxu0
        %v3618 = vadd.f32 %v3547, %v3617
        %v3619 = vpop.f32.mrf.mxu0
        %v3620 = vadd.f32 %v3549, %v3619
        %3621 = vdwg.mxu0
        %3622 = vmatprep.subr.mxu0 %v2334
        %3623 = vmatpush1.msra.mxu0 %v2333
        %3624 = vmatprep.subr.mxu0 %v2331
        %3625 = vmatpush1.msra.mxu0 %v2330
        %3626 = vmatprep.subr.mxu0 %v2328
        %3627 = vmatpush1.msra.mxu0 %v2327
        %3628 = vmatprep.subr.mxu0 %v2325
        %3629 = vmatpush1.msra.mxu0 %v2324
        %3630 = vmatprep.subr.mxu0 %v2322
        %3631 = vmatpush1.msra.mxu0 %v2321
        %3632 = vmatprep.subr.mxu0 %v2319
        %3633 = vmatpush1.msra.mxu0 %v2318
        %3634 = vmatprep.subr.mxu0 %v2316
        %3635 = vmatpush1.msra.mxu0 %v2315
        %3636 = vmatprep.subr.mxu0 %v2313
        %3637 = vmatpush1.msra.mxu0 %v2312
        %3638 = vmatprep.subr.mxu0 %v2310
        %3639 = vmatpush1.msra.mxu0 %v2309
        %3640 = vmatprep.subr.mxu0 %v2307
        %3641 = vmatpush1.msra.mxu0 %v2306
        %3642 = vmatprep.subr.mxu0 %v2304
        %3643 = vmatpush1.msra.mxu0 %v2303
        %3644 = vmatprep.subr.mxu0 %v2301
        %3645 = vmatpush1.msra.mxu0 %v2300
        %3646 = vmatprep.subr.mxu0 %v2298
        %3647 = vmatpush1.msra.mxu0 %v2297
        %3648 = vmatprep.subr.mxu0 %v2295
        %3649 = vmatpush1.msra.mxu0 %v2294
        %3650 = vmatprep.subr.mxu0 %v2292
        %3651 = vmatpush1.msra.mxu0 %v2291
        %3652 = vmatprep.subr.mxu0 %v2289
        %3653 = vmatpush1.msra.mxu0 %v2288
        %3654 = vmatprep.subr.mxu0 %v2382
        %3655 = vmatpush2.msra.mxu0 %v2381
        %3656 = vmatprep.subr.mxu0 %v2379
        %3657 = vmatpush2.msra.mxu0 %v2378
        %3658 = vmatprep.subr.mxu0 %v2376
        %3659 = vmatpush2.msra.mxu0 %v2375
        %3660 = vmatprep.subr.mxu0 %v2373
        %3661 = vmatpush2.msra.mxu0 %v2372
        %3662 = vmatprep.subr.mxu0 %v2370
        %3663 = vmatpush2.msra.mxu0 %v2369
        %3664 = vmatprep.subr.mxu0 %v2367
        %3665 = vmatpush2.msra.mxu0 %v2366
        %3666 = vmatprep.subr.mxu0 %v2364
        %3667 = vmatpush2.msra.mxu0 %v2363
        %3668 = vmatprep.subr.mxu0 %v2361
        %3669 = vmatpush2.msra.mxu0 %v2360
        %3670 = vmatprep.subr.mxu0 %v2358
        %3671 = vmatpush2.msra.mxu0 %v2357
        %3672 = vmatprep.subr.mxu0 %v2355
        %3673 = vmatpush2.msra.mxu0 %v2354
        %3674 = vmatprep.subr.mxu0 %v2352
        %3675 = vmatpush2.msra.mxu0 %v2351
        %3676 = vmatprep.subr.mxu0 %v2349
        %3677 = vmatpush2.msra.mxu0 %v2348
        %3678 = vmatprep.subr.mxu0 %v2346
        %3679 = vmatpush2.msra.mxu0 %v2345
        %3680 = vmatprep.subr.mxu0 %v2343
        %3681 = vmatpush2.msra.mxu0 %v2342
        %3682 = vmatprep.subr.mxu0 %v2340
        %3683 = vmatpush2.msra.mxu0 %v2339
        %3684 = vmatprep.subr.mxu0 %v2337
        %3685 = vmatpush2.msra.mxu0 %v2336
        %3686 = vmatprep.mubr.f32.mxu0 %v2890
        %3687 = vmatmul.mubr.f32.gmra.mxu0 %v298
        %v3688 = vpop.f32.mrf.mxu0
        %v3689 = vadd.f32 %v3618, %v3688
        %v3690 = vpop.f32.mrf.mxu0
        %v3691 = vadd.f32 %v3620, %v3690
        %3692 = vdwg.mxu0
        %3693 = vmatprep.subr.mxu0 %v2430
        %3694 = vmatpush1.msra.mxu0 %v2429
        %3695 = vmatprep.subr.mxu0 %v2427
        %3696 = vmatpush1.msra.mxu0 %v2426
        %3697 = vmatprep.subr.mxu0 %v2424
        %3698 = vmatpush1.msra.mxu0 %v2423
        %3699 = vmatprep.subr.mxu0 %v2421
        %3700 = vmatpush1.msra.mxu0 %v2420
        %3701 = vmatprep.subr.mxu0 %v2418
        %3702 = vmatpush1.msra.mxu0 %v2417
        %3703 = vmatprep.subr.mxu0 %v2415
        %3704 = vmatpush1.msra.mxu0 %v2414
        %3705 = vmatprep.subr.mxu0 %v2412
        %3706 = vmatpush1.msra.mxu0 %v2411
        %3707 = vmatprep.subr.mxu0 %v2409
        %3708 = vmatpush1.msra.mxu0 %v2408
        %3709 = vmatprep.subr.mxu0 %v2406
        %3710 = vmatpush1.msra.mxu0 %v2405
        %3711 = vmatprep.subr.mxu0 %v2403
        %3712 = vmatpush1.msra.mxu0 %v2402
        %3713 = vmatprep.subr.mxu0 %v2400
        %3714 = vmatpush1.msra.mxu0 %v2399
        %3715 = vmatprep.subr.mxu0 %v2397
        %3716 = vmatpush1.msra.mxu0 %v2396
        %3717 = vmatprep.subr.mxu0 %v2394
        %3718 = vmatpush1.msra.mxu0 %v2393
        %3719 = vmatprep.subr.mxu0 %v2391
        %3720 = vmatpush1.msra.mxu0 %v2390
        %3721 = vmatprep.subr.mxu0 %v2388
        %3722 = vmatpush1.msra.mxu0 %v2387
        %3723 = vmatprep.subr.mxu0 %v2385
        %3724 = vmatpush1.msra.mxu0 %v2384
        %3725 = vmatprep.subr.mxu0 %v2478
        %3726 = vmatpush2.msra.mxu0 %v2477
        %3727 = vmatprep.subr.mxu0 %v2475
        %3728 = vmatpush2.msra.mxu0 %v2474
        %3729 = vmatprep.subr.mxu0 %v2472
        %3730 = vmatpush2.msra.mxu0 %v2471
        %3731 = vmatprep.subr.mxu0 %v2469
        %3732 = vmatpush2.msra.mxu0 %v2468
        %3733 = vmatprep.subr.mxu0 %v2466
        %3734 = vmatpush2.msra.mxu0 %v2465
        %3735 = vmatprep.subr.mxu0 %v2463
        %3736 = vmatpush2.msra.mxu0 %v2462
        %3737 = vmatprep.subr.mxu0 %v2460
        %3738 = vmatpush2.msra.mxu0 %v2459
        %3739 = vmatprep.subr.mxu0 %v2457
        %3740 = vmatpush2.msra.mxu0 %v2456
        %3741 = vmatprep.subr.mxu0 %v2454
        %3742 = vmatpush2.msra.mxu0 %v2453
        %3743 = vmatprep.subr.mxu0 %v2451
        %3744 = vmatpush2.msra.mxu0 %v2450
        %3745 = vmatprep.subr.mxu0 %v2448
        %3746 = vmatpush2.msra.mxu0 %v2447
        %3747 = vmatprep.subr.mxu0 %v2445
        %3748 = vmatpush2.msra.mxu0 %v2444
        %3749 = vmatprep.subr.mxu0 %v2442
        %3750 = vmatpush2.msra.mxu0 %v2441
        %3751 = vmatprep.subr.mxu0 %v2439
        %3752 = vmatpush2.msra.mxu0 %v2438
        %3753 = vmatprep.subr.mxu0 %v2436
        %3754 = vmatpush2.msra.mxu0 %v2435
        %3755 = vmatprep.subr.mxu0 %v2433
        %3756 = vmatpush2.msra.mxu0 %v2432
        %3757 = vmatprep.mubr.f32.mxu0 %v2891
        %3758 = vmatmul.mubr.f32.gmra.mxu0 %v299
        %v3759 = vpop.f32.mrf.mxu0
        %v3760 = vadd.f32 %v3689, %v3759
        %v3761 = vpop.f32.mrf.mxu0
        %v3762 = vadd.f32 %v3691, %v3761
        %3763 = vdwg.mxu0
        %3764 = vmatprep.subr.mxu0 %v2526
        %3765 = vmatpush1.msra.mxu0 %v2525
        %3766 = vmatprep.subr.mxu0 %v2523
        %3767 = vmatpush1.msra.mxu0 %v2522
        %3768 = vmatprep.subr.mxu0 %v2520
        %3769 = vmatpush1.msra.mxu0 %v2519
        %3770 = vmatprep.subr.mxu0 %v2517
        %3771 = vmatpush1.msra.mxu0 %v2516
        %3772 = vmatprep.subr.mxu0 %v2514
        %3773 = vmatpush1.msra.mxu0 %v2513
        %3774 = vmatprep.subr.mxu0 %v2511
        %3775 = vmatpush1.msra.mxu0 %v2510
        %3776 = vmatprep.subr.mxu0 %v2508
        %3777 = vmatpush1.msra.mxu0 %v2507
        %3778 = vmatprep.subr.mxu0 %v2505
        %3779 = vmatpush1.msra.mxu0 %v2504
        %3780 = vmatprep.subr.mxu0 %v2502
        %3781 = vmatpush1.msra.mxu0 %v2501
        %3782 = vmatprep.subr.mxu0 %v2499
        %3783 = vmatpush1.msra.mxu0 %v2498
        %3784 = vmatprep.subr.mxu0 %v2496
        %3785 = vmatpush1.msra.mxu0 %v2495
        %3786 = vmatprep.subr.mxu0 %v2493
        %3787 = vmatpush1.msra.mxu0 %v2492
        %3788 = vmatprep.subr.mxu0 %v2490
        %3789 = vmatpush1.msra.mxu0 %v2489
        %3790 = vmatprep.subr.mxu0 %v2487
        %3791 = vmatpush1.msra.mxu0 %v2486
        %3792 = vmatprep.subr.mxu0 %v2484
        %3793 = vmatpush1.msra.mxu0 %v2483
        %3794 = vmatprep.subr.mxu0 %v2481
        %3795 = vmatpush1.msra.mxu0 %v2480
        %3796 = vmatprep.subr.mxu0 %v2574
        %3797 = vmatpush2.msra.mxu0 %v2573
        %3798 = vmatprep.subr.mxu0 %v2571
        %3799 = vmatpush2.msra.mxu0 %v2570
        %3800 = vmatprep.subr.mxu0 %v2568
        %3801 = vmatpush2.msra.mxu0 %v2567
        %3802 = vmatprep.subr.mxu0 %v2565
        %3803 = vmatpush2.msra.mxu0 %v2564
        %3804 = vmatprep.subr.mxu0 %v2562
        %3805 = vmatpush2.msra.mxu0 %v2561
        %3806 = vmatprep.subr.mxu0 %v2559
        %3807 = vmatpush2.msra.mxu0 %v2558
        %3808 = vmatprep.subr.mxu0 %v2556
        %3809 = vmatpush2.msra.mxu0 %v2555
        %3810 = vmatprep.subr.mxu0 %v2553
        %3811 = vmatpush2.msra.mxu0 %v2552
        %3812 = vmatprep.subr.mxu0 %v2550
        %3813 = vmatpush2.msra.mxu0 %v2549
        %3814 = vmatprep.subr.mxu0 %v2547
        %3815 = vmatpush2.msra.mxu0 %v2546
        %3816 = vmatprep.subr.mxu0 %v2544
        %3817 = vmatpush2.msra.mxu0 %v2543
        %3818 = vmatprep.subr.mxu0 %v2541
        %3819 = vmatpush2.msra.mxu0 %v2540
        %3820 = vmatprep.subr.mxu0 %v2538
        %3821 = vmatpush2.msra.mxu0 %v2537
        %3822 = vmatprep.subr.mxu0 %v2535
        %3823 = vmatpush2.msra.mxu0 %v2534
        %3824 = vmatprep.subr.mxu0 %v2532
        %3825 = vmatpush2.msra.mxu0 %v2531
        %3826 = vmatprep.subr.mxu0 %v2529
        %3827 = vmatpush2.msra.mxu0 %v2528
        %3828 = vmatprep.mubr.f32.mxu0 %v2892
        %3829 = vmatmul.mubr.f32.gmra.mxu0 %v300
        %v3830 = vpop.f32.mrf.mxu0
        %v3831 = vadd.f32 %v3760, %v3830
        %v3832 = vpop.f32.mrf.mxu0
        %v3833 = vadd.f32 %v3762, %v3832
        %3834 = vdwg.mxu0
        %3835 = vmatprep.subr.mxu0 %v2622
        %3836 = vmatpush1.msra.mxu0 %v2621
        %3837 = vmatprep.subr.mxu0 %v2619
        %3838 = vmatpush1.msra.mxu0 %v2618
        %3839 = vmatprep.subr.mxu0 %v2616
        %3840 = vmatpush1.msra.mxu0 %v2615
        %3841 = vmatprep.subr.mxu0 %v2613
        %3842 = vmatpush1.msra.mxu0 %v2612
        %3843 = vmatprep.subr.mxu0 %v2610
        %3844 = vmatpush1.msra.mxu0 %v2609
        %3845 = vmatprep.subr.mxu0 %v2607
        %3846 = vmatpush1.msra.mxu0 %v2606
        %3847 = vmatprep.subr.mxu0 %v2604
        %3848 = vmatpush1.msra.mxu0 %v2603
        %3849 = vmatprep.subr.mxu0 %v2601
        %3850 = vmatpush1.msra.mxu0 %v2600
        %3851 = vmatprep.subr.mxu0 %v2598
        %3852 = vmatpush1.msra.mxu0 %v2597
        %3853 = vmatprep.subr.mxu0 %v2595
        %3854 = vmatpush1.msra.mxu0 %v2594
        %3855 = vmatprep.subr.mxu0 %v2592
        %3856 = vmatpush1.msra.mxu0 %v2591
        %3857 = vmatprep.subr.mxu0 %v2589
        %3858 = vmatpush1.msra.mxu0 %v2588
        %3859 = vmatprep.subr.mxu0 %v2586
        %3860 = vmatpush1.msra.mxu0 %v2585
        %3861 = vmatprep.subr.mxu0 %v2583
        %3862 = vmatpush1.msra.mxu0 %v2582
        %3863 = vmatprep.subr.mxu0 %v2580
        %3864 = vmatpush1.msra.mxu0 %v2579
        %3865 = vmatprep.subr.mxu0 %v2577
        %3866 = vmatpush1.msra.mxu0 %v2576
        %3867 = vmatprep.subr.mxu0 %v2670
        %3868 = vmatpush2.msra.mxu0 %v2669
        %3869 = vmatprep.subr.mxu0 %v2667
        %3870 = vmatpush2.msra.mxu0 %v2666
        %3871 = vmatprep.subr.mxu0 %v2664
        %3872 = vmatpush2.msra.mxu0 %v2663
        %3873 = vmatprep.subr.mxu0 %v2661
        %3874 = vmatpush2.msra.mxu0 %v2660
        %3875 = vmatprep.subr.mxu0 %v2658
        %3876 = vmatpush2.msra.mxu0 %v2657
        %3877 = vmatprep.subr.mxu0 %v2655
        %3878 = vmatpush2.msra.mxu0 %v2654
        %3879 = vmatprep.subr.mxu0 %v2652
        %3880 = vmatpush2.msra.mxu0 %v2651
        %3881 = vmatprep.subr.mxu0 %v2649
        %3882 = vmatpush2.msra.mxu0 %v2648
        %3883 = vmatprep.subr.mxu0 %v2646
        %3884 = vmatpush2.msra.mxu0 %v2645
        %3885 = vmatprep.subr.mxu0 %v2643
        %3886 = vmatpush2.msra.mxu0 %v2642
        %3887 = vmatprep.subr.mxu0 %v2640
        %3888 = vmatpush2.msra.mxu0 %v2639
        %3889 = vmatprep.subr.mxu0 %v2637
        %3890 = vmatpush2.msra.mxu0 %v2636
        %3891 = vmatprep.subr.mxu0 %v2634
        %3892 = vmatpush2.msra.mxu0 %v2633
        %3893 = vmatprep.subr.mxu0 %v2631
        %3894 = vmatpush2.msra.mxu0 %v2630
        %3895 = vmatprep.subr.mxu0 %v2628
        %3896 = vmatpush2.msra.mxu0 %v2627
        %3897 = vmatprep.subr.mxu0 %v2625
        %3898 = vmatpush2.msra.mxu0 %v2624
        %3899 = vmatprep.mubr.f32.mxu0 %v2893
        %3900 = vmatmul.mubr.f32.gmra.mxu0 %v301
        %v3901 = vpop.f32.mrf.mxu0
        %v3902 = vadd.f32 %v3831, %v3901
        %v3903 = vpop.f32.mrf.mxu0
        %v3904 = vadd.f32 %v3833, %v3903
        %3905 = vdwg.mxu0
        %3906 = vmatprep.subr.mxu0 %v2718
        %3907 = vmatpush1.msra.mxu0 %v2717
        %3908 = vmatprep.subr.mxu0 %v2715
        %3909 = vmatpush1.msra.mxu0 %v2714
        %3910 = vmatprep.subr.mxu0 %v2712
        %3911 = vmatpush1.msra.mxu0 %v2711
        %3912 = vmatprep.subr.mxu0 %v2709
        %3913 = vmatpush1.msra.mxu0 %v2708
        %3914 = vmatprep.subr.mxu0 %v2706
        %3915 = vmatpush1.msra.mxu0 %v2705
        %3916 = vmatprep.subr.mxu0 %v2703
        %3917 = vmatpush1.msra.mxu0 %v2702
        %3918 = vmatprep.subr.mxu0 %v2700
        %3919 = vmatpush1.msra.mxu0 %v2699
        %3920 = vmatprep.subr.mxu0 %v2697
        %3921 = vmatpush1.msra.mxu0 %v2696
        %3922 = vmatprep.subr.mxu0 %v2694
        %3923 = vmatpush1.msra.mxu0 %v2693
        %3924 = vmatprep.subr.mxu0 %v2691
        %3925 = vmatpush1.msra.mxu0 %v2690
        %3926 = vmatprep.subr.mxu0 %v2688
        %3927 = vmatpush1.msra.mxu0 %v2687
        %3928 = vmatprep.subr.mxu0 %v2685
        %3929 = vmatpush1.msra.mxu0 %v2684
        %3930 = vmatprep.subr.mxu0 %v2682
        %3931 = vmatpush1.msra.mxu0 %v2681
        %3932 = vmatprep.subr.mxu0 %v2679
        %3933 = vmatpush1.msra.mxu0 %v2678
        %3934 = vmatprep.subr.mxu0 %v2676
        %3935 = vmatpush1.msra.mxu0 %v2675
        %3936 = vmatprep.subr.mxu0 %v2673
        %3937 = vmatpush1.msra.mxu0 %v2672
        %3938 = vmatprep.subr.mxu0 %v2766
        %3939 = vmatpush2.msra.mxu0 %v2765
        %3940 = vmatprep.subr.mxu0 %v2763
        %3941 = vmatpush2.msra.mxu0 %v2762
        %3942 = vmatprep.subr.mxu0 %v2760
        %3943 = vmatpush2.msra.mxu0 %v2759
        %3944 = vmatprep.subr.mxu0 %v2757
        %3945 = vmatpush2.msra.mxu0 %v2756
        %3946 = vmatprep.subr.mxu0 %v2754
        %3947 = vmatpush2.msra.mxu0 %v2753
        %3948 = vmatprep.subr.mxu0 %v2751
        %3949 = vmatpush2.msra.mxu0 %v2750
        %3950 = vmatprep.subr.mxu0 %v2748
        %3951 = vmatpush2.msra.mxu0 %v2747
        %3952 = vmatprep.subr.mxu0 %v2745
        %3953 = vmatpush2.msra.mxu0 %v2744
        %3954 = vmatprep.subr.mxu0 %v2742
        %3955 = vmatpush2.msra.mxu0 %v2741
        %3956 = vmatprep.subr.mxu0 %v2739
        %3957 = vmatpush2.msra.mxu0 %v2738
        %3958 = vmatprep.subr.mxu0 %v2736
        %3959 = vmatpush2.msra.mxu0 %v2735
        %3960 = vmatprep.subr.mxu0 %v2733
        %3961 = vmatpush2.msra.mxu0 %v2732
        %3962 = vmatprep.subr.mxu0 %v2730
        %3963 = vmatpush2.msra.mxu0 %v2729
        %3964 = vmatprep.subr.mxu0 %v2727
        %3965 = vmatpush2.msra.mxu0 %v2726
        %3966 = vmatprep.subr.mxu0 %v2724
        %3967 = vmatpush2.msra.mxu0 %v2723
        %3968 = vmatprep.subr.mxu0 %v2721
        %3969 = vmatpush2.msra.mxu0 %v2720
        %3970 = vmatprep.mubr.f32.mxu0 %v2894
        %3971 = vmatmul.mubr.f32.gmra.mxu0 %v302
        %v3972 = vpop.f32.mrf.mxu0
        %v3973 = vadd.f32 %v3902, %v3972
        %v3974 = vpop.f32.mrf.mxu0
        %v3975 = vadd.f32 %v3904, %v3974
        %3976 = vdwg.mxu0
        %3977 = vmatprep.subr.mxu0 %v2814
        %3978 = vmatpush1.msra.mxu0 %v2813
        %3979 = vmatprep.subr.mxu0 %v2811
        %3980 = vmatpush1.msra.mxu0 %v2810
        %3981 = vmatprep.subr.mxu0 %v2808
        %3982 = vmatpush1.msra.mxu0 %v2807
        %3983 = vmatprep.subr.mxu0 %v2805
        %3984 = vmatpush1.msra.mxu0 %v2804
        %3985 = vmatprep.subr.mxu0 %v2802
        %3986 = vmatpush1.msra.mxu0 %v2801
        %3987 = vmatprep.subr.mxu0 %v2799
        %3988 = vmatpush1.msra.mxu0 %v2798
        %3989 = vmatprep.subr.mxu0 %v2796
        %3990 = vmatpush1.msra.mxu0 %v2795
        %3991 = vmatprep.subr.mxu0 %v2793
        %3992 = vmatpush1.msra.mxu0 %v2792
        %3993 = vmatprep.subr.mxu0 %v2790
        %3994 = vmatpush1.msra.mxu0 %v2789
        %3995 = vmatprep.subr.mxu0 %v2787
        %3996 = vmatpush1.msra.mxu0 %v2786
        %3997 = vmatprep.subr.mxu0 %v2784
        %3998 = vmatpush1.msra.mxu0 %v2783
        %3999 = vmatprep.subr.mxu0 %v2781
        %4000 = vmatpush1.msra.mxu0 %v2780
        %4001 = vmatprep.subr.mxu0 %v2778
        %4002 = vmatpush1.msra.mxu0 %v2777
        %4003 = vmatprep.subr.mxu0 %v2775
        %4004 = vmatpush1.msra.mxu0 %v2774
        %4005 = vmatprep.subr.mxu0 %v2772
        %4006 = vmatpush1.msra.mxu0 %v2771
        %4007 = vmatprep.subr.mxu0 %v2769
        %4008 = vmatpush1.msra.mxu0 %v2768
        %4009 = vmatprep.subr.mxu0 %v2862
        %4010 = vmatpush2.msra.mxu0 %v2861
        %4011 = vmatprep.subr.mxu0 %v2859
        %4012 = vmatpush2.msra.mxu0 %v2858
        %4013 = vmatprep.subr.mxu0 %v2856
        %4014 = vmatpush2.msra.mxu0 %v2855
        %4015 = vmatprep.subr.mxu0 %v2853
        %4016 = vmatpush2.msra.mxu0 %v2852
        %4017 = vmatprep.subr.mxu0 %v2850
        %4018 = vmatpush2.msra.mxu0 %v2849
        %4019 = vmatprep.subr.mxu0 %v2847
        %4020 = vmatpush2.msra.mxu0 %v2846
        %4021 = vmatprep.subr.mxu0 %v2844
        %4022 = vmatpush2.msra.mxu0 %v2843
        %4023 = vmatprep.subr.mxu0 %v2841
        %4024 = vmatpush2.msra.mxu0 %v2840
        %4025 = vmatprep.subr.mxu0 %v2838
        %4026 = vmatpush2.msra.mxu0 %v2837
        %4027 = vmatprep.subr.mxu0 %v2835
        %4028 = vmatpush2.msra.mxu0 %v2834
        %4029 = vmatprep.subr.mxu0 %v2832
        %4030 = vmatpush2.msra.mxu0 %v2831
        %4031 = vmatprep.subr.mxu0 %v2829
        %4032 = vmatpush2.msra.mxu0 %v2828
        %4033 = vmatprep.subr.mxu0 %v2826
        %4034 = vmatpush2.msra.mxu0 %v2825
        %4035 = vmatprep.subr.mxu0 %v2823
        %4036 = vmatpush2.msra.mxu0 %v2822
        %4037 = vmatprep.subr.mxu0 %v2820
        %4038 = vmatpush2.msra.mxu0 %v2819
        %4039 = vmatprep.subr.mxu0 %v2817
        %4040 = vmatpush2.msra.mxu0 %v2816
        %4041 = vmatprep.mubr.f32.mxu0 %v2895
        %4042 = vmatmul.mubr.f32.gmra.mxu0 %v303
        %v4043 = vpop.f32.mrf.mxu0
        %v4044 = vadd.f32 %v3973, %v4043
        %v4045 = vpop.f32.mrf.mxu0
        %v4046 = vadd.f32 %v3975, %v4045
        %4047 = vdwg.mxu0
        %4048 = vmatprep.subr.mxu0 0.0
        %4049 = vmatpush1.msra.mxu0 %v1375
        %4050 = vmatprep.subr.mxu0 0.0
        %4051 = vmatpush1.msra.mxu0 %v1372
        %4052 = vmatprep.subr.mxu0 0.0
        %4053 = vmatpush1.msra.mxu0 %v1369
        %4054 = vmatprep.subr.mxu0 0.0
        %4055 = vmatpush1.msra.mxu0 %v1366
        %4056 = vmatprep.subr.mxu0 0.0
        %4057 = vmatpush1.msra.mxu0 %v1363
        %4058 = vmatprep.subr.mxu0 0.0
        %4059 = vmatpush1.msra.mxu0 %v1360
        %4060 = vmatprep.subr.mxu0 0.0
        %4061 = vmatpush1.msra.mxu0 %v1357
        %4062 = vmatprep.subr.mxu0 0.0
        %4063 = vmatpush1.msra.mxu0 %v1354
        %4064 = vmatprep.subr.mxu0 0.0
        %4065 = vmatpush1.msra.mxu0 %v1351
        %4066 = vmatprep.subr.mxu0 0.0
        %4067 = vmatpush1.msra.mxu0 %v1348
        %4068 = vmatprep.subr.mxu0 0.0
        %4069 = vmatpush1.msra.mxu0 %v1345
        %4070 = vmatprep.subr.mxu0 0.0
        %4071 = vmatpush1.msra.mxu0 %v1342
        %4072 = vmatprep.subr.mxu0 0.0
        %4073 = vmatpush1.msra.mxu0 %v1339
        %4074 = vmatprep.subr.mxu0 0.0
        %4075 = vmatpush1.msra.mxu0 %v1336
        %4076 = vmatprep.subr.mxu0 0.0
        %4077 = vmatpush1.msra.mxu0 %v1333
        %4078 = vmatprep.subr.mxu0 0.0
        %4079 = vmatpush1.msra.mxu0 %v1330
        %4080 = vmatprep.subr.mxu0 0.0
        %4081 = vmatpush2.msra.mxu0 %v1423
        %4082 = vmatprep.subr.mxu0 0.0
        %4083 = vmatpush2.msra.mxu0 %v1420
        %4084 = vmatprep.subr.mxu0 0.0
        %4085 = vmatpush2.msra.mxu0 %v1417
        %4086 = vmatprep.subr.mxu0 0.0
        %4087 = vmatpush2.msra.mxu0 %v1414
        %4088 = vmatprep.subr.mxu0 0.0
        %4089 = vmatpush2.msra.mxu0 %v1411
        %4090 = vmatprep.subr.mxu0 0.0
        %4091 = vmatpush2.msra.mxu0 %v1408
        %4092 = vmatprep.subr.mxu0 0.0
        %4093 = vmatpush2.msra.mxu0 %v1405
        %4094 = vmatprep.subr.mxu0 0.0
        %4095 = vmatpush2.msra.mxu0 %v1402
        %4096 = vmatprep.subr.mxu0 0.0
        %4097 = vmatpush2.msra.mxu0 %v1399
        %4098 = vmatprep.subr.mxu0 0.0
        %4099 = vmatpush2.msra.mxu0 %v1396
        %4100 = vmatprep.subr.mxu0 0.0
        %4101 = vmatpush2.msra.mxu0 %v1393
        %4102 = vmatprep.subr.mxu0 0.0
        %4103 = vmatpush2.msra.mxu0 %v1390
        %4104 = vmatprep.subr.mxu0 0.0
        %4105 = vmatpush2.msra.mxu0 %v1387
        %4106 = vmatprep.subr.mxu0 0.0
        %4107 = vmatpush2.msra.mxu0 %v1384
        %4108 = vmatprep.subr.mxu0 0.0
        %4109 = vmatpush2.msra.mxu0 %v1381
        %4110 = vmatprep.subr.mxu0 0.0
        %4111 = vmatpush2.msra.mxu0 %v1378
        %4112 = vmatprep.mubr.f32.mxu0 %v2880
        %4113 = vmatmul.mubr.f32.gmra.mxu0 %v288
        %v4114 = vpop.f32.mrf.mxu0
        %v4115 = vadd.f32 0.0, %v4114
        %v4116 = vpop.f32.mrf.mxu0
        %4117 = vdwg.mxu0
        %4118 = vmatprep.subr.mxu0 0.0
        %4119 = vmatpush1.msra.mxu0 %v1471
        %4120 = vmatprep.subr.mxu0 0.0
        %4121 = vmatpush1.msra.mxu0 %v1468
        %4122 = vmatprep.subr.mxu0 0.0
        %4123 = vmatpush1.msra.mxu0 %v1465
        %4124 = vmatprep.subr.mxu0 0.0
        %4125 = vmatpush1.msra.mxu0 %v1462
        %4126 = vmatprep.subr.mxu0 0.0
        %4127 = vmatpush1.msra.mxu0 %v1459
        %4128 = vmatprep.subr.mxu0 0.0
        %4129 = vmatpush1.msra.mxu0 %v1456
        %4130 = vmatprep.subr.mxu0 0.0
        %4131 = vmatpush1.msra.mxu0 %v1453
        %4132 = vmatprep.subr.mxu0 0.0
        %4133 = vmatpush1.msra.mxu0 %v1450
        %4134 = vmatprep.subr.mxu0 0.0
        %4135 = vmatpush1.msra.mxu0 %v1447
        %4136 = vmatprep.subr.mxu0 0.0
        %4137 = vmatpush1.msra.mxu0 %v1444
        %4138 = vmatprep.subr.mxu0 0.0
        %4139 = vmatpush1.msra.mxu0 %v1441
        %4140 = vmatprep.subr.mxu0 0.0
        %4141 = vmatpush1.msra.mxu0 %v1438
        %4142 = vmatprep.subr.mxu0 0.0
        %4143 = vmatpush1.msra.mxu0 %v1435
        %4144 = vmatprep.subr.mxu0 0.0
        %4145 = vmatpush1.msra.mxu0 %v1432
        %4146 = vmatprep.subr.mxu0 0.0
        %4147 = vmatpush1.msra.mxu0 %v1429
        %4148 = vmatprep.subr.mxu0 0.0
        %4149 = vmatpush1.msra.mxu0 %v1426
        %4150 = vmatprep.subr.mxu0 0.0
        %4151 = vmatpush2.msra.mxu0 %v1519
        %4152 = vmatprep.subr.mxu0 0.0
        %4153 = vmatpush2.msra.mxu0 %v1516
        %4154 = vmatprep.subr.mxu0 0.0
        %4155 = vmatpush2.msra.mxu0 %v1513
        %4156 = vmatprep.subr.mxu0 0.0
        %4157 = vmatpush2.msra.mxu0 %v1510
        %4158 = vmatprep.subr.mxu0 0.0
        %4159 = vmatpush2.msra.mxu0 %v1507
        %4160 = vmatprep.subr.mxu0 0.0
        %4161 = vmatpush2.msra.mxu0 %v1504
        %4162 = vmatprep.subr.mxu0 0.0
        %4163 = vmatpush2.msra.mxu0 %v1501
        %4164 = vmatprep.subr.mxu0 0.0
        %4165 = vmatpush2.msra.mxu0 %v1498
        %4166 = vmatprep.subr.mxu0 0.0
        %4167 = vmatpush2.msra.mxu0 %v1495
        %4168 = vmatprep.subr.mxu0 0.0
        %4169 = vmatpush2.msra.mxu0 %v1492
        %4170 = vmatprep.subr.mxu0 0.0
        %4171 = vmatpush2.msra.mxu0 %v1489
        %4172 = vmatprep.subr.mxu0 0.0
        %4173 = vmatpush2.msra.mxu0 %v1486
        %4174 = vmatprep.subr.mxu0 0.0
        %4175 = vmatpush2.msra.mxu0 %v1483
        %4176 = vmatprep.subr.mxu0 0.0
        %4177 = vmatpush2.msra.mxu0 %v1480
        %4178 = vmatprep.subr.mxu0 0.0
        %4179 = vmatpush2.msra.mxu0 %v1477
        %4180 = vmatprep.subr.mxu0 0.0
        %4181 = vmatpush2.msra.mxu0 %v1474
        %4182 = vmatprep.mubr.f32.mxu0 %v2881
        %4183 = vmatmul.mubr.f32.gmra.mxu0 %v289
        %v4184 = vpop.f32.mrf.mxu0
        %v4185 = vadd.f32 %v4115, %v4184
        %v4186 = vpop.f32.mrf.mxu0
        %4187 = vdwg.mxu0
        %4188 = vmatprep.subr.mxu0 0.0
        %4189 = vmatpush1.msra.mxu0 %v1567
        %4190 = vmatprep.subr.mxu0 0.0
        %4191 = vmatpush1.msra.mxu0 %v1564
        %4192 = vmatprep.subr.mxu0 0.0
        %4193 = vmatpush1.msra.mxu0 %v1561
        %4194 = vmatprep.subr.mxu0 0.0
        %4195 = vmatpush1.msra.mxu0 %v1558
        %4196 = vmatprep.subr.mxu0 0.0
        %4197 = vmatpush1.msra.mxu0 %v1555
        %4198 = vmatprep.subr.mxu0 0.0
        %4199 = vmatpush1.msra.mxu0 %v1552
        %4200 = vmatprep.subr.mxu0 0.0
        %4201 = vmatpush1.msra.mxu0 %v1549
        %4202 = vmatprep.subr.mxu0 0.0
        %4203 = vmatpush1.msra.mxu0 %v1546
        %4204 = vmatprep.subr.mxu0 0.0
        %4205 = vmatpush1.msra.mxu0 %v1543
        %4206 = vmatprep.subr.mxu0 0.0
        %4207 = vmatpush1.msra.mxu0 %v1540
        %4208 = vmatprep.subr.mxu0 0.0
        %4209 = vmatpush1.msra.mxu0 %v1537
        %4210 = vmatprep.subr.mxu0 0.0
        %4211 = vmatpush1.msra.mxu0 %v1534
        %4212 = vmatprep.subr.mxu0 0.0
        %4213 = vmatpush1.msra.mxu0 %v1531
        %4214 = vmatprep.subr.mxu0 0.0
        %4215 = vmatpush1.msra.mxu0 %v1528
        %4216 = vmatprep.subr.mxu0 0.0
        %4217 = vmatpush1.msra.mxu0 %v1525
        %4218 = vmatprep.subr.mxu0 0.0
        %4219 = vmatpush1.msra.mxu0 %v1522
        %4220 = vmatprep.subr.mxu0 0.0
        %4221 = vmatpush2.msra.mxu0 %v1615
        %4222 = vmatprep.subr.mxu0 0.0
        %4223 = vmatpush2.msra.mxu0 %v1612
        %4224 = vmatprep.subr.mxu0 0.0
        %4225 = vmatpush2.msra.mxu0 %v1609
        %4226 = vmatprep.subr.mxu0 0.0
        %4227 = vmatpush2.msra.mxu0 %v1606
        %4228 = vmatprep.subr.mxu0 0.0
        %4229 = vmatpush2.msra.mxu0 %v1603
        %4230 = vmatprep.subr.mxu0 0.0
        %4231 = vmatpush2.msra.mxu0 %v1600
        %4232 = vmatprep.subr.mxu0 0.0
        %4233 = vmatpush2.msra.mxu0 %v1597
        %4234 = vmatprep.subr.mxu0 0.0
        %4235 = vmatpush2.msra.mxu0 %v1594
        %4236 = vmatprep.subr.mxu0 0.0
        %4237 = vmatpush2.msra.mxu0 %v1591
        %4238 = vmatprep.subr.mxu0 0.0
        %4239 = vmatpush2.msra.mxu0 %v1588
        %4240 = vmatprep.subr.mxu0 0.0
        %4241 = vmatpush2.msra.mxu0 %v1585
        %4242 = vmatprep.subr.mxu0 0.0
        %4243 = vmatpush2.msra.mxu0 %v1582
        %4244 = vmatprep.subr.mxu0 0.0
        %4245 = vmatpush2.msra.mxu0 %v1579
        %4246 = vmatprep.subr.mxu0 0.0
        %4247 = vmatpush2.msra.mxu0 %v1576
        %4248 = vmatprep.subr.mxu0 0.0
        %4249 = vmatpush2.msra.mxu0 %v1573
        %4250 = vmatprep.subr.mxu0 0.0
        %4251 = vmatpush2.msra.mxu0 %v1570
        %4252 = vmatprep.mubr.f32.mxu0 %v2882
        %4253 = vmatmul.mubr.f32.gmra.mxu0 %v290
        %v4254 = vpop.f32.mrf.mxu0
        %v4255 = vadd.f32 %v4185, %v4254
        %v4256 = vpop.f32.mrf.mxu0
        %4257 = vdwg.mxu0
        %4258 = vmatprep.subr.mxu0 0.0
        %4259 = vmatpush1.msra.mxu0 %v1663
        %4260 = vmatprep.subr.mxu0 0.0
        %4261 = vmatpush1.msra.mxu0 %v1660
        %4262 = vmatprep.subr.mxu0 0.0
        %4263 = vmatpush1.msra.mxu0 %v1657
        %4264 = vmatprep.subr.mxu0 0.0
        %4265 = vmatpush1.msra.mxu0 %v1654
        %4266 = vmatprep.subr.mxu0 0.0
        %4267 = vmatpush1.msra.mxu0 %v1651
        %4268 = vmatprep.subr.mxu0 0.0
        %4269 = vmatpush1.msra.mxu0 %v1648
        %4270 = vmatprep.subr.mxu0 0.0
        %4271 = vmatpush1.msra.mxu0 %v1645
        %4272 = vmatprep.subr.mxu0 0.0
        %4273 = vmatpush1.msra.mxu0 %v1642
        %4274 = vmatprep.subr.mxu0 0.0
        %4275 = vmatpush1.msra.mxu0 %v1639
        %4276 = vmatprep.subr.mxu0 0.0
        %4277 = vmatpush1.msra.mxu0 %v1636
        %4278 = vmatprep.subr.mxu0 0.0
        %4279 = vmatpush1.msra.mxu0 %v1633
        %4280 = vmatprep.subr.mxu0 0.0
        %4281 = vmatpush1.msra.mxu0 %v1630
        %4282 = vmatprep.subr.mxu0 0.0
        %4283 = vmatpush1.msra.mxu0 %v1627
        %4284 = vmatprep.subr.mxu0 0.0
        %4285 = vmatpush1.msra.mxu0 %v1624
        %4286 = vmatprep.subr.mxu0 0.0
        %4287 = vmatpush1.msra.mxu0 %v1621
        %4288 = vmatprep.subr.mxu0 0.0
        %4289 = vmatpush1.msra.mxu0 %v1618
        %4290 = vmatprep.subr.mxu0 0.0
        %4291 = vmatpush2.msra.mxu0 %v1711
        %4292 = vmatprep.subr.mxu0 0.0
        %4293 = vmatpush2.msra.mxu0 %v1708
        %4294 = vmatprep.subr.mxu0 0.0
        %4295 = vmatpush2.msra.mxu0 %v1705
        %4296 = vmatprep.subr.mxu0 0.0
        %4297 = vmatpush2.msra.mxu0 %v1702
        %4298 = vmatprep.subr.mxu0 0.0
        %4299 = vmatpush2.msra.mxu0 %v1699
        %4300 = vmatprep.subr.mxu0 0.0
        %4301 = vmatpush2.msra.mxu0 %v1696
        %4302 = vmatprep.subr.mxu0 0.0
        %4303 = vmatpush2.msra.mxu0 %v1693
        %4304 = vmatprep.subr.mxu0 0.0
        %4305 = vmatpush2.msra.mxu0 %v1690
        %4306 = vmatprep.subr.mxu0 0.0
        %4307 = vmatpush2.msra.mxu0 %v1687
        %4308 = vmatprep.subr.mxu0 0.0
        %4309 = vmatpush2.msra.mxu0 %v1684
        %4310 = vmatprep.subr.mxu0 0.0
        %4311 = vmatpush2.msra.mxu0 %v1681
        %4312 = vmatprep.subr.mxu0 0.0
        %4313 = vmatpush2.msra.mxu0 %v1678
        %4314 = vmatprep.subr.mxu0 0.0
        %4315 = vmatpush2.msra.mxu0 %v1675
        %4316 = vmatprep.subr.mxu0 0.0
        %4317 = vmatpush2.msra.mxu0 %v1672
        %4318 = vmatprep.subr.mxu0 0.0
        %4319 = vmatpush2.msra.mxu0 %v1669
        %4320 = vmatprep.subr.mxu0 0.0
        %4321 = vmatpush2.msra.mxu0 %v1666
        %4322 = vmatprep.mubr.f32.mxu0 %v2883
        %4323 = vmatmul.mubr.f32.gmra.mxu0 %v291
        %v4324 = vpop.f32.mrf.mxu0
        %v4325 = vadd.f32 %v4255, %v4324
        %v4326 = vpop.f32.mrf.mxu0
        %4327 = vdwg.mxu0
        %4328 = vmatprep.subr.mxu0 0.0
        %4329 = vmatpush1.msra.mxu0 %v1759
        %4330 = vmatprep.subr.mxu0 0.0
        %4331 = vmatpush1.msra.mxu0 %v1756
        %4332 = vmatprep.subr.mxu0 0.0
        %4333 = vmatpush1.msra.mxu0 %v1753
        %4334 = vmatprep.subr.mxu0 0.0
        %4335 = vmatpush1.msra.mxu0 %v1750
        %4336 = vmatprep.subr.mxu0 0.0
        %4337 = vmatpush1.msra.mxu0 %v1747
        %4338 = vmatprep.subr.mxu0 0.0
        %4339 = vmatpush1.msra.mxu0 %v1744
        %4340 = vmatprep.subr.mxu0 0.0
        %4341 = vmatpush1.msra.mxu0 %v1741
        %4342 = vmatprep.subr.mxu0 0.0
        %4343 = vmatpush1.msra.mxu0 %v1738
        %4344 = vmatprep.subr.mxu0 0.0
        %4345 = vmatpush1.msra.mxu0 %v1735
        %4346 = vmatprep.subr.mxu0 0.0
        %4347 = vmatpush1.msra.mxu0 %v1732
        %4348 = vmatprep.subr.mxu0 0.0
        %4349 = vmatpush1.msra.mxu0 %v1729
        %4350 = vmatprep.subr.mxu0 0.0
        %4351 = vmatpush1.msra.mxu0 %v1726
        %4352 = vmatprep.subr.mxu0 0.0
        %4353 = vmatpush1.msra.mxu0 %v1723
        %4354 = vmatprep.subr.mxu0 0.0
        %4355 = vmatpush1.msra.mxu0 %v1720
        %4356 = vmatprep.subr.mxu0 0.0
        %4357 = vmatpush1.msra.mxu0 %v1717
        %4358 = vmatprep.subr.mxu0 0.0
        %4359 = vmatpush1.msra.mxu0 %v1714
        %4360 = vmatprep.subr.mxu0 0.0
        %4361 = vmatpush2.msra.mxu0 %v1807
        %4362 = vmatprep.subr.mxu0 0.0
        %4363 = vmatpush2.msra.mxu0 %v1804
        %4364 = vmatprep.subr.mxu0 0.0
        %4365 = vmatpush2.msra.mxu0 %v1801
        %4366 = vmatprep.subr.mxu0 0.0
        %4367 = vmatpush2.msra.mxu0 %v1798
        %4368 = vmatprep.subr.mxu0 0.0
        %4369 = vmatpush2.msra.mxu0 %v1795
        %4370 = vmatprep.subr.mxu0 0.0
        %4371 = vmatpush2.msra.mxu0 %v1792
        %4372 = vmatprep.subr.mxu0 0.0
        %4373 = vmatpush2.msra.mxu0 %v1789
        %4374 = vmatprep.subr.mxu0 0.0
        %4375 = vmatpush2.msra.mxu0 %v1786
        %4376 = vmatprep.subr.mxu0 0.0
        %4377 = vmatpush2.msra.mxu0 %v1783
        %4378 = vmatprep.subr.mxu0 0.0
        %4379 = vmatpush2.msra.mxu0 %v1780
        %4380 = vmatprep.subr.mxu0 0.0
        %4381 = vmatpush2.msra.mxu0 %v1777
        %4382 = vmatprep.subr.mxu0 0.0
        %4383 = vmatpush2.msra.mxu0 %v1774
        %4384 = vmatprep.subr.mxu0 0.0
        %4385 = vmatpush2.msra.mxu0 %v1771
        %4386 = vmatprep.subr.mxu0 0.0
        %4387 = vmatpush2.msra.mxu0 %v1768
        %4388 = vmatprep.subr.mxu0 0.0
        %4389 = vmatpush2.msra.mxu0 %v1765
        %4390 = vmatprep.subr.mxu0 0.0
        %4391 = vmatpush2.msra.mxu0 %v1762
        %4392 = vmatprep.mubr.f32.mxu0 %v2884
        %4393 = vmatmul.mubr.f32.gmra.mxu0 %v292
        %v4394 = vpop.f32.mrf.mxu0
        %v4395 = vadd.f32 %v4325, %v4394
        %v4396 = vpop.f32.mrf.mxu0
        %4397 = vdwg.mxu0
        %4398 = vmatprep.subr.mxu0 0.0
        %4399 = vmatpush1.msra.mxu0 %v1855
        %4400 = vmatprep.subr.mxu0 0.0
        %4401 = vmatpush1.msra.mxu0 %v1852
        %4402 = vmatprep.subr.mxu0 0.0
        %4403 = vmatpush1.msra.mxu0 %v1849
        %4404 = vmatprep.subr.mxu0 0.0
        %4405 = vmatpush1.msra.mxu0 %v1846
        %4406 = vmatprep.subr.mxu0 0.0
        %4407 = vmatpush1.msra.mxu0 %v1843
        %4408 = vmatprep.subr.mxu0 0.0
        %4409 = vmatpush1.msra.mxu0 %v1840
        %4410 = vmatprep.subr.mxu0 0.0
        %4411 = vmatpush1.msra.mxu0 %v1837
        %4412 = vmatprep.subr.mxu0 0.0
        %4413 = vmatpush1.msra.mxu0 %v1834
        %4414 = vmatprep.subr.mxu0 0.0
        %4415 = vmatpush1.msra.mxu0 %v1831
        %4416 = vmatprep.subr.mxu0 0.0
        %4417 = vmatpush1.msra.mxu0 %v1828
        %4418 = vmatprep.subr.mxu0 0.0
        %4419 = vmatpush1.msra.mxu0 %v1825
        %4420 = vmatprep.subr.mxu0 0.0
        %4421 = vmatpush1.msra.mxu0 %v1822
        %4422 = vmatprep.subr.mxu0 0.0
        %4423 = vmatpush1.msra.mxu0 %v1819
        %4424 = vmatprep.subr.mxu0 0.0
        %4425 = vmatpush1.msra.mxu0 %v1816
        %4426 = vmatprep.subr.mxu0 0.0
        %4427 = vmatpush1.msra.mxu0 %v1813
        %4428 = vmatprep.subr.mxu0 0.0
        %4429 = vmatpush1.msra.mxu0 %v1810
        %4430 = vmatprep.subr.mxu0 0.0
        %4431 = vmatpush2.msra.mxu0 %v1903
        %4432 = vmatprep.subr.mxu0 0.0
        %4433 = vmatpush2.msra.mxu0 %v1900
        %4434 = vmatprep.subr.mxu0 0.0
        %4435 = vmatpush2.msra.mxu0 %v1897
        %4436 = vmatprep.subr.mxu0 0.0
        %4437 = vmatpush2.msra.mxu0 %v1894
        %4438 = vmatprep.subr.mxu0 0.0
        %4439 = vmatpush2.msra.mxu0 %v1891
        %4440 = vmatprep.subr.mxu0 0.0
        %4441 = vmatpush2.msra.mxu0 %v1888
        %4442 = vmatprep.subr.mxu0 0.0
        %4443 = vmatpush2.msra.mxu0 %v1885
        %4444 = vmatprep.subr.mxu0 0.0
        %4445 = vmatpush2.msra.mxu0 %v1882
        %4446 = vmatprep.subr.mxu0 0.0
        %4447 = vmatpush2.msra.mxu0 %v1879
        %4448 = vmatprep.subr.mxu0 0.0
        %4449 = vmatpush2.msra.mxu0 %v1876
        %4450 = vmatprep.subr.mxu0 0.0
        %4451 = vmatpush2.msra.mxu0 %v1873
        %4452 = vmatprep.subr.mxu0 0.0
        %4453 = vmatpush2.msra.mxu0 %v1870
        %4454 = vmatprep.subr.mxu0 0.0
        %4455 = vmatpush2.msra.mxu0 %v1867
        %4456 = vmatprep.subr.mxu0 0.0
        %4457 = vmatpush2.msra.mxu0 %v1864
        %4458 = vmatprep.subr.mxu0 0.0
        %4459 = vmatpush2.msra.mxu0 %v1861
        %4460 = vmatprep.subr.mxu0 0.0
        %4461 = vmatpush2.msra.mxu0 %v1858
        %4462 = vmatprep.mubr.f32.mxu0 %v2885
        %4463 = vmatmul.mubr.f32.gmra.mxu0 %v293
        %v4464 = vpop.f32.mrf.mxu0
        %v4465 = vadd.f32 %v4395, %v4464
        %v4466 = vpop.f32.mrf.mxu0
        %4467 = vdwg.mxu0
        %4468 = vmatprep.subr.mxu0 0.0
        %4469 = vmatpush1.msra.mxu0 %v1951
        %4470 = vmatprep.subr.mxu0 0.0
        %4471 = vmatpush1.msra.mxu0 %v1948
        %4472 = vmatprep.subr.mxu0 0.0
        %4473 = vmatpush1.msra.mxu0 %v1945
        %4474 = vmatprep.subr.mxu0 0.0
        %4475 = vmatpush1.msra.mxu0 %v1942
        %4476 = vmatprep.subr.mxu0 0.0
        %4477 = vmatpush1.msra.mxu0 %v1939
        %4478 = vmatprep.subr.mxu0 0.0
        %4479 = vmatpush1.msra.mxu0 %v1936
        %4480 = vmatprep.subr.mxu0 0.0
        %4481 = vmatpush1.msra.mxu0 %v1933
        %4482 = vmatprep.subr.mxu0 0.0
        %4483 = vmatpush1.msra.mxu0 %v1930
        %4484 = vmatprep.subr.mxu0 0.0
        %4485 = vmatpush1.msra.mxu0 %v1927
        %4486 = vmatprep.subr.mxu0 0.0
        %4487 = vmatpush1.msra.mxu0 %v1924
        %4488 = vmatprep.subr.mxu0 0.0
        %4489 = vmatpush1.msra.mxu0 %v1921
        %4490 = vmatprep.subr.mxu0 0.0
        %4491 = vmatpush1.msra.mxu0 %v1918
        %4492 = vmatprep.subr.mxu0 0.0
        %4493 = vmatpush1.msra.mxu0 %v1915
        %4494 = vmatprep.subr.mxu0 0.0
        %4495 = vmatpush1.msra.mxu0 %v1912
        %4496 = vmatprep.subr.mxu0 0.0
        %4497 = vmatpush1.msra.mxu0 %v1909
        %4498 = vmatprep.subr.mxu0 0.0
        %4499 = vmatpush1.msra.mxu0 %v1906
        %4500 = vmatprep.subr.mxu0 0.0
        %4501 = vmatpush2.msra.mxu0 %v1999
        %4502 = vmatprep.subr.mxu0 0.0
        %4503 = vmatpush2.msra.mxu0 %v1996
        %4504 = vmatprep.subr.mxu0 0.0
        %4505 = vmatpush2.msra.mxu0 %v1993
        %4506 = vmatprep.subr.mxu0 0.0
        %4507 = vmatpush2.msra.mxu0 %v1990
        %4508 = vmatprep.subr.mxu0 0.0
        %4509 = vmatpush2.msra.mxu0 %v1987
        %4510 = vmatprep.subr.mxu0 0.0
        %4511 = vmatpush2.msra.mxu0 %v1984
        %4512 = vmatprep.subr.mxu0 0.0
        %4513 = vmatpush2.msra.mxu0 %v1981
        %4514 = vmatprep.subr.mxu0 0.0
        %4515 = vmatpush2.msra.mxu0 %v1978
        %4516 = vmatprep.subr.mxu0 0.0
        %4517 = vmatpush2.msra.mxu0 %v1975
        %4518 = vmatprep.subr.mxu0 0.0
        %4519 = vmatpush2.msra.mxu0 %v1972
        %4520 = vmatprep.subr.mxu0 0.0
        %4521 = vmatpush2.msra.mxu0 %v1969
        %4522 = vmatprep.subr.mxu0 0.0
        %4523 = vmatpush2.msra.mxu0 %v1966
        %4524 = vmatprep.subr.mxu0 0.0
        %4525 = vmatpush2.msra.mxu0 %v1963
        %4526 = vmatprep.subr.mxu0 0.0
        %4527 = vmatpush2.msra.mxu0 %v1960
        %4528 = vmatprep.subr.mxu0 0.0
        %4529 = vmatpush2.msra.mxu0 %v1957
        %4530 = vmatprep.subr.mxu0 0.0
        %4531 = vmatpush2.msra.mxu0 %v1954
        %4532 = vmatprep.mubr.f32.mxu0 %v2886
        %4533 = vmatmul.mubr.f32.gmra.mxu0 %v294
        %v4534 = vpop.f32.mrf.mxu0
        %v4535 = vadd.f32 %v4465, %v4534
        %v4536 = vpop.f32.mrf.mxu0
        %4537 = vdwg.mxu0
        %4538 = vmatprep.subr.mxu0 0.0
        %4539 = vmatpush1.msra.mxu0 %v2047
        %4540 = vmatprep.subr.mxu0 0.0
        %4541 = vmatpush1.msra.mxu0 %v2044
        %4542 = vmatprep.subr.mxu0 0.0
        %4543 = vmatpush1.msra.mxu0 %v2041
        %4544 = vmatprep.subr.mxu0 0.0
        %4545 = vmatpush1.msra.mxu0 %v2038
        %4546 = vmatprep.subr.mxu0 0.0
        %4547 = vmatpush1.msra.mxu0 %v2035
        %4548 = vmatprep.subr.mxu0 0.0
        %4549 = vmatpush1.msra.mxu0 %v2032
        %4550 = vmatprep.subr.mxu0 0.0
        %4551 = vmatpush1.msra.mxu0 %v2029
        %4552 = vmatprep.subr.mxu0 0.0
        %4553 = vmatpush1.msra.mxu0 %v2026
        %4554 = vmatprep.subr.mxu0 0.0
        %4555 = vmatpush1.msra.mxu0 %v2023
        %4556 = vmatprep.subr.mxu0 0.0
        %4557 = vmatpush1.msra.mxu0 %v2020
        %4558 = vmatprep.subr.mxu0 0.0
        %4559 = vmatpush1.msra.mxu0 %v2017
        %4560 = vmatprep.subr.mxu0 0.0
        %4561 = vmatpush1.msra.mxu0 %v2014
        %4562 = vmatprep.subr.mxu0 0.0
        %4563 = vmatpush1.msra.mxu0 %v2011
        %4564 = vmatprep.subr.mxu0 0.0
        %4565 = vmatpush1.msra.mxu0 %v2008
        %4566 = vmatprep.subr.mxu0 0.0
        %4567 = vmatpush1.msra.mxu0 %v2005
        %4568 = vmatprep.subr.mxu0 0.0
        %4569 = vmatpush1.msra.mxu0 %v2002
        %4570 = vmatprep.subr.mxu0 0.0
        %4571 = vmatpush2.msra.mxu0 %v2095
        %4572 = vmatprep.subr.mxu0 0.0
        %4573 = vmatpush2.msra.mxu0 %v2092
        %4574 = vmatprep.subr.mxu0 0.0
        %4575 = vmatpush2.msra.mxu0 %v2089
        %4576 = vmatprep.subr.mxu0 0.0
        %4577 = vmatpush2.msra.mxu0 %v2086
        %4578 = vmatprep.subr.mxu0 0.0
        %4579 = vmatpush2.msra.mxu0 %v2083
        %4580 = vmatprep.subr.mxu0 0.0
        %4581 = vmatpush2.msra.mxu0 %v2080
        %4582 = vmatprep.subr.mxu0 0.0
        %4583 = vmatpush2.msra.mxu0 %v2077
        %4584 = vmatprep.subr.mxu0 0.0
        %4585 = vmatpush2.msra.mxu0 %v2074
        %4586 = vmatprep.subr.mxu0 0.0
        %4587 = vmatpush2.msra.mxu0 %v2071
        %4588 = vmatprep.subr.mxu0 0.0
        %4589 = vmatpush2.msra.mxu0 %v2068
        %4590 = vmatprep.subr.mxu0 0.0
        %4591 = vmatpush2.msra.mxu0 %v2065
        %4592 = vmatprep.subr.mxu0 0.0
        %4593 = vmatpush2.msra.mxu0 %v2062
        %4594 = vmatprep.subr.mxu0 0.0
        %4595 = vmatpush2.msra.mxu0 %v2059
        %4596 = vmatprep.subr.mxu0 0.0
        %4597 = vmatpush2.msra.mxu0 %v2056
        %4598 = vmatprep.subr.mxu0 0.0
        %4599 = vmatpush2.msra.mxu0 %v2053
        %4600 = vmatprep.subr.mxu0 0.0
        %4601 = vmatpush2.msra.mxu0 %v2050
        %4602 = vmatprep.mubr.f32.mxu0 %v2887
        %4603 = vmatmul.mubr.f32.gmra.mxu0 %v295
        %v4604 = vpop.f32.mrf.mxu0
        %v4605 = vadd.f32 %v4535, %v4604
        %v4606 = vpop.f32.mrf.mxu0
        %4607 = vdwg.mxu0
        %4608 = vmatprep.subr.mxu0 0.0
        %4609 = vmatpush1.msra.mxu0 %v2143
        %4610 = vmatprep.subr.mxu0 0.0
        %4611 = vmatpush1.msra.mxu0 %v2140
        %4612 = vmatprep.subr.mxu0 0.0
        %4613 = vmatpush1.msra.mxu0 %v2137
        %4614 = vmatprep.subr.mxu0 0.0
        %4615 = vmatpush1.msra.mxu0 %v2134
        %4616 = vmatprep.subr.mxu0 0.0
        %4617 = vmatpush1.msra.mxu0 %v2131
        %4618 = vmatprep.subr.mxu0 0.0
        %4619 = vmatpush1.msra.mxu0 %v2128
        %4620 = vmatprep.subr.mxu0 0.0
        %4621 = vmatpush1.msra.mxu0 %v2125
        %4622 = vmatprep.subr.mxu0 0.0
        %4623 = vmatpush1.msra.mxu0 %v2122
        %4624 = vmatprep.subr.mxu0 0.0
        %4625 = vmatpush1.msra.mxu0 %v2119
        %4626 = vmatprep.subr.mxu0 0.0
        %4627 = vmatpush1.msra.mxu0 %v2116
        %4628 = vmatprep.subr.mxu0 0.0
        %4629 = vmatpush1.msra.mxu0 %v2113
        %4630 = vmatprep.subr.mxu0 0.0
        %4631 = vmatpush1.msra.mxu0 %v2110
        %4632 = vmatprep.subr.mxu0 0.0
        %4633 = vmatpush1.msra.mxu0 %v2107
        %4634 = vmatprep.subr.mxu0 0.0
        %4635 = vmatpush1.msra.mxu0 %v2104
        %4636 = vmatprep.subr.mxu0 0.0
        %4637 = vmatpush1.msra.mxu0 %v2101
        %4638 = vmatprep.subr.mxu0 0.0
        %4639 = vmatpush1.msra.mxu0 %v2098
        %4640 = vmatprep.subr.mxu0 0.0
        %4641 = vmatpush2.msra.mxu0 %v2191
        %4642 = vmatprep.subr.mxu0 0.0
        %4643 = vmatpush2.msra.mxu0 %v2188
        %4644 = vmatprep.subr.mxu0 0.0
        %4645 = vmatpush2.msra.mxu0 %v2185
        %4646 = vmatprep.subr.mxu0 0.0
        %4647 = vmatpush2.msra.mxu0 %v2182
        %4648 = vmatprep.subr.mxu0 0.0
        %4649 = vmatpush2.msra.mxu0 %v2179
        %4650 = vmatprep.subr.mxu0 0.0
        %4651 = vmatpush2.msra.mxu0 %v2176
        %4652 = vmatprep.subr.mxu0 0.0
        %4653 = vmatpush2.msra.mxu0 %v2173
        %4654 = vmatprep.subr.mxu0 0.0
        %4655 = vmatpush2.msra.mxu0 %v2170
        %4656 = vmatprep.subr.mxu0 0.0
        %4657 = vmatpush2.msra.mxu0 %v2167
        %4658 = vmatprep.subr.mxu0 0.0
        %4659 = vmatpush2.msra.mxu0 %v2164
        %4660 = vmatprep.subr.mxu0 0.0
        %4661 = vmatpush2.msra.mxu0 %v2161
        %4662 = vmatprep.subr.mxu0 0.0
        %4663 = vmatpush2.msra.mxu0 %v2158
        %4664 = vmatprep.subr.mxu0 0.0
        %4665 = vmatpush2.msra.mxu0 %v2155
        %4666 = vmatprep.subr.mxu0 0.0
        %4667 = vmatpush2.msra.mxu0 %v2152
        %4668 = vmatprep.subr.mxu0 0.0
        %4669 = vmatpush2.msra.mxu0 %v2149
        %4670 = vmatprep.subr.mxu0 0.0
        %4671 = vmatpush2.msra.mxu0 %v2146
        %4672 = vmatprep.mubr.f32.mxu0 %v2888
        %4673 = vmatmul.mubr.f32.gmra.mxu0 %v296
        %v4674 = vpop.f32.mrf.mxu0
        %v4675 = vadd.f32 %v4605, %v4674
        %v4676 = vpop.f32.mrf.mxu0
        %4677 = vdwg.mxu0
        %4678 = vmatprep.subr.mxu0 0.0
        %4679 = vmatpush1.msra.mxu0 %v2239
        %4680 = vmatprep.subr.mxu0 0.0
        %4681 = vmatpush1.msra.mxu0 %v2236
        %4682 = vmatprep.subr.mxu0 0.0
        %4683 = vmatpush1.msra.mxu0 %v2233
        %4684 = vmatprep.subr.mxu0 0.0
        %4685 = vmatpush1.msra.mxu0 %v2230
        %4686 = vmatprep.subr.mxu0 0.0
        %4687 = vmatpush1.msra.mxu0 %v2227
        %4688 = vmatprep.subr.mxu0 0.0
        %4689 = vmatpush1.msra.mxu0 %v2224
        %4690 = vmatprep.subr.mxu0 0.0
        %4691 = vmatpush1.msra.mxu0 %v2221
        %4692 = vmatprep.subr.mxu0 0.0
        %4693 = vmatpush1.msra.mxu0 %v2218
        %4694 = vmatprep.subr.mxu0 0.0
        %4695 = vmatpush1.msra.mxu0 %v2215
        %4696 = vmatprep.subr.mxu0 0.0
        %4697 = vmatpush1.msra.mxu0 %v2212
        %4698 = vmatprep.subr.mxu0 0.0
        %4699 = vmatpush1.msra.mxu0 %v2209
        %4700 = vmatprep.subr.mxu0 0.0
        %4701 = vmatpush1.msra.mxu0 %v2206
        %4702 = vmatprep.subr.mxu0 0.0
        %4703 = vmatpush1.msra.mxu0 %v2203
        %4704 = vmatprep.subr.mxu0 0.0
        %4705 = vmatpush1.msra.mxu0 %v2200
        %4706 = vmatprep.subr.mxu0 0.0
        %4707 = vmatpush1.msra.mxu0 %v2197
        %4708 = vmatprep.subr.mxu0 0.0
        %4709 = vmatpush1.msra.mxu0 %v2194
        %4710 = vmatprep.subr.mxu0 0.0
        %4711 = vmatpush2.msra.mxu0 %v2287
        %4712 = vmatprep.subr.mxu0 0.0
        %4713 = vmatpush2.msra.mxu0 %v2284
        %4714 = vmatprep.subr.mxu0 0.0
        %4715 = vmatpush2.msra.mxu0 %v2281
        %4716 = vmatprep.subr.mxu0 0.0
        %4717 = vmatpush2.msra.mxu0 %v2278
        %4718 = vmatprep.subr.mxu0 0.0
        %4719 = vmatpush2.msra.mxu0 %v2275
        %4720 = vmatprep.subr.mxu0 0.0
        %4721 = vmatpush2.msra.mxu0 %v2272
        %4722 = vmatprep.subr.mxu0 0.0
        %4723 = vmatpush2.msra.mxu0 %v2269
        %4724 = vmatprep.subr.mxu0 0.0
        %4725 = vmatpush2.msra.mxu0 %v2266
        %4726 = vmatprep.subr.mxu0 0.0
        %4727 = vmatpush2.msra.mxu0 %v2263
        %4728 = vmatprep.subr.mxu0 0.0
        %4729 = vmatpush2.msra.mxu0 %v2260
        %4730 = vmatprep.subr.mxu0 0.0
        %4731 = vmatpush2.msra.mxu0 %v2257
        %4732 = vmatprep.subr.mxu0 0.0
        %4733 = vmatpush2.msra.mxu0 %v2254
        %4734 = vmatprep.subr.mxu0 0.0
        %4735 = vmatpush2.msra.mxu0 %v2251
        %4736 = vmatprep.subr.mxu0 0.0
        %4737 = vmatpush2.msra.mxu0 %v2248
        %4738 = vmatprep.subr.mxu0 0.0
        %4739 = vmatpush2.msra.mxu0 %v2245
        %4740 = vmatprep.subr.mxu0 0.0
        %4741 = vmatpush2.msra.mxu0 %v2242
        %4742 = vmatprep.mubr.f32.mxu0 %v2889
        %4743 = vmatmul.mubr.f32.gmra.mxu0 %v297
        %v4744 = vpop.f32.mrf.mxu0
        %v4745 = vadd.f32 %v4675, %v4744
        %v4746 = vpop.f32.mrf.mxu0
        %4747 = vdwg.mxu0
        %4748 = vmatprep.subr.mxu0 0.0
        %4749 = vmatpush1.msra.mxu0 %v2335
        %4750 = vmatprep.subr.mxu0 0.0
        %4751 = vmatpush1.msra.mxu0 %v2332
        %4752 = vmatprep.subr.mxu0 0.0
        %4753 = vmatpush1.msra.mxu0 %v2329
        %4754 = vmatprep.subr.mxu0 0.0
        %4755 = vmatpush1.msra.mxu0 %v2326
        %4756 = vmatprep.subr.mxu0 0.0
        %4757 = vmatpush1.msra.mxu0 %v2323
        %4758 = vmatprep.subr.mxu0 0.0
        %4759 = vmatpush1.msra.mxu0 %v2320
        %4760 = vmatprep.subr.mxu0 0.0
        %4761 = vmatpush1.msra.mxu0 %v2317
        %4762 = vmatprep.subr.mxu0 0.0
        %4763 = vmatpush1.msra.mxu0 %v2314
        %4764 = vmatprep.subr.mxu0 0.0
        %4765 = vmatpush1.msra.mxu0 %v2311
        %4766 = vmatprep.subr.mxu0 0.0
        %4767 = vmatpush1.msra.mxu0 %v2308
        %4768 = vmatprep.subr.mxu0 0.0
        %4769 = vmatpush1.msra.mxu0 %v2305
        %4770 = vmatprep.subr.mxu0 0.0
        %4771 = vmatpush1.msra.mxu0 %v2302
        %4772 = vmatprep.subr.mxu0 0.0
        %4773 = vmatpush1.msra.mxu0 %v2299
        %4774 = vmatprep.subr.mxu0 0.0
        %4775 = vmatpush1.msra.mxu0 %v2296
        %4776 = vmatprep.subr.mxu0 0.0
        %4777 = vmatpush1.msra.mxu0 %v2293
        %4778 = vmatprep.subr.mxu0 0.0
        %4779 = vmatpush1.msra.mxu0 %v2290
        %4780 = vmatprep.subr.mxu0 0.0
        %4781 = vmatpush2.msra.mxu0 %v2383
        %4782 = vmatprep.subr.mxu0 0.0
        %4783 = vmatpush2.msra.mxu0 %v2380
        %4784 = vmatprep.subr.mxu0 0.0
        %4785 = vmatpush2.msra.mxu0 %v2377
        %4786 = vmatprep.subr.mxu0 0.0
        %4787 = vmatpush2.msra.mxu0 %v2374
        %4788 = vmatprep.subr.mxu0 0.0
        %4789 = vmatpush2.msra.mxu0 %v2371
        %4790 = vmatprep.subr.mxu0 0.0
        %4791 = vmatpush2.msra.mxu0 %v2368
        %4792 = vmatprep.subr.mxu0 0.0
        %4793 = vmatpush2.msra.mxu0 %v2365
        %4794 = vmatprep.subr.mxu0 0.0
        %4795 = vmatpush2.msra.mxu0 %v2362
        %4796 = vmatprep.subr.mxu0 0.0
        %4797 = vmatpush2.msra.mxu0 %v2359
        %4798 = vmatprep.subr.mxu0 0.0
        %4799 = vmatpush2.msra.mxu0 %v2356
        %4800 = vmatprep.subr.mxu0 0.0
        %4801 = vmatpush2.msra.mxu0 %v2353
        %4802 = vmatprep.subr.mxu0 0.0
        %4803 = vmatpush2.msra.mxu0 %v2350
        %4804 = vmatprep.subr.mxu0 0.0
        %4805 = vmatpush2.msra.mxu0 %v2347
        %4806 = vmatprep.subr.mxu0 0.0
        %4807 = vmatpush2.msra.mxu0 %v2344
        %4808 = vmatprep.subr.mxu0 0.0
        %4809 = vmatpush2.msra.mxu0 %v2341
        %4810 = vmatprep.subr.mxu0 0.0
        %4811 = vmatpush2.msra.mxu0 %v2338
        %4812 = vmatprep.mubr.f32.mxu0 %v2890
        %4813 = vmatmul.mubr.f32.gmra.mxu0 %v298
        %v4814 = vpop.f32.mrf.mxu0
        %v4815 = vadd.f32 %v4745, %v4814
        %v4816 = vpop.f32.mrf.mxu0
        %4817 = vdwg.mxu0
        %4818 = vmatprep.subr.mxu0 0.0
        %4819 = vmatpush1.msra.mxu0 %v2431
        %4820 = vmatprep.subr.mxu0 0.0
        %4821 = vmatpush1.msra.mxu0 %v2428
        %4822 = vmatprep.subr.mxu0 0.0
        %4823 = vmatpush1.msra.mxu0 %v2425
        %4824 = vmatprep.subr.mxu0 0.0
        %4825 = vmatpush1.msra.mxu0 %v2422
        %4826 = vmatprep.subr.mxu0 0.0
        %4827 = vmatpush1.msra.mxu0 %v2419
        %4828 = vmatprep.subr.mxu0 0.0
        %4829 = vmatpush1.msra.mxu0 %v2416
        %4830 = vmatprep.subr.mxu0 0.0
        %4831 = vmatpush1.msra.mxu0 %v2413
        %4832 = vmatprep.subr.mxu0 0.0
        %4833 = vmatpush1.msra.mxu0 %v2410
        %4834 = vmatprep.subr.mxu0 0.0
        %4835 = vmatpush1.msra.mxu0 %v2407
        %4836 = vmatprep.subr.mxu0 0.0
        %4837 = vmatpush1.msra.mxu0 %v2404
        %4838 = vmatprep.subr.mxu0 0.0
        %4839 = vmatpush1.msra.mxu0 %v2401
        %4840 = vmatprep.subr.mxu0 0.0
        %4841 = vmatpush1.msra.mxu0 %v2398
        %4842 = vmatprep.subr.mxu0 0.0
        %4843 = vmatpush1.msra.mxu0 %v2395
        %4844 = vmatprep.subr.mxu0 0.0
        %4845 = vmatpush1.msra.mxu0 %v2392
        %4846 = vmatprep.subr.mxu0 0.0
        %4847 = vmatpush1.msra.mxu0 %v2389
        %4848 = vmatprep.subr.mxu0 0.0
        %4849 = vmatpush1.msra.mxu0 %v2386
        %4850 = vmatprep.subr.mxu0 0.0
        %4851 = vmatpush2.msra.mxu0 %v2479
        %4852 = vmatprep.subr.mxu0 0.0
        %4853 = vmatpush2.msra.mxu0 %v2476
        %4854 = vmatprep.subr.mxu0 0.0
        %4855 = vmatpush2.msra.mxu0 %v2473
        %4856 = vmatprep.subr.mxu0 0.0
        %4857 = vmatpush2.msra.mxu0 %v2470
        %4858 = vmatprep.subr.mxu0 0.0
        %4859 = vmatpush2.msra.mxu0 %v2467
        %4860 = vmatprep.subr.mxu0 0.0
        %4861 = vmatpush2.msra.mxu0 %v2464
        %4862 = vmatprep.subr.mxu0 0.0
        %4863 = vmatpush2.msra.mxu0 %v2461
        %4864 = vmatprep.subr.mxu0 0.0
        %4865 = vmatpush2.msra.mxu0 %v2458
        %4866 = vmatprep.subr.mxu0 0.0
        %4867 = vmatpush2.msra.mxu0 %v2455
        %4868 = vmatprep.subr.mxu0 0.0
        %4869 = vmatpush2.msra.mxu0 %v2452
        %4870 = vmatprep.subr.mxu0 0.0
        %4871 = vmatpush2.msra.mxu0 %v2449
        %4872 = vmatprep.subr.mxu0 0.0
        %4873 = vmatpush2.msra.mxu0 %v2446
        %4874 = vmatprep.subr.mxu0 0.0
        %4875 = vmatpush2.msra.mxu0 %v2443
        %4876 = vmatprep.subr.mxu0 0.0
        %4877 = vmatpush2.msra.mxu0 %v2440
        %4878 = vmatprep.subr.mxu0 0.0
        %4879 = vmatpush2.msra.mxu0 %v2437
        %4880 = vmatprep.subr.mxu0 0.0
        %4881 = vmatpush2.msra.mxu0 %v2434
        %4882 = vmatprep.mubr.f32.mxu0 %v2891
        %4883 = vmatmul.mubr.f32.gmra.mxu0 %v299
        %v4884 = vpop.f32.mrf.mxu0
        %v4885 = vadd.f32 %v4815, %v4884
        %v4886 = vpop.f32.mrf.mxu0
        %4887 = vdwg.mxu0
        %4888 = vmatprep.subr.mxu0 0.0
        %4889 = vmatpush1.msra.mxu0 %v2527
        %4890 = vmatprep.subr.mxu0 0.0
        %4891 = vmatpush1.msra.mxu0 %v2524
        %4892 = vmatprep.subr.mxu0 0.0
        %4893 = vmatpush1.msra.mxu0 %v2521
        %4894 = vmatprep.subr.mxu0 0.0
        %4895 = vmatpush1.msra.mxu0 %v2518
        %4896 = vmatprep.subr.mxu0 0.0
        %4897 = vmatpush1.msra.mxu0 %v2515
        %4898 = vmatprep.subr.mxu0 0.0
        %4899 = vmatpush1.msra.mxu0 %v2512
        %4900 = vmatprep.subr.mxu0 0.0
        %4901 = vmatpush1.msra.mxu0 %v2509
        %4902 = vmatprep.subr.mxu0 0.0
        %4903 = vmatpush1.msra.mxu0 %v2506
        %4904 = vmatprep.subr.mxu0 0.0
        %4905 = vmatpush1.msra.mxu0 %v2503
        %4906 = vmatprep.subr.mxu0 0.0
        %4907 = vmatpush1.msra.mxu0 %v2500
        %4908 = vmatprep.subr.mxu0 0.0
        %4909 = vmatpush1.msra.mxu0 %v2497
        %4910 = vmatprep.subr.mxu0 0.0
        %4911 = vmatpush1.msra.mxu0 %v2494
        %4912 = vmatprep.subr.mxu0 0.0
        %4913 = vmatpush1.msra.mxu0 %v2491
        %4914 = vmatprep.subr.mxu0 0.0
        %4915 = vmatpush1.msra.mxu0 %v2488
        %4916 = vmatprep.subr.mxu0 0.0
        %4917 = vmatpush1.msra.mxu0 %v2485
        %4918 = vmatprep.subr.mxu0 0.0
        %4919 = vmatpush1.msra.mxu0 %v2482
        %4920 = vmatprep.subr.mxu0 0.0
        %4921 = vmatpush2.msra.mxu0 %v2575
        %4922 = vmatprep.subr.mxu0 0.0
        %4923 = vmatpush2.msra.mxu0 %v2572
        %4924 = vmatprep.subr.mxu0 0.0
        %4925 = vmatpush2.msra.mxu0 %v2569
        %4926 = vmatprep.subr.mxu0 0.0
        %4927 = vmatpush2.msra.mxu0 %v2566
        %4928 = vmatprep.subr.mxu0 0.0
        %4929 = vmatpush2.msra.mxu0 %v2563
        %4930 = vmatprep.subr.mxu0 0.0
        %4931 = vmatpush2.msra.mxu0 %v2560
        %4932 = vmatprep.subr.mxu0 0.0
        %4933 = vmatpush2.msra.mxu0 %v2557
        %4934 = vmatprep.subr.mxu0 0.0
        %4935 = vmatpush2.msra.mxu0 %v2554
        %4936 = vmatprep.subr.mxu0 0.0
        %4937 = vmatpush2.msra.mxu0 %v2551
        %4938 = vmatprep.subr.mxu0 0.0
        %4939 = vmatpush2.msra.mxu0 %v2548
        %4940 = vmatprep.subr.mxu0 0.0
        %4941 = vmatpush2.msra.mxu0 %v2545
        %4942 = vmatprep.subr.mxu0 0.0
        %4943 = vmatpush2.msra.mxu0 %v2542
        %4944 = vmatprep.subr.mxu0 0.0
        %4945 = vmatpush2.msra.mxu0 %v2539
        %4946 = vmatprep.subr.mxu0 0.0
        %4947 = vmatpush2.msra.mxu0 %v2536
        %4948 = vmatprep.subr.mxu0 0.0
        %4949 = vmatpush2.msra.mxu0 %v2533
        %4950 = vmatprep.subr.mxu0 0.0
        %4951 = vmatpush2.msra.mxu0 %v2530
        %4952 = vmatprep.mubr.f32.mxu0 %v2892
        %4953 = vmatmul.mubr.f32.gmra.mxu0 %v300
        %v4954 = vpop.f32.mrf.mxu0
        %v4955 = vadd.f32 %v4885, %v4954
        %v4956 = vpop.f32.mrf.mxu0
        %4957 = vdwg.mxu0
        %4958 = vmatprep.subr.mxu0 0.0
        %4959 = vmatpush1.msra.mxu0 %v2623
        %4960 = vmatprep.subr.mxu0 0.0
        %4961 = vmatpush1.msra.mxu0 %v2620
        %4962 = vmatprep.subr.mxu0 0.0
        %4963 = vmatpush1.msra.mxu0 %v2617
        %4964 = vmatprep.subr.mxu0 0.0
        %4965 = vmatpush1.msra.mxu0 %v2614
        %4966 = vmatprep.subr.mxu0 0.0
        %4967 = vmatpush1.msra.mxu0 %v2611
        %4968 = vmatprep.subr.mxu0 0.0
        %4969 = vmatpush1.msra.mxu0 %v2608
        %4970 = vmatprep.subr.mxu0 0.0
        %4971 = vmatpush1.msra.mxu0 %v2605
        %4972 = vmatprep.subr.mxu0 0.0
        %4973 = vmatpush1.msra.mxu0 %v2602
        %4974 = vmatprep.subr.mxu0 0.0
        %4975 = vmatpush1.msra.mxu0 %v2599
        %4976 = vmatprep.subr.mxu0 0.0
        %4977 = vmatpush1.msra.mxu0 %v2596
        %4978 = vmatprep.subr.mxu0 0.0
        %4979 = vmatpush1.msra.mxu0 %v2593
        %4980 = vmatprep.subr.mxu0 0.0
        %4981 = vmatpush1.msra.mxu0 %v2590
        %4982 = vmatprep.subr.mxu0 0.0
        %4983 = vmatpush1.msra.mxu0 %v2587
        %4984 = vmatprep.subr.mxu0 0.0
        %4985 = vmatpush1.msra.mxu0 %v2584
        %4986 = vmatprep.subr.mxu0 0.0
        %4987 = vmatpush1.msra.mxu0 %v2581
        %4988 = vmatprep.subr.mxu0 0.0
        %4989 = vmatpush1.msra.mxu0 %v2578
        %4990 = vmatprep.subr.mxu0 0.0
        %4991 = vmatpush2.msra.mxu0 %v2671
        %4992 = vmatprep.subr.mxu0 0.0
        %4993 = vmatpush2.msra.mxu0 %v2668
        %4994 = vmatprep.subr.mxu0 0.0
        %4995 = vmatpush2.msra.mxu0 %v2665
        %4996 = vmatprep.subr.mxu0 0.0
        %4997 = vmatpush2.msra.mxu0 %v2662
        %4998 = vmatprep.subr.mxu0 0.0
        %4999 = vmatpush2.msra.mxu0 %v2659
        %5000 = vmatprep.subr.mxu0 0.0
        %5001 = vmatpush2.msra.mxu0 %v2656
        %5002 = vmatprep.subr.mxu0 0.0
        %5003 = vmatpush2.msra.mxu0 %v2653
        %5004 = vmatprep.subr.mxu0 0.0
        %5005 = vmatpush2.msra.mxu0 %v2650
        %5006 = vmatprep.subr.mxu0 0.0
        %5007 = vmatpush2.msra.mxu0 %v2647
        %5008 = vmatprep.subr.mxu0 0.0
        %5009 = vmatpush2.msra.mxu0 %v2644
        %5010 = vmatprep.subr.mxu0 0.0
        %5011 = vmatpush2.msra.mxu0 %v2641
        %5012 = vmatprep.subr.mxu0 0.0
        %5013 = vmatpush2.msra.mxu0 %v2638
        %5014 = vmatprep.subr.mxu0 0.0
        %5015 = vmatpush2.msra.mxu0 %v2635
        %5016 = vmatprep.subr.mxu0 0.0
        %5017 = vmatpush2.msra.mxu0 %v2632
        %5018 = vmatprep.subr.mxu0 0.0
        %5019 = vmatpush2.msra.mxu0 %v2629
        %5020 = vmatprep.subr.mxu0 0.0
        %5021 = vmatpush2.msra.mxu0 %v2626
        %5022 = vmatprep.mubr.f32.mxu0 %v2893
        %5023 = vmatmul.mubr.f32.gmra.mxu0 %v301
        %v5024 = vpop.f32.mrf.mxu0
        %v5025 = vadd.f32 %v4955, %v5024
        %v5026 = vpop.f32.mrf.mxu0
        %5027 = vdwg.mxu0
        %5028 = vmatprep.subr.mxu0 0.0
        %5029 = vmatpush1.msra.mxu0 %v2719
        %5030 = vmatprep.subr.mxu0 0.0
        %5031 = vmatpush1.msra.mxu0 %v2716
        %5032 = vmatprep.subr.mxu0 0.0
        %5033 = vmatpush1.msra.mxu0 %v2713
        %5034 = vmatprep.subr.mxu0 0.0
        %5035 = vmatpush1.msra.mxu0 %v2710
        %5036 = vmatprep.subr.mxu0 0.0
        %5037 = vmatpush1.msra.mxu0 %v2707
        %5038 = vmatprep.subr.mxu0 0.0
        %5039 = vmatpush1.msra.mxu0 %v2704
        %5040 = vmatprep.subr.mxu0 0.0
        %5041 = vmatpush1.msra.mxu0 %v2701
        %5042 = vmatprep.subr.mxu0 0.0
        %5043 = vmatpush1.msra.mxu0 %v2698
        %5044 = vmatprep.subr.mxu0 0.0
        %5045 = vmatpush1.msra.mxu0 %v2695
        %5046 = vmatprep.subr.mxu0 0.0
        %5047 = vmatpush1.msra.mxu0 %v2692
        %5048 = vmatprep.subr.mxu0 0.0
        %5049 = vmatpush1.msra.mxu0 %v2689
        %5050 = vmatprep.subr.mxu0 0.0
        %5051 = vmatpush1.msra.mxu0 %v2686
        %5052 = vmatprep.subr.mxu0 0.0
        %5053 = vmatpush1.msra.mxu0 %v2683
        %5054 = vmatprep.subr.mxu0 0.0
        %5055 = vmatpush1.msra.mxu0 %v2680
        %5056 = vmatprep.subr.mxu0 0.0
        %5057 = vmatpush1.msra.mxu0 %v2677
        %5058 = vmatprep.subr.mxu0 0.0
        %5059 = vmatpush1.msra.mxu0 %v2674
        %5060 = vmatprep.subr.mxu0 0.0
        %5061 = vmatpush2.msra.mxu0 %v2767
        %5062 = vmatprep.subr.mxu0 0.0
        %5063 = vmatpush2.msra.mxu0 %v2764
        %5064 = vmatprep.subr.mxu0 0.0
        %5065 = vmatpush2.msra.mxu0 %v2761
        %5066 = vmatprep.subr.mxu0 0.0
        %5067 = vmatpush2.msra.mxu0 %v2758
        %5068 = vmatprep.subr.mxu0 0.0
        %5069 = vmatpush2.msra.mxu0 %v2755
        %5070 = vmatprep.subr.mxu0 0.0
        %5071 = vmatpush2.msra.mxu0 %v2752
        %5072 = vmatprep.subr.mxu0 0.0
        %5073 = vmatpush2.msra.mxu0 %v2749
        %5074 = vmatprep.subr.mxu0 0.0
        %5075 = vmatpush2.msra.mxu0 %v2746
        %5076 = vmatprep.subr.mxu0 0.0
        %5077 = vmatpush2.msra.mxu0 %v2743
        %5078 = vmatprep.subr.mxu0 0.0
        %5079 = vmatpush2.msra.mxu0 %v2740
        %5080 = vmatprep.subr.mxu0 0.0
        %5081 = vmatpush2.msra.mxu0 %v2737
        %5082 = vmatprep.subr.mxu0 0.0
        %5083 = vmatpush2.msra.mxu0 %v2734
        %5084 = vmatprep.subr.mxu0 0.0
        %5085 = vmatpush2.msra.mxu0 %v2731
        %5086 = vmatprep.subr.mxu0 0.0
        %5087 = vmatpush2.msra.mxu0 %v2728
        %5088 = vmatprep.subr.mxu0 0.0
        %5089 = vmatpush2.msra.mxu0 %v2725
        %5090 = vmatprep.subr.mxu0 0.0
        %5091 = vmatpush2.msra.mxu0 %v2722
        %5092 = vmatprep.mubr.f32.mxu0 %v2894
        %5093 = vmatmul.mubr.f32.gmra.mxu0 %v302
        %v5094 = vpop.f32.mrf.mxu0
        %v5095 = vadd.f32 %v5025, %v5094
        %v5096 = vpop.f32.mrf.mxu0
        %5097 = vdwg.mxu0
        %5098 = vmatprep.subr.mxu0 0.0
        %5099 = vmatpush1.msra.mxu0 %v2815
        %5100 = vmatprep.subr.mxu0 0.0
        %5101 = vmatpush1.msra.mxu0 %v2812
        %5102 = vmatprep.subr.mxu0 0.0
        %5103 = vmatpush1.msra.mxu0 %v2809
        %5104 = vmatprep.subr.mxu0 0.0
        %5105 = vmatpush1.msra.mxu0 %v2806
        %5106 = vmatprep.subr.mxu0 0.0
        %5107 = vmatpush1.msra.mxu0 %v2803
        %5108 = vmatprep.subr.mxu0 0.0
        %5109 = vmatpush1.msra.mxu0 %v2800
        %5110 = vmatprep.subr.mxu0 0.0
        %5111 = vmatpush1.msra.mxu0 %v2797
        %5112 = vmatprep.subr.mxu0 0.0
        %5113 = vmatpush1.msra.mxu0 %v2794
        %5114 = vmatprep.subr.mxu0 0.0
        %5115 = vmatpush1.msra.mxu0 %v2791
        %5116 = vmatprep.subr.mxu0 0.0
        %5117 = vmatpush1.msra.mxu0 %v2788
        %5118 = vmatprep.subr.mxu0 0.0
        %5119 = vmatpush1.msra.mxu0 %v2785
        %5120 = vmatprep.subr.mxu0 0.0
        %5121 = vmatpush1.msra.mxu0 %v2782
        %5122 = vmatprep.subr.mxu0 0.0
        %5123 = vmatpush1.msra.mxu0 %v2779
        %5124 = vmatprep.subr.mxu0 0.0
        %5125 = vmatpush1.msra.mxu0 %v2776
        %5126 = vmatprep.subr.mxu0 0.0
        %5127 = vmatpush1.msra.mxu0 %v2773
        %5128 = vmatprep.subr.mxu0 0.0
        %5129 = vmatpush1.msra.mxu0 %v2770
        %5130 = vmatprep.subr.mxu0 0.0
        %5131 = vmatpush2.msra.mxu0 %v2863
        %5132 = vmatprep.subr.mxu0 0.0
        %5133 = vmatpush2.msra.mxu0 %v2860
        %5134 = vmatprep.subr.mxu0 0.0
        %5135 = vmatpush2.msra.mxu0 %v2857
        %5136 = vmatprep.subr.mxu0 0.0
        %5137 = vmatpush2.msra.mxu0 %v2854
        %5138 = vmatprep.subr.mxu0 0.0
        %5139 = vmatpush2.msra.mxu0 %v2851
        %5140 = vmatprep.subr.mxu0 0.0
        %5141 = vmatpush2.msra.mxu0 %v2848
        %5142 = vmatprep.subr.mxu0 0.0
        %5143 = vmatpush2.msra.mxu0 %v2845
        %5144 = vmatprep.subr.mxu0 0.0
        %5145 = vmatpush2.msra.mxu0 %v2842
        %5146 = vmatprep.subr.mxu0 0.0
        %5147 = vmatpush2.msra.mxu0 %v2839
        %5148 = vmatprep.subr.mxu0 0.0
        %5149 = vmatpush2.msra.mxu0 %v2836
        %5150 = vmatprep.subr.mxu0 0.0
        %5151 = vmatpush2.msra.mxu0 %v2833
        %5152 = vmatprep.subr.mxu0 0.0
        %5153 = vmatpush2.msra.mxu0 %v2830
        %5154 = vmatprep.subr.mxu0 0.0
        %5155 = vmatpush2.msra.mxu0 %v2827
        %5156 = vmatprep.subr.mxu0 0.0
        %5157 = vmatpush2.msra.mxu0 %v2824
        %5158 = vmatprep.subr.mxu0 0.0
        %5159 = vmatpush2.msra.mxu0 %v2821
        %5160 = vmatprep.subr.mxu0 0.0
        %5161 = vmatpush2.msra.mxu0 %v2818
        %5162 = vmatprep.mubr.f32.mxu0 %v2895
        %5163 = vmatmul.mubr.f32.gmra.mxu0 %v303
        %v5164 = vpop.f32.mrf.mxu0
        %v5165 = vadd.f32 %v5095, %v5164
        %v5166 = vpop.f32.mrf.mxu0
        %5167 = vdwg.mxu0
        %v5170 = vcombine.low %v4044, %v4046
        %v5172 = vadd.f32 %v286, %v5170
        %v5173 = vadd.f32 %v287, %v5165
        %5174 = vst [vmem:[#allocation2] sm:$0xff] %v5172
        %5175 = vst [vmem:[#allocation2 + $0x8] sm:$0xf] %v5173
        %p5176 = scmp.eq.s32.totalorder %s21, 3
        // Predicated region
        $region57: #{_forward.3} parent=39 // pred_check
          %p5177 = pneg %p5176
        $region58: #{_forward.3} parent=39 // pred_check_branch
          %5179 = sbr.rel (%p5177) target = $region60
        $region59: #{_forward.3} parent=39 // pred_region
          %v5180 = vld [vmem:[#allocation2] sm:$0xff]
          %v5181 = vld [vmem:[#allocation2 + $0x8] sm:$0xf]
          %v5182 = vld [vmem:[#allocation6] sm:$0x7]
          %v5184 = vlaneseq
          %v5185 = vshrl.u32 %v5184, 7
          %v5186 = vsub.s32 0, %v5185
          %v5187 = vrot.slane %v5182, %v5186
          %v5188 = vlaneseq
          %v5189 = vshrl.u32 %v5188, 7
          %v5190 = vsub.s32 1, %v5189
          %v5191 = vrot.slane %v5182, %v5190
          %v5192 = vlaneseq
          %v5193 = vshrl.u32 %v5192, 7
          %v5194 = vsub.s32 2, %v5193
          %v5195 = vrot.slane %v5182, %v5194
          %v5197 = vcombine.low %v5187, %v5191
          %v5199 = vadd.f32 %v5180, %v5197
          %v5200 = vadd.f32 %v5181, %v5195
          %v5202 = vcombine.high %v5199, %v5199
          %5204 = vmatprep.subr.mxu0 0.0
          %5205 = vmatpush1.xpose.msra.mxu0 0.0
          %5206 = vmatprep.subr.mxu0 0.0
          %5207 = vmatpush1.xpose.msra.mxu0 0.0
          %5208 = vmatprep.subr.mxu0 0.0
          %5209 = vmatpush1.xpose.msra.mxu0 0.0
          %5210 = vmatprep.subr.mxu0 0.0
          %5211 = vmatpush1.xpose.msra.mxu0 0.0
          %5212 = vmatprep.subr.mxu0 0.0
          %5213 = vmatpush1.xpose.msra.mxu0 0.0
          %5214 = vmatprep.subr.mxu0 0.0
          %5215 = vmatpush1.xpose.msra.mxu0 0.0
          %5216 = vmatprep.subr.mxu0 0.0
          %5217 = vmatpush1.xpose.msra.mxu0 0.0
          %5218 = vmatprep.subr.mxu0 0.0
          %5219 = vmatpush1.xpose.msra.mxu0 0.0
          %5220 = vmatprep.subr.mxu0 0.0
          %5221 = vmatpush1.xpose.msra.mxu0 0.0
          %5222 = vmatprep.subr.mxu0 0.0
          %5223 = vmatpush1.xpose.msra.mxu0 0.0
          %5224 = vmatprep.subr.mxu0 0.0
          %5225 = vmatpush1.xpose.msra.mxu0 0.0
          %5226 = vmatprep.subr.mxu0 0.0
          %5227 = vmatpush1.xpose.msra.mxu0 0.0
          %5228 = vmatprep.subr.mxu0 0.0
          %5229 = vmatpush1.xpose.msra.mxu0 0.0
          %5230 = vmatprep.subr.mxu0 0.0
          %5231 = vmatpush1.xpose.msra.mxu0 0.0
          %5232 = vmatprep.subr.mxu0 0.0
          %5233 = vmatpush1.xpose.msra.mxu0 0.0
          %5234 = vmatprep.subr.mxu0 0.0
          %5235 = vmatpush1.xpose.msra.mxu0 %v5202
          %5236 = vmatprep.subr.mxu0 0.0
          %5237 = vmatpush2.xpose.msra.mxu0 0.0
          %5238 = vmatprep.subr.mxu0 0.0
          %5239 = vmatpush2.xpose.msra.mxu0 0.0
          %5240 = vmatprep.subr.mxu0 0.0
          %5241 = vmatpush2.xpose.msra.mxu0 0.0
          %5242 = vmatprep.subr.mxu0 0.0
          %5243 = vmatpush2.xpose.msra.mxu0 0.0
          %5244 = vmatprep.subr.mxu0 0.0
          %5245 = vmatpush2.xpose.msra.mxu0 0.0
          %5246 = vmatprep.subr.mxu0 0.0
          %5247 = vmatpush2.xpose.msra.mxu0 0.0
          %5248 = vmatprep.subr.mxu0 0.0
          %5249 = vmatpush2.xpose.msra.mxu0 0.0
          %5250 = vmatprep.subr.mxu0 0.0
          %5251 = vmatpush2.xpose.msra.mxu0 0.0
          %5252 = vmatprep.subr.mxu0 0.0
          %5253 = vmatpush2.xpose.msra.mxu0 0.0
          %5254 = vmatprep.subr.mxu0 0.0
          %5255 = vmatpush2.xpose.msra.mxu0 0.0
          %5256 = vmatprep.subr.mxu0 0.0
          %5257 = vmatpush2.xpose.msra.mxu0 0.0
          %5258 = vmatprep.subr.mxu0 0.0
          %5259 = vmatpush2.xpose.msra.mxu0 0.0
          %5260 = vmatprep.subr.mxu0 0.0
          %5261 = vmatpush2.xpose.msra.mxu0 0.0
          %5262 = vmatprep.subr.mxu0 0.0
          %5263 = vmatpush2.xpose.msra.mxu0 0.0
          %5264 = vmatprep.subr.mxu0 0.0
          %5265 = vmatpush2.xpose.msra.mxu0 0.0
          %5266 = vmatprep.subr.mxu0 0.0
          %5267 = vmatpush2.xpose.msra.mxu0 0.0
          %5268 = vmatprep.mubr.f32.mxu0 0.0
          %5269 = vmatmul.mubr.f32.gmra.mxu0 %v5199
          %v5270 = vpop.f32.mrf.mxu0
          %v5271 = vadd.f32 0.0, %v5270
          %v5272 = vpop.f32.mrf.mxu0
          %5273 = vdwg.mxu0
          %v5274 = vmul.f32 %v5271, 0.088388346
          %vm5275 = vcmask 27648
          %v5276 = vsel %vm5275, %v5274, -inf
          %5277 = vmax.xlane.f32.xlu0 %v5276
          %v5278 = vpop.xlane.xlu0 %5277
          %v5279 = vsub.f32 %v5274, %v5278
          %v5280 = vmul.f32 %v5279, 1.442695
          %v5281 = vpow.pop %v5280
          %v5282 = vsel %vm5275, %v5281, 0.0
          %5283 = vadd.xlane.f32.xlu0 %v5282
          %v5284 = vpop.xlane.xlu0 %5283
          %v5285 = vrcp.pop %v5284
          %v5286 = vmul.f32 %v5281, %v5285
          %vm5287 = vcmask 31744
          %v5289 = vsel %vm5287, %v5286, 0
          %vm5291 = vcmask 1043456
          %v5293 = vsel %vm5291, %v5200, 0
          %5295 = vmatprep.subr.mxu0 0.0
          %5296 = vmatpush1.msra.mxu0 0.0
          %5297 = vmatprep.subr.mxu0 0.0
          %5298 = vmatpush1.msra.mxu0 0.0
          %5299 = vmatprep.subr.mxu0 0.0
          %5300 = vmatpush1.msra.mxu0 0.0
          %5301 = vmatprep.subr.mxu0 0.0
          %5302 = vmatpush1.msra.mxu0 0.0
          %5303 = vmatprep.subr.mxu0 0.0
          %5304 = vmatpush1.msra.mxu0 0.0
          %5305 = vmatprep.subr.mxu0 0.0
          %5306 = vmatpush1.msra.mxu0 0.0
          %5307 = vmatprep.subr.mxu0 0.0
          %5308 = vmatpush1.msra.mxu0 0.0
          %5309 = vmatprep.subr.mxu0 0.0
          %5310 = vmatpush1.msra.mxu0 0.0
          %5311 = vmatprep.subr.mxu0 0.0
          %5312 = vmatpush1.msra.mxu0 0.0
          %5313 = vmatprep.subr.mxu0 0.0
          %5314 = vmatpush1.msra.mxu0 0.0
          %5315 = vmatprep.subr.mxu0 0.0
          %5316 = vmatpush1.msra.mxu0 0.0
          %5317 = vmatprep.subr.mxu0 0.0
          %5318 = vmatpush1.msra.mxu0 0.0
          %5319 = vmatprep.subr.mxu0 0.0
          %5320 = vmatpush1.msra.mxu0 0.0
          %5321 = vmatprep.subr.mxu0 0.0
          %5322 = vmatpush1.msra.mxu0 0.0
          %5323 = vmatprep.subr.mxu0 0.0
          %5324 = vmatpush1.msra.mxu0 0.0
          %5325 = vmatprep.subr.mxu0 0.0
          %5326 = vmatpush1.msra.mxu0 %v5293
          %5327 = vmatprep.subr.mxu0 0.0
          %5328 = vmatpush2.msra.mxu0 0.0
          %5329 = vmatprep.subr.mxu0 0.0
          %5330 = vmatpush2.msra.mxu0 0.0
          %5331 = vmatprep.subr.mxu0 0.0
          %5332 = vmatpush2.msra.mxu0 0.0
          %5333 = vmatprep.subr.mxu0 0.0
          %5334 = vmatpush2.msra.mxu0 0.0
          %5335 = vmatprep.subr.mxu0 0.0
          %5336 = vmatpush2.msra.mxu0 0.0
          %5337 = vmatprep.subr.mxu0 0.0
          %5338 = vmatpush2.msra.mxu0 0.0
          %5339 = vmatprep.subr.mxu0 0.0
          %5340 = vmatpush2.msra.mxu0 0.0
          %5341 = vmatprep.subr.mxu0 0.0
          %5342 = vmatpush2.msra.mxu0 0.0
          %5343 = vmatprep.subr.mxu0 0.0
          %5344 = vmatpush2.msra.mxu0 0.0
          %5345 = vmatprep.subr.mxu0 0.0
          %5346 = vmatpush2.msra.mxu0 0.0
          %5347 = vmatprep.subr.mxu0 0.0
          %5348 = vmatpush2.msra.mxu0 0.0
          %5349 = vmatprep.subr.mxu0 0.0
          %5350 = vmatpush2.msra.mxu0 0.0
          %5351 = vmatprep.subr.mxu0 0.0
          %5352 = vmatpush2.msra.mxu0 0.0
          %5353 = vmatprep.subr.mxu0 0.0
          %5354 = vmatpush2.msra.mxu0 0.0
          %5355 = vmatprep.subr.mxu0 0.0
          %5356 = vmatpush2.msra.mxu0 0.0
          %5357 = vmatprep.subr.mxu0 0.0
          %5358 = vmatpush2.msra.mxu0 0.0
          %5359 = vmatprep.mubr.f32.mxu0 0.0
          %5360 = vmatmul.mubr.f32.gmra.mxu0 %v5289
          %v5361 = vpop.f32.mrf.mxu0
          %v5362 = vadd.f32 0.0, %v5361
          %v5363 = vpop.f32.mrf.mxu0
          %5364 = vdwg.mxu0
          %v5365 = vld [vmem:[%s3] sm:$0xff]
          %v5366 = vld [vmem:[%s3 + $0x8] sm:$0xff]
          %v5367 = vld [vmem:[%s3 + $0x10] sm:$0xff]
          %v5368 = vld [vmem:[%s3 + $0x18] sm:$0xff]
          %v5369 = vld [vmem:[%s3 + $0x20] sm:$0xff]
          %v5370 = vld [vmem:[%s3 + $0x28] sm:$0xff]
          %v5371 = vld [vmem:[%s3 + $0x30] sm:$0xff]
          %v5372 = vld [vmem:[%s3 + $0x38] sm:$0xff]
          %v5373 = vld [vmem:[%s3 + $0x40] sm:$0xff]
          %v5374 = vld [vmem:[%s3 + $0x48] sm:$0xff]
          %v5375 = vld [vmem:[%s3 + $0x50] sm:$0xff]
          %v5376 = vld [vmem:[%s3 + $0x58] sm:$0xff]
          %v5377 = vld [vmem:[%s3 + $0x60] sm:$0xff]
          %v5378 = vld [vmem:[%s3 + $0x68] sm:$0xff]
          %v5379 = vld [vmem:[%s3 + $0x70] sm:$0xff]
          %v5380 = vld [vmem:[%s3 + $0x78] sm:$0xff]
          %v5381 = vld [vmem:[#allocation8] sm:$0x1]
          %v5383 = vlaneseq
          %v5384 = vshrl.u32 %v5383, 7
          %v5385 = vsub.s32 0, %v5384
          %v5386 = vrot.slane %v5381, %v5385
          %5388 = vmatprep.subr.mxu0 0.0
          %5389 = vmatpush1.msra.mxu0 %v5380
          %5390 = vmatprep.subr.mxu0 0.0
          %5391 = vmatpush1.msra.mxu0 %v5379
          %5392 = vmatprep.subr.mxu0 0.0
          %5393 = vmatpush1.msra.mxu0 %v5378
          %5394 = vmatprep.subr.mxu0 0.0
          %5395 = vmatpush1.msra.mxu0 %v5377
          %5396 = vmatprep.subr.mxu0 0.0
          %5397 = vmatpush1.msra.mxu0 %v5376
          %5398 = vmatprep.subr.mxu0 0.0
          %5399 = vmatpush1.msra.mxu0 %v5375
          %5400 = vmatprep.subr.mxu0 0.0
          %5401 = vmatpush1.msra.mxu0 %v5374
          %5402 = vmatprep.subr.mxu0 0.0
          %5403 = vmatpush1.msra.mxu0 %v5373
          %5404 = vmatprep.subr.mxu0 0.0
          %5405 = vmatpush1.msra.mxu0 %v5372
          %5406 = vmatprep.subr.mxu0 0.0
          %5407 = vmatpush1.msra.mxu0 %v5371
          %5408 = vmatprep.subr.mxu0 0.0
          %5409 = vmatpush1.msra.mxu0 %v5370
          %5410 = vmatprep.subr.mxu0 0.0
          %5411 = vmatpush1.msra.mxu0 %v5369
          %5412 = vmatprep.subr.mxu0 0.0
          %5413 = vmatpush1.msra.mxu0 %v5368
          %5414 = vmatprep.subr.mxu0 0.0
          %5415 = vmatpush1.msra.mxu0 %v5367
          %5416 = vmatprep.subr.mxu0 0.0
          %5417 = vmatpush1.msra.mxu0 %v5366
          %5418 = vmatprep.subr.mxu0 0.0
          %5419 = vmatpush1.msra.mxu0 %v5365
          %5420 = vmatprep.subr.mxu0 0.0
          %5421 = vmatpush2.msra.mxu0 0.0
          %5422 = vmatprep.subr.mxu0 0.0
          %5423 = vmatpush2.msra.mxu0 0.0
          %5424 = vmatprep.subr.mxu0 0.0
          %5425 = vmatpush2.msra.mxu0 0.0
          %5426 = vmatprep.subr.mxu0 0.0
          %5427 = vmatpush2.msra.mxu0 0.0
          %5428 = vmatprep.subr.mxu0 0.0
          %5429 = vmatpush2.msra.mxu0 0.0
          %5430 = vmatprep.subr.mxu0 0.0
          %5431 = vmatpush2.msra.mxu0 0.0
          %5432 = vmatprep.subr.mxu0 0.0
          %5433 = vmatpush2.msra.mxu0 0.0
          %5434 = vmatprep.subr.mxu0 0.0
          %5435 = vmatpush2.msra.mxu0 0.0
          %5436 = vmatprep.subr.mxu0 0.0
          %5437 = vmatpush2.msra.mxu0 0.0
          %5438 = vmatprep.subr.mxu0 0.0
          %5439 = vmatpush2.msra.mxu0 0.0
          %5440 = vmatprep.subr.mxu0 0.0
          %5441 = vmatpush2.msra.mxu0 0.0
          %5442 = vmatprep.subr.mxu0 0.0
          %5443 = vmatpush2.msra.mxu0 0.0
          %5444 = vmatprep.subr.mxu0 0.0
          %5445 = vmatpush2.msra.mxu0 0.0
          %5446 = vmatprep.subr.mxu0 0.0
          %5447 = vmatpush2.msra.mxu0 0.0
          %5448 = vmatprep.subr.mxu0 0.0
          %5449 = vmatpush2.msra.mxu0 0.0
          %5450 = vmatprep.subr.mxu0 0.0
          %5451 = vmatpush2.msra.mxu0 0.0
          %5452 = vmatprep.mubr.f32.mxu0 0.0
          %5453 = vmatmul.mubr.f32.gmra.mxu0 %v5362
          %v5454 = vpop.f32.mrf.mxu0
          %v5455 = vadd.f32 %v5386, %v5454
          %v5456 = vpop.f32.mrf.mxu0
          %5457 = vdwg.mxu0
          %vm5458 = vcmask 257024
          %5459 = vst.msk [vmem:[#allocation9] sm:$0xf] %vm5458, %v5455
        $region60: #{_forward.3} parent=39 // pred_fallthru
          _
        // Predicated region
        $region61: #{_forward.3} parent=39 // pred_check
          %p5460 = pneg %p149
        $region62: #{_forward.3} parent=39 // pred_check_branch
          %5462 = sbr.rel (%p5460) target = $region64
        $region63: #{_forward.3} parent=39 // pred_region
          %s5464 = ssub.s32 64, 64
          %5465 = vsyncadd [#allocation5], %s5464
          %s5467 = sshll.u32 [#allocation9], 4
          %s5468 = int_to_ptr.vmem [resolvable:$true] %s5467
          %5470 = dma.vmem_to_hbm [thread:$0]  %s5468, 64, %s5, [#allocation5]
        $region64: #{_forward.3} parent=39 // pred_fallthru
          _
        // Predicated region
        $region65: #{_forward.3} parent=39 // pred_check
          %p5471 = pneg %p149
        $region66: #{_forward.3} parent=39 // pred_check_branch
          %5473 = sbr.rel (%p5471) target = $region68
        $region67: #{_forward.3} parent=39 // pred_region
          %5474 = dma.done [#allocation5], 64
        $region68: #{_forward.3} parent=39 // pred_fallthru
          _
      $region40: #{_forward.3} parent=5 // pred_fallthru
        _
      %p5475 = scmp.le.s32.totalorder 2, %s16
      // Predicated region
      $region69: #{_forward.3} parent=5 // pred_check
        %p5476 = pneg %p5475
      $region70: #{_forward.3} parent=5 // pred_check_branch
        %5478 = sbr.rel (%p5476) target = $region72
      $region71: #{_forward.3} parent=5 // pred_region
        %s5479 = ssub.s32 %s16, 2
      $region72: #{_forward.3} parent=5 // pred_fallthru
        _
    $region6: #{_forward.3} parent=1 // loop_footer
      %s20 = sadd.s32 1, %s16
    $region7: #{_forward.3} parent=1 // loop_footer_branch
      %15 = sbr.rel target = $region3
    $region8: #{_forward.3} parent=1 // loop_exit
      _
    %5480 = vsyncpa [#allocation4], 1
    %s5481 = scalar_lea.sflag [#allocation4], 1
    %5482 = vsyncpa %s5481, 1
    %5483 = vsyncpa [#allocation7], 1
    %5484 = vsyncpa [#allocation5], 1
    %s5485 = scalar_lea.sflag [#allocation5], 1
    %5486 = vsyncpa %s5485, 1

</llo_original>
